<compile_context>
chip_gen: v7x
topology: tpu7x:2x2x1
jax: 0.10.0
libtpu: 0.0.40
codegen_flags: <defaults>
</compile_context>

<pallas_src>
import functools

import numpy as np
import jax
import jax.numpy as jnp
from jax.experimental import pallas as pl
from jax.experimental.pallas import tpu as pltpu

_BN_EPS = 1e-5
_CIN_PAD = 8      # first-layer input channels padded 7 -> 8
_CMID = 64
_COUT = 3
_TAPS = [(ky, kx) for ky in range(3) for kx in range(3)]   # row-major 3x3 taps


# -----------------------------------------------------------------------------
# Fused Pallas kernel: 5x(conv3x3+BN+ReLU) + conv1x1 + tanh, one batch element
# per grid step.  Activations stay resident in VMEM/vregs between layers.
# -----------------------------------------------------------------------------
def _fused_trigger_kernel(x_ref, mask_ref, w1_ref, b1_ref, w2_ref, b2_ref,
                          wf_ref, bf_ref, o_ref, *, img_w):
    """Fused trigger_model forward for one batch element (channels-major).

    x_ref:    (1, 8, HW)     f32   channel-padded input (target|mask_img|mask|0)
    mask_ref: (9, 1, HW)     f32   per-tap validity masks (1 inside image, 0 halo)
    w1_ref:   (9, 64, 8)     bf16  BN-folded conv1 weights, tap-major
    b1_ref:   (64, 1)        f32
    w2_ref:   (4, 9, 64, 64) bf16  BN-folded conv2..5 weights, tap-major
    b2_ref:   (4, 64, 1)     f32
    wf_ref:   (3, 64)        bf16  final 1x1 conv weights
    bf_ref:   (3, 1)         f32
    o_ref:    (1, 3, HW)     f32   lane-dense output
    """
    hw = o_ref.shape[2]
    n_mid = w2_ref.shape[0]
    offsets = [(ky - 1) * img_w + (kx - 1) for ky, kx in _TAPS]
    # Hoist the 9 per-tap masks once; reused by all 5 conv layers.
    tap_mask = [mask_ref[t] for t in range(9)]          # each (1, HW) f32

    def conv3x3(a_f32, get_w_tap):
        # 9 accumulated MXU matmuls (one per tap) instead of an im2col concat.
        acc = None
        for t, off in enumerate(offsets):
            if off == 0:
                shifted = a_f32
            else:
                # result[j] = a[(j + off) mod HW]  (XLU lane rotation)
                rolled = pltpu.roll(a_f32, (-off) % hw, axis=1)
                shifted = rolled * tap_mask[t]           # zero wrapped/halo taps
            part = jnp.dot(get_w_tap(t), shifted.astype(jnp.bfloat16),
                           preferred_element_type=jnp.float32)
            acc = part if acc is None else acc + part
        return acc                                       # (Cout, HW) f32

    # ---- layer 1: 8 -> 64 ----
    a = conv3x3(x_ref[0], lambda t: w1_ref[t])
    a = jnp.maximum(a + b1_ref[...], 0.0)
    # ---- layers 2..5: 64 -> 64 ----
    for l in range(n_mid):
        a = conv3x3(a, lambda t, l=l: w2_ref[l, t])
        a = jnp.maximum(a + b2_ref[l], 0.0)
    # ---- final 1x1 conv + tanh ----
    y = jnp.dot(wf_ref[...], a.astype(jnp.bfloat16),
                preferred_element_type=jnp.float32) + bf_ref[...]
    o_ref[0] = jnp.tanh(y)


# -----------------------------------------------------------------------------
# pallas_call wrapper
# -----------------------------------------------------------------------------
def fused_trigger_forward(x, tap_masks, w1, b1, w2, b2, wf, bf, img_w):
    """x: (B, 8, H*W) f32 channels-major input; returns (B, 3, H*W) f32."""
    batch, cin, hw = x.shape
    cout = wf.shape[0]
    kernel = functools.partial(_fused_trigger_kernel, img_w=img_w)
    return pl.pallas_call(
        kernel,
        out_shape=jax.ShapeDtypeStruct((batch, cout, hw), jnp.float32),
        grid_spec=pltpu.PrefetchScalarGridSpec(
            num_scalar_prefetch=0,
            grid=(batch,),
            in_specs=[
                pl.BlockSpec((1, cin, hw), lambda b: (b, 0, 0)),
                pl.BlockSpec(tap_masks.shape, lambda b: (0, 0, 0)),
                pl.BlockSpec(w1.shape, lambda b: (0, 0, 0)),
                pl.BlockSpec(b1.shape, lambda b: (0, 0)),
                pl.BlockSpec(w2.shape, lambda b: (0, 0, 0, 0)),
                pl.BlockSpec(b2.shape, lambda b: (0, 0, 0)),
                pl.BlockSpec(wf.shape, lambda b: (0, 0)),
                pl.BlockSpec(bf.shape, lambda b: (0, 0)),
            ],
            out_specs=pl.BlockSpec((1, cout, hw), lambda b: (b, 0, 0)),
        ),
        compiler_params=pltpu.CompilerParams(
            dimension_semantics=("parallel",),
        ),
    )(x, tap_masks, w1, b1, w2, b2, wf, bf)


# -----------------------------------------------------------------------------
# Static per-tap boundary masks (1.0 where the shifted source pixel is inside
# the image, 0.0 where the 1-pixel zero padding would have been read).
# -----------------------------------------------------------------------------
def _make_tap_masks(h, w):
    ys = np.arange(h).reshape(h, 1)
    xs = np.arange(w).reshape(1, w)
    rows = []
    for ky, kx in _TAPS:
        dy, dx = ky - 1, kx - 1
        valid = ((ys + dy >= 0) & (ys + dy < h) &
                 (xs + dx >= 0) & (xs + dx < w))
        rows.append(valid.reshape(1, h * w))
    return np.stack(rows).astype(np.float32)             # (9, 1, H*W)


# -----------------------------------------------------------------------------
# Parameter construction (deterministic, synthetic) + one-time BN folding
# -----------------------------------------------------------------------------
def _make_conv_bn_params(key, cin, cout):
    kw, kb, kg, kbt, km, kv = jax.random.split(key, 6)
    w = jax.random.normal(kw, (cout, cin, 3, 3), jnp.float32) * 0.05   # OIHW
    b = jax.random.normal(kb, (cout,), jnp.float32) * 0.05
    gamma = 1.0 + 0.1 * jax.random.normal(kg, (cout,), jnp.float32)
    beta = 0.1 * jax.random.normal(kbt, (cout,), jnp.float32)
    rmean = 0.1 * jax.random.normal(km, (cout,), jnp.float32)
    rvar = jnp.abs(1.0 + 0.1 * jax.random.normal(kv, (cout,), jnp.float32))
    return dict(w=w, b=b, gamma=gamma, beta=beta, mean=rmean, var=rvar)


def make_trigger_model_params(seed=0):
    key = jax.random.PRNGKey(seed)
    keys = jax.random.split(key, 7)
    chans = [(7, _CMID)] + [(_CMID, _CMID)] * 4
    conv_layers = [_make_conv_bn_params(keys[i], ci, co)
                   for i, (ci, co) in enumerate(chans)]
    kw, kb = jax.random.split(keys[5])
    final_w = jax.random.normal(kw, (_COUT, _CMID, 1, 1), jnp.float32) * 0.05
    final_b = jax.random.normal(kb, (_COUT,), jnp.float32) * 0.05
    return dict(conv_layers=conv_layers, final_w=final_w, final_b=final_b)


def _fold_bn_taps(p, pad_cin_to=None):
    """Fold eval-mode BN into the conv; return (tap-major weights, bias)."""
    scale = p["gamma"] / jnp.sqrt(p["var"] + _BN_EPS)            # (Cout,)
    w = p["w"] * scale[:, None, None, None]                      # OIHW
    b = (p["b"] - p["mean"]) * scale + p["beta"]                 # (Cout,)
    if pad_cin_to is not None and pad_cin_to > w.shape[1]:
        w = jnp.pad(w, ((0, 0), (0, pad_cin_to - w.shape[1]), (0, 0), (0, 0)))
    cout, cin = w.shape[0], w.shape[1]
    # OIHW -> (kh, kw, Cout, Cin) -> (9, Cout, Cin): tap order matches _TAPS.
    w_taps = jnp.transpose(w, (2, 3, 0, 1)).reshape(9, cout, cin)
    return w_taps, b


def fold_trigger_params(params):
    """Precompute folded/reshaped bf16 weights once (outside the jitted path)."""
    w1, b1 = _fold_bn_taps(params["conv_layers"][0], pad_cin_to=_CIN_PAD)
    w2s, b2s = [], []
    for p in params["conv_layers"][1:]:
        w, b = _fold_bn_taps(p)
        w2s.append(w)
        b2s.append(b)
    w2 = jnp.stack(w2s)                                  # (4, 9, 64, 64)
    b2 = jnp.stack(b2s)[..., None]                       # (4, 64, 1)
    wf = params["final_w"][:, :, 0, 0]                   # (3, 64)
    bf = params["final_b"].reshape(-1, 1)                # (3, 1)
    return dict(
        w1=w1.astype(jnp.bfloat16), b1=b1.reshape(-1, 1),
        w2=w2.astype(jnp.bfloat16), b2=b2,
        wf=wf.astype(jnp.bfloat16), bf=bf,
    )


# -----------------------------------------------------------------------------
# Full forward pass (mirrors trigger_model.forward), jitted
# -----------------------------------------------------------------------------
@jax.jit
def trigger_model_forward(folded, mask_img_nchw, mask_nchw, target_nchw):
    batch, _, h, w = target_nchw.shape
    # concat = torch.cat([target, mask_img, mask], dim=1)  -> (B, 7, H, W)
    concat = jnp.concatenate([target_nchw, mask_img_nchw, mask_nchw], axis=1)
    x = concat.reshape(batch, 7, h * w)                          # free reshape
    x = jnp.pad(x, ((0, 0), (0, _CIN_PAD - 7), (0, 0)))          # 7 -> 8 chans
    tap_masks = jnp.asarray(_make_tap_masks(h, w))               # (9, 1, H*W)
    out = fused_trigger_forward(
        x, tap_masks, folded["w1"], folded["b1"], folded["w2"], folded["b2"],
        folded["wf"], folded["bf"], w)
    return out.reshape(batch, _COUT, h, w)                       # free reshape


# -----------------------------------------------------------------------------
# Pure-JAX reference (for correctness check)
# -----------------------------------------------------------------------------
def _reference_forward(params, mask_img, mask, target):
    x = jnp.concatenate([target, mask_img, mask], axis=1)        # NCHW
    for p in params["conv_layers"]:
        scale = p["gamma"] / jnp.sqrt(p["var"] + _BN_EPS)
        w = p["w"] * scale[:, None, None, None]
        b = (p["b"] - p["mean"]) * scale + p["beta"]
        x = jax.lax.conv_general_dilated(
            x, w, window_strides=(1, 1), padding=((1, 1), (1, 1)),
            dimension_numbers=("NCHW", "OIHW", "NCHW"))
        x = jnp.maximum(x + b[None, :, None, None], 0.0)
    x = jax.lax.conv_general_dilated(
        x, params["final_w"], window_strides=(1, 1), padding=((0, 0), (0, 0)),
        dimension_numbers=("NCHW", "OIHW", "NCHW"))
    return jnp.tanh(x + params["final_b"][None, :, None, None])


# -----------------------------------------------------------------------------
if __name__ == "__main__":
    B, H, W = 2, 16, 16
    key = jax.random.PRNGKey(0)
    k1, k2, k3 = jax.random.split(key, 3)
    mask_img = jax.random.normal(k1, (B, 3, H, W), jnp.float32)   # NCHW
    mask = jax.random.normal(k2, (B, 1, H, W), jnp.float32)       # NCHW
    target = jax.random.normal(k3, (B, 3, H, W), jnp.float32)     # NCHW

    params = make_trigger_model_params(seed=0)
    folded = fold_trigger_params(params)          # BN folding done ONCE

    out = jax.block_until_ready(
        trigger_model_forward(folded, mask_img, mask, target))
    ref = jax.block_until_ready(
        _reference_forward(params, mask_img, mask, target))

    assert out.shape == (B, 3, H, W), out.shape
    max_err = float(jnp.max(jnp.abs(out - ref)))
    # bf16 MXU matmuls vs f32 reference -> loosened tolerance.
    assert max_err < 5e-2, f"max abs err {max_err}"

    print("KERNEL_OK")
</pallas_src>

<mosaic_0001>
module attributes {stable_mosaic.version = 11 : i64} {
  func.func @_fused_trigger_kernel(%arg0: i32, %arg1: memref<1x8x256xf32, #tpu.memory_space<vmem>>, %arg2: memref<9x1x256xf32, #tpu.memory_space<vmem>>, %arg3: memref<9x64x8xbf16, #tpu.memory_space<vmem>>, %arg4: memref<64x1xf32, #tpu.memory_space<vmem>>, %arg5: memref<4x9x64x64xbf16, #tpu.memory_space<vmem>>, %arg6: memref<4x64x1xf32, #tpu.memory_space<vmem>>, %arg7: memref<3x64xbf16, #tpu.memory_space<vmem>>, %arg8: memref<3x1xf32, #tpu.memory_space<vmem>>, %arg9: memref<1x3x256xf32, #tpu.memory_space<vmem>>) attributes {dimension_semantics = [#tpu.dimension_semantics<parallel>], iteration_bounds = array<i64: 2>, scalar_prefetch = 0 : i64, scratch_operands = 0 : i64, tpu.core_type = #tpu.core_type<tc>, window_params = [{transform_indices = @transform_0, window_bounds = array<i64: 1, 8, 256>}, {pipeline_mode = #tpu.pipeline_mode<synchronous>, transform_indices = @transform_1, window_bounds = array<i64: 9, 1, 256>}, {pipeline_mode = #tpu.pipeline_mode<synchronous>, transform_indices = @transform_2, window_bounds = array<i64: 9, 64, 8>}, {pipeline_mode = #tpu.pipeline_mode<synchronous>, transform_indices = @transform_3, window_bounds = array<i64: 64, 1>}, {pipeline_mode = #tpu.pipeline_mode<synchronous>, transform_indices = @transform_4, window_bounds = array<i64: 4, 9, 64, 64>}, {pipeline_mode = #tpu.pipeline_mode<synchronous>, transform_indices = @transform_5, window_bounds = array<i64: 4, 64, 1>}, {pipeline_mode = #tpu.pipeline_mode<synchronous>, transform_indices = @transform_6, window_bounds = array<i64: 3, 64>}, {pipeline_mode = #tpu.pipeline_mode<synchronous>, transform_indices = @transform_7, window_bounds = array<i64: 3, 1>}, {transform_indices = @transform_8, window_bounds = array<i64: 1, 3, 256>}]} {
    %c0 = arith.constant 0 : index
    %c0_0 = arith.constant 0 : index
    %c0_1 = arith.constant 0 : index
    %0 = vector.load %arg2[%c0, %c0_0, %c0_1] : memref<9x1x256xf32, #tpu.memory_space<vmem>>, vector<1x1x256xf32>
    %1 = vector.shape_cast %0 : vector<1x1x256xf32> to vector<1x256xf32>
    %c1 = arith.constant 1 : index
    %c0_2 = arith.constant 0 : index
    %c0_3 = arith.constant 0 : index
    %2 = vector.load %arg2[%c1, %c0_2, %c0_3] : memref<9x1x256xf32, #tpu.memory_space<vmem>>, vector<1x1x256xf32>
    %3 = vector.shape_cast %2 : vector<1x1x256xf32> to vector<1x256xf32>
    %c2 = arith.constant 2 : index
    %c0_4 = arith.constant 0 : index
    %c0_5 = arith.constant 0 : index
    %4 = vector.load %arg2[%c2, %c0_4, %c0_5] : memref<9x1x256xf32, #tpu.memory_space<vmem>>, vector<1x1x256xf32>
    %5 = vector.shape_cast %4 : vector<1x1x256xf32> to vector<1x256xf32>
    %c3 = arith.constant 3 : index
    %c0_6 = arith.constant 0 : index
    %c0_7 = arith.constant 0 : index
    %6 = vector.load %arg2[%c3, %c0_6, %c0_7] : memref<9x1x256xf32, #tpu.memory_space<vmem>>, vector<1x1x256xf32>
    %7 = vector.shape_cast %6 : vector<1x1x256xf32> to vector<1x256xf32>
    %c5 = arith.constant 5 : index
    %c0_8 = arith.constant 0 : index
    %c0_9 = arith.constant 0 : index
    %8 = vector.load %arg2[%c5, %c0_8, %c0_9] : memref<9x1x256xf32, #tpu.memory_space<vmem>>, vector<1x1x256xf32>
    %9 = vector.shape_cast %8 : vector<1x1x256xf32> to vector<1x256xf32>
    %c6 = arith.constant 6 : index
    %c0_10 = arith.constant 0 : index
    %c0_11 = arith.constant 0 : index
    %10 = vector.load %arg2[%c6, %c0_10, %c0_11] : memref<9x1x256xf32, #tpu.memory_space<vmem>>, vector<1x1x256xf32>
    %11 = vector.shape_cast %10 : vector<1x1x256xf32> to vector<1x256xf32>
    %c7 = arith.constant 7 : index
    %c0_12 = arith.constant 0 : index
    %c0_13 = arith.constant 0 : index
    %12 = vector.load %arg2[%c7, %c0_12, %c0_13] : memref<9x1x256xf32, #tpu.memory_space<vmem>>, vector<1x1x256xf32>
    %13 = vector.shape_cast %12 : vector<1x1x256xf32> to vector<1x256xf32>
    %c8 = arith.constant 8 : index
    %c0_14 = arith.constant 0 : index
    %c0_15 = arith.constant 0 : index
    %14 = vector.load %arg2[%c8, %c0_14, %c0_15] : memref<9x1x256xf32, #tpu.memory_space<vmem>>, vector<1x1x256xf32>
    %15 = vector.shape_cast %14 : vector<1x1x256xf32> to vector<1x256xf32>
    %c0_16 = arith.constant 0 : index
    %c0_17 = arith.constant 0 : index
    %c0_18 = arith.constant 0 : index
    %16 = vector.load %arg1[%c0_16, %c0_17, %c0_18] : memref<1x8x256xf32, #tpu.memory_space<vmem>>, vector<1x8x256xf32>
    %17 = vector.shape_cast %16 : vector<1x8x256xf32> to vector<8x256xf32>
    %c17_i32 = arith.constant 17 : i32
    %18 = tpu.dynamic_rotate %17 by %c17_i32 dim 1 : vector<8x256xf32>, i32 -> vector<8x256xf32>
    %19 = vector.broadcast %1 : vector<1x256xf32> to vector<8x256xf32>
    %20 = arith.mulf %18, %19 : vector<8x256xf32>
    %c0_19 = arith.constant 0 : index
    %c0_20 = arith.constant 0 : index
    %c0_21 = arith.constant 0 : index
    %21 = vector.load %arg3[%c0_19, %c0_20, %c0_21] : memref<9x64x8xbf16, #tpu.memory_space<vmem>>, vector<1x64x8xbf16>
    %22 = vector.shape_cast %21 : vector<1x64x8xbf16> to vector<64x8xbf16>
    %23 = arith.truncf %20 : vector<8x256xf32> to vector<8x256xbf16>
    %cst = arith.constant dense<0.000000e+00> : vector<64x256xf32>
    %24 = tpu.matmul %22, %23, %cst {dimension_numbers = #tpu.dot_dimension_numbers<[1], [0], [0], [1], [0, 0, 1, 1], [], []>} : vector<64x8xbf16>, vector<8x256xbf16>, vector<64x256xf32> -> vector<64x256xf32>
    %c16_i32 = arith.constant 16 : i32
    %25 = tpu.dynamic_rotate %17 by %c16_i32 dim 1 : vector<8x256xf32>, i32 -> vector<8x256xf32>
    %26 = vector.broadcast %3 : vector<1x256xf32> to vector<8x256xf32>
    %27 = arith.mulf %25, %26 : vector<8x256xf32>
    %c1_22 = arith.constant 1 : index
    %c0_23 = arith.constant 0 : index
    %c0_24 = arith.constant 0 : index
    %28 = vector.load %arg3[%c1_22, %c0_23, %c0_24] : memref<9x64x8xbf16, #tpu.memory_space<vmem>>, vector<1x64x8xbf16>
    %29 = vector.shape_cast %28 : vector<1x64x8xbf16> to vector<64x8xbf16>
    %30 = arith.truncf %27 : vector<8x256xf32> to vector<8x256xbf16>
    %cst_25 = arith.constant dense<0.000000e+00> : vector<64x256xf32>
    %31 = tpu.matmul %29, %30, %cst_25 {dimension_numbers = #tpu.dot_dimension_numbers<[1], [0], [0], [1], [0, 0, 1, 1], [], []>} : vector<64x8xbf16>, vector<8x256xbf16>, vector<64x256xf32> -> vector<64x256xf32>
    %32 = arith.addf %24, %31 : vector<64x256xf32>
    %c15_i32 = arith.constant 15 : i32
    %33 = tpu.dynamic_rotate %17 by %c15_i32 dim 1 : vector<8x256xf32>, i32 -> vector<8x256xf32>
    %34 = vector.broadcast %5 : vector<1x256xf32> to vector<8x256xf32>
    %35 = arith.mulf %33, %34 : vector<8x256xf32>
    %c2_26 = arith.constant 2 : index
    %c0_27 = arith.constant 0 : index
    %c0_28 = arith.constant 0 : index
    %36 = vector.load %arg3[%c2_26, %c0_27, %c0_28] : memref<9x64x8xbf16, #tpu.memory_space<vmem>>, vector<1x64x8xbf16>
    %37 = vector.shape_cast %36 : vector<1x64x8xbf16> to vector<64x8xbf16>
    %38 = arith.truncf %35 : vector<8x256xf32> to vector<8x256xbf16>
    %cst_29 = arith.constant dense<0.000000e+00> : vector<64x256xf32>
    %39 = tpu.matmul %37, %38, %cst_29 {dimension_numbers = #tpu.dot_dimension_numbers<[1], [0], [0], [1], [0, 0, 1, 1], [], []>} : vector<64x8xbf16>, vector<8x256xbf16>, vector<64x256xf32> -> vector<64x256xf32>
    %40 = arith.addf %32, %39 : vector<64x256xf32>
    %c1_i32 = arith.constant 1 : i32
    %41 = tpu.dynamic_rotate %17 by %c1_i32 dim 1 : vector<8x256xf32>, i32 -> vector<8x256xf32>
    %42 = vector.broadcast %7 : vector<1x256xf32> to vector<8x256xf32>
    %43 = arith.mulf %41, %42 : vector<8x256xf32>
    %c3_30 = arith.constant 3 : index
    %c0_31 = arith.constant 0 : index
    %c0_32 = arith.constant 0 : index
    %44 = vector.load %arg3[%c3_30, %c0_31, %c0_32] : memref<9x64x8xbf16, #tpu.memory_space<vmem>>, vector<1x64x8xbf16>
    %45 = vector.shape_cast %44 : vector<1x64x8xbf16> to vector<64x8xbf16>
    %46 = arith.truncf %43 : vector<8x256xf32> to vector<8x256xbf16>
    %cst_33 = arith.constant dense<0.000000e+00> : vector<64x256xf32>
    %47 = tpu.matmul %45, %46, %cst_33 {dimension_numbers = #tpu.dot_dimension_numbers<[1], [0], [0], [1], [0, 0, 1, 1], [], []>} : vector<64x8xbf16>, vector<8x256xbf16>, vector<64x256xf32> -> vector<64x256xf32>
    %48 = arith.addf %40, %47 : vector<64x256xf32>
    %c4 = arith.constant 4 : index
    %c0_34 = arith.constant 0 : index
    %c0_35 = arith.constant 0 : index
    %49 = vector.load %arg3[%c4, %c0_34, %c0_35] : memref<9x64x8xbf16, #tpu.memory_space<vmem>>, vector<1x64x8xbf16>
    %50 = vector.shape_cast %49 : vector<1x64x8xbf16> to vector<64x8xbf16>
    %51 = arith.truncf %17 : vector<8x256xf32> to vector<8x256xbf16>
    %cst_36 = arith.constant dense<0.000000e+00> : vector<64x256xf32>
    %52 = tpu.matmul %50, %51, %cst_36 {dimension_numbers = #tpu.dot_dimension_numbers<[1], [0], [0], [1], [0, 0, 1, 1], [], []>} : vector<64x8xbf16>, vector<8x256xbf16>, vector<64x256xf32> -> vector<64x256xf32>
    %53 = arith.addf %48, %52 : vector<64x256xf32>
    %c255_i32 = arith.constant 255 : i32
    %54 = tpu.dynamic_rotate %17 by %c255_i32 dim 1 : vector<8x256xf32>, i32 -> vector<8x256xf32>
    %55 = vector.broadcast %9 : vector<1x256xf32> to vector<8x256xf32>
    %56 = arith.mulf %54, %55 : vector<8x256xf32>
    %c5_37 = arith.constant 5 : index
    %c0_38 = arith.constant 0 : index
    %c0_39 = arith.constant 0 : index
    %57 = vector.load %arg3[%c5_37, %c0_38, %c0_39] : memref<9x64x8xbf16, #tpu.memory_space<vmem>>, vector<1x64x8xbf16>
    %58 = vector.shape_cast %57 : vector<1x64x8xbf16> to vector<64x8xbf16>
    %59 = arith.truncf %56 : vector<8x256xf32> to vector<8x256xbf16>
    %cst_40 = arith.constant dense<0.000000e+00> : vector<64x256xf32>
    %60 = tpu.matmul %58, %59, %cst_40 {dimension_numbers = #tpu.dot_dimension_numbers<[1], [0], [0], [1], [0, 0, 1, 1], [], []>} : vector<64x8xbf16>, vector<8x256xbf16>, vector<64x256xf32> -> vector<64x256xf32>
    %61 = arith.addf %53, %60 : vector<64x256xf32>
    %c241_i32 = arith.constant 241 : i32
    %62 = tpu.dynamic_rotate %17 by %c241_i32 dim 1 : vector<8x256xf32>, i32 -> vector<8x256xf32>
    %63 = vector.broadcast %11 : vector<1x256xf32> to vector<8x256xf32>
    %64 = arith.mulf %62, %63 : vector<8x256xf32>
    %c6_41 = arith.constant 6 : index
    %c0_42 = arith.constant 0 : index
    %c0_43 = arith.constant 0 : index
    %65 = vector.load %arg3[%c6_41, %c0_42, %c0_43] : memref<9x64x8xbf16, #tpu.memory_space<vmem>>, vector<1x64x8xbf16>
    %66 = vector.shape_cast %65 : vector<1x64x8xbf16> to vector<64x8xbf16>
    %67 = arith.truncf %64 : vector<8x256xf32> to vector<8x256xbf16>
    %cst_44 = arith.constant dense<0.000000e+00> : vector<64x256xf32>
    %68 = tpu.matmul %66, %67, %cst_44 {dimension_numbers = #tpu.dot_dimension_numbers<[1], [0], [0], [1], [0, 0, 1, 1], [], []>} : vector<64x8xbf16>, vector<8x256xbf16>, vector<64x256xf32> -> vector<64x256xf32>
    %69 = arith.addf %61, %68 : vector<64x256xf32>
    %c240_i32 = arith.constant 240 : i32
    %70 = tpu.dynamic_rotate %17 by %c240_i32 dim 1 : vector<8x256xf32>, i32 -> vector<8x256xf32>
    %71 = vector.broadcast %13 : vector<1x256xf32> to vector<8x256xf32>
    %72 = arith.mulf %70, %71 : vector<8x256xf32>
    %c7_45 = arith.constant 7 : index
    %c0_46 = arith.constant 0 : index
    %c0_47 = arith.constant 0 : index
    %73 = vector.load %arg3[%c7_45, %c0_46, %c0_47] : memref<9x64x8xbf16, #tpu.memory_space<vmem>>, vector<1x64x8xbf16>
    %74 = vector.shape_cast %73 : vector<1x64x8xbf16> to vector<64x8xbf16>
    %75 = arith.truncf %72 : vector<8x256xf32> to vector<8x256xbf16>
    %cst_48 = arith.constant dense<0.000000e+00> : vector<64x256xf32>
    %76 = tpu.matmul %74, %75, %cst_48 {dimension_numbers = #tpu.dot_dimension_numbers<[1], [0], [0], [1], [0, 0, 1, 1], [], []>} : vector<64x8xbf16>, vector<8x256xbf16>, vector<64x256xf32> -> vector<64x256xf32>
    %77 = arith.addf %69, %76 : vector<64x256xf32>
    %c239_i32 = arith.constant 239 : i32
    %78 = tpu.dynamic_rotate %17 by %c239_i32 dim 1 : vector<8x256xf32>, i32 -> vector<8x256xf32>
    %79 = vector.broadcast %15 : vector<1x256xf32> to vector<8x256xf32>
    %80 = arith.mulf %78, %79 : vector<8x256xf32>
    %c8_49 = arith.constant 8 : index
    %c0_50 = arith.constant 0 : index
    %c0_51 = arith.constant 0 : index
    %81 = vector.load %arg3[%c8_49, %c0_50, %c0_51] : memref<9x64x8xbf16, #tpu.memory_space<vmem>>, vector<1x64x8xbf16>
    %82 = vector.shape_cast %81 : vector<1x64x8xbf16> to vector<64x8xbf16>
    %83 = arith.truncf %80 : vector<8x256xf32> to vector<8x256xbf16>
    %cst_52 = arith.constant dense<0.000000e+00> : vector<64x256xf32>
    %84 = tpu.matmul %82, %83, %cst_52 {dimension_numbers = #tpu.dot_dimension_numbers<[1], [0], [0], [1], [0, 0, 1, 1], [], []>} : vector<64x8xbf16>, vector<8x256xbf16>, vector<64x256xf32> -> vector<64x256xf32>
    %85 = arith.addf %77, %84 : vector<64x256xf32>
    %c0_53 = arith.constant 0 : index
    %c0_54 = arith.constant 0 : index
    %86 = vector.load %arg4[%c0_53, %c0_54] : memref<64x1xf32, #tpu.memory_space<vmem>>, vector<64x1xf32>
    %87 = vector.broadcast %86 : vector<64x1xf32> to vector<64x256xf32>
    %88 = arith.addf %85, %87 : vector<64x256xf32>
    %cst_55 = arith.constant 0.000000e+00 : f32
    %89 = vector.broadcast %cst_55 : f32 to vector<64x256xf32>
    %90 = arith.maximumf %88, %89 : vector<64x256xf32>
    %c17_i32_56 = arith.constant 17 : i32
    %91 = tpu.dynamic_rotate %90 by %c17_i32_56 dim 1 : vector<64x256xf32>, i32 -> vector<64x256xf32>
    %92 = vector.broadcast %1 : vector<1x256xf32> to vector<64x256xf32>
    %93 = arith.mulf %91, %92 : vector<64x256xf32>
    %c0_57 = arith.constant 0 : index
    %c0_58 = arith.constant 0 : index
    %c0_59 = arith.constant 0 : index
    %c0_60 = arith.constant 0 : index
    %94 = vector.load %arg5[%c0_57, %c0_58, %c0_59, %c0_60] : memref<4x9x64x64xbf16, #tpu.memory_space<vmem>>, vector<1x1x64x64xbf16>
    %95 = vector.shape_cast %94 : vector<1x1x64x64xbf16> to vector<64x64xbf16>
    %96 = arith.truncf %93 : vector<64x256xf32> to vector<64x256xbf16>
    %cst_61 = arith.constant dense<0.000000e+00> : vector<64x256xf32>
    %97 = tpu.matmul %95, %96, %cst_61 {dimension_numbers = #tpu.dot_dimension_numbers<[1], [0], [0], [1], [0, 0, 1, 1], [], []>} : vector<64x64xbf16>, vector<64x256xbf16>, vector<64x256xf32> -> vector<64x256xf32>
    %c16_i32_62 = arith.constant 16 : i32
    %98 = tpu.dynamic_rotate %90 by %c16_i32_62 dim 1 : vector<64x256xf32>, i32 -> vector<64x256xf32>
    %99 = vector.broadcast %3 : vector<1x256xf32> to vector<64x256xf32>
    %100 = arith.mulf %98, %99 : vector<64x256xf32>
    %c0_63 = arith.constant 0 : index
    %c1_64 = arith.constant 1 : index
    %c0_65 = arith.constant 0 : index
    %c0_66 = arith.constant 0 : index
    %101 = vector.load %arg5[%c0_63, %c1_64, %c0_65, %c0_66] : memref<4x9x64x64xbf16, #tpu.memory_space<vmem>>, vector<1x1x64x64xbf16>
    %102 = vector.shape_cast %101 : vector<1x1x64x64xbf16> to vector<64x64xbf16>
    %103 = arith.truncf %100 : vector<64x256xf32> to vector<64x256xbf16>
    %cst_67 = arith.constant dense<0.000000e+00> : vector<64x256xf32>
    %104 = tpu.matmul %102, %103, %cst_67 {dimension_numbers = #tpu.dot_dimension_numbers<[1], [0], [0], [1], [0, 0, 1, 1], [], []>} : vector<64x64xbf16>, vector<64x256xbf16>, vector<64x256xf32> -> vector<64x256xf32>
    %105 = arith.addf %97, %104 : vector<64x256xf32>
    %c15_i32_68 = arith.constant 15 : i32
    %106 = tpu.dynamic_rotate %90 by %c15_i32_68 dim 1 : vector<64x256xf32>, i32 -> vector<64x256xf32>
    %107 = vector.broadcast %5 : vector<1x256xf32> to vector<64x256xf32>
    %108 = arith.mulf %106, %107 : vector<64x256xf32>
    %c0_69 = arith.constant 0 : index
    %c2_70 = arith.constant 2 : index
    %c0_71 = arith.constant 0 : index
    %c0_72 = arith.constant 0 : index
    %109 = vector.load %arg5[%c0_69, %c2_70, %c0_71, %c0_72] : memref<4x9x64x64xbf16, #tpu.memory_space<vmem>>, vector<1x1x64x64xbf16>
    %110 = vector.shape_cast %109 : vector<1x1x64x64xbf16> to vector<64x64xbf16>
    %111 = arith.truncf %108 : vector<64x256xf32> to vector<64x256xbf16>
    %cst_73 = arith.constant dense<0.000000e+00> : vector<64x256xf32>
    %112 = tpu.matmul %110, %111, %cst_73 {dimension_numbers = #tpu.dot_dimension_numbers<[1], [0], [0], [1], [0, 0, 1, 1], [], []>} : vector<64x64xbf16>, vector<64x256xbf16>, vector<64x256xf32> -> vector<64x256xf32>
    %113 = arith.addf %105, %112 : vector<64x256xf32>
    %c1_i32_74 = arith.constant 1 : i32
    %114 = tpu.dynamic_rotate %90 by %c1_i32_74 dim 1 : vector<64x256xf32>, i32 -> vector<64x256xf32>
    %115 = vector.broadcast %7 : vector<1x256xf32> to vector<64x256xf32>
    %116 = arith.mulf %114, %115 : vector<64x256xf32>
    %c0_75 = arith.constant 0 : index
    %c3_76 = arith.constant 3 : index
    %c0_77 = arith.constant 0 : index
    %c0_78 = arith.constant 0 : index
    %117 = vector.load %arg5[%c0_75, %c3_76, %c0_77, %c0_78] : memref<4x9x64x64xbf16, #tpu.memory_space<vmem>>, vector<1x1x64x64xbf16>
    %118 = vector.shape_cast %117 : vector<1x1x64x64xbf16> to vector<64x64xbf16>
    %119 = arith.truncf %116 : vector<64x256xf32> to vector<64x256xbf16>
    %cst_79 = arith.constant dense<0.000000e+00> : vector<64x256xf32>
    %120 = tpu.matmul %118, %119, %cst_79 {dimension_numbers = #tpu.dot_dimension_numbers<[1], [0], [0], [1], [0, 0, 1, 1], [], []>} : vector<64x64xbf16>, vector<64x256xbf16>, vector<64x256xf32> -> vector<64x256xf32>
    %121 = arith.addf %113, %120 : vector<64x256xf32>
    %c0_80 = arith.constant 0 : index
    %c4_81 = arith.constant 4 : index
    %c0_82 = arith.constant 0 : index
    %c0_83 = arith.constant 0 : index
    %122 = vector.load %arg5[%c0_80, %c4_81, %c0_82, %c0_83] : memref<4x9x64x64xbf16, #tpu.memory_space<vmem>>, vector<1x1x64x64xbf16>
    %123 = vector.shape_cast %122 : vector<1x1x64x64xbf16> to vector<64x64xbf16>
    %124 = arith.truncf %90 : vector<64x256xf32> to vector<64x256xbf16>
    %cst_84 = arith.constant dense<0.000000e+00> : vector<64x256xf32>
    %125 = tpu.matmul %123, %124, %cst_84 {dimension_numbers = #tpu.dot_dimension_numbers<[1], [0], [0], [1], [0, 0, 1, 1], [], []>} : vector<64x64xbf16>, vector<64x256xbf16>, vector<64x256xf32> -> vector<64x256xf32>
    %126 = arith.addf %121, %125 : vector<64x256xf32>
    %c255_i32_85 = arith.constant 255 : i32
    %127 = tpu.dynamic_rotate %90 by %c255_i32_85 dim 1 : vector<64x256xf32>, i32 -> vector<64x256xf32>
    %128 = vector.broadcast %9 : vector<1x256xf32> to vector<64x256xf32>
    %129 = arith.mulf %127, %128 : vector<64x256xf32>
    %c0_86 = arith.constant 0 : index
    %c5_87 = arith.constant 5 : index
    %c0_88 = arith.constant 0 : index
    %c0_89 = arith.constant 0 : index
    %130 = vector.load %arg5[%c0_86, %c5_87, %c0_88, %c0_89] : memref<4x9x64x64xbf16, #tpu.memory_space<vmem>>, vector<1x1x64x64xbf16>
    %131 = vector.shape_cast %130 : vector<1x1x64x64xbf16> to vector<64x64xbf16>
    %132 = arith.truncf %129 : vector<64x256xf32> to vector<64x256xbf16>
    %cst_90 = arith.constant dense<0.000000e+00> : vector<64x256xf32>
    %133 = tpu.matmul %131, %132, %cst_90 {dimension_numbers = #tpu.dot_dimension_numbers<[1], [0], [0], [1], [0, 0, 1, 1], [], []>} : vector<64x64xbf16>, vector<64x256xbf16>, vector<64x256xf32> -> vector<64x256xf32>
    %134 = arith.addf %126, %133 : vector<64x256xf32>
    %c241_i32_91 = arith.constant 241 : i32
    %135 = tpu.dynamic_rotate %90 by %c241_i32_91 dim 1 : vector<64x256xf32>, i32 -> vector<64x256xf32>
    %136 = vector.broadcast %11 : vector<1x256xf32> to vector<64x256xf32>
    %137 = arith.mulf %135, %136 : vector<64x256xf32>
    %c0_92 = arith.constant 0 : index
    %c6_93 = arith.constant 6 : index
    %c0_94 = arith.constant 0 : index
    %c0_95 = arith.constant 0 : index
    %138 = vector.load %arg5[%c0_92, %c6_93, %c0_94, %c0_95] : memref<4x9x64x64xbf16, #tpu.memory_space<vmem>>, vector<1x1x64x64xbf16>
    %139 = vector.shape_cast %138 : vector<1x1x64x64xbf16> to vector<64x64xbf16>
    %140 = arith.truncf %137 : vector<64x256xf32> to vector<64x256xbf16>
    %cst_96 = arith.constant dense<0.000000e+00> : vector<64x256xf32>
    %141 = tpu.matmul %139, %140, %cst_96 {dimension_numbers = #tpu.dot_dimension_numbers<[1], [0], [0], [1], [0, 0, 1, 1], [], []>} : vector<64x64xbf16>, vector<64x256xbf16>, vector<64x256xf32> -> vector<64x256xf32>
    %142 = arith.addf %134, %141 : vector<64x256xf32>
    %c240_i32_97 = arith.constant 240 : i32
    %143 = tpu.dynamic_rotate %90 by %c240_i32_97 dim 1 : vector<64x256xf32>, i32 -> vector<64x256xf32>
    %144 = vector.broadcast %13 : vector<1x256xf32> to vector<64x256xf32>
    %145 = arith.mulf %143, %144 : vector<64x256xf32>
    %c0_98 = arith.constant 0 : index
    %c7_99 = arith.constant 7 : index
    %c0_100 = arith.constant 0 : index
    %c0_101 = arith.constant 0 : index
    %146 = vector.load %arg5[%c0_98, %c7_99, %c0_100, %c0_101] : memref<4x9x64x64xbf16, #tpu.memory_space<vmem>>, vector<1x1x64x64xbf16>
    %147 = vector.shape_cast %146 : vector<1x1x64x64xbf16> to vector<64x64xbf16>
    %148 = arith.truncf %145 : vector<64x256xf32> to vector<64x256xbf16>
    %cst_102 = arith.constant dense<0.000000e+00> : vector<64x256xf32>
    %149 = tpu.matmul %147, %148, %cst_102 {dimension_numbers = #tpu.dot_dimension_numbers<[1], [0], [0], [1], [0, 0, 1, 1], [], []>} : vector<64x64xbf16>, vector<64x256xbf16>, vector<64x256xf32> -> vector<64x256xf32>
    %150 = arith.addf %142, %149 : vector<64x256xf32>
    %c239_i32_103 = arith.constant 239 : i32
    %151 = tpu.dynamic_rotate %90 by %c239_i32_103 dim 1 : vector<64x256xf32>, i32 -> vector<64x256xf32>
    %152 = vector.broadcast %15 : vector<1x256xf32> to vector<64x256xf32>
    %153 = arith.mulf %151, %152 : vector<64x256xf32>
    %c0_104 = arith.constant 0 : index
    %c8_105 = arith.constant 8 : index
    %c0_106 = arith.constant 0 : index
    %c0_107 = arith.constant 0 : index
    %154 = vector.load %arg5[%c0_104, %c8_105, %c0_106, %c0_107] : memref<4x9x64x64xbf16, #tpu.memory_space<vmem>>, vector<1x1x64x64xbf16>
    %155 = vector.shape_cast %154 : vector<1x1x64x64xbf16> to vector<64x64xbf16>
    %156 = arith.truncf %153 : vector<64x256xf32> to vector<64x256xbf16>
    %cst_108 = arith.constant dense<0.000000e+00> : vector<64x256xf32>
    %157 = tpu.matmul %155, %156, %cst_108 {dimension_numbers = #tpu.dot_dimension_numbers<[1], [0], [0], [1], [0, 0, 1, 1], [], []>} : vector<64x64xbf16>, vector<64x256xbf16>, vector<64x256xf32> -> vector<64x256xf32>
    %158 = arith.addf %150, %157 : vector<64x256xf32>
    %c0_109 = arith.constant 0 : index
    %c0_110 = arith.constant 0 : index
    %c0_111 = arith.constant 0 : index
    %159 = vector.load %arg6[%c0_109, %c0_110, %c0_111] : memref<4x64x1xf32, #tpu.memory_space<vmem>>, vector<1x64x1xf32>
    %160 = vector.shape_cast %159 : vector<1x64x1xf32> to vector<64x1xf32>
    %161 = vector.broadcast %160 : vector<64x1xf32> to vector<64x256xf32>
    %162 = arith.addf %158, %161 : vector<64x256xf32>
    %cst_112 = arith.constant 0.000000e+00 : f32
    %163 = vector.broadcast %cst_112 : f32 to vector<64x256xf32>
    %164 = arith.maximumf %162, %163 : vector<64x256xf32>
    %c17_i32_113 = arith.constant 17 : i32
    %165 = tpu.dynamic_rotate %164 by %c17_i32_113 dim 1 : vector<64x256xf32>, i32 -> vector<64x256xf32>
    %166 = vector.broadcast %1 : vector<1x256xf32> to vector<64x256xf32>
    %167 = arith.mulf %165, %166 : vector<64x256xf32>
    %c1_114 = arith.constant 1 : index
    %c0_115 = arith.constant 0 : index
    %c0_116 = arith.constant 0 : index
    %c0_117 = arith.constant 0 : index
    %168 = vector.load %arg5[%c1_114, %c0_115, %c0_116, %c0_117] : memref<4x9x64x64xbf16, #tpu.memory_space<vmem>>, vector<1x1x64x64xbf16>
    %169 = vector.shape_cast %168 : vector<1x1x64x64xbf16> to vector<64x64xbf16>
    %170 = arith.truncf %167 : vector<64x256xf32> to vector<64x256xbf16>
    %cst_118 = arith.constant dense<0.000000e+00> : vector<64x256xf32>
    %171 = tpu.matmul %169, %170, %cst_118 {dimension_numbers = #tpu.dot_dimension_numbers<[1], [0], [0], [1], [0, 0, 1, 1], [], []>} : vector<64x64xbf16>, vector<64x256xbf16>, vector<64x256xf32> -> vector<64x256xf32>
    %c16_i32_119 = arith.constant 16 : i32
    %172 = tpu.dynamic_rotate %164 by %c16_i32_119 dim 1 : vector<64x256xf32>, i32 -> vector<64x256xf32>
    %173 = vector.broadcast %3 : vector<1x256xf32> to vector<64x256xf32>
    %174 = arith.mulf %172, %173 : vector<64x256xf32>
    %c1_120 = arith.constant 1 : index
    %c1_121 = arith.constant 1 : index
    %c0_122 = arith.constant 0 : index
    %c0_123 = arith.constant 0 : index
    %175 = vector.load %arg5[%c1_120, %c1_121, %c0_122, %c0_123] : memref<4x9x64x64xbf16, #tpu.memory_space<vmem>>, vector<1x1x64x64xbf16>
    %176 = vector.shape_cast %175 : vector<1x1x64x64xbf16> to vector<64x64xbf16>
    %177 = arith.truncf %174 : vector<64x256xf32> to vector<64x256xbf16>
    %cst_124 = arith.constant dense<0.000000e+00> : vector<64x256xf32>
    %178 = tpu.matmul %176, %177, %cst_124 {dimension_numbers = #tpu.dot_dimension_numbers<[1], [0], [0], [1], [0, 0, 1, 1], [], []>} : vector<64x64xbf16>, vector<64x256xbf16>, vector<64x256xf32> -> vector<64x256xf32>
    %179 = arith.addf %171, %178 : vector<64x256xf32>
    %c15_i32_125 = arith.constant 15 : i32
    %180 = tpu.dynamic_rotate %164 by %c15_i32_125 dim 1 : vector<64x256xf32>, i32 -> vector<64x256xf32>
    %181 = vector.broadcast %5 : vector<1x256xf32> to vector<64x256xf32>
    %182 = arith.mulf %180, %181 : vector<64x256xf32>
    %c1_126 = arith.constant 1 : index
    %c2_127 = arith.constant 2 : index
    %c0_128 = arith.constant 0 : index
    %c0_129 = arith.constant 0 : index
    %183 = vector.load %arg5[%c1_126, %c2_127, %c0_128, %c0_129] : memref<4x9x64x64xbf16, #tpu.memory_space<vmem>>, vector<1x1x64x64xbf16>
    %184 = vector.shape_cast %183 : vector<1x1x64x64xbf16> to vector<64x64xbf16>
    %185 = arith.truncf %182 : vector<64x256xf32> to vector<64x256xbf16>
    %cst_130 = arith.constant dense<0.000000e+00> : vector<64x256xf32>
    %186 = tpu.matmul %184, %185, %cst_130 {dimension_numbers = #tpu.dot_dimension_numbers<[1], [0], [0], [1], [0, 0, 1, 1], [], []>} : vector<64x64xbf16>, vector<64x256xbf16>, vector<64x256xf32> -> vector<64x256xf32>
    %187 = arith.addf %179, %186 : vector<64x256xf32>
    %c1_i32_131 = arith.constant 1 : i32
    %188 = tpu.dynamic_rotate %164 by %c1_i32_131 dim 1 : vector<64x256xf32>, i32 -> vector<64x256xf32>
    %189 = vector.broadcast %7 : vector<1x256xf32> to vector<64x256xf32>
    %190 = arith.mulf %188, %189 : vector<64x256xf32>
    %c1_132 = arith.constant 1 : index
    %c3_133 = arith.constant 3 : index
    %c0_134 = arith.constant 0 : index
    %c0_135 = arith.constant 0 : index
    %191 = vector.load %arg5[%c1_132, %c3_133, %c0_134, %c0_135] : memref<4x9x64x64xbf16, #tpu.memory_space<vmem>>, vector<1x1x64x64xbf16>
    %192 = vector.shape_cast %191 : vector<1x1x64x64xbf16> to vector<64x64xbf16>
    %193 = arith.truncf %190 : vector<64x256xf32> to vector<64x256xbf16>
    %cst_136 = arith.constant dense<0.000000e+00> : vector<64x256xf32>
    %194 = tpu.matmul %192, %193, %cst_136 {dimension_numbers = #tpu.dot_dimension_numbers<[1], [0], [0], [1], [0, 0, 1, 1], [], []>} : vector<64x64xbf16>, vector<64x256xbf16>, vector<64x256xf32> -> vector<64x256xf32>
    %195 = arith.addf %187, %194 : vector<64x256xf32>
    %c1_137 = arith.constant 1 : index
    %c4_138 = arith.constant 4 : index
    %c0_139 = arith.constant 0 : index
    %c0_140 = arith.constant 0 : index
    %196 = vector.load %arg5[%c1_137, %c4_138, %c0_139, %c0_140] : memref<4x9x64x64xbf16, #tpu.memory_space<vmem>>, vector<1x1x64x64xbf16>
    %197 = vector.shape_cast %196 : vector<1x1x64x64xbf16> to vector<64x64xbf16>
    %198 = arith.truncf %164 : vector<64x256xf32> to vector<64x256xbf16>
    %cst_141 = arith.constant dense<0.000000e+00> : vector<64x256xf32>
    %199 = tpu.matmul %197, %198, %cst_141 {dimension_numbers = #tpu.dot_dimension_numbers<[1], [0], [0], [1], [0, 0, 1, 1], [], []>} : vector<64x64xbf16>, vector<64x256xbf16>, vector<64x256xf32> -> vector<64x256xf32>
    %200 = arith.addf %195, %199 : vector<64x256xf32>
    %c255_i32_142 = arith.constant 255 : i32
    %201 = tpu.dynamic_rotate %164 by %c255_i32_142 dim 1 : vector<64x256xf32>, i32 -> vector<64x256xf32>
    %202 = vector.broadcast %9 : vector<1x256xf32> to vector<64x256xf32>
    %203 = arith.mulf %201, %202 : vector<64x256xf32>
    %c1_143 = arith.constant 1 : index
    %c5_144 = arith.constant 5 : index
    %c0_145 = arith.constant 0 : index
    %c0_146 = arith.constant 0 : index
    %204 = vector.load %arg5[%c1_143, %c5_144, %c0_145, %c0_146] : memref<4x9x64x64xbf16, #tpu.memory_space<vmem>>, vector<1x1x64x64xbf16>
    %205 = vector.shape_cast %204 : vector<1x1x64x64xbf16> to vector<64x64xbf16>
    %206 = arith.truncf %203 : vector<64x256xf32> to vector<64x256xbf16>
    %cst_147 = arith.constant dense<0.000000e+00> : vector<64x256xf32>
    %207 = tpu.matmul %205, %206, %cst_147 {dimension_numbers = #tpu.dot_dimension_numbers<[1], [0], [0], [1], [0, 0, 1, 1], [], []>} : vector<64x64xbf16>, vector<64x256xbf16>, vector<64x256xf32> -> vector<64x256xf32>
    %208 = arith.addf %200, %207 : vector<64x256xf32>
    %c241_i32_148 = arith.constant 241 : i32
    %209 = tpu.dynamic_rotate %164 by %c241_i32_148 dim 1 : vector<64x256xf32>, i32 -> vector<64x256xf32>
    %210 = vector.broadcast %11 : vector<1x256xf32> to vector<64x256xf32>
    %211 = arith.mulf %209, %210 : vector<64x256xf32>
    %c1_149 = arith.constant 1 : index
    %c6_150 = arith.constant 6 : index
    %c0_151 = arith.constant 0 : index
    %c0_152 = arith.constant 0 : index
    %212 = vector.load %arg5[%c1_149, %c6_150, %c0_151, %c0_152] : memref<4x9x64x64xbf16, #tpu.memory_space<vmem>>, vector<1x1x64x64xbf16>
    %213 = vector.shape_cast %212 : vector<1x1x64x64xbf16> to vector<64x64xbf16>
    %214 = arith.truncf %211 : vector<64x256xf32> to vector<64x256xbf16>
    %cst_153 = arith.constant dense<0.000000e+00> : vector<64x256xf32>
    %215 = tpu.matmul %213, %214, %cst_153 {dimension_numbers = #tpu.dot_dimension_numbers<[1], [0], [0], [1], [0, 0, 1, 1], [], []>} : vector<64x64xbf16>, vector<64x256xbf16>, vector<64x256xf32> -> vector<64x256xf32>
    %216 = arith.addf %208, %215 : vector<64x256xf32>
    %c240_i32_154 = arith.constant 240 : i32
    %217 = tpu.dynamic_rotate %164 by %c240_i32_154 dim 1 : vector<64x256xf32>, i32 -> vector<64x256xf32>
    %218 = vector.broadcast %13 : vector<1x256xf32> to vector<64x256xf32>
    %219 = arith.mulf %217, %218 : vector<64x256xf32>
    %c1_155 = arith.constant 1 : index
    %c7_156 = arith.constant 7 : index
    %c0_157 = arith.constant 0 : index
    %c0_158 = arith.constant 0 : index
    %220 = vector.load %arg5[%c1_155, %c7_156, %c0_157, %c0_158] : memref<4x9x64x64xbf16, #tpu.memory_space<vmem>>, vector<1x1x64x64xbf16>
    %221 = vector.shape_cast %220 : vector<1x1x64x64xbf16> to vector<64x64xbf16>
    %222 = arith.truncf %219 : vector<64x256xf32> to vector<64x256xbf16>
    %cst_159 = arith.constant dense<0.000000e+00> : vector<64x256xf32>
    %223 = tpu.matmul %221, %222, %cst_159 {dimension_numbers = #tpu.dot_dimension_numbers<[1], [0], [0], [1], [0, 0, 1, 1], [], []>} : vector<64x64xbf16>, vector<64x256xbf16>, vector<64x256xf32> -> vector<64x256xf32>
    %224 = arith.addf %216, %223 : vector<64x256xf32>
    %c239_i32_160 = arith.constant 239 : i32
    %225 = tpu.dynamic_rotate %164 by %c239_i32_160 dim 1 : vector<64x256xf32>, i32 -> vector<64x256xf32>
    %226 = vector.broadcast %15 : vector<1x256xf32> to vector<64x256xf32>
    %227 = arith.mulf %225, %226 : vector<64x256xf32>
    %c1_161 = arith.constant 1 : index
    %c8_162 = arith.constant 8 : index
    %c0_163 = arith.constant 0 : index
    %c0_164 = arith.constant 0 : index
    %228 = vector.load %arg5[%c1_161, %c8_162, %c0_163, %c0_164] : memref<4x9x64x64xbf16, #tpu.memory_space<vmem>>, vector<1x1x64x64xbf16>
    %229 = vector.shape_cast %228 : vector<1x1x64x64xbf16> to vector<64x64xbf16>
    %230 = arith.truncf %227 : vector<64x256xf32> to vector<64x256xbf16>
    %cst_165 = arith.constant dense<0.000000e+00> : vector<64x256xf32>
    %231 = tpu.matmul %229, %230, %cst_165 {dimension_numbers = #tpu.dot_dimension_numbers<[1], [0], [0], [1], [0, 0, 1, 1], [], []>} : vector<64x64xbf16>, vector<64x256xbf16>, vector<64x256xf32> -> vector<64x256xf32>
    %232 = arith.addf %224, %231 : vector<64x256xf32>
    %c1_166 = arith.constant 1 : index
    %c0_167 = arith.constant 0 : index
    %c0_168 = arith.constant 0 : index
    %233 = vector.load %arg6[%c1_166, %c0_167, %c0_168] : memref<4x64x1xf32, #tpu.memory_space<vmem>>, vector<1x64x1xf32>
    %234 = vector.shape_cast %233 : vector<1x64x1xf32> to vector<64x1xf32>
    %235 = vector.broadcast %234 : vector<64x1xf32> to vector<64x256xf32>
    %236 = arith.addf %232, %235 : vector<64x256xf32>
    %cst_169 = arith.constant 0.000000e+00 : f32
    %237 = vector.broadcast %cst_169 : f32 to vector<64x256xf32>
    %238 = arith.maximumf %236, %237 : vector<64x256xf32>
    %c17_i32_170 = arith.constant 17 : i32
    %239 = tpu.dynamic_rotate %238 by %c17_i32_170 dim 1 : vector<64x256xf32>, i32 -> vector<64x256xf32>
    %240 = vector.broadcast %1 : vector<1x256xf32> to vector<64x256xf32>
    %241 = arith.mulf %239, %240 : vector<64x256xf32>
    %c2_171 = arith.constant 2 : index
    %c0_172 = arith.constant 0 : index
    %c0_173 = arith.constant 0 : index
    %c0_174 = arith.constant 0 : index
    %242 = vector.load %arg5[%c2_171, %c0_172, %c0_173, %c0_174] : memref<4x9x64x64xbf16, #tpu.memory_space<vmem>>, vector<1x1x64x64xbf16>
    %243 = vector.shape_cast %242 : vector<1x1x64x64xbf16> to vector<64x64xbf16>
    %244 = arith.truncf %241 : vector<64x256xf32> to vector<64x256xbf16>
    %cst_175 = arith.constant dense<0.000000e+00> : vector<64x256xf32>
    %245 = tpu.matmul %243, %244, %cst_175 {dimension_numbers = #tpu.dot_dimension_numbers<[1], [0], [0], [1], [0, 0, 1, 1], [], []>} : vector<64x64xbf16>, vector<64x256xbf16>, vector<64x256xf32> -> vector<64x256xf32>
    %c16_i32_176 = arith.constant 16 : i32
    %246 = tpu.dynamic_rotate %238 by %c16_i32_176 dim 1 : vector<64x256xf32>, i32 -> vector<64x256xf32>
    %247 = vector.broadcast %3 : vector<1x256xf32> to vector<64x256xf32>
    %248 = arith.mulf %246, %247 : vector<64x256xf32>
    %c2_177 = arith.constant 2 : index
    %c1_178 = arith.constant 1 : index
    %c0_179 = arith.constant 0 : index
    %c0_180 = arith.constant 0 : index
    %249 = vector.load %arg5[%c2_177, %c1_178, %c0_179, %c0_180] : memref<4x9x64x64xbf16, #tpu.memory_space<vmem>>, vector<1x1x64x64xbf16>
    %250 = vector.shape_cast %249 : vector<1x1x64x64xbf16> to vector<64x64xbf16>
    %251 = arith.truncf %248 : vector<64x256xf32> to vector<64x256xbf16>
    %cst_181 = arith.constant dense<0.000000e+00> : vector<64x256xf32>
    %252 = tpu.matmul %250, %251, %cst_181 {dimension_numbers = #tpu.dot_dimension_numbers<[1], [0], [0], [1], [0, 0, 1, 1], [], []>} : vector<64x64xbf16>, vector<64x256xbf16>, vector<64x256xf32> -> vector<64x256xf32>
    %253 = arith.addf %245, %252 : vector<64x256xf32>
    %c15_i32_182 = arith.constant 15 : i32
    %254 = tpu.dynamic_rotate %238 by %c15_i32_182 dim 1 : vector<64x256xf32>, i32 -> vector<64x256xf32>
    %255 = vector.broadcast %5 : vector<1x256xf32> to vector<64x256xf32>
    %256 = arith.mulf %254, %255 : vector<64x256xf32>
    %c2_183 = arith.constant 2 : index
    %c2_184 = arith.constant 2 : index
    %c0_185 = arith.constant 0 : index
    %c0_186 = arith.constant 0 : index
    %257 = vector.load %arg5[%c2_183, %c2_184, %c0_185, %c0_186] : memref<4x9x64x64xbf16, #tpu.memory_space<vmem>>, vector<1x1x64x64xbf16>
    %258 = vector.shape_cast %257 : vector<1x1x64x64xbf16> to vector<64x64xbf16>
    %259 = arith.truncf %256 : vector<64x256xf32> to vector<64x256xbf16>
    %cst_187 = arith.constant dense<0.000000e+00> : vector<64x256xf32>
    %260 = tpu.matmul %258, %259, %cst_187 {dimension_numbers = #tpu.dot_dimension_numbers<[1], [0], [0], [1], [0, 0, 1, 1], [], []>} : vector<64x64xbf16>, vector<64x256xbf16>, vector<64x256xf32> -> vector<64x256xf32>
    %261 = arith.addf %253, %260 : vector<64x256xf32>
    %c1_i32_188 = arith.constant 1 : i32
    %262 = tpu.dynamic_rotate %238 by %c1_i32_188 dim 1 : vector<64x256xf32>, i32 -> vector<64x256xf32>
    %263 = vector.broadcast %7 : vector<1x256xf32> to vector<64x256xf32>
    %264 = arith.mulf %262, %263 : vector<64x256xf32>
    %c2_189 = arith.constant 2 : index
    %c3_190 = arith.constant 3 : index
    %c0_191 = arith.constant 0 : index
    %c0_192 = arith.constant 0 : index
    %265 = vector.load %arg5[%c2_189, %c3_190, %c0_191, %c0_192] : memref<4x9x64x64xbf16, #tpu.memory_space<vmem>>, vector<1x1x64x64xbf16>
    %266 = vector.shape_cast %265 : vector<1x1x64x64xbf16> to vector<64x64xbf16>
    %267 = arith.truncf %264 : vector<64x256xf32> to vector<64x256xbf16>
    %cst_193 = arith.constant dense<0.000000e+00> : vector<64x256xf32>
    %268 = tpu.matmul %266, %267, %cst_193 {dimension_numbers = #tpu.dot_dimension_numbers<[1], [0], [0], [1], [0, 0, 1, 1], [], []>} : vector<64x64xbf16>, vector<64x256xbf16>, vector<64x256xf32> -> vector<64x256xf32>
    %269 = arith.addf %261, %268 : vector<64x256xf32>
    %c2_194 = arith.constant 2 : index
    %c4_195 = arith.constant 4 : index
    %c0_196 = arith.constant 0 : index
    %c0_197 = arith.constant 0 : index
    %270 = vector.load %arg5[%c2_194, %c4_195, %c0_196, %c0_197] : memref<4x9x64x64xbf16, #tpu.memory_space<vmem>>, vector<1x1x64x64xbf16>
    %271 = vector.shape_cast %270 : vector<1x1x64x64xbf16> to vector<64x64xbf16>
    %272 = arith.truncf %238 : vector<64x256xf32> to vector<64x256xbf16>
    %cst_198 = arith.constant dense<0.000000e+00> : vector<64x256xf32>
    %273 = tpu.matmul %271, %272, %cst_198 {dimension_numbers = #tpu.dot_dimension_numbers<[1], [0], [0], [1], [0, 0, 1, 1], [], []>} : vector<64x64xbf16>, vector<64x256xbf16>, vector<64x256xf32> -> vector<64x256xf32>
    %274 = arith.addf %269, %273 : vector<64x256xf32>
    %c255_i32_199 = arith.constant 255 : i32
    %275 = tpu.dynamic_rotate %238 by %c255_i32_199 dim 1 : vector<64x256xf32>, i32 -> vector<64x256xf32>
    %276 = vector.broadcast %9 : vector<1x256xf32> to vector<64x256xf32>
    %277 = arith.mulf %275, %276 : vector<64x256xf32>
    %c2_200 = arith.constant 2 : index
    %c5_201 = arith.constant 5 : index
    %c0_202 = arith.constant 0 : index
    %c0_203 = arith.constant 0 : index
    %278 = vector.load %arg5[%c2_200, %c5_201, %c0_202, %c0_203] : memref<4x9x64x64xbf16, #tpu.memory_space<vmem>>, vector<1x1x64x64xbf16>
    %279 = vector.shape_cast %278 : vector<1x1x64x64xbf16> to vector<64x64xbf16>
    %280 = arith.truncf %277 : vector<64x256xf32> to vector<64x256xbf16>
    %cst_204 = arith.constant dense<0.000000e+00> : vector<64x256xf32>
    %281 = tpu.matmul %279, %280, %cst_204 {dimension_numbers = #tpu.dot_dimension_numbers<[1], [0], [0], [1], [0, 0, 1, 1], [], []>} : vector<64x64xbf16>, vector<64x256xbf16>, vector<64x256xf32> -> vector<64x256xf32>
    %282 = arith.addf %274, %281 : vector<64x256xf32>
    %c241_i32_205 = arith.constant 241 : i32
    %283 = tpu.dynamic_rotate %238 by %c241_i32_205 dim 1 : vector<64x256xf32>, i32 -> vector<64x256xf32>
    %284 = vector.broadcast %11 : vector<1x256xf32> to vector<64x256xf32>
    %285 = arith.mulf %283, %284 : vector<64x256xf32>
    %c2_206 = arith.constant 2 : index
    %c6_207 = arith.constant 6 : index
    %c0_208 = arith.constant 0 : index
    %c0_209 = arith.constant 0 : index
    %286 = vector.load %arg5[%c2_206, %c6_207, %c0_208, %c0_209] : memref<4x9x64x64xbf16, #tpu.memory_space<vmem>>, vector<1x1x64x64xbf16>
    %287 = vector.shape_cast %286 : vector<1x1x64x64xbf16> to vector<64x64xbf16>
    %288 = arith.truncf %285 : vector<64x256xf32> to vector<64x256xbf16>
    %cst_210 = arith.constant dense<0.000000e+00> : vector<64x256xf32>
    %289 = tpu.matmul %287, %288, %cst_210 {dimension_numbers = #tpu.dot_dimension_numbers<[1], [0], [0], [1], [0, 0, 1, 1], [], []>} : vector<64x64xbf16>, vector<64x256xbf16>, vector<64x256xf32> -> vector<64x256xf32>
    %290 = arith.addf %282, %289 : vector<64x256xf32>
    %c240_i32_211 = arith.constant 240 : i32
    %291 = tpu.dynamic_rotate %238 by %c240_i32_211 dim 1 : vector<64x256xf32>, i32 -> vector<64x256xf32>
    %292 = vector.broadcast %13 : vector<1x256xf32> to vector<64x256xf32>
    %293 = arith.mulf %291, %292 : vector<64x256xf32>
    %c2_212 = arith.constant 2 : index
    %c7_213 = arith.constant 7 : index
    %c0_214 = arith.constant 0 : index
    %c0_215 = arith.constant 0 : index
    %294 = vector.load %arg5[%c2_212, %c7_213, %c0_214, %c0_215] : memref<4x9x64x64xbf16, #tpu.memory_space<vmem>>, vector<1x1x64x64xbf16>
    %295 = vector.shape_cast %294 : vector<1x1x64x64xbf16> to vector<64x64xbf16>
    %296 = arith.truncf %293 : vector<64x256xf32> to vector<64x256xbf16>
    %cst_216 = arith.constant dense<0.000000e+00> : vector<64x256xf32>
    %297 = tpu.matmul %295, %296, %cst_216 {dimension_numbers = #tpu.dot_dimension_numbers<[1], [0], [0], [1], [0, 0, 1, 1], [], []>} : vector<64x64xbf16>, vector<64x256xbf16>, vector<64x256xf32> -> vector<64x256xf32>
    %298 = arith.addf %290, %297 : vector<64x256xf32>
    %c239_i32_217 = arith.constant 239 : i32
    %299 = tpu.dynamic_rotate %238 by %c239_i32_217 dim 1 : vector<64x256xf32>, i32 -> vector<64x256xf32>
    %300 = vector.broadcast %15 : vector<1x256xf32> to vector<64x256xf32>
    %301 = arith.mulf %299, %300 : vector<64x256xf32>
    %c2_218 = arith.constant 2 : index
    %c8_219 = arith.constant 8 : index
    %c0_220 = arith.constant 0 : index
    %c0_221 = arith.constant 0 : index
    %302 = vector.load %arg5[%c2_218, %c8_219, %c0_220, %c0_221] : memref<4x9x64x64xbf16, #tpu.memory_space<vmem>>, vector<1x1x64x64xbf16>
    %303 = vector.shape_cast %302 : vector<1x1x64x64xbf16> to vector<64x64xbf16>
    %304 = arith.truncf %301 : vector<64x256xf32> to vector<64x256xbf16>
    %cst_222 = arith.constant dense<0.000000e+00> : vector<64x256xf32>
    %305 = tpu.matmul %303, %304, %cst_222 {dimension_numbers = #tpu.dot_dimension_numbers<[1], [0], [0], [1], [0, 0, 1, 1], [], []>} : vector<64x64xbf16>, vector<64x256xbf16>, vector<64x256xf32> -> vector<64x256xf32>
    %306 = arith.addf %298, %305 : vector<64x256xf32>
    %c2_223 = arith.constant 2 : index
    %c0_224 = arith.constant 0 : index
    %c0_225 = arith.constant 0 : index
    %307 = vector.load %arg6[%c2_223, %c0_224, %c0_225] : memref<4x64x1xf32, #tpu.memory_space<vmem>>, vector<1x64x1xf32>
    %308 = vector.shape_cast %307 : vector<1x64x1xf32> to vector<64x1xf32>
    %309 = vector.broadcast %308 : vector<64x1xf32> to vector<64x256xf32>
    %310 = arith.addf %306, %309 : vector<64x256xf32>
    %cst_226 = arith.constant 0.000000e+00 : f32
    %311 = vector.broadcast %cst_226 : f32 to vector<64x256xf32>
    %312 = arith.maximumf %310, %311 : vector<64x256xf32>
    %c17_i32_227 = arith.constant 17 : i32
    %313 = tpu.dynamic_rotate %312 by %c17_i32_227 dim 1 : vector<64x256xf32>, i32 -> vector<64x256xf32>
    %314 = vector.broadcast %1 : vector<1x256xf32> to vector<64x256xf32>
    %315 = arith.mulf %313, %314 : vector<64x256xf32>
    %c3_228 = arith.constant 3 : index
    %c0_229 = arith.constant 0 : index
    %c0_230 = arith.constant 0 : index
    %c0_231 = arith.constant 0 : index
    %316 = vector.load %arg5[%c3_228, %c0_229, %c0_230, %c0_231] : memref<4x9x64x64xbf16, #tpu.memory_space<vmem>>, vector<1x1x64x64xbf16>
    %317 = vector.shape_cast %316 : vector<1x1x64x64xbf16> to vector<64x64xbf16>
    %318 = arith.truncf %315 : vector<64x256xf32> to vector<64x256xbf16>
    %cst_232 = arith.constant dense<0.000000e+00> : vector<64x256xf32>
    %319 = tpu.matmul %317, %318, %cst_232 {dimension_numbers = #tpu.dot_dimension_numbers<[1], [0], [0], [1], [0, 0, 1, 1], [], []>} : vector<64x64xbf16>, vector<64x256xbf16>, vector<64x256xf32> -> vector<64x256xf32>
    %c16_i32_233 = arith.constant 16 : i32
    %320 = tpu.dynamic_rotate %312 by %c16_i32_233 dim 1 : vector<64x256xf32>, i32 -> vector<64x256xf32>
    %321 = vector.broadcast %3 : vector<1x256xf32> to vector<64x256xf32>
    %322 = arith.mulf %320, %321 : vector<64x256xf32>
    %c3_234 = arith.constant 3 : index
    %c1_235 = arith.constant 1 : index
    %c0_236 = arith.constant 0 : index
    %c0_237 = arith.constant 0 : index
    %323 = vector.load %arg5[%c3_234, %c1_235, %c0_236, %c0_237] : memref<4x9x64x64xbf16, #tpu.memory_space<vmem>>, vector<1x1x64x64xbf16>
    %324 = vector.shape_cast %323 : vector<1x1x64x64xbf16> to vector<64x64xbf16>
    %325 = arith.truncf %322 : vector<64x256xf32> to vector<64x256xbf16>
    %cst_238 = arith.constant dense<0.000000e+00> : vector<64x256xf32>
    %326 = tpu.matmul %324, %325, %cst_238 {dimension_numbers = #tpu.dot_dimension_numbers<[1], [0], [0], [1], [0, 0, 1, 1], [], []>} : vector<64x64xbf16>, vector<64x256xbf16>, vector<64x256xf32> -> vector<64x256xf32>
    %327 = arith.addf %319, %326 : vector<64x256xf32>
    %c15_i32_239 = arith.constant 15 : i32
    %328 = tpu.dynamic_rotate %312 by %c15_i32_239 dim 1 : vector<64x256xf32>, i32 -> vector<64x256xf32>
    %329 = vector.broadcast %5 : vector<1x256xf32> to vector<64x256xf32>
    %330 = arith.mulf %328, %329 : vector<64x256xf32>
    %c3_240 = arith.constant 3 : index
    %c2_241 = arith.constant 2 : index
    %c0_242 = arith.constant 0 : index
    %c0_243 = arith.constant 0 : index
    %331 = vector.load %arg5[%c3_240, %c2_241, %c0_242, %c0_243] : memref<4x9x64x64xbf16, #tpu.memory_space<vmem>>, vector<1x1x64x64xbf16>
    %332 = vector.shape_cast %331 : vector<1x1x64x64xbf16> to vector<64x64xbf16>
    %333 = arith.truncf %330 : vector<64x256xf32> to vector<64x256xbf16>
    %cst_244 = arith.constant dense<0.000000e+00> : vector<64x256xf32>
    %334 = tpu.matmul %332, %333, %cst_244 {dimension_numbers = #tpu.dot_dimension_numbers<[1], [0], [0], [1], [0, 0, 1, 1], [], []>} : vector<64x64xbf16>, vector<64x256xbf16>, vector<64x256xf32> -> vector<64x256xf32>
    %335 = arith.addf %327, %334 : vector<64x256xf32>
    %c1_i32_245 = arith.constant 1 : i32
    %336 = tpu.dynamic_rotate %312 by %c1_i32_245 dim 1 : vector<64x256xf32>, i32 -> vector<64x256xf32>
    %337 = vector.broadcast %7 : vector<1x256xf32> to vector<64x256xf32>
    %338 = arith.mulf %336, %337 : vector<64x256xf32>
    %c3_246 = arith.constant 3 : index
    %c3_247 = arith.constant 3 : index
    %c0_248 = arith.constant 0 : index
    %c0_249 = arith.constant 0 : index
    %339 = vector.load %arg5[%c3_246, %c3_247, %c0_248, %c0_249] : memref<4x9x64x64xbf16, #tpu.memory_space<vmem>>, vector<1x1x64x64xbf16>
    %340 = vector.shape_cast %339 : vector<1x1x64x64xbf16> to vector<64x64xbf16>
    %341 = arith.truncf %338 : vector<64x256xf32> to vector<64x256xbf16>
    %cst_250 = arith.constant dense<0.000000e+00> : vector<64x256xf32>
    %342 = tpu.matmul %340, %341, %cst_250 {dimension_numbers = #tpu.dot_dimension_numbers<[1], [0], [0], [1], [0, 0, 1, 1], [], []>} : vector<64x64xbf16>, vector<64x256xbf16>, vector<64x256xf32> -> vector<64x256xf32>
    %343 = arith.addf %335, %342 : vector<64x256xf32>
    %c3_251 = arith.constant 3 : index
    %c4_252 = arith.constant 4 : index
    %c0_253 = arith.constant 0 : index
    %c0_254 = arith.constant 0 : index
    %344 = vector.load %arg5[%c3_251, %c4_252, %c0_253, %c0_254] : memref<4x9x64x64xbf16, #tpu.memory_space<vmem>>, vector<1x1x64x64xbf16>
    %345 = vector.shape_cast %344 : vector<1x1x64x64xbf16> to vector<64x64xbf16>
    %346 = arith.truncf %312 : vector<64x256xf32> to vector<64x256xbf16>
    %cst_255 = arith.constant dense<0.000000e+00> : vector<64x256xf32>
    %347 = tpu.matmul %345, %346, %cst_255 {dimension_numbers = #tpu.dot_dimension_numbers<[1], [0], [0], [1], [0, 0, 1, 1], [], []>} : vector<64x64xbf16>, vector<64x256xbf16>, vector<64x256xf32> -> vector<64x256xf32>
    %348 = arith.addf %343, %347 : vector<64x256xf32>
    %c255_i32_256 = arith.constant 255 : i32
    %349 = tpu.dynamic_rotate %312 by %c255_i32_256 dim 1 : vector<64x256xf32>, i32 -> vector<64x256xf32>
    %350 = vector.broadcast %9 : vector<1x256xf32> to vector<64x256xf32>
    %351 = arith.mulf %349, %350 : vector<64x256xf32>
    %c3_257 = arith.constant 3 : index
    %c5_258 = arith.constant 5 : index
    %c0_259 = arith.constant 0 : index
    %c0_260 = arith.constant 0 : index
    %352 = vector.load %arg5[%c3_257, %c5_258, %c0_259, %c0_260] : memref<4x9x64x64xbf16, #tpu.memory_space<vmem>>, vector<1x1x64x64xbf16>
    %353 = vector.shape_cast %352 : vector<1x1x64x64xbf16> to vector<64x64xbf16>
    %354 = arith.truncf %351 : vector<64x256xf32> to vector<64x256xbf16>
    %cst_261 = arith.constant dense<0.000000e+00> : vector<64x256xf32>
    %355 = tpu.matmul %353, %354, %cst_261 {dimension_numbers = #tpu.dot_dimension_numbers<[1], [0], [0], [1], [0, 0, 1, 1], [], []>} : vector<64x64xbf16>, vector<64x256xbf16>, vector<64x256xf32> -> vector<64x256xf32>
    %356 = arith.addf %348, %355 : vector<64x256xf32>
    %c241_i32_262 = arith.constant 241 : i32
    %357 = tpu.dynamic_rotate %312 by %c241_i32_262 dim 1 : vector<64x256xf32>, i32 -> vector<64x256xf32>
    %358 = vector.broadcast %11 : vector<1x256xf32> to vector<64x256xf32>
    %359 = arith.mulf %357, %358 : vector<64x256xf32>
    %c3_263 = arith.constant 3 : index
    %c6_264 = arith.constant 6 : index
    %c0_265 = arith.constant 0 : index
    %c0_266 = arith.constant 0 : index
    %360 = vector.load %arg5[%c3_263, %c6_264, %c0_265, %c0_266] : memref<4x9x64x64xbf16, #tpu.memory_space<vmem>>, vector<1x1x64x64xbf16>
    %361 = vector.shape_cast %360 : vector<1x1x64x64xbf16> to vector<64x64xbf16>
    %362 = arith.truncf %359 : vector<64x256xf32> to vector<64x256xbf16>
    %cst_267 = arith.constant dense<0.000000e+00> : vector<64x256xf32>
    %363 = tpu.matmul %361, %362, %cst_267 {dimension_numbers = #tpu.dot_dimension_numbers<[1], [0], [0], [1], [0, 0, 1, 1], [], []>} : vector<64x64xbf16>, vector<64x256xbf16>, vector<64x256xf32> -> vector<64x256xf32>
    %364 = arith.addf %356, %363 : vector<64x256xf32>
    %c240_i32_268 = arith.constant 240 : i32
    %365 = tpu.dynamic_rotate %312 by %c240_i32_268 dim 1 : vector<64x256xf32>, i32 -> vector<64x256xf32>
    %366 = vector.broadcast %13 : vector<1x256xf32> to vector<64x256xf32>
    %367 = arith.mulf %365, %366 : vector<64x256xf32>
    %c3_269 = arith.constant 3 : index
    %c7_270 = arith.constant 7 : index
    %c0_271 = arith.constant 0 : index
    %c0_272 = arith.constant 0 : index
    %368 = vector.load %arg5[%c3_269, %c7_270, %c0_271, %c0_272] : memref<4x9x64x64xbf16, #tpu.memory_space<vmem>>, vector<1x1x64x64xbf16>
    %369 = vector.shape_cast %368 : vector<1x1x64x64xbf16> to vector<64x64xbf16>
    %370 = arith.truncf %367 : vector<64x256xf32> to vector<64x256xbf16>
    %cst_273 = arith.constant dense<0.000000e+00> : vector<64x256xf32>
    %371 = tpu.matmul %369, %370, %cst_273 {dimension_numbers = #tpu.dot_dimension_numbers<[1], [0], [0], [1], [0, 0, 1, 1], [], []>} : vector<64x64xbf16>, vector<64x256xbf16>, vector<64x256xf32> -> vector<64x256xf32>
    %372 = arith.addf %364, %371 : vector<64x256xf32>
    %c239_i32_274 = arith.constant 239 : i32
    %373 = tpu.dynamic_rotate %312 by %c239_i32_274 dim 1 : vector<64x256xf32>, i32 -> vector<64x256xf32>
    %374 = vector.broadcast %15 : vector<1x256xf32> to vector<64x256xf32>
    %375 = arith.mulf %373, %374 : vector<64x256xf32>
    %c3_275 = arith.constant 3 : index
    %c8_276 = arith.constant 8 : index
    %c0_277 = arith.constant 0 : index
    %c0_278 = arith.constant 0 : index
    %376 = vector.load %arg5[%c3_275, %c8_276, %c0_277, %c0_278] : memref<4x9x64x64xbf16, #tpu.memory_space<vmem>>, vector<1x1x64x64xbf16>
    %377 = vector.shape_cast %376 : vector<1x1x64x64xbf16> to vector<64x64xbf16>
    %378 = arith.truncf %375 : vector<64x256xf32> to vector<64x256xbf16>
    %cst_279 = arith.constant dense<0.000000e+00> : vector<64x256xf32>
    %379 = tpu.matmul %377, %378, %cst_279 {dimension_numbers = #tpu.dot_dimension_numbers<[1], [0], [0], [1], [0, 0, 1, 1], [], []>} : vector<64x64xbf16>, vector<64x256xbf16>, vector<64x256xf32> -> vector<64x256xf32>
    %380 = arith.addf %372, %379 : vector<64x256xf32>
    %c3_280 = arith.constant 3 : index
    %c0_281 = arith.constant 0 : index
    %c0_282 = arith.constant 0 : index
    %381 = vector.load %arg6[%c3_280, %c0_281, %c0_282] : memref<4x64x1xf32, #tpu.memory_space<vmem>>, vector<1x64x1xf32>
    %382 = vector.shape_cast %381 : vector<1x64x1xf32> to vector<64x1xf32>
    %383 = vector.broadcast %382 : vector<64x1xf32> to vector<64x256xf32>
    %384 = arith.addf %380, %383 : vector<64x256xf32>
    %cst_283 = arith.constant 0.000000e+00 : f32
    %385 = vector.broadcast %cst_283 : f32 to vector<64x256xf32>
    %386 = arith.maximumf %384, %385 : vector<64x256xf32>
    %c0_284 = arith.constant 0 : index
    %c0_285 = arith.constant 0 : index
    %387 = vector.load %arg7[%c0_284, %c0_285] : memref<3x64xbf16, #tpu.memory_space<vmem>>, vector<3x64xbf16>
    %388 = arith.truncf %386 : vector<64x256xf32> to vector<64x256xbf16>
    %cst_286 = arith.constant dense<0.000000e+00> : vector<3x256xf32>
    %389 = tpu.matmul %387, %388, %cst_286 {dimension_numbers = #tpu.dot_dimension_numbers<[1], [0], [0], [1], [0, 0, 1, 1], [], []>} : vector<3x64xbf16>, vector<64x256xbf16>, vector<3x256xf32> -> vector<3x256xf32>
    %c0_287 = arith.constant 0 : index
    %c0_288 = arith.constant 0 : index
    %390 = vector.load %arg8[%c0_287, %c0_288] : memref<3x1xf32, #tpu.memory_space<vmem>>, vector<3x1xf32>
    %391 = vector.broadcast %390 : vector<3x1xf32> to vector<3x256xf32>
    %392 = arith.addf %389, %391 : vector<3x256xf32>
    %393 = math.tanh %392 : vector<3x256xf32>
    %c0_289 = arith.constant 0 : index
    %c0_290 = arith.constant 0 : index
    %c0_291 = arith.constant 0 : index
    %394 = vector.load %arg9[%c0_289, %c0_290, %c0_291] : memref<1x3x256xf32, #tpu.memory_space<vmem>>, vector<1x3x256xf32>
    %395 = vector.shape_cast %394 : vector<1x3x256xf32> to vector<3x256xf32>
    %396 = vector.shape_cast %393 : vector<3x256xf32> to vector<1x3x256xf32>
    tpu.vector_store %arg9[%c0_289, %c0_290, %c0_291], %396 {strides = array<i32>} : memref<1x3x256xf32, #tpu.memory_space<vmem>>, vector<1x3x256xf32>,
    return
  }
  func.func @transform_0(%arg0: i32) -> (i32, i32, i32) {
    %c0_i32 = arith.constant 0 : i32
    %c0_i32_0 = arith.constant 0 : i32
    %c0_i32_1 = arith.constant 0 : i32
    return %arg0, %c0_i32, %c0_i32_0 : i32, i32, i32
  }
  func.func @transform_1(%arg0: i32) -> (i32, i32, i32) {
    %c0_i32 = arith.constant 0 : i32
    %c0_i32_0 = arith.constant 0 : i32
    %c0_i32_1 = arith.constant 0 : i32
    %c0_i32_2 = arith.constant 0 : i32
    return %c0_i32, %c0_i32_0, %c0_i32_1 : i32, i32, i32
  }
  func.func @transform_2(%arg0: i32) -> (i32, i32, i32) {
    %c0_i32 = arith.constant 0 : i32
    %c0_i32_0 = arith.constant 0 : i32
    %c0_i32_1 = arith.constant 0 : i32
    %c0_i32_2 = arith.constant 0 : i32
    return %c0_i32, %c0_i32_0, %c0_i32_1 : i32, i32, i32
  }
  func.func @transform_3(%arg0: i32) -> (i32, i32) {
    %c0_i32 = arith.constant 0 : i32
    %c0_i32_0 = arith.constant 0 : i32
    %c0_i32_1 = arith.constant 0 : i32
    return %c0_i32, %c0_i32_0 : i32, i32
  }
  func.func @transform_4(%arg0: i32) -> (i32, i32, i32, i32) {
    %c0_i32 = arith.constant 0 : i32
    %c0_i32_0 = arith.constant 0 : i32
    %c0_i32_1 = arith.constant 0 : i32
    %c0_i32_2 = arith.constant 0 : i32
    %c0_i32_3 = arith.constant 0 : i32
    return %c0_i32, %c0_i32_0, %c0_i32_1, %c0_i32_2 : i32, i32, i32, i32
  }
  func.func @transform_5(%arg0: i32) -> (i32, i32, i32) {
    %c0_i32 = arith.constant 0 : i32
    %c0_i32_0 = arith.constant 0 : i32
    %c0_i32_1 = arith.constant 0 : i32
    %c0_i32_2 = arith.constant 0 : i32
    return %c0_i32, %c0_i32_0, %c0_i32_1 : i32, i32, i32
  }
  func.func @transform_6(%arg0: i32) -> (i32, i32) {
    %c0_i32 = arith.constant 0 : i32
    %c0_i32_0 = arith.constant 0 : i32
    %c0_i32_1 = arith.constant 0 : i32
    return %c0_i32, %c0_i32_0 : i32, i32
  }
  func.func @transform_7(%arg0: i32) -> (i32, i32) {
    %c0_i32 = arith.constant 0 : i32
    %c0_i32_0 = arith.constant 0 : i32
    %c0_i32_1 = arith.constant 0 : i32
    return %c0_i32, %c0_i32_0 : i32, i32
  }
  func.func @transform_8(%arg0: i32) -> (i32, i32, i32) {
    %c0_i32 = arith.constant 0 : i32
    %c0_i32_0 = arith.constant 0 : i32
    %c0_i32_1 = arith.constant 0 : i32
    return %arg0, %c0_i32, %c0_i32_0 : i32, i32, i32
  }
}

</mosaic_0001>

<llo_original>
// kernel: trigger_model_forward.1
$region0: #{trigger_model_forward.1}
  #allocation0 [shape = 'u32[]', space=smem, size = 0x4, offset = 0x4, fixed_abs, tag = 'smem constant byte address 0x4 - core index']
  #allocation1 [shape = 'u32[144,128]{1,0:T(1,128)}', space=vmem, size = 0x12000, scoped, tag = 'internal scratch']
  %s0 = inlined_call_operand.vmem [shape: f32[2,8,256], index: 0, kind: input, shape index: {}]
  %s1 = inlined_call_operand.vmem [shape: f32[9,1,256], index: 1, kind: input, shape index: {}]
  %s2 = inlined_call_operand.vmem [shape: bf16[9,64,8], index: 2, kind: input, shape index: {}]
  %s3 = inlined_call_operand.vmem [shape: f32[64,1], index: 3, kind: input, shape index: {}]
  %s4 = inlined_call_operand.vmem [shape: bf16[4,9,64,64], index: 4, kind: input, shape index: {}]
  %s5 = inlined_call_operand.vmem [shape: f32[4,64,1], index: 5, kind: input, shape index: {}]
  %s6 = inlined_call_operand.vmem [shape: bf16[3,64], index: 6, kind: input, shape index: {}]
  %s7 = inlined_call_operand.vmem [shape: f32[3,1], index: 7, kind: input, shape index: {}]
  %s8 = inlined_call_operand.vmem [shape: f32[2,3,256], index: 8, kind: output, shape index: {}]
  %s9 = sld [smem:[#allocation0]]
  $region65: #{trigger_model_forward.1} parent=0
    _
  %s11 = ssub.s32 1, %s9
  %s12 = scalar_select 0, %s11, %s9
  loop: start=0, step=1, limit=4
  $region2: #{trigger_model_forward.1} parent=0 // loop_pre_header
    _
  $region3: #{trigger_model_forward.1} parent=0 // loop_header
    %s14 = sphi 0, %s18
    %p15 = scmp.ge.s32.totalorder %s14, 4
    %s24 = sphi 0, %s26
    %s27 = sphi 0, %s24
    %s28 = sphi 0, %s27
    %s44 = sphi 0, %s28
    %s48 = sphi 0, %s48
    %s50 = sphi 0, %s48
    %s51 = sphi 0, %s50
    %s65 = sphi 0, %s51
    %s69 = sphi 0, %s69
    %s71 = sphi 0, %s69
    %s72 = sphi 0, %s71
    %s86 = sphi 0, %s72
    %s90 = sphi 0, %s90
    %s92 = sphi 0, %s90
    %s93 = sphi 0, %s92
    %s107 = sphi 0, %s93
    %s111 = sphi 0, %s111
    %s113 = sphi 0, %s111
    %s114 = sphi 0, %s113
    %s128 = sphi 0, %s114
    %s132 = sphi 0, %s132
    %s134 = sphi 0, %s132
    %s135 = sphi 0, %s134
    %s149 = sphi 0, %s135
    %s153 = sphi 0, %s153
    %s155 = sphi 0, %s153
    %s156 = sphi 0, %s155
    %s170 = sphi 0, %s156
    %s174 = sphi 0, %s174
    %s176 = sphi 0, %s174
    %s177 = sphi 0, %s176
    %s191 = sphi 0, %s177
    %s197 = sphi 0, %s199
    %s200 = sphi 0, %s197
    %s201 = sphi 0, %s200
    %s217 = sphi 0, %s201
  $region4: #{trigger_model_forward.1} parent=0 // loop_header_branch
    %17 = sbr.rel (%p15) target = $region8
  $region5: #{trigger_model_forward.1} parent=0 // loop_body
    %s19 = ssub.s32 %s14, 1
    %s20 = ssub.s32 %s14, 2
    %s21 = sadd.s32 %s14, 1
    %s22 = ssub.s32 %s14, %s21
    %p23 = scmp.eq.s32.totalorder %s22, 0
    %s25 = sadd.s32 %s24, 1
    %s26 = scalar_select %p23, %s24, %s25
    %p29 = pneg %p23
    %p30 = scmp.eq.s32.totalorder %s14, 1
    %p31 = por %p29, %p30
    %p32 = scmp.ne.s32.totalorder %s24, %s27
    %p33 = scmp.eq.s32.totalorder %s14, 0
    %p34 = por %p32, %p33
    %p35 = scmp.ne.s32.totalorder %s24, %s27
    %p36 = scmp.eq.s32.totalorder %s19, 1
    %p37 = por %p35, %p36
    %p38 = scmp.ne.s32.totalorder %s27, %s28
    %p39 = scmp.eq.s32.totalorder %s19, 0
    %p40 = por %p38, %p39
    %p41 = scmp.ne.s32.totalorder %s27, %s28
    %p42 = scmp.eq.s32.totalorder %s20, 1
    %p43 = por %p41, %p42
    %p45 = scmp.ne.s32.totalorder %s28, %s44
    %p46 = scmp.eq.s32.totalorder %s20, 0
    %p47 = por %p45, %p46
    %s49 = sadd.s32 %s48, 1
    %p52 = scmp.eq.s32.totalorder %s14, 1
    %p53 = scmp.ne.s32.totalorder %s48, %s50
    %p54 = scmp.eq.s32.totalorder %s14, 0
    %p55 = por %p53, %p54
    %p56 = scmp.ne.s32.totalorder %s48, %s50
    %p57 = scmp.eq.s32.totalorder %s19, 1
    %p58 = por %p56, %p57
    %p59 = scmp.ne.s32.totalorder %s50, %s51
    %p60 = scmp.eq.s32.totalorder %s19, 0
    %p61 = por %p59, %p60
    %p62 = scmp.ne.s32.totalorder %s50, %s51
    %p63 = scmp.eq.s32.totalorder %s20, 1
    %p64 = por %p62, %p63
    %p66 = scmp.ne.s32.totalorder %s51, %s65
    %p67 = scmp.eq.s32.totalorder %s20, 0
    %p68 = por %p66, %p67
    %s70 = sadd.s32 %s69, 1
    %p73 = scmp.eq.s32.totalorder %s14, 1
    %p74 = scmp.ne.s32.totalorder %s69, %s71
    %p75 = scmp.eq.s32.totalorder %s14, 0
    %p76 = por %p74, %p75
    %p77 = scmp.ne.s32.totalorder %s69, %s71
    %p78 = scmp.eq.s32.totalorder %s19, 1
    %p79 = por %p77, %p78
    %p80 = scmp.ne.s32.totalorder %s71, %s72
    %p81 = scmp.eq.s32.totalorder %s19, 0
    %p82 = por %p80, %p81
    %p83 = scmp.ne.s32.totalorder %s71, %s72
    %p84 = scmp.eq.s32.totalorder %s20, 1
    %p85 = por %p83, %p84
    %p87 = scmp.ne.s32.totalorder %s72, %s86
    %p88 = scmp.eq.s32.totalorder %s20, 0
    %p89 = por %p87, %p88
    %s91 = sadd.s32 %s90, 1
    %p94 = scmp.eq.s32.totalorder %s14, 1
    %p95 = scmp.ne.s32.totalorder %s90, %s92
    %p96 = scmp.eq.s32.totalorder %s14, 0
    %p97 = por %p95, %p96
    %p98 = scmp.ne.s32.totalorder %s90, %s92
    %p99 = scmp.eq.s32.totalorder %s19, 1
    %p100 = por %p98, %p99
    %p101 = scmp.ne.s32.totalorder %s92, %s93
    %p102 = scmp.eq.s32.totalorder %s19, 0
    %p103 = por %p101, %p102
    %p104 = scmp.ne.s32.totalorder %s92, %s93
    %p105 = scmp.eq.s32.totalorder %s20, 1
    %p106 = por %p104, %p105
    %p108 = scmp.ne.s32.totalorder %s93, %s107
    %p109 = scmp.eq.s32.totalorder %s20, 0
    %p110 = por %p108, %p109
    %s112 = sadd.s32 %s111, 1
    %p115 = scmp.eq.s32.totalorder %s14, 1
    %p116 = scmp.ne.s32.totalorder %s111, %s113
    %p117 = scmp.eq.s32.totalorder %s14, 0
    %p118 = por %p116, %p117
    %p119 = scmp.ne.s32.totalorder %s111, %s113
    %p120 = scmp.eq.s32.totalorder %s19, 1
    %p121 = por %p119, %p120
    %p122 = scmp.ne.s32.totalorder %s113, %s114
    %p123 = scmp.eq.s32.totalorder %s19, 0
    %p124 = por %p122, %p123
    %p125 = scmp.ne.s32.totalorder %s113, %s114
    %p126 = scmp.eq.s32.totalorder %s20, 1
    %p127 = por %p125, %p126
    %p129 = scmp.ne.s32.totalorder %s114, %s128
    %p130 = scmp.eq.s32.totalorder %s20, 0
    %p131 = por %p129, %p130
    %s133 = sadd.s32 %s132, 1
    %p136 = scmp.eq.s32.totalorder %s14, 1
    %p137 = scmp.ne.s32.totalorder %s132, %s134
    %p138 = scmp.eq.s32.totalorder %s14, 0
    %p139 = por %p137, %p138
    %p140 = scmp.ne.s32.totalorder %s132, %s134
    %p141 = scmp.eq.s32.totalorder %s19, 1
    %p142 = por %p140, %p141
    %p143 = scmp.ne.s32.totalorder %s134, %s135
    %p144 = scmp.eq.s32.totalorder %s19, 0
    %p145 = por %p143, %p144
    %p146 = scmp.ne.s32.totalorder %s134, %s135
    %p147 = scmp.eq.s32.totalorder %s20, 1
    %p148 = por %p146, %p147
    %p150 = scmp.ne.s32.totalorder %s135, %s149
    %p151 = scmp.eq.s32.totalorder %s20, 0
    %p152 = por %p150, %p151
    %s154 = sadd.s32 %s153, 1
    %p157 = scmp.eq.s32.totalorder %s14, 1
    %p158 = scmp.ne.s32.totalorder %s153, %s155
    %p159 = scmp.eq.s32.totalorder %s14, 0
    %p160 = por %p158, %p159
    %p161 = scmp.ne.s32.totalorder %s153, %s155
    %p162 = scmp.eq.s32.totalorder %s19, 1
    %p163 = por %p161, %p162
    %p164 = scmp.ne.s32.totalorder %s155, %s156
    %p165 = scmp.eq.s32.totalorder %s19, 0
    %p166 = por %p164, %p165
    %p167 = scmp.ne.s32.totalorder %s155, %s156
    %p168 = scmp.eq.s32.totalorder %s20, 1
    %p169 = por %p167, %p168
    %p171 = scmp.ne.s32.totalorder %s156, %s170
    %p172 = scmp.eq.s32.totalorder %s20, 0
    %p173 = por %p171, %p172
    %s175 = sadd.s32 %s174, 1
    %p178 = scmp.eq.s32.totalorder %s14, 1
    %p179 = scmp.ne.s32.totalorder %s174, %s176
    %p180 = scmp.eq.s32.totalorder %s14, 0
    %p181 = por %p179, %p180
    %p182 = scmp.ne.s32.totalorder %s174, %s176
    %p183 = scmp.eq.s32.totalorder %s19, 1
    %p184 = por %p182, %p183
    %p185 = scmp.ne.s32.totalorder %s176, %s177
    %p186 = scmp.eq.s32.totalorder %s19, 0
    %p187 = por %p185, %p186
    %p188 = scmp.ne.s32.totalorder %s176, %s177
    %p189 = scmp.eq.s32.totalorder %s20, 1
    %p190 = por %p188, %p189
    %p192 = scmp.ne.s32.totalorder %s177, %s191
    %p193 = scmp.eq.s32.totalorder %s20, 0
    %p194 = por %p192, %p193
    %s195 = ssub.s32 %s14, %s21
    %p196 = scmp.eq.s32.totalorder %s195, 0
    %s198 = sadd.s32 %s197, 1
    %s199 = scalar_select %p196, %s197, %s198
    %p202 = pneg %p196
    %p203 = scmp.eq.s32.totalorder %s14, 1
    %p204 = por %p202, %p203
    %p205 = scmp.ne.s32.totalorder %s197, %s200
    %p206 = scmp.eq.s32.totalorder %s14, 0
    %p207 = por %p205, %p206
    %p208 = scmp.ne.s32.totalorder %s197, %s200
    %p209 = scmp.eq.s32.totalorder %s19, 1
    %p210 = por %p208, %p209
    %p211 = scmp.ne.s32.totalorder %s200, %s201
    %p212 = scmp.eq.s32.totalorder %s19, 0
    %p213 = por %p211, %p212
    %p214 = scmp.ne.s32.totalorder %s200, %s201
    %p215 = scmp.eq.s32.totalorder %s20, 1
    %p216 = por %p214, %p215
    %p218 = scmp.ne.s32.totalorder %s201, %s217
    %p219 = scmp.eq.s32.totalorder %s20, 0
    %p220 = por %p218, %p219
    %p221 = scmp.le.s32.totalorder 1, %s14
    %p222 = scmp.lt.s32.totalorder %s14, 3
    %p223 = pnand %p221, %p222
    %p224 = pneg %p223
    // Predicated region
    $region9: #{trigger_model_forward.1} parent=5 // pred_check
      _
    $region10: #{trigger_model_forward.1} parent=5 // pred_check_branch
      %226 = sbr.rel (%p223) target = $region12
    $region11: #{trigger_model_forward.1} parent=5 // pred_region
      %s227 = ssub.s32 %s14, 1
      // Predicated region
      $region13: #{trigger_model_forward.1} parent=11 // pred_check
        %p228 = pneg %p61
      $region14: #{trigger_model_forward.1} parent=11 // pred_check_branch
        %230 = sbr.rel (%p228) target = $region16
      $region15: #{trigger_model_forward.1} parent=11 // pred_region
        _
      $region16: #{trigger_model_forward.1} parent=11 // pred_fallthru
        _
      // Predicated region
      $region17: #{trigger_model_forward.1} parent=11 // pred_check
        %p231 = pneg %p82
      $region18: #{trigger_model_forward.1} parent=11 // pred_check_branch
        %233 = sbr.rel (%p231) target = $region20
      $region19: #{trigger_model_forward.1} parent=11 // pred_region
        _
      $region20: #{trigger_model_forward.1} parent=11 // pred_fallthru
        _
      // Predicated region
      $region21: #{trigger_model_forward.1} parent=11 // pred_check
        %p234 = pneg %p103
      $region22: #{trigger_model_forward.1} parent=11 // pred_check_branch
        %236 = sbr.rel (%p234) target = $region24
      $region23: #{trigger_model_forward.1} parent=11 // pred_region
        _
      $region24: #{trigger_model_forward.1} parent=11 // pred_fallthru
        _
      // Predicated region
      $region25: #{trigger_model_forward.1} parent=11 // pred_check
        %p237 = pneg %p124
      $region26: #{trigger_model_forward.1} parent=11 // pred_check_branch
        %239 = sbr.rel (%p237) target = $region28
      $region27: #{trigger_model_forward.1} parent=11 // pred_region
        _
      $region28: #{trigger_model_forward.1} parent=11 // pred_fallthru
        _
      // Predicated region
      $region29: #{trigger_model_forward.1} parent=11 // pred_check
        %p240 = pneg %p145
      $region30: #{trigger_model_forward.1} parent=11 // pred_check_branch
        %242 = sbr.rel (%p240) target = $region32
      $region31: #{trigger_model_forward.1} parent=11 // pred_region
        _
      $region32: #{trigger_model_forward.1} parent=11 // pred_fallthru
        _
      // Predicated region
      $region33: #{trigger_model_forward.1} parent=11 // pred_check
        %p243 = pneg %p166
      $region34: #{trigger_model_forward.1} parent=11 // pred_check_branch
        %245 = sbr.rel (%p243) target = $region36
      $region35: #{trigger_model_forward.1} parent=11 // pred_region
        _
      $region36: #{trigger_model_forward.1} parent=11 // pred_fallthru
        _
      // Predicated region
      $region37: #{trigger_model_forward.1} parent=11 // pred_check
        %p246 = pneg %p187
      $region38: #{trigger_model_forward.1} parent=11 // pred_check_branch
        %248 = sbr.rel (%p246) target = $region40
      $region39: #{trigger_model_forward.1} parent=11 // pred_region
        _
      $region40: #{trigger_model_forward.1} parent=11 // pred_fallthru
        _
    $region12: #{trigger_model_forward.1} parent=5 // pred_fallthru
      _
    %p249 = scmp.lt.s32.totalorder %s14, 2
    // Predicated region
    $region41: #{trigger_model_forward.1} parent=5 // pred_check
      %p250 = pneg %p249
    $region42: #{trigger_model_forward.1} parent=5 // pred_check_branch
      %252 = sbr.rel (%p250) target = $region44
    $region43: #{trigger_model_forward.1} parent=5 // pred_region
      // Predicated region
      $region45: #{trigger_model_forward.1} parent=43 // pred_check
        %p253 = pneg %p34
      $region46: #{trigger_model_forward.1} parent=43 // pred_check_branch
        %255 = sbr.rel (%p253) target = $region48
      $region47: #{trigger_model_forward.1} parent=43 // pred_region
        %p256 = scmp.lt.s32.totalorder %s14, 1
        %s257 = scalar_select %p256, %s14, 1
        %s258 = smul.addr %s257, 2
        %s259 = smul.addr %s258, 8
        %s260 = scalar_lea.vmem %s0, %s259
      $region48: #{trigger_model_forward.1} parent=43 // pred_fallthru
        _
    $region44: #{trigger_model_forward.1} parent=5 // pred_fallthru
      _
    %p261 = scmp.le.s32.totalorder 1, %s14
    %p262 = scmp.lt.s32.totalorder %s14, 3
    %p263 = pnand %p261, %p262
    %p264 = pneg %p263
    // Predicated region
    $region49: #{trigger_model_forward.1} parent=5 // pred_check
      _
    $region50: #{trigger_model_forward.1} parent=5 // pred_check_branch
      %266 = sbr.rel (%p263) target = $region52
    $region51: #{trigger_model_forward.1} parent=5 // pred_region
      %s267 = ssub.s32 %s14, 1
      %p268 = scmp.lt.s32.totalorder %s19, 1
      %s269 = scalar_select %p268, %s19, 1
      %s270 = smul.addr %s269, 2
      %s271 = smul.addr %s270, 8
      %s272 = scalar_lea.vmem %s0, %s271
      %p273 = pneg %p40
      %p274 = pneg %p37
      %p275 = pneg %p61
      %p276 = pneg %p58
      %p277 = pneg %p82
      %p278 = pneg %p79
      %p279 = pneg %p103
      %p280 = pneg %p100
      %p281 = pneg %p124
      %p282 = pneg %p121
      %p283 = pneg %p145
      %p284 = pneg %p142
      %p285 = pneg %p166
      %p286 = pneg %p163
      %p287 = pneg %p187
      %p288 = pneg %p184
      %p289 = pneg %p213
      %p290 = pneg %p210
      %p291 = scmp.lt.s32.totalorder %s19, 1
      %s292 = scalar_select %p291, %s19, 1
      %s293 = smul.addr %s292, 2
      %s294 = smul.addr %s293, 4
      %s295 = scalar_lea.vmem %s8, %s294
      %p296 = scmp.lt.s32.totalorder %s19, 1
      %s297 = scalar_select %p296, %s19, 1
      %s298 = smul.addr %s297, 2
      %s299 = smul.addr %s298, 8
      %s300 = scalar_lea.vmem %s0, %s299
      %p301 = scmp.lt.s32.totalorder %s19, 1
      %s302 = scalar_select %p301, %s19, 1
      %s303 = smul.addr %s302, 2
      %s304 = smul.addr %s303, 4
      %s305 = scalar_lea.vmem %s8, %s304
      %v307 = vld [vmem:[%s1] sm:$0x3]
      %s308 = scalar_lea.vmem %s1, 2
      %v309 = vld [vmem:[%s308] sm:$0x3]
      %s310 = scalar_lea.vmem %s1, 4
      %v311 = vld [vmem:[%s310] sm:$0x3]
      %s312 = scalar_lea.vmem %s1, 6
      %v313 = vld [vmem:[%s312] sm:$0x3]
      %s314 = scalar_lea.vmem %s1, 10
      %v315 = vld [vmem:[%s314] sm:$0x3]
      %s316 = scalar_lea.vmem %s1, 12
      %v317 = vld [vmem:[%s316] sm:$0x3]
      %s318 = scalar_lea.vmem %s1, 14
      %v319 = vld [vmem:[%s318] sm:$0x3]
      %s320 = scalar_lea.vmem %s1, 16
      %v321 = vld [vmem:[%s320] sm:$0x3]
      %v322 = vld [vmem:[%s300] sm:$0xff]
      %v323 = vld [vmem:[%s300 + $0x8] sm:$0xff]
      %324 = vrot.lane.b32.xlu0 %v322, 17
      %v325 = vpop.permute.xlu0 %324
      %326 = vrot.lane.b32.xlu0 %v323, 17
      %v327 = vpop.permute.xlu0 %326
      %v328 = vlaneseq
      %v329 = vand.u32 %v328, 127
      %vm330 = vcmp.lt.s32.totalorder %v329, 17
      %v331 = vsel %vm330, %v325, %v327
      %v332 = vsel %vm330, %v327, %v325
      %v334 = vlaneseq
      %v335 = vshrl.u32 %v334, 7
      %v336 = vsub.s32 0, %v335
      %v337 = vrot.slane %v307, %v336
      %v338 = vlaneseq
      %v339 = vshrl.u32 %v338, 7
      %v340 = vsub.s32 1, %v339
      %v341 = vrot.slane %v307, %v340
      %v344 = vmul.f32 %v332, %v337
      %v345 = vmul.f32 %v331, %v341
      %v346 = vld [vmem:[%s2] sm:$0xf]
      %v347 = vld [vmem:[%s2 + $0x4] sm:$0xf]
      %v348 = vld [vmem:[%s2 + $0x8] sm:$0xf]
      %v349 = vld [vmem:[%s2 + $0xc] sm:$0xf]
      %v350 = vld [vmem:[%s2 + $0x10] sm:$0xf]
      %v351 = vld [vmem:[%s2 + $0x14] sm:$0xf]
      %v352 = vld [vmem:[%s2 + $0x18] sm:$0xf]
      %v353 = vld [vmem:[%s2 + $0x1c] sm:$0xf]
      %v354 = vpack.c.bf16 %v344, %v344
      %v355 = vpack.c.bf16 %v345, %v345
      %356 = vrot.lane.b32.xlu0 %v322, 16
      %v357 = vpop.permute.xlu0 %356
      %358 = vrot.lane.b32.xlu0 %v323, 16
      %v359 = vpop.permute.xlu0 %358
      %vm360 = vcmp.lt.s32.totalorder %v329, 16
      %v361 = vsel %vm360, %v357, %v359
      %v362 = vsel %vm360, %v359, %v357
      %v364 = vlaneseq
      %v365 = vshrl.u32 %v364, 7
      %v366 = vsub.s32 0, %v365
      %v367 = vrot.slane %v309, %v366
      %v368 = vlaneseq
      %v369 = vshrl.u32 %v368, 7
      %v370 = vsub.s32 1, %v369
      %v371 = vrot.slane %v309, %v370
      %v374 = vmul.f32 %v362, %v367
      %v375 = vmul.f32 %v361, %v371
      %s376 = scalar_lea.vmem %s2, 32
      %v377 = vld [vmem:[%s376] sm:$0xf]
      %v378 = vld [vmem:[%s376 + $0x4] sm:$0xf]
      %v379 = vld [vmem:[%s376 + $0x8] sm:$0xf]
      %v380 = vld [vmem:[%s376 + $0xc] sm:$0xf]
      %v381 = vld [vmem:[%s376 + $0x10] sm:$0xf]
      %v382 = vld [vmem:[%s376 + $0x14] sm:$0xf]
      %v383 = vld [vmem:[%s376 + $0x18] sm:$0xf]
      %v384 = vld [vmem:[%s376 + $0x1c] sm:$0xf]
      %v385 = vpack.c.bf16 %v374, %v374
      %v386 = vpack.c.bf16 %v375, %v375
      %v395 = vunpack.c.l.b16 %v377
      %v396 = vunpack.c.l.b16 %v378
      %v397 = vunpack.c.l.b16 %v379
      %v398 = vunpack.c.l.b16 %v380
      %v399 = vunpack.c.l.b16 %v381
      %v400 = vunpack.c.l.b16 %v382
      %v401 = vunpack.c.l.b16 %v383
      %v402 = vunpack.c.l.b16 %v384
      %v403 = vpack.c.b16 %v396, %v395
      %v404 = vpack.c.b16 %v398, %v397
      %v405 = vpack.c.b16 %v400, %v399
      %v406 = vpack.c.b16 %v402, %v401
      %vm407 = vcmask 64512
      %v409 = vsel %vm407, %v403, 0
      %v412 = vsel %vm407, %v404, 0
      %v415 = vsel %vm407, %v405, 0
      %v418 = vsel %vm407, %v406, 0
      %vm420 = vcmask 1043456
      %v422 = vsel %vm420, %v385, 0
      %v425 = vsel %vm420, %v386, 0
      %427 = vmatprep.subr.bf16.mxu0 %v425
      %428 = vmatpush1.bf16.msra.mxu0 %v422
      %429 = vmatprep.subr.bf16.mxu0 0
      %430 = vmatpush1.bf16.msra.mxu0 0
      %431 = vmatprep.subr.bf16.mxu0 0
      %432 = vmatpush1.bf16.msra.mxu0 0
      %433 = vmatprep.subr.bf16.mxu0 0
      %434 = vmatpush1.bf16.msra.mxu0 0
      %435 = vmatprep.subr.bf16.mxu0 0
      %436 = vmatpush1.bf16.msra.mxu0 0
      %437 = vmatprep.subr.bf16.mxu0 0
      %438 = vmatpush1.bf16.msra.mxu0 0
      %439 = vmatprep.subr.bf16.mxu0 0
      %440 = vmatpush1.bf16.msra.mxu0 0
      %441 = vmatprep.subr.bf16.mxu0 0
      %442 = vmatpush1.bf16.msra.mxu0 0
      %443 = vmatprep.subr.bf16.mxu0 0
      %444 = vmatpush1.bf16.msra.mxu0 0
      %445 = vmatprep.subr.bf16.mxu0 0
      %446 = vmatpush1.bf16.msra.mxu0 0
      %447 = vmatprep.subr.bf16.mxu0 0
      %448 = vmatpush1.bf16.msra.mxu0 0
      %449 = vmatprep.subr.bf16.mxu0 0
      %450 = vmatpush1.bf16.msra.mxu0 0
      %451 = vmatprep.subr.bf16.mxu0 0
      %452 = vmatpush1.bf16.msra.mxu0 0
      %453 = vmatprep.subr.bf16.mxu0 0
      %454 = vmatpush1.bf16.msra.mxu0 0
      %455 = vmatprep.subr.bf16.mxu0 0
      %456 = vmatpush1.bf16.msra.mxu0 0
      %457 = vmatprep.subr.bf16.mxu0 0
      %458 = vmatpush1.bf16.msra.mxu0 0
      %459 = vmatprep.mubr.bf16.mxu0 0
      %460 = vmatmul.mubr.bf16.gmra.mrb[0].mxu0 %v409
      %v461 = vpop.f32.mrb[0].mxu0
      %v462 = vadd.f32 0.0, %v461
      %v463 = vpop.f32.mrb[0].mxu0
      %v464 = vadd.f32 0.0, %v463
      %v465 = vpop.f32.mrb[0].mxu0
      %v466 = vadd.f32 0.0, %v465
      %v467 = vpop.f32.mrb[0].mxu0
      %v468 = vadd.f32 0.0, %v467
      %469 = vmatprep.mubr.bf16.mxu0 0
      %470 = vmatmul.mubr.bf16.gmra.mrb[0].mxu0 %v412
      %v471 = vpop.f32.mrb[0].mxu0
      %v472 = vadd.f32 0.0, %v471
      %v473 = vpop.f32.mrb[0].mxu0
      %v474 = vadd.f32 0.0, %v473
      %v475 = vpop.f32.mrb[0].mxu0
      %v476 = vadd.f32 0.0, %v475
      %v477 = vpop.f32.mrb[0].mxu0
      %v478 = vadd.f32 0.0, %v477
      %479 = vmatprep.mubr.bf16.mxu0 0
      %480 = vmatmul.mubr.bf16.gmra.mrb[0].mxu0 %v415
      %v481 = vpop.f32.mrb[0].mxu0
      %v482 = vadd.f32 0.0, %v481
      %v483 = vpop.f32.mrb[0].mxu0
      %v484 = vadd.f32 0.0, %v483
      %v485 = vpop.f32.mrb[0].mxu0
      %v486 = vadd.f32 0.0, %v485
      %v487 = vpop.f32.mrb[0].mxu0
      %v488 = vadd.f32 0.0, %v487
      %489 = vmatprep.mubr.bf16.mxu0 0
      %490 = vmatmul.mubr.bf16.gmra.mrb[0].mxu0 %v418
      %v491 = vpop.f32.mrb[0].mxu0
      %v492 = vadd.f32 0.0, %v491
      %v493 = vpop.f32.mrb[0].mxu0
      %v494 = vadd.f32 0.0, %v493
      %v495 = vpop.f32.mrb[0].mxu0
      %v496 = vadd.f32 0.0, %v495
      %v497 = vpop.f32.mrb[0].mxu0
      %v498 = vadd.f32 0.0, %v497
      %499 = vdwg.mxu0
      %v508 = vunpack.c.l.b16 %v346
      %v509 = vunpack.c.l.b16 %v347
      %v510 = vunpack.c.l.b16 %v348
      %v511 = vunpack.c.l.b16 %v349
      %v512 = vunpack.c.l.b16 %v350
      %v513 = vunpack.c.l.b16 %v351
      %v514 = vunpack.c.l.b16 %v352
      %v515 = vunpack.c.l.b16 %v353
      %v516 = vpack.c.b16 %v509, %v508
      %v517 = vpack.c.b16 %v511, %v510
      %v518 = vpack.c.b16 %v513, %v512
      %v519 = vpack.c.b16 %v515, %v514
      %v521 = vsel %vm407, %v516, 0
      %v524 = vsel %vm407, %v517, 0
      %v527 = vsel %vm407, %v518, 0
      %v530 = vsel %vm407, %v519, 0
      %v533 = vsel %vm420, %v354, 0
      %v536 = vsel %vm420, %v355, 0
      %538 = vmatprep.subr.bf16.mxu0 %v536
      %539 = vmatpush1.bf16.msra.mxu0 %v533
      %540 = vmatprep.subr.bf16.mxu0 0
      %541 = vmatpush1.bf16.msra.mxu0 0
      %542 = vmatprep.subr.bf16.mxu0 0
      %543 = vmatpush1.bf16.msra.mxu0 0
      %544 = vmatprep.subr.bf16.mxu0 0
      %545 = vmatpush1.bf16.msra.mxu0 0
      %546 = vmatprep.subr.bf16.mxu0 0
      %547 = vmatpush1.bf16.msra.mxu0 0
      %548 = vmatprep.subr.bf16.mxu0 0
      %549 = vmatpush1.bf16.msra.mxu0 0
      %550 = vmatprep.subr.bf16.mxu0 0
      %551 = vmatpush1.bf16.msra.mxu0 0
      %552 = vmatprep.subr.bf16.mxu0 0
      %553 = vmatpush1.bf16.msra.mxu0 0
      %554 = vmatprep.subr.bf16.mxu0 0
      %555 = vmatpush1.bf16.msra.mxu0 0
      %556 = vmatprep.subr.bf16.mxu0 0
      %557 = vmatpush1.bf16.msra.mxu0 0
      %558 = vmatprep.subr.bf16.mxu0 0
      %559 = vmatpush1.bf16.msra.mxu0 0
      %560 = vmatprep.subr.bf16.mxu0 0
      %561 = vmatpush1.bf16.msra.mxu0 0
      %562 = vmatprep.subr.bf16.mxu0 0
      %563 = vmatpush1.bf16.msra.mxu0 0
      %564 = vmatprep.subr.bf16.mxu0 0
      %565 = vmatpush1.bf16.msra.mxu0 0
      %566 = vmatprep.subr.bf16.mxu0 0
      %567 = vmatpush1.bf16.msra.mxu0 0
      %568 = vmatprep.subr.bf16.mxu0 0
      %569 = vmatpush1.bf16.msra.mxu0 0
      %570 = vmatprep.mubr.bf16.mxu0 0
      %571 = vmatmul.mubr.bf16.gmra.mrb[0].mxu0 %v521
      %v572 = vpop.f32.mrb[0].mxu0
      %v573 = vadd.f32 %v462, %v572
      %v574 = vpop.f32.mrb[0].mxu0
      %v575 = vadd.f32 %v464, %v574
      %v576 = vpop.f32.mrb[0].mxu0
      %v577 = vadd.f32 %v466, %v576
      %v578 = vpop.f32.mrb[0].mxu0
      %v579 = vadd.f32 %v468, %v578
      %580 = vmatprep.mubr.bf16.mxu0 0
      %581 = vmatmul.mubr.bf16.gmra.mrb[0].mxu0 %v524
      %v582 = vpop.f32.mrb[0].mxu0
      %v583 = vadd.f32 %v472, %v582
      %v584 = vpop.f32.mrb[0].mxu0
      %v585 = vadd.f32 %v474, %v584
      %v586 = vpop.f32.mrb[0].mxu0
      %v587 = vadd.f32 %v476, %v586
      %v588 = vpop.f32.mrb[0].mxu0
      %v589 = vadd.f32 %v478, %v588
      %590 = vmatprep.mubr.bf16.mxu0 0
      %591 = vmatmul.mubr.bf16.gmra.mrb[0].mxu0 %v527
      %v592 = vpop.f32.mrb[0].mxu0
      %v593 = vadd.f32 %v482, %v592
      %v594 = vpop.f32.mrb[0].mxu0
      %v595 = vadd.f32 %v484, %v594
      %v596 = vpop.f32.mrb[0].mxu0
      %v597 = vadd.f32 %v486, %v596
      %v598 = vpop.f32.mrb[0].mxu0
      %v599 = vadd.f32 %v488, %v598
      %600 = vmatprep.mubr.bf16.mxu0 0
      %601 = vmatmul.mubr.bf16.gmra.mrb[0].mxu0 %v530
      %v602 = vpop.f32.mrb[0].mxu0
      %v603 = vadd.f32 %v492, %v602
      %v604 = vpop.f32.mrb[0].mxu0
      %v605 = vadd.f32 %v494, %v604
      %v606 = vpop.f32.mrb[0].mxu0
      %v607 = vadd.f32 %v496, %v606
      %v608 = vpop.f32.mrb[0].mxu0
      %v609 = vadd.f32 %v498, %v608
      %610 = vdwg.mxu0
      %611 = vrot.lane.b32.xlu0 %v322, 15
      %v612 = vpop.permute.xlu0 %611
      %613 = vrot.lane.b32.xlu0 %v323, 15
      %v614 = vpop.permute.xlu0 %613
      %vm615 = vcmp.lt.s32.totalorder %v329, 15
      %v616 = vsel %vm615, %v612, %v614
      %v617 = vsel %vm615, %v614, %v612
      %v619 = vlaneseq
      %v620 = vshrl.u32 %v619, 7
      %v621 = vsub.s32 0, %v620
      %v622 = vrot.slane %v311, %v621
      %v623 = vlaneseq
      %v624 = vshrl.u32 %v623, 7
      %v625 = vsub.s32 1, %v624
      %v626 = vrot.slane %v311, %v625
      %v629 = vmul.f32 %v617, %v622
      %v630 = vmul.f32 %v616, %v626
      %s631 = scalar_lea.vmem %s2, 64
      %v632 = vld [vmem:[%s631] sm:$0xf]
      %v633 = vld [vmem:[%s631 + $0x4] sm:$0xf]
      %v634 = vld [vmem:[%s631 + $0x8] sm:$0xf]
      %v635 = vld [vmem:[%s631 + $0xc] sm:$0xf]
      %v636 = vld [vmem:[%s631 + $0x10] sm:$0xf]
      %v637 = vld [vmem:[%s631 + $0x14] sm:$0xf]
      %v638 = vld [vmem:[%s631 + $0x18] sm:$0xf]
      %v639 = vld [vmem:[%s631 + $0x1c] sm:$0xf]
      %v640 = vpack.c.bf16 %v629, %v629
      %v641 = vpack.c.bf16 %v630, %v630
      %v650 = vunpack.c.l.b16 %v632
      %v651 = vunpack.c.l.b16 %v633
      %v652 = vunpack.c.l.b16 %v634
      %v653 = vunpack.c.l.b16 %v635
      %v654 = vunpack.c.l.b16 %v636
      %v655 = vunpack.c.l.b16 %v637
      %v656 = vunpack.c.l.b16 %v638
      %v657 = vunpack.c.l.b16 %v639
      %v658 = vpack.c.b16 %v651, %v650
      %v659 = vpack.c.b16 %v653, %v652
      %v660 = vpack.c.b16 %v655, %v654
      %v661 = vpack.c.b16 %v657, %v656
      %v663 = vsel %vm407, %v658, 0
      %v666 = vsel %vm407, %v659, 0
      %v669 = vsel %vm407, %v660, 0
      %v672 = vsel %vm407, %v661, 0
      %v675 = vsel %vm420, %v640, 0
      %v678 = vsel %vm420, %v641, 0
      %680 = vmatprep.subr.bf16.mxu0 %v678
      %681 = vmatpush1.bf16.msra.mxu0 %v675
      %682 = vmatprep.subr.bf16.mxu0 0
      %683 = vmatpush1.bf16.msra.mxu0 0
      %684 = vmatprep.subr.bf16.mxu0 0
      %685 = vmatpush1.bf16.msra.mxu0 0
      %686 = vmatprep.subr.bf16.mxu0 0
      %687 = vmatpush1.bf16.msra.mxu0 0
      %688 = vmatprep.subr.bf16.mxu0 0
      %689 = vmatpush1.bf16.msra.mxu0 0
      %690 = vmatprep.subr.bf16.mxu0 0
      %691 = vmatpush1.bf16.msra.mxu0 0
      %692 = vmatprep.subr.bf16.mxu0 0
      %693 = vmatpush1.bf16.msra.mxu0 0
      %694 = vmatprep.subr.bf16.mxu0 0
      %695 = vmatpush1.bf16.msra.mxu0 0
      %696 = vmatprep.subr.bf16.mxu0 0
      %697 = vmatpush1.bf16.msra.mxu0 0
      %698 = vmatprep.subr.bf16.mxu0 0
      %699 = vmatpush1.bf16.msra.mxu0 0
      %700 = vmatprep.subr.bf16.mxu0 0
      %701 = vmatpush1.bf16.msra.mxu0 0
      %702 = vmatprep.subr.bf16.mxu0 0
      %703 = vmatpush1.bf16.msra.mxu0 0
      %704 = vmatprep.subr.bf16.mxu0 0
      %705 = vmatpush1.bf16.msra.mxu0 0
      %706 = vmatprep.subr.bf16.mxu0 0
      %707 = vmatpush1.bf16.msra.mxu0 0
      %708 = vmatprep.subr.bf16.mxu0 0
      %709 = vmatpush1.bf16.msra.mxu0 0
      %710 = vmatprep.subr.bf16.mxu0 0
      %711 = vmatpush1.bf16.msra.mxu0 0
      %712 = vmatprep.mubr.bf16.mxu0 0
      %713 = vmatmul.mubr.bf16.gmra.mrb[0].mxu0 %v663
      %v714 = vpop.f32.mrb[0].mxu0
      %v715 = vadd.f32 0.0, %v714
      %v716 = vpop.f32.mrb[0].mxu0
      %v717 = vadd.f32 0.0, %v716
      %v718 = vpop.f32.mrb[0].mxu0
      %v719 = vadd.f32 0.0, %v718
      %v720 = vpop.f32.mrb[0].mxu0
      %v721 = vadd.f32 0.0, %v720
      %722 = vmatprep.mubr.bf16.mxu0 0
      %723 = vmatmul.mubr.bf16.gmra.mrb[0].mxu0 %v666
      %v724 = vpop.f32.mrb[0].mxu0
      %v725 = vadd.f32 0.0, %v724
      %v726 = vpop.f32.mrb[0].mxu0
      %v727 = vadd.f32 0.0, %v726
      %v728 = vpop.f32.mrb[0].mxu0
      %v729 = vadd.f32 0.0, %v728
      %v730 = vpop.f32.mrb[0].mxu0
      %v731 = vadd.f32 0.0, %v730
      %732 = vmatprep.mubr.bf16.mxu0 0
      %733 = vmatmul.mubr.bf16.gmra.mrb[0].mxu0 %v669
      %v734 = vpop.f32.mrb[0].mxu0
      %v735 = vadd.f32 0.0, %v734
      %v736 = vpop.f32.mrb[0].mxu0
      %v737 = vadd.f32 0.0, %v736
      %v738 = vpop.f32.mrb[0].mxu0
      %v739 = vadd.f32 0.0, %v738
      %v740 = vpop.f32.mrb[0].mxu0
      %v741 = vadd.f32 0.0, %v740
      %742 = vmatprep.mubr.bf16.mxu0 0
      %743 = vmatmul.mubr.bf16.gmra.mrb[0].mxu0 %v672
      %v744 = vpop.f32.mrb[0].mxu0
      %v745 = vadd.f32 0.0, %v744
      %v746 = vpop.f32.mrb[0].mxu0
      %v747 = vadd.f32 0.0, %v746
      %v748 = vpop.f32.mrb[0].mxu0
      %v749 = vadd.f32 0.0, %v748
      %v750 = vpop.f32.mrb[0].mxu0
      %v751 = vadd.f32 0.0, %v750
      %752 = vdwg.mxu0
      %v753 = vadd.f32 %v573, %v715
      %v754 = vadd.f32 %v575, %v717
      %v755 = vadd.f32 %v577, %v719
      %v756 = vadd.f32 %v579, %v721
      %v757 = vadd.f32 %v583, %v725
      %v758 = vadd.f32 %v585, %v727
      %v759 = vadd.f32 %v587, %v729
      %v760 = vadd.f32 %v589, %v731
      %v761 = vadd.f32 %v593, %v735
      %v762 = vadd.f32 %v595, %v737
      %v763 = vadd.f32 %v597, %v739
      %v764 = vadd.f32 %v599, %v741
      %v765 = vadd.f32 %v603, %v745
      %v766 = vadd.f32 %v605, %v747
      %v767 = vadd.f32 %v607, %v749
      %v768 = vadd.f32 %v609, %v751
      %769 = vrot.lane.b32.xlu0 %v322, 1
      %v770 = vpop.permute.xlu0 %769
      %771 = vrot.lane.b32.xlu0 %v323, 1
      %v772 = vpop.permute.xlu0 %771
      %vm773 = vcmp.lt.s32.totalorder %v329, 1
      %v774 = vsel %vm773, %v770, %v772
      %v775 = vsel %vm773, %v772, %v770
      %v777 = vlaneseq
      %v778 = vshrl.u32 %v777, 7
      %v779 = vsub.s32 0, %v778
      %v780 = vrot.slane %v313, %v779
      %v781 = vlaneseq
      %v782 = vshrl.u32 %v781, 7
      %v783 = vsub.s32 1, %v782
      %v784 = vrot.slane %v313, %v783
      %v787 = vmul.f32 %v775, %v780
      %v788 = vmul.f32 %v774, %v784
      %s789 = scalar_lea.vmem %s2, 96
      %v790 = vld [vmem:[%s789] sm:$0xf]
      %v791 = vld [vmem:[%s789 + $0x4] sm:$0xf]
      %v792 = vld [vmem:[%s789 + $0x8] sm:$0xf]
      %v793 = vld [vmem:[%s789 + $0xc] sm:$0xf]
      %v794 = vld [vmem:[%s789 + $0x10] sm:$0xf]
      %v795 = vld [vmem:[%s789 + $0x14] sm:$0xf]
      %v796 = vld [vmem:[%s789 + $0x18] sm:$0xf]
      %v797 = vld [vmem:[%s789 + $0x1c] sm:$0xf]
      %v798 = vpack.c.bf16 %v787, %v787
      %v799 = vpack.c.bf16 %v788, %v788
      %v808 = vunpack.c.l.b16 %v790
      %v809 = vunpack.c.l.b16 %v791
      %v810 = vunpack.c.l.b16 %v792
      %v811 = vunpack.c.l.b16 %v793
      %v812 = vunpack.c.l.b16 %v794
      %v813 = vunpack.c.l.b16 %v795
      %v814 = vunpack.c.l.b16 %v796
      %v815 = vunpack.c.l.b16 %v797
      %v816 = vpack.c.b16 %v809, %v808
      %v817 = vpack.c.b16 %v811, %v810
      %v818 = vpack.c.b16 %v813, %v812
      %v819 = vpack.c.b16 %v815, %v814
      %v821 = vsel %vm407, %v816, 0
      %v824 = vsel %vm407, %v817, 0
      %v827 = vsel %vm407, %v818, 0
      %v830 = vsel %vm407, %v819, 0
      %v833 = vsel %vm420, %v798, 0
      %v836 = vsel %vm420, %v799, 0
      %838 = vmatprep.subr.bf16.mxu0 %v836
      %839 = vmatpush1.bf16.msra.mxu0 %v833
      %840 = vmatprep.subr.bf16.mxu0 0
      %841 = vmatpush1.bf16.msra.mxu0 0
      %842 = vmatprep.subr.bf16.mxu0 0
      %843 = vmatpush1.bf16.msra.mxu0 0
      %844 = vmatprep.subr.bf16.mxu0 0
      %845 = vmatpush1.bf16.msra.mxu0 0
      %846 = vmatprep.subr.bf16.mxu0 0
      %847 = vmatpush1.bf16.msra.mxu0 0
      %848 = vmatprep.subr.bf16.mxu0 0
      %849 = vmatpush1.bf16.msra.mxu0 0
      %850 = vmatprep.subr.bf16.mxu0 0
      %851 = vmatpush1.bf16.msra.mxu0 0
      %852 = vmatprep.subr.bf16.mxu0 0
      %853 = vmatpush1.bf16.msra.mxu0 0
      %854 = vmatprep.subr.bf16.mxu0 0
      %855 = vmatpush1.bf16.msra.mxu0 0
      %856 = vmatprep.subr.bf16.mxu0 0
      %857 = vmatpush1.bf16.msra.mxu0 0
      %858 = vmatprep.subr.bf16.mxu0 0
      %859 = vmatpush1.bf16.msra.mxu0 0
      %860 = vmatprep.subr.bf16.mxu0 0
      %861 = vmatpush1.bf16.msra.mxu0 0
      %862 = vmatprep.subr.bf16.mxu0 0
      %863 = vmatpush1.bf16.msra.mxu0 0
      %864 = vmatprep.subr.bf16.mxu0 0
      %865 = vmatpush1.bf16.msra.mxu0 0
      %866 = vmatprep.subr.bf16.mxu0 0
      %867 = vmatpush1.bf16.msra.mxu0 0
      %868 = vmatprep.subr.bf16.mxu0 0
      %869 = vmatpush1.bf16.msra.mxu0 0
      %870 = vmatprep.mubr.bf16.mxu0 0
      %871 = vmatmul.mubr.bf16.gmra.mrb[0].mxu0 %v821
      %v872 = vpop.f32.mrb[0].mxu0
      %v873 = vadd.f32 0.0, %v872
      %v874 = vpop.f32.mrb[0].mxu0
      %v875 = vadd.f32 0.0, %v874
      %v876 = vpop.f32.mrb[0].mxu0
      %v877 = vadd.f32 0.0, %v876
      %v878 = vpop.f32.mrb[0].mxu0
      %v879 = vadd.f32 0.0, %v878
      %880 = vmatprep.mubr.bf16.mxu0 0
      %881 = vmatmul.mubr.bf16.gmra.mrb[0].mxu0 %v824
      %v882 = vpop.f32.mrb[0].mxu0
      %v883 = vadd.f32 0.0, %v882
      %v884 = vpop.f32.mrb[0].mxu0
      %v885 = vadd.f32 0.0, %v884
      %v886 = vpop.f32.mrb[0].mxu0
      %v887 = vadd.f32 0.0, %v886
      %v888 = vpop.f32.mrb[0].mxu0
      %v889 = vadd.f32 0.0, %v888
      %890 = vmatprep.mubr.bf16.mxu0 0
      %891 = vmatmul.mubr.bf16.gmra.mrb[0].mxu0 %v827
      %v892 = vpop.f32.mrb[0].mxu0
      %v893 = vadd.f32 0.0, %v892
      %v894 = vpop.f32.mrb[0].mxu0
      %v895 = vadd.f32 0.0, %v894
      %v896 = vpop.f32.mrb[0].mxu0
      %v897 = vadd.f32 0.0, %v896
      %v898 = vpop.f32.mrb[0].mxu0
      %v899 = vadd.f32 0.0, %v898
      %900 = vmatprep.mubr.bf16.mxu0 0
      %901 = vmatmul.mubr.bf16.gmra.mrb[0].mxu0 %v830
      %v902 = vpop.f32.mrb[0].mxu0
      %v903 = vadd.f32 0.0, %v902
      %v904 = vpop.f32.mrb[0].mxu0
      %v905 = vadd.f32 0.0, %v904
      %v906 = vpop.f32.mrb[0].mxu0
      %v907 = vadd.f32 0.0, %v906
      %v908 = vpop.f32.mrb[0].mxu0
      %v909 = vadd.f32 0.0, %v908
      %910 = vdwg.mxu0
      %v911 = vadd.f32 %v753, %v873
      %v912 = vadd.f32 %v754, %v875
      %v913 = vadd.f32 %v755, %v877
      %v914 = vadd.f32 %v756, %v879
      %v915 = vadd.f32 %v757, %v883
      %v916 = vadd.f32 %v758, %v885
      %v917 = vadd.f32 %v759, %v887
      %v918 = vadd.f32 %v760, %v889
      %v919 = vadd.f32 %v761, %v893
      %v920 = vadd.f32 %v762, %v895
      %v921 = vadd.f32 %v763, %v897
      %v922 = vadd.f32 %v764, %v899
      %v923 = vadd.f32 %v765, %v903
      %v924 = vadd.f32 %v766, %v905
      %v925 = vadd.f32 %v767, %v907
      %v926 = vadd.f32 %v768, %v909
      %s927 = scalar_lea.vmem %s2, 128
      %v928 = vld [vmem:[%s927] sm:$0xf]
      %v929 = vld [vmem:[%s927 + $0x4] sm:$0xf]
      %v930 = vld [vmem:[%s927 + $0x8] sm:$0xf]
      %v931 = vld [vmem:[%s927 + $0xc] sm:$0xf]
      %v932 = vld [vmem:[%s927 + $0x10] sm:$0xf]
      %v933 = vld [vmem:[%s927 + $0x14] sm:$0xf]
      %v934 = vld [vmem:[%s927 + $0x18] sm:$0xf]
      %v935 = vld [vmem:[%s927 + $0x1c] sm:$0xf]
      %v936 = vpack.c.bf16 %v322, %v322
      %v937 = vpack.c.bf16 %v323, %v323
      %v946 = vunpack.c.l.b16 %v928
      %v947 = vunpack.c.l.b16 %v929
      %v948 = vunpack.c.l.b16 %v930
      %v949 = vunpack.c.l.b16 %v931
      %v950 = vunpack.c.l.b16 %v932
      %v951 = vunpack.c.l.b16 %v933
      %v952 = vunpack.c.l.b16 %v934
      %v953 = vunpack.c.l.b16 %v935
      %v954 = vpack.c.b16 %v947, %v946
      %v955 = vpack.c.b16 %v949, %v948
      %v956 = vpack.c.b16 %v951, %v950
      %v957 = vpack.c.b16 %v953, %v952
      %v959 = vsel %vm407, %v954, 0
      %v962 = vsel %vm407, %v955, 0
      %v965 = vsel %vm407, %v956, 0
      %v968 = vsel %vm407, %v957, 0
      %v971 = vsel %vm420, %v936, 0
      %v974 = vsel %vm420, %v937, 0
      %976 = vmatprep.subr.bf16.mxu0 %v974
      %977 = vmatpush1.bf16.msra.mxu0 %v971
      %978 = vmatprep.subr.bf16.mxu0 0
      %979 = vmatpush1.bf16.msra.mxu0 0
      %980 = vmatprep.subr.bf16.mxu0 0
      %981 = vmatpush1.bf16.msra.mxu0 0
      %982 = vmatprep.subr.bf16.mxu0 0
      %983 = vmatpush1.bf16.msra.mxu0 0
      %984 = vmatprep.subr.bf16.mxu0 0
      %985 = vmatpush1.bf16.msra.mxu0 0
      %986 = vmatprep.subr.bf16.mxu0 0
      %987 = vmatpush1.bf16.msra.mxu0 0
      %988 = vmatprep.subr.bf16.mxu0 0
      %989 = vmatpush1.bf16.msra.mxu0 0
      %990 = vmatprep.subr.bf16.mxu0 0
      %991 = vmatpush1.bf16.msra.mxu0 0
      %992 = vmatprep.subr.bf16.mxu0 0
      %993 = vmatpush1.bf16.msra.mxu0 0
      %994 = vmatprep.subr.bf16.mxu0 0
      %995 = vmatpush1.bf16.msra.mxu0 0
      %996 = vmatprep.subr.bf16.mxu0 0
      %997 = vmatpush1.bf16.msra.mxu0 0
      %998 = vmatprep.subr.bf16.mxu0 0
      %999 = vmatpush1.bf16.msra.mxu0 0
      %1000 = vmatprep.subr.bf16.mxu0 0
      %1001 = vmatpush1.bf16.msra.mxu0 0
      %1002 = vmatprep.subr.bf16.mxu0 0
      %1003 = vmatpush1.bf16.msra.mxu0 0
      %1004 = vmatprep.subr.bf16.mxu0 0
      %1005 = vmatpush1.bf16.msra.mxu0 0
      %1006 = vmatprep.subr.bf16.mxu0 0
      %1007 = vmatpush1.bf16.msra.mxu0 0
      %1008 = vmatprep.mubr.bf16.mxu0 0
      %1009 = vmatmul.mubr.bf16.gmra.mrb[0].mxu0 %v959
      %v1010 = vpop.f32.mrb[0].mxu0
      %v1011 = vadd.f32 0.0, %v1010
      %v1012 = vpop.f32.mrb[0].mxu0
      %v1013 = vadd.f32 0.0, %v1012
      %v1014 = vpop.f32.mrb[0].mxu0
      %v1015 = vadd.f32 0.0, %v1014
      %v1016 = vpop.f32.mrb[0].mxu0
      %v1017 = vadd.f32 0.0, %v1016
      %1018 = vmatprep.mubr.bf16.mxu0 0
      %1019 = vmatmul.mubr.bf16.gmra.mrb[0].mxu0 %v962
      %v1020 = vpop.f32.mrb[0].mxu0
      %v1021 = vadd.f32 0.0, %v1020
      %v1022 = vpop.f32.mrb[0].mxu0
      %v1023 = vadd.f32 0.0, %v1022
      %v1024 = vpop.f32.mrb[0].mxu0
      %v1025 = vadd.f32 0.0, %v1024
      %v1026 = vpop.f32.mrb[0].mxu0
      %v1027 = vadd.f32 0.0, %v1026
      %1028 = vmatprep.mubr.bf16.mxu0 0
      %1029 = vmatmul.mubr.bf16.gmra.mrb[0].mxu0 %v965
      %v1030 = vpop.f32.mrb[0].mxu0
      %v1031 = vadd.f32 0.0, %v1030
      %v1032 = vpop.f32.mrb[0].mxu0
      %v1033 = vadd.f32 0.0, %v1032
      %v1034 = vpop.f32.mrb[0].mxu0
      %v1035 = vadd.f32 0.0, %v1034
      %v1036 = vpop.f32.mrb[0].mxu0
      %v1037 = vadd.f32 0.0, %v1036
      %1038 = vmatprep.mubr.bf16.mxu0 0
      %1039 = vmatmul.mubr.bf16.gmra.mrb[0].mxu0 %v968
      %v1040 = vpop.f32.mrb[0].mxu0
      %v1041 = vadd.f32 0.0, %v1040
      %v1042 = vpop.f32.mrb[0].mxu0
      %v1043 = vadd.f32 0.0, %v1042
      %v1044 = vpop.f32.mrb[0].mxu0
      %v1045 = vadd.f32 0.0, %v1044
      %v1046 = vpop.f32.mrb[0].mxu0
      %v1047 = vadd.f32 0.0, %v1046
      %1048 = vdwg.mxu0
      %v1049 = vadd.f32 %v911, %v1011
      %v1050 = vadd.f32 %v912, %v1013
      %v1051 = vadd.f32 %v913, %v1015
      %v1052 = vadd.f32 %v914, %v1017
      %v1053 = vadd.f32 %v915, %v1021
      %v1054 = vadd.f32 %v916, %v1023
      %v1055 = vadd.f32 %v917, %v1025
      %v1056 = vadd.f32 %v918, %v1027
      %v1057 = vadd.f32 %v919, %v1031
      %v1058 = vadd.f32 %v920, %v1033
      %v1059 = vadd.f32 %v921, %v1035
      %v1060 = vadd.f32 %v922, %v1037
      %v1061 = vadd.f32 %v923, %v1041
      %v1062 = vadd.f32 %v924, %v1043
      %v1063 = vadd.f32 %v925, %v1045
      %v1064 = vadd.f32 %v926, %v1047
      %1065 = vrot.lane.b32.xlu0 %v322, 127
      %v1066 = vpop.permute.xlu0 %1065
      %1067 = vrot.lane.b32.xlu0 %v323, 127
      %v1068 = vpop.permute.xlu0 %1067
      %vm1069 = vcmp.lt.s32.totalorder %v329, 127
      %v1070 = vsel %vm1069, %v1066, %v1068
      %v1071 = vsel %vm1069, %v1068, %v1066
      %v1073 = vlaneseq
      %v1074 = vshrl.u32 %v1073, 7
      %v1075 = vsub.s32 0, %v1074
      %v1076 = vrot.slane %v315, %v1075
      %v1077 = vlaneseq
      %v1078 = vshrl.u32 %v1077, 7
      %v1079 = vsub.s32 1, %v1078
      %v1080 = vrot.slane %v315, %v1079
      %v1083 = vmul.f32 %v1070, %v1076
      %v1084 = vmul.f32 %v1071, %v1080
      %s1085 = scalar_lea.vmem %s2, 160
      %v1086 = vld [vmem:[%s1085] sm:$0xf]
      %v1087 = vld [vmem:[%s1085 + $0x4] sm:$0xf]
      %v1088 = vld [vmem:[%s1085 + $0x8] sm:$0xf]
      %v1089 = vld [vmem:[%s1085 + $0xc] sm:$0xf]
      %v1090 = vld [vmem:[%s1085 + $0x10] sm:$0xf]
      %v1091 = vld [vmem:[%s1085 + $0x14] sm:$0xf]
      %v1092 = vld [vmem:[%s1085 + $0x18] sm:$0xf]
      %v1093 = vld [vmem:[%s1085 + $0x1c] sm:$0xf]
      %v1094 = vpack.c.bf16 %v1083, %v1083
      %v1095 = vpack.c.bf16 %v1084, %v1084
      %v1104 = vunpack.c.l.b16 %v1086
      %v1105 = vunpack.c.l.b16 %v1087
      %v1106 = vunpack.c.l.b16 %v1088
      %v1107 = vunpack.c.l.b16 %v1089
      %v1108 = vunpack.c.l.b16 %v1090
      %v1109 = vunpack.c.l.b16 %v1091
      %v1110 = vunpack.c.l.b16 %v1092
      %v1111 = vunpack.c.l.b16 %v1093
      %v1112 = vpack.c.b16 %v1105, %v1104
      %v1113 = vpack.c.b16 %v1107, %v1106
      %v1114 = vpack.c.b16 %v1109, %v1108
      %v1115 = vpack.c.b16 %v1111, %v1110
      %v1117 = vsel %vm407, %v1112, 0
      %v1120 = vsel %vm407, %v1113, 0
      %v1123 = vsel %vm407, %v1114, 0
      %v1126 = vsel %vm407, %v1115, 0
      %v1129 = vsel %vm420, %v1094, 0
      %v1132 = vsel %vm420, %v1095, 0
      %1134 = vmatprep.subr.bf16.mxu0 %v1132
      %1135 = vmatpush1.bf16.msra.mxu0 %v1129
      %1136 = vmatprep.subr.bf16.mxu0 0
      %1137 = vmatpush1.bf16.msra.mxu0 0
      %1138 = vmatprep.subr.bf16.mxu0 0
      %1139 = vmatpush1.bf16.msra.mxu0 0
      %1140 = vmatprep.subr.bf16.mxu0 0
      %1141 = vmatpush1.bf16.msra.mxu0 0
      %1142 = vmatprep.subr.bf16.mxu0 0
      %1143 = vmatpush1.bf16.msra.mxu0 0
      %1144 = vmatprep.subr.bf16.mxu0 0
      %1145 = vmatpush1.bf16.msra.mxu0 0
      %1146 = vmatprep.subr.bf16.mxu0 0
      %1147 = vmatpush1.bf16.msra.mxu0 0
      %1148 = vmatprep.subr.bf16.mxu0 0
      %1149 = vmatpush1.bf16.msra.mxu0 0
      %1150 = vmatprep.subr.bf16.mxu0 0
      %1151 = vmatpush1.bf16.msra.mxu0 0
      %1152 = vmatprep.subr.bf16.mxu0 0
      %1153 = vmatpush1.bf16.msra.mxu0 0
      %1154 = vmatprep.subr.bf16.mxu0 0
      %1155 = vmatpush1.bf16.msra.mxu0 0
      %1156 = vmatprep.subr.bf16.mxu0 0
      %1157 = vmatpush1.bf16.msra.mxu0 0
      %1158 = vmatprep.subr.bf16.mxu0 0
      %1159 = vmatpush1.bf16.msra.mxu0 0
      %1160 = vmatprep.subr.bf16.mxu0 0
      %1161 = vmatpush1.bf16.msra.mxu0 0
      %1162 = vmatprep.subr.bf16.mxu0 0
      %1163 = vmatpush1.bf16.msra.mxu0 0
      %1164 = vmatprep.subr.bf16.mxu0 0
      %1165 = vmatpush1.bf16.msra.mxu0 0
      %1166 = vmatprep.mubr.bf16.mxu0 0
      %1167 = vmatmul.mubr.bf16.gmra.mrb[0].mxu0 %v1117
      %v1168 = vpop.f32.mrb[0].mxu0
      %v1169 = vadd.f32 0.0, %v1168
      %v1170 = vpop.f32.mrb[0].mxu0
      %v1171 = vadd.f32 0.0, %v1170
      %v1172 = vpop.f32.mrb[0].mxu0
      %v1173 = vadd.f32 0.0, %v1172
      %v1174 = vpop.f32.mrb[0].mxu0
      %v1175 = vadd.f32 0.0, %v1174
      %1176 = vmatprep.mubr.bf16.mxu0 0
      %1177 = vmatmul.mubr.bf16.gmra.mrb[0].mxu0 %v1120
      %v1178 = vpop.f32.mrb[0].mxu0
      %v1179 = vadd.f32 0.0, %v1178
      %v1180 = vpop.f32.mrb[0].mxu0
      %v1181 = vadd.f32 0.0, %v1180
      %v1182 = vpop.f32.mrb[0].mxu0
      %v1183 = vadd.f32 0.0, %v1182
      %v1184 = vpop.f32.mrb[0].mxu0
      %v1185 = vadd.f32 0.0, %v1184
      %1186 = vmatprep.mubr.bf16.mxu0 0
      %1187 = vmatmul.mubr.bf16.gmra.mrb[0].mxu0 %v1123
      %v1188 = vpop.f32.mrb[0].mxu0
      %v1189 = vadd.f32 0.0, %v1188
      %v1190 = vpop.f32.mrb[0].mxu0
      %v1191 = vadd.f32 0.0, %v1190
      %v1192 = vpop.f32.mrb[0].mxu0
      %v1193 = vadd.f32 0.0, %v1192
      %v1194 = vpop.f32.mrb[0].mxu0
      %v1195 = vadd.f32 0.0, %v1194
      %1196 = vmatprep.mubr.bf16.mxu0 0
      %1197 = vmatmul.mubr.bf16.gmra.mrb[0].mxu0 %v1126
      %v1198 = vpop.f32.mrb[0].mxu0
      %v1199 = vadd.f32 0.0, %v1198
      %v1200 = vpop.f32.mrb[0].mxu0
      %v1201 = vadd.f32 0.0, %v1200
      %v1202 = vpop.f32.mrb[0].mxu0
      %v1203 = vadd.f32 0.0, %v1202
      %v1204 = vpop.f32.mrb[0].mxu0
      %v1205 = vadd.f32 0.0, %v1204
      %1206 = vdwg.mxu0
      %v1207 = vadd.f32 %v1049, %v1169
      %v1208 = vadd.f32 %v1050, %v1171
      %v1209 = vadd.f32 %v1051, %v1173
      %v1210 = vadd.f32 %v1052, %v1175
      %v1211 = vadd.f32 %v1053, %v1179
      %v1212 = vadd.f32 %v1054, %v1181
      %v1213 = vadd.f32 %v1055, %v1183
      %v1214 = vadd.f32 %v1056, %v1185
      %v1215 = vadd.f32 %v1057, %v1189
      %v1216 = vadd.f32 %v1058, %v1191
      %v1217 = vadd.f32 %v1059, %v1193
      %v1218 = vadd.f32 %v1060, %v1195
      %v1219 = vadd.f32 %v1061, %v1199
      %v1220 = vadd.f32 %v1062, %v1201
      %v1221 = vadd.f32 %v1063, %v1203
      %v1222 = vadd.f32 %v1064, %v1205
      %1223 = vrot.lane.b32.xlu0 %v322, 113
      %v1224 = vpop.permute.xlu0 %1223
      %1225 = vrot.lane.b32.xlu0 %v323, 113
      %v1226 = vpop.permute.xlu0 %1225
      %vm1227 = vcmp.lt.s32.totalorder %v329, 113
      %v1228 = vsel %vm1227, %v1224, %v1226
      %v1229 = vsel %vm1227, %v1226, %v1224
      %v1231 = vlaneseq
      %v1232 = vshrl.u32 %v1231, 7
      %v1233 = vsub.s32 0, %v1232
      %v1234 = vrot.slane %v317, %v1233
      %v1235 = vlaneseq
      %v1236 = vshrl.u32 %v1235, 7
      %v1237 = vsub.s32 1, %v1236
      %v1238 = vrot.slane %v317, %v1237
      %v1241 = vmul.f32 %v1228, %v1234
      %v1242 = vmul.f32 %v1229, %v1238
      %s1243 = scalar_lea.vmem %s2, 192
      %v1244 = vld [vmem:[%s1243] sm:$0xf]
      %v1245 = vld [vmem:[%s1243 + $0x4] sm:$0xf]
      %v1246 = vld [vmem:[%s1243 + $0x8] sm:$0xf]
      %v1247 = vld [vmem:[%s1243 + $0xc] sm:$0xf]
      %v1248 = vld [vmem:[%s1243 + $0x10] sm:$0xf]
      %v1249 = vld [vmem:[%s1243 + $0x14] sm:$0xf]
      %v1250 = vld [vmem:[%s1243 + $0x18] sm:$0xf]
      %v1251 = vld [vmem:[%s1243 + $0x1c] sm:$0xf]
      %v1252 = vpack.c.bf16 %v1241, %v1241
      %v1253 = vpack.c.bf16 %v1242, %v1242
      %v1262 = vunpack.c.l.b16 %v1244
      %v1263 = vunpack.c.l.b16 %v1245
      %v1264 = vunpack.c.l.b16 %v1246
      %v1265 = vunpack.c.l.b16 %v1247
      %v1266 = vunpack.c.l.b16 %v1248
      %v1267 = vunpack.c.l.b16 %v1249
      %v1268 = vunpack.c.l.b16 %v1250
      %v1269 = vunpack.c.l.b16 %v1251
      %v1270 = vpack.c.b16 %v1263, %v1262
      %v1271 = vpack.c.b16 %v1265, %v1264
      %v1272 = vpack.c.b16 %v1267, %v1266
      %v1273 = vpack.c.b16 %v1269, %v1268
      %v1275 = vsel %vm407, %v1270, 0
      %v1278 = vsel %vm407, %v1271, 0
      %v1281 = vsel %vm407, %v1272, 0
      %v1284 = vsel %vm407, %v1273, 0
      %v1287 = vsel %vm420, %v1252, 0
      %v1290 = vsel %vm420, %v1253, 0
      %1292 = vmatprep.subr.bf16.mxu0 %v1290
      %1293 = vmatpush1.bf16.msra.mxu0 %v1287
      %1294 = vmatprep.subr.bf16.mxu0 0
      %1295 = vmatpush1.bf16.msra.mxu0 0
      %1296 = vmatprep.subr.bf16.mxu0 0
      %1297 = vmatpush1.bf16.msra.mxu0 0
      %1298 = vmatprep.subr.bf16.mxu0 0
      %1299 = vmatpush1.bf16.msra.mxu0 0
      %1300 = vmatprep.subr.bf16.mxu0 0
      %1301 = vmatpush1.bf16.msra.mxu0 0
      %1302 = vmatprep.subr.bf16.mxu0 0
      %1303 = vmatpush1.bf16.msra.mxu0 0
      %1304 = vmatprep.subr.bf16.mxu0 0
      %1305 = vmatpush1.bf16.msra.mxu0 0
      %1306 = vmatprep.subr.bf16.mxu0 0
      %1307 = vmatpush1.bf16.msra.mxu0 0
      %1308 = vmatprep.subr.bf16.mxu0 0
      %1309 = vmatpush1.bf16.msra.mxu0 0
      %1310 = vmatprep.subr.bf16.mxu0 0
      %1311 = vmatpush1.bf16.msra.mxu0 0
      %1312 = vmatprep.subr.bf16.mxu0 0
      %1313 = vmatpush1.bf16.msra.mxu0 0
      %1314 = vmatprep.subr.bf16.mxu0 0
      %1315 = vmatpush1.bf16.msra.mxu0 0
      %1316 = vmatprep.subr.bf16.mxu0 0
      %1317 = vmatpush1.bf16.msra.mxu0 0
      %1318 = vmatprep.subr.bf16.mxu0 0
      %1319 = vmatpush1.bf16.msra.mxu0 0
      %1320 = vmatprep.subr.bf16.mxu0 0
      %1321 = vmatpush1.bf16.msra.mxu0 0
      %1322 = vmatprep.subr.bf16.mxu0 0
      %1323 = vmatpush1.bf16.msra.mxu0 0
      %1324 = vmatprep.mubr.bf16.mxu0 0
      %1325 = vmatmul.mubr.bf16.gmra.mrb[0].mxu0 %v1275
      %v1326 = vpop.f32.mrb[0].mxu0
      %v1327 = vadd.f32 0.0, %v1326
      %v1328 = vpop.f32.mrb[0].mxu0
      %v1329 = vadd.f32 0.0, %v1328
      %v1330 = vpop.f32.mrb[0].mxu0
      %v1331 = vadd.f32 0.0, %v1330
      %v1332 = vpop.f32.mrb[0].mxu0
      %v1333 = vadd.f32 0.0, %v1332
      %1334 = vmatprep.mubr.bf16.mxu0 0
      %1335 = vmatmul.mubr.bf16.gmra.mrb[0].mxu0 %v1278
      %v1336 = vpop.f32.mrb[0].mxu0
      %v1337 = vadd.f32 0.0, %v1336
      %v1338 = vpop.f32.mrb[0].mxu0
      %v1339 = vadd.f32 0.0, %v1338
      %v1340 = vpop.f32.mrb[0].mxu0
      %v1341 = vadd.f32 0.0, %v1340
      %v1342 = vpop.f32.mrb[0].mxu0
      %v1343 = vadd.f32 0.0, %v1342
      %1344 = vmatprep.mubr.bf16.mxu0 0
      %1345 = vmatmul.mubr.bf16.gmra.mrb[0].mxu0 %v1281
      %v1346 = vpop.f32.mrb[0].mxu0
      %v1347 = vadd.f32 0.0, %v1346
      %v1348 = vpop.f32.mrb[0].mxu0
      %v1349 = vadd.f32 0.0, %v1348
      %v1350 = vpop.f32.mrb[0].mxu0
      %v1351 = vadd.f32 0.0, %v1350
      %v1352 = vpop.f32.mrb[0].mxu0
      %v1353 = vadd.f32 0.0, %v1352
      %1354 = vmatprep.mubr.bf16.mxu0 0
      %1355 = vmatmul.mubr.bf16.gmra.mrb[0].mxu0 %v1284
      %v1356 = vpop.f32.mrb[0].mxu0
      %v1357 = vadd.f32 0.0, %v1356
      %v1358 = vpop.f32.mrb[0].mxu0
      %v1359 = vadd.f32 0.0, %v1358
      %v1360 = vpop.f32.mrb[0].mxu0
      %v1361 = vadd.f32 0.0, %v1360
      %v1362 = vpop.f32.mrb[0].mxu0
      %v1363 = vadd.f32 0.0, %v1362
      %1364 = vdwg.mxu0
      %v1365 = vadd.f32 %v1207, %v1327
      %v1366 = vadd.f32 %v1208, %v1329
      %v1367 = vadd.f32 %v1209, %v1331
      %v1368 = vadd.f32 %v1210, %v1333
      %v1369 = vadd.f32 %v1211, %v1337
      %v1370 = vadd.f32 %v1212, %v1339
      %v1371 = vadd.f32 %v1213, %v1341
      %v1372 = vadd.f32 %v1214, %v1343
      %v1373 = vadd.f32 %v1215, %v1347
      %v1374 = vadd.f32 %v1216, %v1349
      %v1375 = vadd.f32 %v1217, %v1351
      %v1376 = vadd.f32 %v1218, %v1353
      %v1377 = vadd.f32 %v1219, %v1357
      %v1378 = vadd.f32 %v1220, %v1359
      %v1379 = vadd.f32 %v1221, %v1361
      %v1380 = vadd.f32 %v1222, %v1363
      %1381 = vrot.lane.b32.xlu0 %v322, 112
      %v1382 = vpop.permute.xlu0 %1381
      %1383 = vrot.lane.b32.xlu0 %v323, 112
      %v1384 = vpop.permute.xlu0 %1383
      %vm1385 = vcmp.lt.s32.totalorder %v329, 112
      %v1386 = vsel %vm1385, %v1382, %v1384
      %v1387 = vsel %vm1385, %v1384, %v1382
      %v1389 = vlaneseq
      %v1390 = vshrl.u32 %v1389, 7
      %v1391 = vsub.s32 0, %v1390
      %v1392 = vrot.slane %v319, %v1391
      %v1393 = vlaneseq
      %v1394 = vshrl.u32 %v1393, 7
      %v1395 = vsub.s32 1, %v1394
      %v1396 = vrot.slane %v319, %v1395
      %v1399 = vmul.f32 %v1386, %v1392
      %v1400 = vmul.f32 %v1387, %v1396
      %s1401 = scalar_lea.vmem %s2, 224
      %v1402 = vld [vmem:[%s1401] sm:$0xf]
      %v1403 = vld [vmem:[%s1401 + $0x4] sm:$0xf]
      %v1404 = vld [vmem:[%s1401 + $0x8] sm:$0xf]
      %v1405 = vld [vmem:[%s1401 + $0xc] sm:$0xf]
      %v1406 = vld [vmem:[%s1401 + $0x10] sm:$0xf]
      %v1407 = vld [vmem:[%s1401 + $0x14] sm:$0xf]
      %v1408 = vld [vmem:[%s1401 + $0x18] sm:$0xf]
      %v1409 = vld [vmem:[%s1401 + $0x1c] sm:$0xf]
      %v1410 = vpack.c.bf16 %v1399, %v1399
      %v1411 = vpack.c.bf16 %v1400, %v1400
      %v1420 = vunpack.c.l.b16 %v1402
      %v1421 = vunpack.c.l.b16 %v1403
      %v1422 = vunpack.c.l.b16 %v1404
      %v1423 = vunpack.c.l.b16 %v1405
      %v1424 = vunpack.c.l.b16 %v1406
      %v1425 = vunpack.c.l.b16 %v1407
      %v1426 = vunpack.c.l.b16 %v1408
      %v1427 = vunpack.c.l.b16 %v1409
      %v1428 = vpack.c.b16 %v1421, %v1420
      %v1429 = vpack.c.b16 %v1423, %v1422
      %v1430 = vpack.c.b16 %v1425, %v1424
      %v1431 = vpack.c.b16 %v1427, %v1426
      %v1433 = vsel %vm407, %v1428, 0
      %v1436 = vsel %vm407, %v1429, 0
      %v1439 = vsel %vm407, %v1430, 0
      %v1442 = vsel %vm407, %v1431, 0
      %v1445 = vsel %vm420, %v1410, 0
      %v1448 = vsel %vm420, %v1411, 0
      %1450 = vmatprep.subr.bf16.mxu0 %v1448
      %1451 = vmatpush1.bf16.msra.mxu0 %v1445
      %1452 = vmatprep.subr.bf16.mxu0 0
      %1453 = vmatpush1.bf16.msra.mxu0 0
      %1454 = vmatprep.subr.bf16.mxu0 0
      %1455 = vmatpush1.bf16.msra.mxu0 0
      %1456 = vmatprep.subr.bf16.mxu0 0
      %1457 = vmatpush1.bf16.msra.mxu0 0
      %1458 = vmatprep.subr.bf16.mxu0 0
      %1459 = vmatpush1.bf16.msra.mxu0 0
      %1460 = vmatprep.subr.bf16.mxu0 0
      %1461 = vmatpush1.bf16.msra.mxu0 0
      %1462 = vmatprep.subr.bf16.mxu0 0
      %1463 = vmatpush1.bf16.msra.mxu0 0
      %1464 = vmatprep.subr.bf16.mxu0 0
      %1465 = vmatpush1.bf16.msra.mxu0 0
      %1466 = vmatprep.subr.bf16.mxu0 0
      %1467 = vmatpush1.bf16.msra.mxu0 0
      %1468 = vmatprep.subr.bf16.mxu0 0
      %1469 = vmatpush1.bf16.msra.mxu0 0
      %1470 = vmatprep.subr.bf16.mxu0 0
      %1471 = vmatpush1.bf16.msra.mxu0 0
      %1472 = vmatprep.subr.bf16.mxu0 0
      %1473 = vmatpush1.bf16.msra.mxu0 0
      %1474 = vmatprep.subr.bf16.mxu0 0
      %1475 = vmatpush1.bf16.msra.mxu0 0
      %1476 = vmatprep.subr.bf16.mxu0 0
      %1477 = vmatpush1.bf16.msra.mxu0 0
      %1478 = vmatprep.subr.bf16.mxu0 0
      %1479 = vmatpush1.bf16.msra.mxu0 0
      %1480 = vmatprep.subr.bf16.mxu0 0
      %1481 = vmatpush1.bf16.msra.mxu0 0
      %1482 = vmatprep.mubr.bf16.mxu0 0
      %1483 = vmatmul.mubr.bf16.gmra.mrb[0].mxu0 %v1433
      %v1484 = vpop.f32.mrb[0].mxu0
      %v1485 = vadd.f32 0.0, %v1484
      %v1486 = vpop.f32.mrb[0].mxu0
      %v1487 = vadd.f32 0.0, %v1486
      %v1488 = vpop.f32.mrb[0].mxu0
      %v1489 = vadd.f32 0.0, %v1488
      %v1490 = vpop.f32.mrb[0].mxu0
      %v1491 = vadd.f32 0.0, %v1490
      %1492 = vmatprep.mubr.bf16.mxu0 0
      %1493 = vmatmul.mubr.bf16.gmra.mrb[0].mxu0 %v1436
      %v1494 = vpop.f32.mrb[0].mxu0
      %v1495 = vadd.f32 0.0, %v1494
      %v1496 = vpop.f32.mrb[0].mxu0
      %v1497 = vadd.f32 0.0, %v1496
      %v1498 = vpop.f32.mrb[0].mxu0
      %v1499 = vadd.f32 0.0, %v1498
      %v1500 = vpop.f32.mrb[0].mxu0
      %v1501 = vadd.f32 0.0, %v1500
      %1502 = vmatprep.mubr.bf16.mxu0 0
      %1503 = vmatmul.mubr.bf16.gmra.mrb[0].mxu0 %v1439
      %v1504 = vpop.f32.mrb[0].mxu0
      %v1505 = vadd.f32 0.0, %v1504
      %v1506 = vpop.f32.mrb[0].mxu0
      %v1507 = vadd.f32 0.0, %v1506
      %v1508 = vpop.f32.mrb[0].mxu0
      %v1509 = vadd.f32 0.0, %v1508
      %v1510 = vpop.f32.mrb[0].mxu0
      %v1511 = vadd.f32 0.0, %v1510
      %1512 = vmatprep.mubr.bf16.mxu0 0
      %1513 = vmatmul.mubr.bf16.gmra.mrb[0].mxu0 %v1442
      %v1514 = vpop.f32.mrb[0].mxu0
      %v1515 = vadd.f32 0.0, %v1514
      %v1516 = vpop.f32.mrb[0].mxu0
      %v1517 = vadd.f32 0.0, %v1516
      %v1518 = vpop.f32.mrb[0].mxu0
      %v1519 = vadd.f32 0.0, %v1518
      %v1520 = vpop.f32.mrb[0].mxu0
      %v1521 = vadd.f32 0.0, %v1520
      %1522 = vdwg.mxu0
      %v1523 = vadd.f32 %v1365, %v1485
      %v1524 = vadd.f32 %v1366, %v1487
      %v1525 = vadd.f32 %v1367, %v1489
      %v1526 = vadd.f32 %v1368, %v1491
      %v1527 = vadd.f32 %v1369, %v1495
      %v1528 = vadd.f32 %v1370, %v1497
      %v1529 = vadd.f32 %v1371, %v1499
      %v1530 = vadd.f32 %v1372, %v1501
      %v1531 = vadd.f32 %v1373, %v1505
      %v1532 = vadd.f32 %v1374, %v1507
      %v1533 = vadd.f32 %v1375, %v1509
      %v1534 = vadd.f32 %v1376, %v1511
      %v1535 = vadd.f32 %v1377, %v1515
      %v1536 = vadd.f32 %v1378, %v1517
      %v1537 = vadd.f32 %v1379, %v1519
      %v1538 = vadd.f32 %v1380, %v1521
      %1539 = vrot.lane.b32.xlu0 %v322, 111
      %v1540 = vpop.permute.xlu0 %1539
      %1541 = vrot.lane.b32.xlu0 %v323, 111
      %v1542 = vpop.permute.xlu0 %1541
      %vm1543 = vcmp.lt.s32.totalorder %v329, 111
      %v1544 = vsel %vm1543, %v1540, %v1542
      %v1545 = vsel %vm1543, %v1542, %v1540
      %v1547 = vlaneseq
      %v1548 = vshrl.u32 %v1547, 7
      %v1549 = vsub.s32 0, %v1548
      %v1550 = vrot.slane %v321, %v1549
      %v1551 = vlaneseq
      %v1552 = vshrl.u32 %v1551, 7
      %v1553 = vsub.s32 1, %v1552
      %v1554 = vrot.slane %v321, %v1553
      %v1557 = vmul.f32 %v1544, %v1550
      %v1558 = vmul.f32 %v1545, %v1554
      %s1559 = scalar_lea.vmem %s2, 256
      %v1560 = vld [vmem:[%s1559] sm:$0xf]
      %v1561 = vld [vmem:[%s1559 + $0x4] sm:$0xf]
      %v1562 = vld [vmem:[%s1559 + $0x8] sm:$0xf]
      %v1563 = vld [vmem:[%s1559 + $0xc] sm:$0xf]
      %v1564 = vld [vmem:[%s1559 + $0x10] sm:$0xf]
      %v1565 = vld [vmem:[%s1559 + $0x14] sm:$0xf]
      %v1566 = vld [vmem:[%s1559 + $0x18] sm:$0xf]
      %v1567 = vld [vmem:[%s1559 + $0x1c] sm:$0xf]
      %v1568 = vpack.c.bf16 %v1557, %v1557
      %v1569 = vpack.c.bf16 %v1558, %v1558
      %v1578 = vunpack.c.l.b16 %v1560
      %v1579 = vunpack.c.l.b16 %v1561
      %v1580 = vunpack.c.l.b16 %v1562
      %v1581 = vunpack.c.l.b16 %v1563
      %v1582 = vunpack.c.l.b16 %v1564
      %v1583 = vunpack.c.l.b16 %v1565
      %v1584 = vunpack.c.l.b16 %v1566
      %v1585 = vunpack.c.l.b16 %v1567
      %v1586 = vpack.c.b16 %v1579, %v1578
      %v1587 = vpack.c.b16 %v1581, %v1580
      %v1588 = vpack.c.b16 %v1583, %v1582
      %v1589 = vpack.c.b16 %v1585, %v1584
      %v1591 = vsel %vm407, %v1586, 0
      %v1594 = vsel %vm407, %v1587, 0
      %v1597 = vsel %vm407, %v1588, 0
      %v1600 = vsel %vm407, %v1589, 0
      %v1603 = vsel %vm420, %v1568, 0
      %v1606 = vsel %vm420, %v1569, 0
      %1608 = vmatprep.subr.bf16.mxu0 %v1606
      %1609 = vmatpush1.bf16.msra.mxu0 %v1603
      %1610 = vmatprep.subr.bf16.mxu0 0
      %1611 = vmatpush1.bf16.msra.mxu0 0
      %1612 = vmatprep.subr.bf16.mxu0 0
      %1613 = vmatpush1.bf16.msra.mxu0 0
      %1614 = vmatprep.subr.bf16.mxu0 0
      %1615 = vmatpush1.bf16.msra.mxu0 0
      %1616 = vmatprep.subr.bf16.mxu0 0
      %1617 = vmatpush1.bf16.msra.mxu0 0
      %1618 = vmatprep.subr.bf16.mxu0 0
      %1619 = vmatpush1.bf16.msra.mxu0 0
      %1620 = vmatprep.subr.bf16.mxu0 0
      %1621 = vmatpush1.bf16.msra.mxu0 0
      %1622 = vmatprep.subr.bf16.mxu0 0
      %1623 = vmatpush1.bf16.msra.mxu0 0
      %1624 = vmatprep.subr.bf16.mxu0 0
      %1625 = vmatpush1.bf16.msra.mxu0 0
      %1626 = vmatprep.subr.bf16.mxu0 0
      %1627 = vmatpush1.bf16.msra.mxu0 0
      %1628 = vmatprep.subr.bf16.mxu0 0
      %1629 = vmatpush1.bf16.msra.mxu0 0
      %1630 = vmatprep.subr.bf16.mxu0 0
      %1631 = vmatpush1.bf16.msra.mxu0 0
      %1632 = vmatprep.subr.bf16.mxu0 0
      %1633 = vmatpush1.bf16.msra.mxu0 0
      %1634 = vmatprep.subr.bf16.mxu0 0
      %1635 = vmatpush1.bf16.msra.mxu0 0
      %1636 = vmatprep.subr.bf16.mxu0 0
      %1637 = vmatpush1.bf16.msra.mxu0 0
      %1638 = vmatprep.subr.bf16.mxu0 0
      %1639 = vmatpush1.bf16.msra.mxu0 0
      %1640 = vmatprep.mubr.bf16.mxu0 0
      %1641 = vmatmul.mubr.bf16.gmra.mrb[0].mxu0 %v1591
      %v1642 = vpop.f32.mrb[0].mxu0
      %v1643 = vadd.f32 0.0, %v1642
      %v1644 = vpop.f32.mrb[0].mxu0
      %v1645 = vadd.f32 0.0, %v1644
      %v1646 = vpop.f32.mrb[0].mxu0
      %v1647 = vadd.f32 0.0, %v1646
      %v1648 = vpop.f32.mrb[0].mxu0
      %v1649 = vadd.f32 0.0, %v1648
      %1650 = vmatprep.mubr.bf16.mxu0 0
      %1651 = vmatmul.mubr.bf16.gmra.mrb[0].mxu0 %v1594
      %v1652 = vpop.f32.mrb[0].mxu0
      %v1653 = vadd.f32 0.0, %v1652
      %v1654 = vpop.f32.mrb[0].mxu0
      %v1655 = vadd.f32 0.0, %v1654
      %v1656 = vpop.f32.mrb[0].mxu0
      %v1657 = vadd.f32 0.0, %v1656
      %v1658 = vpop.f32.mrb[0].mxu0
      %v1659 = vadd.f32 0.0, %v1658
      %1660 = vmatprep.mubr.bf16.mxu0 0
      %1661 = vmatmul.mubr.bf16.gmra.mrb[0].mxu0 %v1597
      %v1662 = vpop.f32.mrb[0].mxu0
      %v1663 = vadd.f32 0.0, %v1662
      %v1664 = vpop.f32.mrb[0].mxu0
      %v1665 = vadd.f32 0.0, %v1664
      %v1666 = vpop.f32.mrb[0].mxu0
      %v1667 = vadd.f32 0.0, %v1666
      %v1668 = vpop.f32.mrb[0].mxu0
      %v1669 = vadd.f32 0.0, %v1668
      %1670 = vmatprep.mubr.bf16.mxu0 0
      %1671 = vmatmul.mubr.bf16.gmra.mrb[0].mxu0 %v1600
      %v1672 = vpop.f32.mrb[0].mxu0
      %v1673 = vadd.f32 0.0, %v1672
      %v1674 = vpop.f32.mrb[0].mxu0
      %v1675 = vadd.f32 0.0, %v1674
      %v1676 = vpop.f32.mrb[0].mxu0
      %v1677 = vadd.f32 0.0, %v1676
      %v1678 = vpop.f32.mrb[0].mxu0
      %v1679 = vadd.f32 0.0, %v1678
      %1680 = vdwg.mxu0
      %v1681 = vadd.f32 %v1523, %v1643
      %v1682 = vadd.f32 %v1524, %v1645
      %v1683 = vadd.f32 %v1525, %v1647
      %v1684 = vadd.f32 %v1526, %v1649
      %v1685 = vadd.f32 %v1527, %v1653
      %v1686 = vadd.f32 %v1528, %v1655
      %v1687 = vadd.f32 %v1529, %v1657
      %v1688 = vadd.f32 %v1530, %v1659
      %v1689 = vadd.f32 %v1531, %v1663
      %v1690 = vadd.f32 %v1532, %v1665
      %v1691 = vadd.f32 %v1533, %v1667
      %v1692 = vadd.f32 %v1534, %v1669
      %v1693 = vadd.f32 %v1535, %v1673
      %v1694 = vadd.f32 %v1536, %v1675
      %v1695 = vadd.f32 %v1537, %v1677
      %v1696 = vadd.f32 %v1538, %v1679
      %v1697 = vld [vmem:[%s3] sm:$0xff]
      %v1698 = vld [vmem:[%s3 + $0x8] sm:$0xff]
      %v1699 = vld [vmem:[%s3 + $0x10] sm:$0xff]
      %v1700 = vld [vmem:[%s3 + $0x18] sm:$0xff]
      %v1701 = vld [vmem:[%s3 + $0x20] sm:$0xff]
      %v1702 = vld [vmem:[%s3 + $0x28] sm:$0xff]
      %v1703 = vld [vmem:[%s3 + $0x30] sm:$0xff]
      %v1704 = vld [vmem:[%s3 + $0x38] sm:$0xff]
      %1706 = vset.pattern.permute.xlu0 0
      %1707 = vperm.xlu0 %1706, %v1697
      %v1708 = vpop.permute.xlu0 %1707
      %1711 = vset.pattern.permute.xlu0 0
      %1712 = vperm.xlu0 %1711, %v1698
      %v1713 = vpop.permute.xlu0 %1712
      %1716 = vset.pattern.permute.xlu0 0
      %1717 = vperm.xlu0 %1716, %v1699
      %v1718 = vpop.permute.xlu0 %1717
      %1721 = vset.pattern.permute.xlu0 0
      %1722 = vperm.xlu0 %1721, %v1700
      %v1723 = vpop.permute.xlu0 %1722
      %1726 = vset.pattern.permute.xlu0 0
      %1727 = vperm.xlu0 %1726, %v1701
      %v1728 = vpop.permute.xlu0 %1727
      %1731 = vset.pattern.permute.xlu0 0
      %1732 = vperm.xlu0 %1731, %v1702
      %v1733 = vpop.permute.xlu0 %1732
      %1736 = vset.pattern.permute.xlu0 0
      %1737 = vperm.xlu0 %1736, %v1703
      %v1738 = vpop.permute.xlu0 %1737
      %1741 = vset.pattern.permute.xlu0 0
      %1742 = vperm.xlu0 %1741, %v1704
      %v1743 = vpop.permute.xlu0 %1742
      %v1745 = vadd.f32 %v1681, %v1708
      %v1746 = vadd.f32 %v1682, %v1708
      %v1747 = vadd.f32 %v1683, %v1713
      %v1748 = vadd.f32 %v1684, %v1713
      %v1749 = vadd.f32 %v1685, %v1718
      %v1750 = vadd.f32 %v1686, %v1718
      %v1751 = vadd.f32 %v1687, %v1723
      %v1752 = vadd.f32 %v1688, %v1723
      %v1753 = vadd.f32 %v1689, %v1728
      %v1754 = vadd.f32 %v1690, %v1728
      %v1755 = vadd.f32 %v1691, %v1733
      %v1756 = vadd.f32 %v1692, %v1733
      %v1757 = vadd.f32 %v1693, %v1738
      %v1758 = vadd.f32 %v1694, %v1738
      %v1759 = vadd.f32 %v1695, %v1743
      %v1760 = vadd.f32 %v1696, %v1743
      %v1761 = vmax.f32 %v1745, 0.0
      %v1762 = vmax.f32 %v1746, 0.0
      %v1763 = vmax.f32 %v1747, 0.0
      %v1764 = vmax.f32 %v1748, 0.0
      %v1765 = vmax.f32 %v1749, 0.0
      %v1766 = vmax.f32 %v1750, 0.0
      %v1767 = vmax.f32 %v1751, 0.0
      %v1768 = vmax.f32 %v1752, 0.0
      %v1769 = vmax.f32 %v1753, 0.0
      %v1770 = vmax.f32 %v1754, 0.0
      %v1771 = vmax.f32 %v1755, 0.0
      %v1772 = vmax.f32 %v1756, 0.0
      %v1773 = vmax.f32 %v1757, 0.0
      %v1774 = vmax.f32 %v1758, 0.0
      %v1775 = vmax.f32 %v1759, 0.0
      %v1776 = vmax.f32 %v1760, 0.0
      %1777 = vrot.lane.b32.xlu0 %v1761, 17
      %v1778 = vpop.permute.xlu0 %1777
      %1779 = vrot.lane.b32.xlu0 %v1763, 17
      %v1780 = vpop.permute.xlu0 %1779
      %1781 = vrot.lane.b32.xlu0 %v1765, 17
      %v1782 = vpop.permute.xlu0 %1781
      %1783 = vrot.lane.b32.xlu0 %v1767, 17
      %v1784 = vpop.permute.xlu0 %1783
      %1785 = vrot.lane.b32.xlu0 %v1769, 17
      %v1786 = vpop.permute.xlu0 %1785
      %1787 = vrot.lane.b32.xlu0 %v1771, 17
      %v1788 = vpop.permute.xlu0 %1787
      %1789 = vrot.lane.b32.xlu0 %v1773, 17
      %v1790 = vpop.permute.xlu0 %1789
      %1791 = vrot.lane.b32.xlu0 %v1775, 17
      %v1792 = vpop.permute.xlu0 %1791
      %1793 = vrot.lane.b32.xlu0 %v1762, 17
      %v1794 = vpop.permute.xlu0 %1793
      %1795 = vrot.lane.b32.xlu0 %v1764, 17
      %v1796 = vpop.permute.xlu0 %1795
      %1797 = vrot.lane.b32.xlu0 %v1766, 17
      %v1798 = vpop.permute.xlu0 %1797
      %1799 = vrot.lane.b32.xlu0 %v1768, 17
      %v1800 = vpop.permute.xlu0 %1799
      %1801 = vrot.lane.b32.xlu0 %v1770, 17
      %v1802 = vpop.permute.xlu0 %1801
      %1803 = vrot.lane.b32.xlu0 %v1772, 17
      %v1804 = vpop.permute.xlu0 %1803
      %1805 = vrot.lane.b32.xlu0 %v1774, 17
      %v1806 = vpop.permute.xlu0 %1805
      %1807 = vrot.lane.b32.xlu0 %v1776, 17
      %v1808 = vpop.permute.xlu0 %1807
      %v1809 = vsel %vm330, %v1778, %v1794
      %v1810 = vsel %vm330, %v1780, %v1796
      %v1811 = vsel %vm330, %v1782, %v1798
      %v1812 = vsel %vm330, %v1784, %v1800
      %v1813 = vsel %vm330, %v1786, %v1802
      %v1814 = vsel %vm330, %v1788, %v1804
      %v1815 = vsel %vm330, %v1790, %v1806
      %v1816 = vsel %vm330, %v1792, %v1808
      %v1817 = vsel %vm330, %v1794, %v1778
      %v1818 = vsel %vm330, %v1796, %v1780
      %v1819 = vsel %vm330, %v1798, %v1782
      %v1820 = vsel %vm330, %v1800, %v1784
      %v1821 = vsel %vm330, %v1802, %v1786
      %v1822 = vsel %vm330, %v1804, %v1788
      %v1823 = vsel %vm330, %v1806, %v1790
      %v1824 = vsel %vm330, %v1808, %v1792
      %v1825 = vmul.f32 %v1817, %v337
      %v1826 = vmul.f32 %v1809, %v341
      %v1827 = vmul.f32 %v1818, %v337
      %v1828 = vmul.f32 %v1810, %v341
      %v1829 = vmul.f32 %v1819, %v337
      %v1830 = vmul.f32 %v1811, %v341
      %v1831 = vmul.f32 %v1820, %v337
      %v1832 = vmul.f32 %v1812, %v341
      %v1833 = vmul.f32 %v1821, %v337
      %v1834 = vmul.f32 %v1813, %v341
      %v1835 = vmul.f32 %v1822, %v337
      %v1836 = vmul.f32 %v1814, %v341
      %v1837 = vmul.f32 %v1823, %v337
      %v1838 = vmul.f32 %v1815, %v341
      %v1839 = vmul.f32 %v1824, %v337
      %v1840 = vmul.f32 %v1816, %v341
      %v1841 = vld [vmem:[%s4] sm:$0xf]
      %v1842 = vld [vmem:[%s4 + $0x4] sm:$0xf]
      %v1843 = vld [vmem:[%s4 + $0x8] sm:$0xf]
      %v1844 = vld [vmem:[%s4 + $0xc] sm:$0xf]
      %v1845 = vld [vmem:[%s4 + $0x10] sm:$0xf]
      %v1846 = vld [vmem:[%s4 + $0x14] sm:$0xf]
      %v1847 = vld [vmem:[%s4 + $0x18] sm:$0xf]
      %v1848 = vld [vmem:[%s4 + $0x1c] sm:$0xf]
      %v1849 = vpack.c.bf16 %v1827, %v1825
      %v1850 = vpack.c.bf16 %v1828, %v1826
      %v1851 = vpack.c.bf16 %v1831, %v1829
      %v1852 = vpack.c.bf16 %v1832, %v1830
      %v1853 = vpack.c.bf16 %v1835, %v1833
      %v1854 = vpack.c.bf16 %v1836, %v1834
      %v1855 = vpack.c.bf16 %v1839, %v1837
      %v1856 = vpack.c.bf16 %v1840, %v1838
      %1857 = vrot.lane.b32.xlu0 %v1761, 16
      %v1858 = vpop.permute.xlu0 %1857
      %1859 = vrot.lane.b32.xlu0 %v1763, 16
      %v1860 = vpop.permute.xlu0 %1859
      %1861 = vrot.lane.b32.xlu0 %v1765, 16
      %v1862 = vpop.permute.xlu0 %1861
      %1863 = vrot.lane.b32.xlu0 %v1767, 16
      %v1864 = vpop.permute.xlu0 %1863
      %1865 = vrot.lane.b32.xlu0 %v1769, 16
      %v1866 = vpop.permute.xlu0 %1865
      %1867 = vrot.lane.b32.xlu0 %v1771, 16
      %v1868 = vpop.permute.xlu0 %1867
      %1869 = vrot.lane.b32.xlu0 %v1773, 16
      %v1870 = vpop.permute.xlu0 %1869
      %1871 = vrot.lane.b32.xlu0 %v1775, 16
      %v1872 = vpop.permute.xlu0 %1871
      %1873 = vrot.lane.b32.xlu0 %v1762, 16
      %v1874 = vpop.permute.xlu0 %1873
      %1875 = vrot.lane.b32.xlu0 %v1764, 16
      %v1876 = vpop.permute.xlu0 %1875
      %1877 = vrot.lane.b32.xlu0 %v1766, 16
      %v1878 = vpop.permute.xlu0 %1877
      %1879 = vrot.lane.b32.xlu0 %v1768, 16
      %v1880 = vpop.permute.xlu0 %1879
      %1881 = vrot.lane.b32.xlu0 %v1770, 16
      %v1882 = vpop.permute.xlu0 %1881
      %1883 = vrot.lane.b32.xlu0 %v1772, 16
      %v1884 = vpop.permute.xlu0 %1883
      %1885 = vrot.lane.b32.xlu0 %v1774, 16
      %v1886 = vpop.permute.xlu0 %1885
      %1887 = vrot.lane.b32.xlu0 %v1776, 16
      %v1888 = vpop.permute.xlu0 %1887
      %v1889 = vsel %vm360, %v1858, %v1874
      %v1890 = vsel %vm360, %v1860, %v1876
      %v1891 = vsel %vm360, %v1862, %v1878
      %v1892 = vsel %vm360, %v1864, %v1880
      %v1893 = vsel %vm360, %v1866, %v1882
      %v1894 = vsel %vm360, %v1868, %v1884
      %v1895 = vsel %vm360, %v1870, %v1886
      %v1896 = vsel %vm360, %v1872, %v1888
      %v1897 = vsel %vm360, %v1874, %v1858
      %v1898 = vsel %vm360, %v1876, %v1860
      %v1899 = vsel %vm360, %v1878, %v1862
      %v1900 = vsel %vm360, %v1880, %v1864
      %v1901 = vsel %vm360, %v1882, %v1866
      %v1902 = vsel %vm360, %v1884, %v1868
      %v1903 = vsel %vm360, %v1886, %v1870
      %v1904 = vsel %vm360, %v1888, %v1872
      %v1905 = vmul.f32 %v1897, %v367
      %v1906 = vmul.f32 %v1889, %v371
      %v1907 = vmul.f32 %v1898, %v367
      %v1908 = vmul.f32 %v1890, %v371
      %v1909 = vmul.f32 %v1899, %v367
      %v1910 = vmul.f32 %v1891, %v371
      %v1911 = vmul.f32 %v1900, %v367
      %v1912 = vmul.f32 %v1892, %v371
      %v1913 = vmul.f32 %v1901, %v367
      %v1914 = vmul.f32 %v1893, %v371
      %v1915 = vmul.f32 %v1902, %v367
      %v1916 = vmul.f32 %v1894, %v371
      %v1917 = vmul.f32 %v1903, %v367
      %v1918 = vmul.f32 %v1895, %v371
      %v1919 = vmul.f32 %v1904, %v367
      %v1920 = vmul.f32 %v1896, %v371
      %s1921 = scalar_lea.vmem %s4, 32
      %v1922 = vld [vmem:[%s1921] sm:$0xf]
      %v1923 = vld [vmem:[%s1921 + $0x4] sm:$0xf]
      %v1924 = vld [vmem:[%s1921 + $0x8] sm:$0xf]
      %v1925 = vld [vmem:[%s1921 + $0xc] sm:$0xf]
      %v1926 = vld [vmem:[%s1921 + $0x10] sm:$0xf]
      %v1927 = vld [vmem:[%s1921 + $0x14] sm:$0xf]
      %v1928 = vld [vmem:[%s1921 + $0x18] sm:$0xf]
      %v1929 = vld [vmem:[%s1921 + $0x1c] sm:$0xf]
      %v1930 = vpack.c.bf16 %v1907, %v1905
      %v1931 = vpack.c.bf16 %v1908, %v1906
      %v1932 = vpack.c.bf16 %v1911, %v1909
      %v1933 = vpack.c.bf16 %v1912, %v1910
      %v1934 = vpack.c.bf16 %v1915, %v1913
      %v1935 = vpack.c.bf16 %v1916, %v1914
      %v1936 = vpack.c.bf16 %v1919, %v1917
      %v1937 = vpack.c.bf16 %v1920, %v1918
      %v1946 = vunpack.c.l.b16 %v1922
      %v1947 = vunpack.c.l.b16 %v1923
      %v1948 = vunpack.c.l.b16 %v1924
      %v1949 = vunpack.c.l.b16 %v1925
      %v1950 = vunpack.c.l.b16 %v1926
      %v1951 = vunpack.c.l.b16 %v1927
      %v1952 = vunpack.c.l.b16 %v1928
      %v1953 = vunpack.c.l.b16 %v1929
      %v1954 = vpack.c.b16 %v1947, %v1946
      %v1955 = vpack.c.b16 %v1949, %v1948
      %v1956 = vpack.c.b16 %v1951, %v1950
      %v1957 = vpack.c.b16 %v1953, %v1952
      %vm1958 = vcmask 523264
      %v1960 = vsel %vm1958, %v1954, 0
      %v1963 = vsel %vm1958, %v1955, 0
      %v1966 = vsel %vm1958, %v1956, 0
      %v1969 = vsel %vm1958, %v1957, 0
      %1971 = vmatprep.subr.bf16.mxu0 %v1931
      %1972 = vmatpush1.bf16.msra.mxu0 %v1930
      %1973 = vmatprep.subr.bf16.mxu0 %v1933
      %1974 = vmatpush1.bf16.msra.mxu0 %v1932
      %1975 = vmatprep.subr.bf16.mxu0 %v1935
      %1976 = vmatpush1.bf16.msra.mxu0 %v1934
      %1977 = vmatprep.subr.bf16.mxu0 %v1937
      %1978 = vmatpush1.bf16.msra.mxu0 %v1936
      %1979 = vmatprep.subr.bf16.mxu0 0
      %1980 = vmatpush1.bf16.msra.mxu0 0
      %1981 = vmatprep.subr.bf16.mxu0 0
      %1982 = vmatpush1.bf16.msra.mxu0 0
      %1983 = vmatprep.subr.bf16.mxu0 0
      %1984 = vmatpush1.bf16.msra.mxu0 0
      %1985 = vmatprep.subr.bf16.mxu0 0
      %1986 = vmatpush1.bf16.msra.mxu0 0
      %1987 = vmatprep.subr.bf16.mxu0 0
      %1988 = vmatpush1.bf16.msra.mxu0 0
      %1989 = vmatprep.subr.bf16.mxu0 0
      %1990 = vmatpush1.bf16.msra.mxu0 0
      %1991 = vmatprep.subr.bf16.mxu0 0
      %1992 = vmatpush1.bf16.msra.mxu0 0
      %1993 = vmatprep.subr.bf16.mxu0 0
      %1994 = vmatpush1.bf16.msra.mxu0 0
      %1995 = vmatprep.subr.bf16.mxu0 0
      %1996 = vmatpush1.bf16.msra.mxu0 0
      %1997 = vmatprep.subr.bf16.mxu0 0
      %1998 = vmatpush1.bf16.msra.mxu0 0
      %1999 = vmatprep.subr.bf16.mxu0 0
      %2000 = vmatpush1.bf16.msra.mxu0 0
      %2001 = vmatprep.subr.bf16.mxu0 0
      %2002 = vmatpush1.bf16.msra.mxu0 0
      %2003 = vmatprep.mubr.bf16.mxu0 0
      %2004 = vmatmul.mubr.bf16.gmra.mrb[0].mxu0 %v1960
      %v2005 = vpop.f32.mrb[0].mxu0
      %v2006 = vadd.f32 0.0, %v2005
      %v2007 = vpop.f32.mrb[0].mxu0
      %v2008 = vadd.f32 0.0, %v2007
      %v2009 = vpop.f32.mrb[0].mxu0
      %v2010 = vadd.f32 0.0, %v2009
      %v2011 = vpop.f32.mrb[0].mxu0
      %v2012 = vadd.f32 0.0, %v2011
      %2013 = vmatprep.mubr.bf16.mxu0 0
      %2014 = vmatmul.mubr.bf16.gmra.mrb[0].mxu0 %v1963
      %v2015 = vpop.f32.mrb[0].mxu0
      %v2016 = vadd.f32 0.0, %v2015
      %v2017 = vpop.f32.mrb[0].mxu0
      %v2018 = vadd.f32 0.0, %v2017
      %v2019 = vpop.f32.mrb[0].mxu0
      %v2020 = vadd.f32 0.0, %v2019
      %v2021 = vpop.f32.mrb[0].mxu0
      %v2022 = vadd.f32 0.0, %v2021
      %2023 = vmatprep.mubr.bf16.mxu0 0
      %2024 = vmatmul.mubr.bf16.gmra.mrb[0].mxu0 %v1966
      %v2025 = vpop.f32.mrb[0].mxu0
      %v2026 = vadd.f32 0.0, %v2025
      %v2027 = vpop.f32.mrb[0].mxu0
      %v2028 = vadd.f32 0.0, %v2027
      %v2029 = vpop.f32.mrb[0].mxu0
      %v2030 = vadd.f32 0.0, %v2029
      %v2031 = vpop.f32.mrb[0].mxu0
      %v2032 = vadd.f32 0.0, %v2031
      %2033 = vmatprep.mubr.bf16.mxu0 0
      %2034 = vmatmul.mubr.bf16.gmra.mrb[0].mxu0 %v1969
      %v2035 = vpop.f32.mrb[0].mxu0
      %v2036 = vadd.f32 0.0, %v2035
      %v2037 = vpop.f32.mrb[0].mxu0
      %v2038 = vadd.f32 0.0, %v2037
      %v2039 = vpop.f32.mrb[0].mxu0
      %v2040 = vadd.f32 0.0, %v2039
      %v2041 = vpop.f32.mrb[0].mxu0
      %v2042 = vadd.f32 0.0, %v2041
      %2043 = vdwg.mxu0
      %v2052 = vunpack.c.l.b16 %v1841
      %v2053 = vunpack.c.l.b16 %v1842
      %v2054 = vunpack.c.l.b16 %v1843
      %v2055 = vunpack.c.l.b16 %v1844
      %v2056 = vunpack.c.l.b16 %v1845
      %v2057 = vunpack.c.l.b16 %v1846
      %v2058 = vunpack.c.l.b16 %v1847
      %v2059 = vunpack.c.l.b16 %v1848
      %v2060 = vpack.c.b16 %v2053, %v2052
      %v2061 = vpack.c.b16 %v2055, %v2054
      %v2062 = vpack.c.b16 %v2057, %v2056
      %v2063 = vpack.c.b16 %v2059, %v2058
      %v2065 = vsel %vm1958, %v2060, 0
      %v2068 = vsel %vm1958, %v2061, 0
      %v2071 = vsel %vm1958, %v2062, 0
      %v2074 = vsel %vm1958, %v2063, 0
      %2076 = vmatprep.subr.bf16.mxu0 %v1850
      %2077 = vmatpush1.bf16.msra.mxu0 %v1849
      %2078 = vmatprep.subr.bf16.mxu0 %v1852
      %2079 = vmatpush1.bf16.msra.mxu0 %v1851
      %2080 = vmatprep.subr.bf16.mxu0 %v1854
      %2081 = vmatpush1.bf16.msra.mxu0 %v1853
      %2082 = vmatprep.subr.bf16.mxu0 %v1856
      %2083 = vmatpush1.bf16.msra.mxu0 %v1855
      %2084 = vmatprep.subr.bf16.mxu0 0
      %2085 = vmatpush1.bf16.msra.mxu0 0
      %2086 = vmatprep.subr.bf16.mxu0 0
      %2087 = vmatpush1.bf16.msra.mxu0 0
      %2088 = vmatprep.subr.bf16.mxu0 0
      %2089 = vmatpush1.bf16.msra.mxu0 0
      %2090 = vmatprep.subr.bf16.mxu0 0
      %2091 = vmatpush1.bf16.msra.mxu0 0
      %2092 = vmatprep.subr.bf16.mxu0 0
      %2093 = vmatpush1.bf16.msra.mxu0 0
      %2094 = vmatprep.subr.bf16.mxu0 0
      %2095 = vmatpush1.bf16.msra.mxu0 0
      %2096 = vmatprep.subr.bf16.mxu0 0
      %2097 = vmatpush1.bf16.msra.mxu0 0
      %2098 = vmatprep.subr.bf16.mxu0 0
      %2099 = vmatpush1.bf16.msra.mxu0 0
      %2100 = vmatprep.subr.bf16.mxu0 0
      %2101 = vmatpush1.bf16.msra.mxu0 0
      %2102 = vmatprep.subr.bf16.mxu0 0
      %2103 = vmatpush1.bf16.msra.mxu0 0
      %2104 = vmatprep.subr.bf16.mxu0 0
      %2105 = vmatpush1.bf16.msra.mxu0 0
      %2106 = vmatprep.subr.bf16.mxu0 0
      %2107 = vmatpush1.bf16.msra.mxu0 0
      %2108 = vmatprep.mubr.bf16.mxu0 0
      %2109 = vmatmul.mubr.bf16.gmra.mrb[0].mxu0 %v2065
      %v2110 = vpop.f32.mrb[0].mxu0
      %v2111 = vadd.f32 %v2006, %v2110
      %v2112 = vpop.f32.mrb[0].mxu0
      %v2113 = vadd.f32 %v2008, %v2112
      %v2114 = vpop.f32.mrb[0].mxu0
      %v2115 = vadd.f32 %v2010, %v2114
      %v2116 = vpop.f32.mrb[0].mxu0
      %v2117 = vadd.f32 %v2012, %v2116
      %2118 = vmatprep.mubr.bf16.mxu0 0
      %2119 = vmatmul.mubr.bf16.gmra.mrb[0].mxu0 %v2068
      %v2120 = vpop.f32.mrb[0].mxu0
      %v2121 = vadd.f32 %v2016, %v2120
      %v2122 = vpop.f32.mrb[0].mxu0
      %v2123 = vadd.f32 %v2018, %v2122
      %v2124 = vpop.f32.mrb[0].mxu0
      %v2125 = vadd.f32 %v2020, %v2124
      %v2126 = vpop.f32.mrb[0].mxu0
      %v2127 = vadd.f32 %v2022, %v2126
      %2128 = vmatprep.mubr.bf16.mxu0 0
      %2129 = vmatmul.mubr.bf16.gmra.mrb[0].mxu0 %v2071
      %v2130 = vpop.f32.mrb[0].mxu0
      %v2131 = vadd.f32 %v2026, %v2130
      %v2132 = vpop.f32.mrb[0].mxu0
      %v2133 = vadd.f32 %v2028, %v2132
      %v2134 = vpop.f32.mrb[0].mxu0
      %v2135 = vadd.f32 %v2030, %v2134
      %v2136 = vpop.f32.mrb[0].mxu0
      %v2137 = vadd.f32 %v2032, %v2136
      %2138 = vmatprep.mubr.bf16.mxu0 0
      %2139 = vmatmul.mubr.bf16.gmra.mrb[0].mxu0 %v2074
      %v2140 = vpop.f32.mrb[0].mxu0
      %v2141 = vadd.f32 %v2036, %v2140
      %v2142 = vpop.f32.mrb[0].mxu0
      %v2143 = vadd.f32 %v2038, %v2142
      %v2144 = vpop.f32.mrb[0].mxu0
      %v2145 = vadd.f32 %v2040, %v2144
      %v2146 = vpop.f32.mrb[0].mxu0
      %v2147 = vadd.f32 %v2042, %v2146
      %2148 = vdwg.mxu0
      %2149 = vrot.lane.b32.xlu0 %v1761, 15
      %v2150 = vpop.permute.xlu0 %2149
      %2151 = vrot.lane.b32.xlu0 %v1763, 15
      %v2152 = vpop.permute.xlu0 %2151
      %2153 = vrot.lane.b32.xlu0 %v1765, 15
      %v2154 = vpop.permute.xlu0 %2153
      %2155 = vrot.lane.b32.xlu0 %v1767, 15
      %v2156 = vpop.permute.xlu0 %2155
      %2157 = vrot.lane.b32.xlu0 %v1769, 15
      %v2158 = vpop.permute.xlu0 %2157
      %2159 = vrot.lane.b32.xlu0 %v1771, 15
      %v2160 = vpop.permute.xlu0 %2159
      %2161 = vrot.lane.b32.xlu0 %v1773, 15
      %v2162 = vpop.permute.xlu0 %2161
      %2163 = vrot.lane.b32.xlu0 %v1775, 15
      %v2164 = vpop.permute.xlu0 %2163
      %2165 = vrot.lane.b32.xlu0 %v1762, 15
      %v2166 = vpop.permute.xlu0 %2165
      %2167 = vrot.lane.b32.xlu0 %v1764, 15
      %v2168 = vpop.permute.xlu0 %2167
      %2169 = vrot.lane.b32.xlu0 %v1766, 15
      %v2170 = vpop.permute.xlu0 %2169
      %2171 = vrot.lane.b32.xlu0 %v1768, 15
      %v2172 = vpop.permute.xlu0 %2171
      %2173 = vrot.lane.b32.xlu0 %v1770, 15
      %v2174 = vpop.permute.xlu0 %2173
      %2175 = vrot.lane.b32.xlu0 %v1772, 15
      %v2176 = vpop.permute.xlu0 %2175
      %2177 = vrot.lane.b32.xlu0 %v1774, 15
      %v2178 = vpop.permute.xlu0 %2177
      %2179 = vrot.lane.b32.xlu0 %v1776, 15
      %v2180 = vpop.permute.xlu0 %2179
      %v2181 = vsel %vm615, %v2150, %v2166
      %v2182 = vsel %vm615, %v2152, %v2168
      %v2183 = vsel %vm615, %v2154, %v2170
      %v2184 = vsel %vm615, %v2156, %v2172
      %v2185 = vsel %vm615, %v2158, %v2174
      %v2186 = vsel %vm615, %v2160, %v2176
      %v2187 = vsel %vm615, %v2162, %v2178
      %v2188 = vsel %vm615, %v2164, %v2180
      %v2189 = vsel %vm615, %v2166, %v2150
      %v2190 = vsel %vm615, %v2168, %v2152
      %v2191 = vsel %vm615, %v2170, %v2154
      %v2192 = vsel %vm615, %v2172, %v2156
      %v2193 = vsel %vm615, %v2174, %v2158
      %v2194 = vsel %vm615, %v2176, %v2160
      %v2195 = vsel %vm615, %v2178, %v2162
      %v2196 = vsel %vm615, %v2180, %v2164
      %v2197 = vmul.f32 %v2189, %v622
      %v2198 = vmul.f32 %v2181, %v626
      %v2199 = vmul.f32 %v2190, %v622
      %v2200 = vmul.f32 %v2182, %v626
      %v2201 = vmul.f32 %v2191, %v622
      %v2202 = vmul.f32 %v2183, %v626
      %v2203 = vmul.f32 %v2192, %v622
      %v2204 = vmul.f32 %v2184, %v626
      %v2205 = vmul.f32 %v2193, %v622
      %v2206 = vmul.f32 %v2185, %v626
      %v2207 = vmul.f32 %v2194, %v622
      %v2208 = vmul.f32 %v2186, %v626
      %v2209 = vmul.f32 %v2195, %v622
      %v2210 = vmul.f32 %v2187, %v626
      %v2211 = vmul.f32 %v2196, %v622
      %v2212 = vmul.f32 %v2188, %v626
      %s2213 = scalar_lea.vmem %s4, 64
      %v2214 = vld [vmem:[%s2213] sm:$0xf]
      %v2215 = vld [vmem:[%s2213 + $0x4] sm:$0xf]
      %v2216 = vld [vmem:[%s2213 + $0x8] sm:$0xf]
      %v2217 = vld [vmem:[%s2213 + $0xc] sm:$0xf]
      %v2218 = vld [vmem:[%s2213 + $0x10] sm:$0xf]
      %v2219 = vld [vmem:[%s2213 + $0x14] sm:$0xf]
      %v2220 = vld [vmem:[%s2213 + $0x18] sm:$0xf]
      %v2221 = vld [vmem:[%s2213 + $0x1c] sm:$0xf]
      %v2222 = vpack.c.bf16 %v2199, %v2197
      %v2223 = vpack.c.bf16 %v2200, %v2198
      %v2224 = vpack.c.bf16 %v2203, %v2201
      %v2225 = vpack.c.bf16 %v2204, %v2202
      %v2226 = vpack.c.bf16 %v2207, %v2205
      %v2227 = vpack.c.bf16 %v2208, %v2206
      %v2228 = vpack.c.bf16 %v2211, %v2209
      %v2229 = vpack.c.bf16 %v2212, %v2210
      %v2238 = vunpack.c.l.b16 %v2214
      %v2239 = vunpack.c.l.b16 %v2215
      %v2240 = vunpack.c.l.b16 %v2216
      %v2241 = vunpack.c.l.b16 %v2217
      %v2242 = vunpack.c.l.b16 %v2218
      %v2243 = vunpack.c.l.b16 %v2219
      %v2244 = vunpack.c.l.b16 %v2220
      %v2245 = vunpack.c.l.b16 %v2221
      %v2246 = vpack.c.b16 %v2239, %v2238
      %v2247 = vpack.c.b16 %v2241, %v2240
      %v2248 = vpack.c.b16 %v2243, %v2242
      %v2249 = vpack.c.b16 %v2245, %v2244
      %v2251 = vsel %vm1958, %v2246, 0
      %v2254 = vsel %vm1958, %v2247, 0
      %v2257 = vsel %vm1958, %v2248, 0
      %v2260 = vsel %vm1958, %v2249, 0
      %2262 = vmatprep.subr.bf16.mxu0 %v2223
      %2263 = vmatpush1.bf16.msra.mxu0 %v2222
      %2264 = vmatprep.subr.bf16.mxu0 %v2225
      %2265 = vmatpush1.bf16.msra.mxu0 %v2224
      %2266 = vmatprep.subr.bf16.mxu0 %v2227
      %2267 = vmatpush1.bf16.msra.mxu0 %v2226
      %2268 = vmatprep.subr.bf16.mxu0 %v2229
      %2269 = vmatpush1.bf16.msra.mxu0 %v2228
      %2270 = vmatprep.subr.bf16.mxu0 0
      %2271 = vmatpush1.bf16.msra.mxu0 0
      %2272 = vmatprep.subr.bf16.mxu0 0
      %2273 = vmatpush1.bf16.msra.mxu0 0
      %2274 = vmatprep.subr.bf16.mxu0 0
      %2275 = vmatpush1.bf16.msra.mxu0 0
      %2276 = vmatprep.subr.bf16.mxu0 0
      %2277 = vmatpush1.bf16.msra.mxu0 0
      %2278 = vmatprep.subr.bf16.mxu0 0
      %2279 = vmatpush1.bf16.msra.mxu0 0
      %2280 = vmatprep.subr.bf16.mxu0 0
      %2281 = vmatpush1.bf16.msra.mxu0 0
      %2282 = vmatprep.subr.bf16.mxu0 0
      %2283 = vmatpush1.bf16.msra.mxu0 0
      %2284 = vmatprep.subr.bf16.mxu0 0
      %2285 = vmatpush1.bf16.msra.mxu0 0
      %2286 = vmatprep.subr.bf16.mxu0 0
      %2287 = vmatpush1.bf16.msra.mxu0 0
      %2288 = vmatprep.subr.bf16.mxu0 0
      %2289 = vmatpush1.bf16.msra.mxu0 0
      %2290 = vmatprep.subr.bf16.mxu0 0
      %2291 = vmatpush1.bf16.msra.mxu0 0
      %2292 = vmatprep.subr.bf16.mxu0 0
      %2293 = vmatpush1.bf16.msra.mxu0 0
      %2294 = vmatprep.mubr.bf16.mxu0 0
      %2295 = vmatmul.mubr.bf16.gmra.mrb[0].mxu0 %v2251
      %v2296 = vpop.f32.mrb[0].mxu0
      %v2297 = vadd.f32 0.0, %v2296
      %v2298 = vpop.f32.mrb[0].mxu0
      %v2299 = vadd.f32 0.0, %v2298
      %v2300 = vpop.f32.mrb[0].mxu0
      %v2301 = vadd.f32 0.0, %v2300
      %v2302 = vpop.f32.mrb[0].mxu0
      %v2303 = vadd.f32 0.0, %v2302
      %2304 = vmatprep.mubr.bf16.mxu0 0
      %2305 = vmatmul.mubr.bf16.gmra.mrb[0].mxu0 %v2254
      %v2306 = vpop.f32.mrb[0].mxu0
      %v2307 = vadd.f32 0.0, %v2306
      %v2308 = vpop.f32.mrb[0].mxu0
      %v2309 = vadd.f32 0.0, %v2308
      %v2310 = vpop.f32.mrb[0].mxu0
      %v2311 = vadd.f32 0.0, %v2310
      %v2312 = vpop.f32.mrb[0].mxu0
      %v2313 = vadd.f32 0.0, %v2312
      %2314 = vmatprep.mubr.bf16.mxu0 0
      %2315 = vmatmul.mubr.bf16.gmra.mrb[0].mxu0 %v2257
      %v2316 = vpop.f32.mrb[0].mxu0
      %v2317 = vadd.f32 0.0, %v2316
      %v2318 = vpop.f32.mrb[0].mxu0
      %v2319 = vadd.f32 0.0, %v2318
      %v2320 = vpop.f32.mrb[0].mxu0
      %v2321 = vadd.f32 0.0, %v2320
      %v2322 = vpop.f32.mrb[0].mxu0
      %v2323 = vadd.f32 0.0, %v2322
      %2324 = vmatprep.mubr.bf16.mxu0 0
      %2325 = vmatmul.mubr.bf16.gmra.mrb[0].mxu0 %v2260
      %v2326 = vpop.f32.mrb[0].mxu0
      %v2327 = vadd.f32 0.0, %v2326
      %v2328 = vpop.f32.mrb[0].mxu0
      %v2329 = vadd.f32 0.0, %v2328
      %v2330 = vpop.f32.mrb[0].mxu0
      %v2331 = vadd.f32 0.0, %v2330
      %v2332 = vpop.f32.mrb[0].mxu0
      %v2333 = vadd.f32 0.0, %v2332
      %2334 = vdwg.mxu0
      %v2335 = vadd.f32 %v2111, %v2297
      %v2336 = vadd.f32 %v2113, %v2299
      %v2337 = vadd.f32 %v2115, %v2301
      %v2338 = vadd.f32 %v2117, %v2303
      %v2339 = vadd.f32 %v2121, %v2307
      %v2340 = vadd.f32 %v2123, %v2309
      %v2341 = vadd.f32 %v2125, %v2311
      %v2342 = vadd.f32 %v2127, %v2313
      %v2343 = vadd.f32 %v2131, %v2317
      %v2344 = vadd.f32 %v2133, %v2319
      %v2345 = vadd.f32 %v2135, %v2321
      %v2346 = vadd.f32 %v2137, %v2323
      %v2347 = vadd.f32 %v2141, %v2327
      %v2348 = vadd.f32 %v2143, %v2329
      %v2349 = vadd.f32 %v2145, %v2331
      %v2350 = vadd.f32 %v2147, %v2333
      %2351 = vrot.lane.b32.xlu0 %v1761, 1
      %v2352 = vpop.permute.xlu0 %2351
      %2353 = vrot.lane.b32.xlu0 %v1763, 1
      %v2354 = vpop.permute.xlu0 %2353
      %2355 = vrot.lane.b32.xlu0 %v1765, 1
      %v2356 = vpop.permute.xlu0 %2355
      %2357 = vrot.lane.b32.xlu0 %v1767, 1
      %v2358 = vpop.permute.xlu0 %2357
      %2359 = vrot.lane.b32.xlu0 %v1769, 1
      %v2360 = vpop.permute.xlu0 %2359
      %2361 = vrot.lane.b32.xlu0 %v1771, 1
      %v2362 = vpop.permute.xlu0 %2361
      %2363 = vrot.lane.b32.xlu0 %v1773, 1
      %v2364 = vpop.permute.xlu0 %2363
      %2365 = vrot.lane.b32.xlu0 %v1775, 1
      %v2366 = vpop.permute.xlu0 %2365
      %2367 = vrot.lane.b32.xlu0 %v1762, 1
      %v2368 = vpop.permute.xlu0 %2367
      %2369 = vrot.lane.b32.xlu0 %v1764, 1
      %v2370 = vpop.permute.xlu0 %2369
      %2371 = vrot.lane.b32.xlu0 %v1766, 1
      %v2372 = vpop.permute.xlu0 %2371
      %2373 = vrot.lane.b32.xlu0 %v1768, 1
      %v2374 = vpop.permute.xlu0 %2373
      %2375 = vrot.lane.b32.xlu0 %v1770, 1
      %v2376 = vpop.permute.xlu0 %2375
      %2377 = vrot.lane.b32.xlu0 %v1772, 1
      %v2378 = vpop.permute.xlu0 %2377
      %2379 = vrot.lane.b32.xlu0 %v1774, 1
      %v2380 = vpop.permute.xlu0 %2379
      %2381 = vrot.lane.b32.xlu0 %v1776, 1
      %v2382 = vpop.permute.xlu0 %2381
      %v2383 = vsel %vm773, %v2352, %v2368
      %v2384 = vsel %vm773, %v2354, %v2370
      %v2385 = vsel %vm773, %v2356, %v2372
      %v2386 = vsel %vm773, %v2358, %v2374
      %v2387 = vsel %vm773, %v2360, %v2376
      %v2388 = vsel %vm773, %v2362, %v2378
      %v2389 = vsel %vm773, %v2364, %v2380
      %v2390 = vsel %vm773, %v2366, %v2382
      %v2391 = vsel %vm773, %v2368, %v2352
      %v2392 = vsel %vm773, %v2370, %v2354
      %v2393 = vsel %vm773, %v2372, %v2356
      %v2394 = vsel %vm773, %v2374, %v2358
      %v2395 = vsel %vm773, %v2376, %v2360
      %v2396 = vsel %vm773, %v2378, %v2362
      %v2397 = vsel %vm773, %v2380, %v2364
      %v2398 = vsel %vm773, %v2382, %v2366
      %v2399 = vmul.f32 %v2391, %v780
      %v2400 = vmul.f32 %v2383, %v784
      %v2401 = vmul.f32 %v2392, %v780
      %v2402 = vmul.f32 %v2384, %v784
      %v2403 = vmul.f32 %v2393, %v780
      %v2404 = vmul.f32 %v2385, %v784
      %v2405 = vmul.f32 %v2394, %v780
      %v2406 = vmul.f32 %v2386, %v784
      %v2407 = vmul.f32 %v2395, %v780
      %v2408 = vmul.f32 %v2387, %v784
      %v2409 = vmul.f32 %v2396, %v780
      %v2410 = vmul.f32 %v2388, %v784
      %v2411 = vmul.f32 %v2397, %v780
      %v2412 = vmul.f32 %v2389, %v784
      %v2413 = vmul.f32 %v2398, %v780
      %v2414 = vmul.f32 %v2390, %v784
      %s2415 = scalar_lea.vmem %s4, 96
      %v2416 = vld [vmem:[%s2415] sm:$0xf]
      %v2417 = vld [vmem:[%s2415 + $0x4] sm:$0xf]
      %v2418 = vld [vmem:[%s2415 + $0x8] sm:$0xf]
      %v2419 = vld [vmem:[%s2415 + $0xc] sm:$0xf]
      %v2420 = vld [vmem:[%s2415 + $0x10] sm:$0xf]
      %v2421 = vld [vmem:[%s2415 + $0x14] sm:$0xf]
      %v2422 = vld [vmem:[%s2415 + $0x18] sm:$0xf]
      %v2423 = vld [vmem:[%s2415 + $0x1c] sm:$0xf]
      %v2424 = vpack.c.bf16 %v2401, %v2399
      %v2425 = vpack.c.bf16 %v2402, %v2400
      %v2426 = vpack.c.bf16 %v2405, %v2403
      %v2427 = vpack.c.bf16 %v2406, %v2404
      %v2428 = vpack.c.bf16 %v2409, %v2407
      %v2429 = vpack.c.bf16 %v2410, %v2408
      %v2430 = vpack.c.bf16 %v2413, %v2411
      %v2431 = vpack.c.bf16 %v2414, %v2412
      %v2440 = vunpack.c.l.b16 %v2416
      %v2441 = vunpack.c.l.b16 %v2417
      %v2442 = vunpack.c.l.b16 %v2418
      %v2443 = vunpack.c.l.b16 %v2419
      %v2444 = vunpack.c.l.b16 %v2420
      %v2445 = vunpack.c.l.b16 %v2421
      %v2446 = vunpack.c.l.b16 %v2422
      %v2447 = vunpack.c.l.b16 %v2423
      %v2448 = vpack.c.b16 %v2441, %v2440
      %v2449 = vpack.c.b16 %v2443, %v2442
      %v2450 = vpack.c.b16 %v2445, %v2444
      %v2451 = vpack.c.b16 %v2447, %v2446
      %v2453 = vsel %vm1958, %v2448, 0
      %v2456 = vsel %vm1958, %v2449, 0
      %v2459 = vsel %vm1958, %v2450, 0
      %v2462 = vsel %vm1958, %v2451, 0
      %2464 = vmatprep.subr.bf16.mxu0 %v2425
      %2465 = vmatpush1.bf16.msra.mxu0 %v2424
      %2466 = vmatprep.subr.bf16.mxu0 %v2427
      %2467 = vmatpush1.bf16.msra.mxu0 %v2426
      %2468 = vmatprep.subr.bf16.mxu0 %v2429
      %2469 = vmatpush1.bf16.msra.mxu0 %v2428
      %2470 = vmatprep.subr.bf16.mxu0 %v2431
      %2471 = vmatpush1.bf16.msra.mxu0 %v2430
      %2472 = vmatprep.subr.bf16.mxu0 0
      %2473 = vmatpush1.bf16.msra.mxu0 0
      %2474 = vmatprep.subr.bf16.mxu0 0
      %2475 = vmatpush1.bf16.msra.mxu0 0
      %2476 = vmatprep.subr.bf16.mxu0 0
      %2477 = vmatpush1.bf16.msra.mxu0 0
      %2478 = vmatprep.subr.bf16.mxu0 0
      %2479 = vmatpush1.bf16.msra.mxu0 0
      %2480 = vmatprep.subr.bf16.mxu0 0
      %2481 = vmatpush1.bf16.msra.mxu0 0
      %2482 = vmatprep.subr.bf16.mxu0 0
      %2483 = vmatpush1.bf16.msra.mxu0 0
      %2484 = vmatprep.subr.bf16.mxu0 0
      %2485 = vmatpush1.bf16.msra.mxu0 0
      %2486 = vmatprep.subr.bf16.mxu0 0
      %2487 = vmatpush1.bf16.msra.mxu0 0
      %2488 = vmatprep.subr.bf16.mxu0 0
      %2489 = vmatpush1.bf16.msra.mxu0 0
      %2490 = vmatprep.subr.bf16.mxu0 0
      %2491 = vmatpush1.bf16.msra.mxu0 0
      %2492 = vmatprep.subr.bf16.mxu0 0
      %2493 = vmatpush1.bf16.msra.mxu0 0
      %2494 = vmatprep.subr.bf16.mxu0 0
      %2495 = vmatpush1.bf16.msra.mxu0 0
      %2496 = vmatprep.mubr.bf16.mxu0 0
      %2497 = vmatmul.mubr.bf16.gmra.mrb[0].mxu0 %v2453
      %v2498 = vpop.f32.mrb[0].mxu0
      %v2499 = vadd.f32 0.0, %v2498
      %v2500 = vpop.f32.mrb[0].mxu0
      %v2501 = vadd.f32 0.0, %v2500
      %v2502 = vpop.f32.mrb[0].mxu0
      %v2503 = vadd.f32 0.0, %v2502
      %v2504 = vpop.f32.mrb[0].mxu0
      %v2505 = vadd.f32 0.0, %v2504
      %2506 = vmatprep.mubr.bf16.mxu0 0
      %2507 = vmatmul.mubr.bf16.gmra.mrb[0].mxu0 %v2456
      %v2508 = vpop.f32.mrb[0].mxu0
      %v2509 = vadd.f32 0.0, %v2508
      %v2510 = vpop.f32.mrb[0].mxu0
      %v2511 = vadd.f32 0.0, %v2510
      %v2512 = vpop.f32.mrb[0].mxu0
      %v2513 = vadd.f32 0.0, %v2512
      %v2514 = vpop.f32.mrb[0].mxu0
      %v2515 = vadd.f32 0.0, %v2514
      %2516 = vmatprep.mubr.bf16.mxu0 0
      %2517 = vmatmul.mubr.bf16.gmra.mrb[0].mxu0 %v2459
      %v2518 = vpop.f32.mrb[0].mxu0
      %v2519 = vadd.f32 0.0, %v2518
      %v2520 = vpop.f32.mrb[0].mxu0
      %v2521 = vadd.f32 0.0, %v2520
      %v2522 = vpop.f32.mrb[0].mxu0
      %v2523 = vadd.f32 0.0, %v2522
      %v2524 = vpop.f32.mrb[0].mxu0
      %v2525 = vadd.f32 0.0, %v2524
      %2526 = vmatprep.mubr.bf16.mxu0 0
      %2527 = vmatmul.mubr.bf16.gmra.mrb[0].mxu0 %v2462
      %v2528 = vpop.f32.mrb[0].mxu0
      %v2529 = vadd.f32 0.0, %v2528
      %v2530 = vpop.f32.mrb[0].mxu0
      %v2531 = vadd.f32 0.0, %v2530
      %v2532 = vpop.f32.mrb[0].mxu0
      %v2533 = vadd.f32 0.0, %v2532
      %v2534 = vpop.f32.mrb[0].mxu0
      %v2535 = vadd.f32 0.0, %v2534
      %2536 = vdwg.mxu0
      %v2537 = vadd.f32 %v2335, %v2499
      %v2538 = vadd.f32 %v2336, %v2501
      %v2539 = vadd.f32 %v2337, %v2503
      %v2540 = vadd.f32 %v2338, %v2505
      %v2541 = vadd.f32 %v2339, %v2509
      %v2542 = vadd.f32 %v2340, %v2511
      %v2543 = vadd.f32 %v2341, %v2513
      %v2544 = vadd.f32 %v2342, %v2515
      %v2545 = vadd.f32 %v2343, %v2519
      %v2546 = vadd.f32 %v2344, %v2521
      %v2547 = vadd.f32 %v2345, %v2523
      %v2548 = vadd.f32 %v2346, %v2525
      %v2549 = vadd.f32 %v2347, %v2529
      %v2550 = vadd.f32 %v2348, %v2531
      %v2551 = vadd.f32 %v2349, %v2533
      %v2552 = vadd.f32 %v2350, %v2535
      %s2553 = scalar_lea.vmem %s4, 128
      %v2554 = vld [vmem:[%s2553] sm:$0xf]
      %v2555 = vld [vmem:[%s2553 + $0x4] sm:$0xf]
      %v2556 = vld [vmem:[%s2553 + $0x8] sm:$0xf]
      %v2557 = vld [vmem:[%s2553 + $0xc] sm:$0xf]
      %v2558 = vld [vmem:[%s2553 + $0x10] sm:$0xf]
      %v2559 = vld [vmem:[%s2553 + $0x14] sm:$0xf]
      %v2560 = vld [vmem:[%s2553 + $0x18] sm:$0xf]
      %v2561 = vld [vmem:[%s2553 + $0x1c] sm:$0xf]
      %v2562 = vpack.c.bf16 %v1763, %v1761
      %v2563 = vpack.c.bf16 %v1764, %v1762
      %v2564 = vpack.c.bf16 %v1767, %v1765
      %v2565 = vpack.c.bf16 %v1768, %v1766
      %v2566 = vpack.c.bf16 %v1771, %v1769
      %v2567 = vpack.c.bf16 %v1772, %v1770
      %v2568 = vpack.c.bf16 %v1775, %v1773
      %v2569 = vpack.c.bf16 %v1776, %v1774
      %v2578 = vunpack.c.l.b16 %v2554
      %v2579 = vunpack.c.l.b16 %v2555
      %v2580 = vunpack.c.l.b16 %v2556
      %v2581 = vunpack.c.l.b16 %v2557
      %v2582 = vunpack.c.l.b16 %v2558
      %v2583 = vunpack.c.l.b16 %v2559
      %v2584 = vunpack.c.l.b16 %v2560
      %v2585 = vunpack.c.l.b16 %v2561
      %v2586 = vpack.c.b16 %v2579, %v2578
      %v2587 = vpack.c.b16 %v2581, %v2580
      %v2588 = vpack.c.b16 %v2583, %v2582
      %v2589 = vpack.c.b16 %v2585, %v2584
      %v2591 = vsel %vm1958, %v2586, 0
      %v2594 = vsel %vm1958, %v2587, 0
      %v2597 = vsel %vm1958, %v2588, 0
      %v2600 = vsel %vm1958, %v2589, 0
      %2602 = vmatprep.subr.bf16.mxu0 %v2563
      %2603 = vmatpush1.bf16.msra.mxu0 %v2562
      %2604 = vmatprep.subr.bf16.mxu0 %v2565
      %2605 = vmatpush1.bf16.msra.mxu0 %v2564
      %2606 = vmatprep.subr.bf16.mxu0 %v2567
      %2607 = vmatpush1.bf16.msra.mxu0 %v2566
      %2608 = vmatprep.subr.bf16.mxu0 %v2569
      %2609 = vmatpush1.bf16.msra.mxu0 %v2568
      %2610 = vmatprep.subr.bf16.mxu0 0
      %2611 = vmatpush1.bf16.msra.mxu0 0
      %2612 = vmatprep.subr.bf16.mxu0 0
      %2613 = vmatpush1.bf16.msra.mxu0 0
      %2614 = vmatprep.subr.bf16.mxu0 0
      %2615 = vmatpush1.bf16.msra.mxu0 0
      %2616 = vmatprep.subr.bf16.mxu0 0
      %2617 = vmatpush1.bf16.msra.mxu0 0
      %2618 = vmatprep.subr.bf16.mxu0 0
      %2619 = vmatpush1.bf16.msra.mxu0 0
      %2620 = vmatprep.subr.bf16.mxu0 0
      %2621 = vmatpush1.bf16.msra.mxu0 0
      %2622 = vmatprep.subr.bf16.mxu0 0
      %2623 = vmatpush1.bf16.msra.mxu0 0
      %2624 = vmatprep.subr.bf16.mxu0 0
      %2625 = vmatpush1.bf16.msra.mxu0 0
      %2626 = vmatprep.subr.bf16.mxu0 0
      %2627 = vmatpush1.bf16.msra.mxu0 0
      %2628 = vmatprep.subr.bf16.mxu0 0
      %2629 = vmatpush1.bf16.msra.mxu0 0
      %2630 = vmatprep.subr.bf16.mxu0 0
      %2631 = vmatpush1.bf16.msra.mxu0 0
      %2632 = vmatprep.subr.bf16.mxu0 0
      %2633 = vmatpush1.bf16.msra.mxu0 0
      %2634 = vmatprep.mubr.bf16.mxu0 0
      %2635 = vmatmul.mubr.bf16.gmra.mrb[0].mxu0 %v2591
      %v2636 = vpop.f32.mrb[0].mxu0
      %v2637 = vadd.f32 0.0, %v2636
      %v2638 = vpop.f32.mrb[0].mxu0
      %v2639 = vadd.f32 0.0, %v2638
      %v2640 = vpop.f32.mrb[0].mxu0
      %v2641 = vadd.f32 0.0, %v2640
      %v2642 = vpop.f32.mrb[0].mxu0
      %v2643 = vadd.f32 0.0, %v2642
      %2644 = vmatprep.mubr.bf16.mxu0 0
      %2645 = vmatmul.mubr.bf16.gmra.mrb[0].mxu0 %v2594
      %v2646 = vpop.f32.mrb[0].mxu0
      %v2647 = vadd.f32 0.0, %v2646
      %v2648 = vpop.f32.mrb[0].mxu0
      %v2649 = vadd.f32 0.0, %v2648
      %v2650 = vpop.f32.mrb[0].mxu0
      %v2651 = vadd.f32 0.0, %v2650
      %v2652 = vpop.f32.mrb[0].mxu0
      %v2653 = vadd.f32 0.0, %v2652
      %2654 = vmatprep.mubr.bf16.mxu0 0
      %2655 = vmatmul.mubr.bf16.gmra.mrb[0].mxu0 %v2597
      %v2656 = vpop.f32.mrb[0].mxu0
      %v2657 = vadd.f32 0.0, %v2656
      %v2658 = vpop.f32.mrb[0].mxu0
      %v2659 = vadd.f32 0.0, %v2658
      %v2660 = vpop.f32.mrb[0].mxu0
      %v2661 = vadd.f32 0.0, %v2660
      %v2662 = vpop.f32.mrb[0].mxu0
      %v2663 = vadd.f32 0.0, %v2662
      %2664 = vmatprep.mubr.bf16.mxu0 0
      %2665 = vmatmul.mubr.bf16.gmra.mrb[0].mxu0 %v2600
      %v2666 = vpop.f32.mrb[0].mxu0
      %v2667 = vadd.f32 0.0, %v2666
      %v2668 = vpop.f32.mrb[0].mxu0
      %v2669 = vadd.f32 0.0, %v2668
      %v2670 = vpop.f32.mrb[0].mxu0
      %v2671 = vadd.f32 0.0, %v2670
      %v2672 = vpop.f32.mrb[0].mxu0
      %v2673 = vadd.f32 0.0, %v2672
      %2674 = vdwg.mxu0
      %v2675 = vadd.f32 %v2537, %v2637
      %v2676 = vadd.f32 %v2538, %v2639
      %v2677 = vadd.f32 %v2539, %v2641
      %v2678 = vadd.f32 %v2540, %v2643
      %v2679 = vadd.f32 %v2541, %v2647
      %v2680 = vadd.f32 %v2542, %v2649
      %v2681 = vadd.f32 %v2543, %v2651
      %v2682 = vadd.f32 %v2544, %v2653
      %v2683 = vadd.f32 %v2545, %v2657
      %v2684 = vadd.f32 %v2546, %v2659
      %v2685 = vadd.f32 %v2547, %v2661
      %v2686 = vadd.f32 %v2548, %v2663
      %v2687 = vadd.f32 %v2549, %v2667
      %v2688 = vadd.f32 %v2550, %v2669
      %v2689 = vadd.f32 %v2551, %v2671
      %v2690 = vadd.f32 %v2552, %v2673
      %2691 = vrot.lane.b32.xlu0 %v1761, 127
      %v2692 = vpop.permute.xlu0 %2691
      %2693 = vrot.lane.b32.xlu0 %v1763, 127
      %v2694 = vpop.permute.xlu0 %2693
      %2695 = vrot.lane.b32.xlu0 %v1765, 127
      %v2696 = vpop.permute.xlu0 %2695
      %2697 = vrot.lane.b32.xlu0 %v1767, 127
      %v2698 = vpop.permute.xlu0 %2697
      %2699 = vrot.lane.b32.xlu0 %v1769, 127
      %v2700 = vpop.permute.xlu0 %2699
      %2701 = vrot.lane.b32.xlu0 %v1771, 127
      %v2702 = vpop.permute.xlu0 %2701
      %2703 = vrot.lane.b32.xlu0 %v1773, 127
      %v2704 = vpop.permute.xlu0 %2703
      %2705 = vrot.lane.b32.xlu0 %v1775, 127
      %v2706 = vpop.permute.xlu0 %2705
      %2707 = vrot.lane.b32.xlu0 %v1762, 127
      %v2708 = vpop.permute.xlu0 %2707
      %2709 = vrot.lane.b32.xlu0 %v1764, 127
      %v2710 = vpop.permute.xlu0 %2709
      %2711 = vrot.lane.b32.xlu0 %v1766, 127
      %v2712 = vpop.permute.xlu0 %2711
      %2713 = vrot.lane.b32.xlu0 %v1768, 127
      %v2714 = vpop.permute.xlu0 %2713
      %2715 = vrot.lane.b32.xlu0 %v1770, 127
      %v2716 = vpop.permute.xlu0 %2715
      %2717 = vrot.lane.b32.xlu0 %v1772, 127
      %v2718 = vpop.permute.xlu0 %2717
      %2719 = vrot.lane.b32.xlu0 %v1774, 127
      %v2720 = vpop.permute.xlu0 %2719
      %2721 = vrot.lane.b32.xlu0 %v1776, 127
      %v2722 = vpop.permute.xlu0 %2721
      %v2723 = vsel %vm1069, %v2692, %v2708
      %v2724 = vsel %vm1069, %v2694, %v2710
      %v2725 = vsel %vm1069, %v2696, %v2712
      %v2726 = vsel %vm1069, %v2698, %v2714
      %v2727 = vsel %vm1069, %v2700, %v2716
      %v2728 = vsel %vm1069, %v2702, %v2718
      %v2729 = vsel %vm1069, %v2704, %v2720
      %v2730 = vsel %vm1069, %v2706, %v2722
      %v2731 = vsel %vm1069, %v2708, %v2692
      %v2732 = vsel %vm1069, %v2710, %v2694
      %v2733 = vsel %vm1069, %v2712, %v2696
      %v2734 = vsel %vm1069, %v2714, %v2698
      %v2735 = vsel %vm1069, %v2716, %v2700
      %v2736 = vsel %vm1069, %v2718, %v2702
      %v2737 = vsel %vm1069, %v2720, %v2704
      %v2738 = vsel %vm1069, %v2722, %v2706
      %v2739 = vmul.f32 %v2723, %v1076
      %v2740 = vmul.f32 %v2731, %v1080
      %v2741 = vmul.f32 %v2724, %v1076
      %v2742 = vmul.f32 %v2732, %v1080
      %v2743 = vmul.f32 %v2725, %v1076
      %v2744 = vmul.f32 %v2733, %v1080
      %v2745 = vmul.f32 %v2726, %v1076
      %v2746 = vmul.f32 %v2734, %v1080
      %v2747 = vmul.f32 %v2727, %v1076
      %v2748 = vmul.f32 %v2735, %v1080
      %v2749 = vmul.f32 %v2728, %v1076
      %v2750 = vmul.f32 %v2736, %v1080
      %v2751 = vmul.f32 %v2729, %v1076
      %v2752 = vmul.f32 %v2737, %v1080
      %v2753 = vmul.f32 %v2730, %v1076
      %v2754 = vmul.f32 %v2738, %v1080
      %s2755 = scalar_lea.vmem %s4, 160
      %v2756 = vld [vmem:[%s2755] sm:$0xf]
      %v2757 = vld [vmem:[%s2755 + $0x4] sm:$0xf]
      %v2758 = vld [vmem:[%s2755 + $0x8] sm:$0xf]
      %v2759 = vld [vmem:[%s2755 + $0xc] sm:$0xf]
      %v2760 = vld [vmem:[%s2755 + $0x10] sm:$0xf]
      %v2761 = vld [vmem:[%s2755 + $0x14] sm:$0xf]
      %v2762 = vld [vmem:[%s2755 + $0x18] sm:$0xf]
      %v2763 = vld [vmem:[%s2755 + $0x1c] sm:$0xf]
      %v2764 = vpack.c.bf16 %v2741, %v2739
      %v2765 = vpack.c.bf16 %v2742, %v2740
      %v2766 = vpack.c.bf16 %v2745, %v2743
      %v2767 = vpack.c.bf16 %v2746, %v2744
      %v2768 = vpack.c.bf16 %v2749, %v2747
      %v2769 = vpack.c.bf16 %v2750, %v2748
      %v2770 = vpack.c.bf16 %v2753, %v2751
      %v2771 = vpack.c.bf16 %v2754, %v2752
      %v2780 = vunpack.c.l.b16 %v2756
      %v2781 = vunpack.c.l.b16 %v2757
      %v2782 = vunpack.c.l.b16 %v2758
      %v2783 = vunpack.c.l.b16 %v2759
      %v2784 = vunpack.c.l.b16 %v2760
      %v2785 = vunpack.c.l.b16 %v2761
      %v2786 = vunpack.c.l.b16 %v2762
      %v2787 = vunpack.c.l.b16 %v2763
      %v2788 = vpack.c.b16 %v2781, %v2780
      %v2789 = vpack.c.b16 %v2783, %v2782
      %v2790 = vpack.c.b16 %v2785, %v2784
      %v2791 = vpack.c.b16 %v2787, %v2786
      %v2793 = vsel %vm1958, %v2788, 0
      %v2796 = vsel %vm1958, %v2789, 0
      %v2799 = vsel %vm1958, %v2790, 0
      %v2802 = vsel %vm1958, %v2791, 0
      %2804 = vmatprep.subr.bf16.mxu0 %v2765
      %2805 = vmatpush1.bf16.msra.mxu0 %v2764
      %2806 = vmatprep.subr.bf16.mxu0 %v2767
      %2807 = vmatpush1.bf16.msra.mxu0 %v2766
      %2808 = vmatprep.subr.bf16.mxu0 %v2769
      %2809 = vmatpush1.bf16.msra.mxu0 %v2768
      %2810 = vmatprep.subr.bf16.mxu0 %v2771
      %2811 = vmatpush1.bf16.msra.mxu0 %v2770
      %2812 = vmatprep.subr.bf16.mxu0 0
      %2813 = vmatpush1.bf16.msra.mxu0 0
      %2814 = vmatprep.subr.bf16.mxu0 0
      %2815 = vmatpush1.bf16.msra.mxu0 0
      %2816 = vmatprep.subr.bf16.mxu0 0
      %2817 = vmatpush1.bf16.msra.mxu0 0
      %2818 = vmatprep.subr.bf16.mxu0 0
      %2819 = vmatpush1.bf16.msra.mxu0 0
      %2820 = vmatprep.subr.bf16.mxu0 0
      %2821 = vmatpush1.bf16.msra.mxu0 0
      %2822 = vmatprep.subr.bf16.mxu0 0
      %2823 = vmatpush1.bf16.msra.mxu0 0
      %2824 = vmatprep.subr.bf16.mxu0 0
      %2825 = vmatpush1.bf16.msra.mxu0 0
      %2826 = vmatprep.subr.bf16.mxu0 0
      %2827 = vmatpush1.bf16.msra.mxu0 0
      %2828 = vmatprep.subr.bf16.mxu0 0
      %2829 = vmatpush1.bf16.msra.mxu0 0
      %2830 = vmatprep.subr.bf16.mxu0 0
      %2831 = vmatpush1.bf16.msra.mxu0 0
      %2832 = vmatprep.subr.bf16.mxu0 0
      %2833 = vmatpush1.bf16.msra.mxu0 0
      %2834 = vmatprep.subr.bf16.mxu0 0
      %2835 = vmatpush1.bf16.msra.mxu0 0
      %2836 = vmatprep.mubr.bf16.mxu0 0
      %2837 = vmatmul.mubr.bf16.gmra.mrb[0].mxu0 %v2793
      %v2838 = vpop.f32.mrb[0].mxu0
      %v2839 = vadd.f32 0.0, %v2838
      %v2840 = vpop.f32.mrb[0].mxu0
      %v2841 = vadd.f32 0.0, %v2840
      %v2842 = vpop.f32.mrb[0].mxu0
      %v2843 = vadd.f32 0.0, %v2842
      %v2844 = vpop.f32.mrb[0].mxu0
      %v2845 = vadd.f32 0.0, %v2844
      %2846 = vmatprep.mubr.bf16.mxu0 0
      %2847 = vmatmul.mubr.bf16.gmra.mrb[0].mxu0 %v2796
      %v2848 = vpop.f32.mrb[0].mxu0
      %v2849 = vadd.f32 0.0, %v2848
      %v2850 = vpop.f32.mrb[0].mxu0
      %v2851 = vadd.f32 0.0, %v2850
      %v2852 = vpop.f32.mrb[0].mxu0
      %v2853 = vadd.f32 0.0, %v2852
      %v2854 = vpop.f32.mrb[0].mxu0
      %v2855 = vadd.f32 0.0, %v2854
      %2856 = vmatprep.mubr.bf16.mxu0 0
      %2857 = vmatmul.mubr.bf16.gmra.mrb[0].mxu0 %v2799
      %v2858 = vpop.f32.mrb[0].mxu0
      %v2859 = vadd.f32 0.0, %v2858
      %v2860 = vpop.f32.mrb[0].mxu0
      %v2861 = vadd.f32 0.0, %v2860
      %v2862 = vpop.f32.mrb[0].mxu0
      %v2863 = vadd.f32 0.0, %v2862
      %v2864 = vpop.f32.mrb[0].mxu0
      %v2865 = vadd.f32 0.0, %v2864
      %2866 = vmatprep.mubr.bf16.mxu0 0
      %2867 = vmatmul.mubr.bf16.gmra.mrb[0].mxu0 %v2802
      %v2868 = vpop.f32.mrb[0].mxu0
      %v2869 = vadd.f32 0.0, %v2868
      %v2870 = vpop.f32.mrb[0].mxu0
      %v2871 = vadd.f32 0.0, %v2870
      %v2872 = vpop.f32.mrb[0].mxu0
      %v2873 = vadd.f32 0.0, %v2872
      %v2874 = vpop.f32.mrb[0].mxu0
      %v2875 = vadd.f32 0.0, %v2874
      %2876 = vdwg.mxu0
      %v2877 = vadd.f32 %v2675, %v2839
      %v2878 = vadd.f32 %v2676, %v2841
      %v2879 = vadd.f32 %v2677, %v2843
      %v2880 = vadd.f32 %v2678, %v2845
      %v2881 = vadd.f32 %v2679, %v2849
      %v2882 = vadd.f32 %v2680, %v2851
      %v2883 = vadd.f32 %v2681, %v2853
      %v2884 = vadd.f32 %v2682, %v2855
      %v2885 = vadd.f32 %v2683, %v2859
      %v2886 = vadd.f32 %v2684, %v2861
      %v2887 = vadd.f32 %v2685, %v2863
      %v2888 = vadd.f32 %v2686, %v2865
      %v2889 = vadd.f32 %v2687, %v2869
      %v2890 = vadd.f32 %v2688, %v2871
      %v2891 = vadd.f32 %v2689, %v2873
      %v2892 = vadd.f32 %v2690, %v2875
      %2893 = vrot.lane.b32.xlu0 %v1761, 113
      %v2894 = vpop.permute.xlu0 %2893
      %2895 = vrot.lane.b32.xlu0 %v1763, 113
      %v2896 = vpop.permute.xlu0 %2895
      %2897 = vrot.lane.b32.xlu0 %v1765, 113
      %v2898 = vpop.permute.xlu0 %2897
      %2899 = vrot.lane.b32.xlu0 %v1767, 113
      %v2900 = vpop.permute.xlu0 %2899
      %2901 = vrot.lane.b32.xlu0 %v1769, 113
      %v2902 = vpop.permute.xlu0 %2901
      %2903 = vrot.lane.b32.xlu0 %v1771, 113
      %v2904 = vpop.permute.xlu0 %2903
      %2905 = vrot.lane.b32.xlu0 %v1773, 113
      %v2906 = vpop.permute.xlu0 %2905
      %2907 = vrot.lane.b32.xlu0 %v1775, 113
      %v2908 = vpop.permute.xlu0 %2907
      %2909 = vrot.lane.b32.xlu0 %v1762, 113
      %v2910 = vpop.permute.xlu0 %2909
      %2911 = vrot.lane.b32.xlu0 %v1764, 113
      %v2912 = vpop.permute.xlu0 %2911
      %2913 = vrot.lane.b32.xlu0 %v1766, 113
      %v2914 = vpop.permute.xlu0 %2913
      %2915 = vrot.lane.b32.xlu0 %v1768, 113
      %v2916 = vpop.permute.xlu0 %2915
      %2917 = vrot.lane.b32.xlu0 %v1770, 113
      %v2918 = vpop.permute.xlu0 %2917
      %2919 = vrot.lane.b32.xlu0 %v1772, 113
      %v2920 = vpop.permute.xlu0 %2919
      %2921 = vrot.lane.b32.xlu0 %v1774, 113
      %v2922 = vpop.permute.xlu0 %2921
      %2923 = vrot.lane.b32.xlu0 %v1776, 113
      %v2924 = vpop.permute.xlu0 %2923
      %v2925 = vsel %vm1227, %v2894, %v2910
      %v2926 = vsel %vm1227, %v2896, %v2912
      %v2927 = vsel %vm1227, %v2898, %v2914
      %v2928 = vsel %vm1227, %v2900, %v2916
      %v2929 = vsel %vm1227, %v2902, %v2918
      %v2930 = vsel %vm1227, %v2904, %v2920
      %v2931 = vsel %vm1227, %v2906, %v2922
      %v2932 = vsel %vm1227, %v2908, %v2924
      %v2933 = vsel %vm1227, %v2910, %v2894
      %v2934 = vsel %vm1227, %v2912, %v2896
      %v2935 = vsel %vm1227, %v2914, %v2898
      %v2936 = vsel %vm1227, %v2916, %v2900
      %v2937 = vsel %vm1227, %v2918, %v2902
      %v2938 = vsel %vm1227, %v2920, %v2904
      %v2939 = vsel %vm1227, %v2922, %v2906
      %v2940 = vsel %vm1227, %v2924, %v2908
      %v2941 = vmul.f32 %v2925, %v1234
      %v2942 = vmul.f32 %v2933, %v1238
      %v2943 = vmul.f32 %v2926, %v1234
      %v2944 = vmul.f32 %v2934, %v1238
      %v2945 = vmul.f32 %v2927, %v1234
      %v2946 = vmul.f32 %v2935, %v1238
      %v2947 = vmul.f32 %v2928, %v1234
      %v2948 = vmul.f32 %v2936, %v1238
      %v2949 = vmul.f32 %v2929, %v1234
      %v2950 = vmul.f32 %v2937, %v1238
      %v2951 = vmul.f32 %v2930, %v1234
      %v2952 = vmul.f32 %v2938, %v1238
      %v2953 = vmul.f32 %v2931, %v1234
      %v2954 = vmul.f32 %v2939, %v1238
      %v2955 = vmul.f32 %v2932, %v1234
      %v2956 = vmul.f32 %v2940, %v1238
      %s2957 = scalar_lea.vmem %s4, 192
      %v2958 = vld [vmem:[%s2957] sm:$0xf]
      %v2959 = vld [vmem:[%s2957 + $0x4] sm:$0xf]
      %v2960 = vld [vmem:[%s2957 + $0x8] sm:$0xf]
      %v2961 = vld [vmem:[%s2957 + $0xc] sm:$0xf]
      %v2962 = vld [vmem:[%s2957 + $0x10] sm:$0xf]
      %v2963 = vld [vmem:[%s2957 + $0x14] sm:$0xf]
      %v2964 = vld [vmem:[%s2957 + $0x18] sm:$0xf]
      %v2965 = vld [vmem:[%s2957 + $0x1c] sm:$0xf]
      %v2966 = vpack.c.bf16 %v2943, %v2941
      %v2967 = vpack.c.bf16 %v2944, %v2942
      %v2968 = vpack.c.bf16 %v2947, %v2945
      %v2969 = vpack.c.bf16 %v2948, %v2946
      %v2970 = vpack.c.bf16 %v2951, %v2949
      %v2971 = vpack.c.bf16 %v2952, %v2950
      %v2972 = vpack.c.bf16 %v2955, %v2953
      %v2973 = vpack.c.bf16 %v2956, %v2954
      %v2982 = vunpack.c.l.b16 %v2958
      %v2983 = vunpack.c.l.b16 %v2959
      %v2984 = vunpack.c.l.b16 %v2960
      %v2985 = vunpack.c.l.b16 %v2961
      %v2986 = vunpack.c.l.b16 %v2962
      %v2987 = vunpack.c.l.b16 %v2963
      %v2988 = vunpack.c.l.b16 %v2964
      %v2989 = vunpack.c.l.b16 %v2965
      %v2990 = vpack.c.b16 %v2983, %v2982
      %v2991 = vpack.c.b16 %v2985, %v2984
      %v2992 = vpack.c.b16 %v2987, %v2986
      %v2993 = vpack.c.b16 %v2989, %v2988
      %v2995 = vsel %vm1958, %v2990, 0
      %v2998 = vsel %vm1958, %v2991, 0
      %v3001 = vsel %vm1958, %v2992, 0
      %v3004 = vsel %vm1958, %v2993, 0
      %3006 = vmatprep.subr.bf16.mxu0 %v2967
      %3007 = vmatpush1.bf16.msra.mxu0 %v2966
      %3008 = vmatprep.subr.bf16.mxu0 %v2969
      %3009 = vmatpush1.bf16.msra.mxu0 %v2968
      %3010 = vmatprep.subr.bf16.mxu0 %v2971
      %3011 = vmatpush1.bf16.msra.mxu0 %v2970
      %3012 = vmatprep.subr.bf16.mxu0 %v2973
      %3013 = vmatpush1.bf16.msra.mxu0 %v2972
      %3014 = vmatprep.subr.bf16.mxu0 0
      %3015 = vmatpush1.bf16.msra.mxu0 0
      %3016 = vmatprep.subr.bf16.mxu0 0
      %3017 = vmatpush1.bf16.msra.mxu0 0
      %3018 = vmatprep.subr.bf16.mxu0 0
      %3019 = vmatpush1.bf16.msra.mxu0 0
      %3020 = vmatprep.subr.bf16.mxu0 0
      %3021 = vmatpush1.bf16.msra.mxu0 0
      %3022 = vmatprep.subr.bf16.mxu0 0
      %3023 = vmatpush1.bf16.msra.mxu0 0
      %3024 = vmatprep.subr.bf16.mxu0 0
      %3025 = vmatpush1.bf16.msra.mxu0 0
      %3026 = vmatprep.subr.bf16.mxu0 0
      %3027 = vmatpush1.bf16.msra.mxu0 0
      %3028 = vmatprep.subr.bf16.mxu0 0
      %3029 = vmatpush1.bf16.msra.mxu0 0
      %3030 = vmatprep.subr.bf16.mxu0 0
      %3031 = vmatpush1.bf16.msra.mxu0 0
      %3032 = vmatprep.subr.bf16.mxu0 0
      %3033 = vmatpush1.bf16.msra.mxu0 0
      %3034 = vmatprep.subr.bf16.mxu0 0
      %3035 = vmatpush1.bf16.msra.mxu0 0
      %3036 = vmatprep.subr.bf16.mxu0 0
      %3037 = vmatpush1.bf16.msra.mxu0 0
      %3038 = vmatprep.mubr.bf16.mxu0 0
      %3039 = vmatmul.mubr.bf16.gmra.mrb[0].mxu0 %v2995
      %v3040 = vpop.f32.mrb[0].mxu0
      %v3041 = vadd.f32 0.0, %v3040
      %v3042 = vpop.f32.mrb[0].mxu0
      %v3043 = vadd.f32 0.0, %v3042
      %v3044 = vpop.f32.mrb[0].mxu0
      %v3045 = vadd.f32 0.0, %v3044
      %v3046 = vpop.f32.mrb[0].mxu0
      %v3047 = vadd.f32 0.0, %v3046
      %3048 = vmatprep.mubr.bf16.mxu0 0
      %3049 = vmatmul.mubr.bf16.gmra.mrb[0].mxu0 %v2998
      %v3050 = vpop.f32.mrb[0].mxu0
      %v3051 = vadd.f32 0.0, %v3050
      %v3052 = vpop.f32.mrb[0].mxu0
      %v3053 = vadd.f32 0.0, %v3052
      %v3054 = vpop.f32.mrb[0].mxu0
      %v3055 = vadd.f32 0.0, %v3054
      %v3056 = vpop.f32.mrb[0].mxu0
      %v3057 = vadd.f32 0.0, %v3056
      %3058 = vmatprep.mubr.bf16.mxu0 0
      %3059 = vmatmul.mubr.bf16.gmra.mrb[0].mxu0 %v3001
      %v3060 = vpop.f32.mrb[0].mxu0
      %v3061 = vadd.f32 0.0, %v3060
      %v3062 = vpop.f32.mrb[0].mxu0
      %v3063 = vadd.f32 0.0, %v3062
      %v3064 = vpop.f32.mrb[0].mxu0
      %v3065 = vadd.f32 0.0, %v3064
      %v3066 = vpop.f32.mrb[0].mxu0
      %v3067 = vadd.f32 0.0, %v3066
      %3068 = vmatprep.mubr.bf16.mxu0 0
      %3069 = vmatmul.mubr.bf16.gmra.mrb[0].mxu0 %v3004
      %v3070 = vpop.f32.mrb[0].mxu0
      %v3071 = vadd.f32 0.0, %v3070
      %v3072 = vpop.f32.mrb[0].mxu0
      %v3073 = vadd.f32 0.0, %v3072
      %v3074 = vpop.f32.mrb[0].mxu0
      %v3075 = vadd.f32 0.0, %v3074
      %v3076 = vpop.f32.mrb[0].mxu0
      %v3077 = vadd.f32 0.0, %v3076
      %3078 = vdwg.mxu0
      %v3079 = vadd.f32 %v2877, %v3041
      %v3080 = vadd.f32 %v2878, %v3043
      %v3081 = vadd.f32 %v2879, %v3045
      %v3082 = vadd.f32 %v2880, %v3047
      %v3083 = vadd.f32 %v2881, %v3051
      %v3084 = vadd.f32 %v2882, %v3053
      %v3085 = vadd.f32 %v2883, %v3055
      %v3086 = vadd.f32 %v2884, %v3057
      %v3087 = vadd.f32 %v2885, %v3061
      %v3088 = vadd.f32 %v2886, %v3063
      %v3089 = vadd.f32 %v2887, %v3065
      %v3090 = vadd.f32 %v2888, %v3067
      %v3091 = vadd.f32 %v2889, %v3071
      %v3092 = vadd.f32 %v2890, %v3073
      %v3093 = vadd.f32 %v2891, %v3075
      %v3094 = vadd.f32 %v2892, %v3077
      %3095 = vrot.lane.b32.xlu0 %v1761, 112
      %v3096 = vpop.permute.xlu0 %3095
      %3097 = vrot.lane.b32.xlu0 %v1763, 112
      %v3098 = vpop.permute.xlu0 %3097
      %3099 = vrot.lane.b32.xlu0 %v1765, 112
      %v3100 = vpop.permute.xlu0 %3099
      %3101 = vrot.lane.b32.xlu0 %v1767, 112
      %v3102 = vpop.permute.xlu0 %3101
      %3103 = vrot.lane.b32.xlu0 %v1769, 112
      %v3104 = vpop.permute.xlu0 %3103
      %3105 = vrot.lane.b32.xlu0 %v1771, 112
      %v3106 = vpop.permute.xlu0 %3105
      %3107 = vrot.lane.b32.xlu0 %v1773, 112
      %v3108 = vpop.permute.xlu0 %3107
      %3109 = vrot.lane.b32.xlu0 %v1775, 112
      %v3110 = vpop.permute.xlu0 %3109
      %3111 = vrot.lane.b32.xlu0 %v1762, 112
      %v3112 = vpop.permute.xlu0 %3111
      %3113 = vrot.lane.b32.xlu0 %v1764, 112
      %v3114 = vpop.permute.xlu0 %3113
      %3115 = vrot.lane.b32.xlu0 %v1766, 112
      %v3116 = vpop.permute.xlu0 %3115
      %3117 = vrot.lane.b32.xlu0 %v1768, 112
      %v3118 = vpop.permute.xlu0 %3117
      %3119 = vrot.lane.b32.xlu0 %v1770, 112
      %v3120 = vpop.permute.xlu0 %3119
      %3121 = vrot.lane.b32.xlu0 %v1772, 112
      %v3122 = vpop.permute.xlu0 %3121
      %3123 = vrot.lane.b32.xlu0 %v1774, 112
      %v3124 = vpop.permute.xlu0 %3123
      %3125 = vrot.lane.b32.xlu0 %v1776, 112
      %v3126 = vpop.permute.xlu0 %3125
      %v3127 = vsel %vm1385, %v3096, %v3112
      %v3128 = vsel %vm1385, %v3098, %v3114
      %v3129 = vsel %vm1385, %v3100, %v3116
      %v3130 = vsel %vm1385, %v3102, %v3118
      %v3131 = vsel %vm1385, %v3104, %v3120
      %v3132 = vsel %vm1385, %v3106, %v3122
      %v3133 = vsel %vm1385, %v3108, %v3124
      %v3134 = vsel %vm1385, %v3110, %v3126
      %v3135 = vsel %vm1385, %v3112, %v3096
      %v3136 = vsel %vm1385, %v3114, %v3098
      %v3137 = vsel %vm1385, %v3116, %v3100
      %v3138 = vsel %vm1385, %v3118, %v3102
      %v3139 = vsel %vm1385, %v3120, %v3104
      %v3140 = vsel %vm1385, %v3122, %v3106
      %v3141 = vsel %vm1385, %v3124, %v3108
      %v3142 = vsel %vm1385, %v3126, %v3110
      %v3143 = vmul.f32 %v3127, %v1392
      %v3144 = vmul.f32 %v3135, %v1396
      %v3145 = vmul.f32 %v3128, %v1392
      %v3146 = vmul.f32 %v3136, %v1396
      %v3147 = vmul.f32 %v3129, %v1392
      %v3148 = vmul.f32 %v3137, %v1396
      %v3149 = vmul.f32 %v3130, %v1392
      %v3150 = vmul.f32 %v3138, %v1396
      %v3151 = vmul.f32 %v3131, %v1392
      %v3152 = vmul.f32 %v3139, %v1396
      %v3153 = vmul.f32 %v3132, %v1392
      %v3154 = vmul.f32 %v3140, %v1396
      %v3155 = vmul.f32 %v3133, %v1392
      %v3156 = vmul.f32 %v3141, %v1396
      %v3157 = vmul.f32 %v3134, %v1392
      %v3158 = vmul.f32 %v3142, %v1396
      %s3159 = scalar_lea.vmem %s4, 224
      %v3160 = vld [vmem:[%s3159] sm:$0xf]
      %v3161 = vld [vmem:[%s3159 + $0x4] sm:$0xf]
      %v3162 = vld [vmem:[%s3159 + $0x8] sm:$0xf]
      %v3163 = vld [vmem:[%s3159 + $0xc] sm:$0xf]
      %v3164 = vld [vmem:[%s3159 + $0x10] sm:$0xf]
      %v3165 = vld [vmem:[%s3159 + $0x14] sm:$0xf]
      %v3166 = vld [vmem:[%s3159 + $0x18] sm:$0xf]
      %v3167 = vld [vmem:[%s3159 + $0x1c] sm:$0xf]
      %v3168 = vpack.c.bf16 %v3145, %v3143
      %v3169 = vpack.c.bf16 %v3146, %v3144
      %v3170 = vpack.c.bf16 %v3149, %v3147
      %v3171 = vpack.c.bf16 %v3150, %v3148
      %v3172 = vpack.c.bf16 %v3153, %v3151
      %v3173 = vpack.c.bf16 %v3154, %v3152
      %v3174 = vpack.c.bf16 %v3157, %v3155
      %v3175 = vpack.c.bf16 %v3158, %v3156
      %v3184 = vunpack.c.l.b16 %v3160
      %v3185 = vunpack.c.l.b16 %v3161
      %v3186 = vunpack.c.l.b16 %v3162
      %v3187 = vunpack.c.l.b16 %v3163
      %v3188 = vunpack.c.l.b16 %v3164
      %v3189 = vunpack.c.l.b16 %v3165
      %v3190 = vunpack.c.l.b16 %v3166
      %v3191 = vunpack.c.l.b16 %v3167
      %v3192 = vpack.c.b16 %v3185, %v3184
      %v3193 = vpack.c.b16 %v3187, %v3186
      %v3194 = vpack.c.b16 %v3189, %v3188
      %v3195 = vpack.c.b16 %v3191, %v3190
      %v3197 = vsel %vm1958, %v3192, 0
      %v3200 = vsel %vm1958, %v3193, 0
      %v3203 = vsel %vm1958, %v3194, 0
      %v3206 = vsel %vm1958, %v3195, 0
      %3208 = vmatprep.subr.bf16.mxu0 %v3169
      %3209 = vmatpush1.bf16.msra.mxu0 %v3168
      %3210 = vmatprep.subr.bf16.mxu0 %v3171
      %3211 = vmatpush1.bf16.msra.mxu0 %v3170
      %3212 = vmatprep.subr.bf16.mxu0 %v3173
      %3213 = vmatpush1.bf16.msra.mxu0 %v3172
      %3214 = vmatprep.subr.bf16.mxu0 %v3175
      %3215 = vmatpush1.bf16.msra.mxu0 %v3174
      %3216 = vmatprep.subr.bf16.mxu0 0
      %3217 = vmatpush1.bf16.msra.mxu0 0
      %3218 = vmatprep.subr.bf16.mxu0 0
      %3219 = vmatpush1.bf16.msra.mxu0 0
      %3220 = vmatprep.subr.bf16.mxu0 0
      %3221 = vmatpush1.bf16.msra.mxu0 0
      %3222 = vmatprep.subr.bf16.mxu0 0
      %3223 = vmatpush1.bf16.msra.mxu0 0
      %3224 = vmatprep.subr.bf16.mxu0 0
      %3225 = vmatpush1.bf16.msra.mxu0 0
      %3226 = vmatprep.subr.bf16.mxu0 0
      %3227 = vmatpush1.bf16.msra.mxu0 0
      %3228 = vmatprep.subr.bf16.mxu0 0
      %3229 = vmatpush1.bf16.msra.mxu0 0
      %3230 = vmatprep.subr.bf16.mxu0 0
      %3231 = vmatpush1.bf16.msra.mxu0 0
      %3232 = vmatprep.subr.bf16.mxu0 0
      %3233 = vmatpush1.bf16.msra.mxu0 0
      %3234 = vmatprep.subr.bf16.mxu0 0
      %3235 = vmatpush1.bf16.msra.mxu0 0
      %3236 = vmatprep.subr.bf16.mxu0 0
      %3237 = vmatpush1.bf16.msra.mxu0 0
      %3238 = vmatprep.subr.bf16.mxu0 0
      %3239 = vmatpush1.bf16.msra.mxu0 0
      %3240 = vmatprep.mubr.bf16.mxu0 0
      %3241 = vmatmul.mubr.bf16.gmra.mrb[0].mxu0 %v3197
      %v3242 = vpop.f32.mrb[0].mxu0
      %v3243 = vadd.f32 0.0, %v3242
      %v3244 = vpop.f32.mrb[0].mxu0
      %v3245 = vadd.f32 0.0, %v3244
      %v3246 = vpop.f32.mrb[0].mxu0
      %v3247 = vadd.f32 0.0, %v3246
      %v3248 = vpop.f32.mrb[0].mxu0
      %v3249 = vadd.f32 0.0, %v3248
      %3250 = vmatprep.mubr.bf16.mxu0 0
      %3251 = vmatmul.mubr.bf16.gmra.mrb[0].mxu0 %v3200
      %v3252 = vpop.f32.mrb[0].mxu0
      %v3253 = vadd.f32 0.0, %v3252
      %v3254 = vpop.f32.mrb[0].mxu0
      %v3255 = vadd.f32 0.0, %v3254
      %v3256 = vpop.f32.mrb[0].mxu0
      %v3257 = vadd.f32 0.0, %v3256
      %v3258 = vpop.f32.mrb[0].mxu0
      %v3259 = vadd.f32 0.0, %v3258
      %3260 = vmatprep.mubr.bf16.mxu0 0
      %3261 = vmatmul.mubr.bf16.gmra.mrb[0].mxu0 %v3203
      %v3262 = vpop.f32.mrb[0].mxu0
      %v3263 = vadd.f32 0.0, %v3262
      %v3264 = vpop.f32.mrb[0].mxu0
      %v3265 = vadd.f32 0.0, %v3264
      %v3266 = vpop.f32.mrb[0].mxu0
      %v3267 = vadd.f32 0.0, %v3266
      %v3268 = vpop.f32.mrb[0].mxu0
      %v3269 = vadd.f32 0.0, %v3268
      %3270 = vmatprep.mubr.bf16.mxu0 0
      %3271 = vmatmul.mubr.bf16.gmra.mrb[0].mxu0 %v3206
      %v3272 = vpop.f32.mrb[0].mxu0
      %v3273 = vadd.f32 0.0, %v3272
      %v3274 = vpop.f32.mrb[0].mxu0
      %v3275 = vadd.f32 0.0, %v3274
      %v3276 = vpop.f32.mrb[0].mxu0
      %v3277 = vadd.f32 0.0, %v3276
      %v3278 = vpop.f32.mrb[0].mxu0
      %v3279 = vadd.f32 0.0, %v3278
      %3280 = vdwg.mxu0
      %v3281 = vadd.f32 %v3079, %v3243
      %v3282 = vadd.f32 %v3080, %v3245
      %v3283 = vadd.f32 %v3081, %v3247
      %v3284 = vadd.f32 %v3082, %v3249
      %v3285 = vadd.f32 %v3083, %v3253
      %v3286 = vadd.f32 %v3084, %v3255
      %v3287 = vadd.f32 %v3085, %v3257
      %v3288 = vadd.f32 %v3086, %v3259
      %v3289 = vadd.f32 %v3087, %v3263
      %v3290 = vadd.f32 %v3088, %v3265
      %v3291 = vadd.f32 %v3089, %v3267
      %v3292 = vadd.f32 %v3090, %v3269
      %v3293 = vadd.f32 %v3091, %v3273
      %v3294 = vadd.f32 %v3092, %v3275
      %v3295 = vadd.f32 %v3093, %v3277
      %v3296 = vadd.f32 %v3094, %v3279
      %3297 = vrot.lane.b32.xlu0 %v1761, 111
      %v3298 = vpop.permute.xlu0 %3297
      %3299 = vrot.lane.b32.xlu0 %v1763, 111
      %v3300 = vpop.permute.xlu0 %3299
      %3301 = vrot.lane.b32.xlu0 %v1765, 111
      %v3302 = vpop.permute.xlu0 %3301
      %3303 = vrot.lane.b32.xlu0 %v1767, 111
      %v3304 = vpop.permute.xlu0 %3303
      %3305 = vrot.lane.b32.xlu0 %v1769, 111
      %v3306 = vpop.permute.xlu0 %3305
      %3307 = vrot.lane.b32.xlu0 %v1771, 111
      %v3308 = vpop.permute.xlu0 %3307
      %3309 = vrot.lane.b32.xlu0 %v1773, 111
      %v3310 = vpop.permute.xlu0 %3309
      %3311 = vrot.lane.b32.xlu0 %v1775, 111
      %v3312 = vpop.permute.xlu0 %3311
      %3313 = vrot.lane.b32.xlu0 %v1762, 111
      %v3314 = vpop.permute.xlu0 %3313
      %3315 = vrot.lane.b32.xlu0 %v1764, 111
      %v3316 = vpop.permute.xlu0 %3315
      %3317 = vrot.lane.b32.xlu0 %v1766, 111
      %v3318 = vpop.permute.xlu0 %3317
      %3319 = vrot.lane.b32.xlu0 %v1768, 111
      %v3320 = vpop.permute.xlu0 %3319
      %3321 = vrot.lane.b32.xlu0 %v1770, 111
      %v3322 = vpop.permute.xlu0 %3321
      %3323 = vrot.lane.b32.xlu0 %v1772, 111
      %v3324 = vpop.permute.xlu0 %3323
      %3325 = vrot.lane.b32.xlu0 %v1774, 111
      %v3326 = vpop.permute.xlu0 %3325
      %3327 = vrot.lane.b32.xlu0 %v1776, 111
      %v3328 = vpop.permute.xlu0 %3327
      %v3329 = vsel %vm1543, %v3298, %v3314
      %v3330 = vsel %vm1543, %v3300, %v3316
      %v3331 = vsel %vm1543, %v3302, %v3318
      %v3332 = vsel %vm1543, %v3304, %v3320
      %v3333 = vsel %vm1543, %v3306, %v3322
      %v3334 = vsel %vm1543, %v3308, %v3324
      %v3335 = vsel %vm1543, %v3310, %v3326
      %v3336 = vsel %vm1543, %v3312, %v3328
      %v3337 = vsel %vm1543, %v3314, %v3298
      %v3338 = vsel %vm1543, %v3316, %v3300
      %v3339 = vsel %vm1543, %v3318, %v3302
      %v3340 = vsel %vm1543, %v3320, %v3304
      %v3341 = vsel %vm1543, %v3322, %v3306
      %v3342 = vsel %vm1543, %v3324, %v3308
      %v3343 = vsel %vm1543, %v3326, %v3310
      %v3344 = vsel %vm1543, %v3328, %v3312
      %v3345 = vmul.f32 %v3329, %v1550
      %v3346 = vmul.f32 %v3337, %v1554
      %v3347 = vmul.f32 %v3330, %v1550
      %v3348 = vmul.f32 %v3338, %v1554
      %v3349 = vmul.f32 %v3331, %v1550
      %v3350 = vmul.f32 %v3339, %v1554
      %v3351 = vmul.f32 %v3332, %v1550
      %v3352 = vmul.f32 %v3340, %v1554
      %v3353 = vmul.f32 %v3333, %v1550
      %v3354 = vmul.f32 %v3341, %v1554
      %v3355 = vmul.f32 %v3334, %v1550
      %v3356 = vmul.f32 %v3342, %v1554
      %v3357 = vmul.f32 %v3335, %v1550
      %v3358 = vmul.f32 %v3343, %v1554
      %v3359 = vmul.f32 %v3336, %v1550
      %v3360 = vmul.f32 %v3344, %v1554
      %s3361 = scalar_lea.vmem %s4, 256
      %v3362 = vld [vmem:[%s3361] sm:$0xf]
      %v3363 = vld [vmem:[%s3361 + $0x4] sm:$0xf]
      %v3364 = vld [vmem:[%s3361 + $0x8] sm:$0xf]
      %v3365 = vld [vmem:[%s3361 + $0xc] sm:$0xf]
      %v3366 = vld [vmem:[%s3361 + $0x10] sm:$0xf]
      %v3367 = vld [vmem:[%s3361 + $0x14] sm:$0xf]
      %v3368 = vld [vmem:[%s3361 + $0x18] sm:$0xf]
      %v3369 = vld [vmem:[%s3361 + $0x1c] sm:$0xf]
      %v3370 = vpack.c.bf16 %v3347, %v3345
      %v3371 = vpack.c.bf16 %v3348, %v3346
      %v3372 = vpack.c.bf16 %v3351, %v3349
      %v3373 = vpack.c.bf16 %v3352, %v3350
      %v3374 = vpack.c.bf16 %v3355, %v3353
      %v3375 = vpack.c.bf16 %v3356, %v3354
      %v3376 = vpack.c.bf16 %v3359, %v3357
      %v3377 = vpack.c.bf16 %v3360, %v3358
      %v3386 = vunpack.c.l.b16 %v3362
      %v3387 = vunpack.c.l.b16 %v3363
      %v3388 = vunpack.c.l.b16 %v3364
      %v3389 = vunpack.c.l.b16 %v3365
      %v3390 = vunpack.c.l.b16 %v3366
      %v3391 = vunpack.c.l.b16 %v3367
      %v3392 = vunpack.c.l.b16 %v3368
      %v3393 = vunpack.c.l.b16 %v3369
      %v3394 = vpack.c.b16 %v3387, %v3386
      %v3395 = vpack.c.b16 %v3389, %v3388
      %v3396 = vpack.c.b16 %v3391, %v3390
      %v3397 = vpack.c.b16 %v3393, %v3392
      %v3399 = vsel %vm1958, %v3394, 0
      %v3402 = vsel %vm1958, %v3395, 0
      %v3405 = vsel %vm1958, %v3396, 0
      %v3408 = vsel %vm1958, %v3397, 0
      %3410 = vmatprep.subr.bf16.mxu0 %v3371
      %3411 = vmatpush1.bf16.msra.mxu0 %v3370
      %3412 = vmatprep.subr.bf16.mxu0 %v3373
      %3413 = vmatpush1.bf16.msra.mxu0 %v3372
      %3414 = vmatprep.subr.bf16.mxu0 %v3375
      %3415 = vmatpush1.bf16.msra.mxu0 %v3374
      %3416 = vmatprep.subr.bf16.mxu0 %v3377
      %3417 = vmatpush1.bf16.msra.mxu0 %v3376
      %3418 = vmatprep.subr.bf16.mxu0 0
      %3419 = vmatpush1.bf16.msra.mxu0 0
      %3420 = vmatprep.subr.bf16.mxu0 0
      %3421 = vmatpush1.bf16.msra.mxu0 0
      %3422 = vmatprep.subr.bf16.mxu0 0
      %3423 = vmatpush1.bf16.msra.mxu0 0
      %3424 = vmatprep.subr.bf16.mxu0 0
      %3425 = vmatpush1.bf16.msra.mxu0 0
      %3426 = vmatprep.subr.bf16.mxu0 0
      %3427 = vmatpush1.bf16.msra.mxu0 0
      %3428 = vmatprep.subr.bf16.mxu0 0
      %3429 = vmatpush1.bf16.msra.mxu0 0
      %3430 = vmatprep.subr.bf16.mxu0 0
      %3431 = vmatpush1.bf16.msra.mxu0 0
      %3432 = vmatprep.subr.bf16.mxu0 0
      %3433 = vmatpush1.bf16.msra.mxu0 0
      %3434 = vmatprep.subr.bf16.mxu0 0
      %3435 = vmatpush1.bf16.msra.mxu0 0
      %3436 = vmatprep.subr.bf16.mxu0 0
      %3437 = vmatpush1.bf16.msra.mxu0 0
      %3438 = vmatprep.subr.bf16.mxu0 0
      %3439 = vmatpush1.bf16.msra.mxu0 0
      %3440 = vmatprep.subr.bf16.mxu0 0
      %3441 = vmatpush1.bf16.msra.mxu0 0
      %3442 = vmatprep.mubr.bf16.mxu0 0
      %3443 = vmatmul.mubr.bf16.gmra.mrb[0].mxu0 %v3399
      %v3444 = vpop.f32.mrb[0].mxu0
      %v3445 = vadd.f32 0.0, %v3444
      %v3446 = vpop.f32.mrb[0].mxu0
      %v3447 = vadd.f32 0.0, %v3446
      %v3448 = vpop.f32.mrb[0].mxu0
      %v3449 = vadd.f32 0.0, %v3448
      %v3450 = vpop.f32.mrb[0].mxu0
      %v3451 = vadd.f32 0.0, %v3450
      %3452 = vmatprep.mubr.bf16.mxu0 0
      %3453 = vmatmul.mubr.bf16.gmra.mrb[0].mxu0 %v3402
      %v3454 = vpop.f32.mrb[0].mxu0
      %v3455 = vadd.f32 0.0, %v3454
      %v3456 = vpop.f32.mrb[0].mxu0
      %v3457 = vadd.f32 0.0, %v3456
      %v3458 = vpop.f32.mrb[0].mxu0
      %v3459 = vadd.f32 0.0, %v3458
      %v3460 = vpop.f32.mrb[0].mxu0
      %v3461 = vadd.f32 0.0, %v3460
      %3462 = vmatprep.mubr.bf16.mxu0 0
      %3463 = vmatmul.mubr.bf16.gmra.mrb[0].mxu0 %v3405
      %v3464 = vpop.f32.mrb[0].mxu0
      %v3465 = vadd.f32 0.0, %v3464
      %v3466 = vpop.f32.mrb[0].mxu0
      %v3467 = vadd.f32 0.0, %v3466
      %v3468 = vpop.f32.mrb[0].mxu0
      %v3469 = vadd.f32 0.0, %v3468
      %v3470 = vpop.f32.mrb[0].mxu0
      %v3471 = vadd.f32 0.0, %v3470
      %3472 = vmatprep.mubr.bf16.mxu0 0
      %3473 = vmatmul.mubr.bf16.gmra.mrb[0].mxu0 %v3408
      %v3474 = vpop.f32.mrb[0].mxu0
      %v3475 = vadd.f32 0.0, %v3474
      %v3476 = vpop.f32.mrb[0].mxu0
      %v3477 = vadd.f32 0.0, %v3476
      %v3478 = vpop.f32.mrb[0].mxu0
      %v3479 = vadd.f32 0.0, %v3478
      %v3480 = vpop.f32.mrb[0].mxu0
      %v3481 = vadd.f32 0.0, %v3480
      %3482 = vdwg.mxu0
      %v3483 = vadd.f32 %v3281, %v3445
      %v3484 = vadd.f32 %v3282, %v3447
      %v3485 = vadd.f32 %v3283, %v3449
      %v3486 = vadd.f32 %v3284, %v3451
      %v3487 = vadd.f32 %v3285, %v3455
      %v3488 = vadd.f32 %v3286, %v3457
      %v3489 = vadd.f32 %v3287, %v3459
      %v3490 = vadd.f32 %v3288, %v3461
      %v3491 = vadd.f32 %v3289, %v3465
      %v3492 = vadd.f32 %v3290, %v3467
      %v3493 = vadd.f32 %v3291, %v3469
      %v3494 = vadd.f32 %v3292, %v3471
      %v3495 = vadd.f32 %v3293, %v3475
      %v3496 = vadd.f32 %v3294, %v3477
      %v3497 = vadd.f32 %v3295, %v3479
      %v3498 = vadd.f32 %v3296, %v3481
      %v3499 = vld [vmem:[%s5] sm:$0xff]
      %v3500 = vld [vmem:[%s5 + $0x8] sm:$0xff]
      %v3501 = vld [vmem:[%s5 + $0x10] sm:$0xff]
      %v3502 = vld [vmem:[%s5 + $0x18] sm:$0xff]
      %v3503 = vld [vmem:[%s5 + $0x20] sm:$0xff]
      %v3504 = vld [vmem:[%s5 + $0x28] sm:$0xff]
      %v3505 = vld [vmem:[%s5 + $0x30] sm:$0xff]
      %v3506 = vld [vmem:[%s5 + $0x38] sm:$0xff]
      %3508 = vset.pattern.permute.xlu0 0
      %3509 = vperm.xlu0 %3508, %v3499
      %v3510 = vpop.permute.xlu0 %3509
      %3513 = vset.pattern.permute.xlu0 0
      %3514 = vperm.xlu0 %3513, %v3500
      %v3515 = vpop.permute.xlu0 %3514
      %3518 = vset.pattern.permute.xlu0 0
      %3519 = vperm.xlu0 %3518, %v3501
      %v3520 = vpop.permute.xlu0 %3519
      %3523 = vset.pattern.permute.xlu0 0
      %3524 = vperm.xlu0 %3523, %v3502
      %v3525 = vpop.permute.xlu0 %3524
      %3528 = vset.pattern.permute.xlu0 0
      %3529 = vperm.xlu0 %3528, %v3503
      %v3530 = vpop.permute.xlu0 %3529
      %3533 = vset.pattern.permute.xlu0 0
      %3534 = vperm.xlu0 %3533, %v3504
      %v3535 = vpop.permute.xlu0 %3534
      %3538 = vset.pattern.permute.xlu0 0
      %3539 = vperm.xlu0 %3538, %v3505
      %v3540 = vpop.permute.xlu0 %3539
      %3543 = vset.pattern.permute.xlu0 0
      %3544 = vperm.xlu0 %3543, %v3506
      %v3545 = vpop.permute.xlu0 %3544
      %v3547 = vadd.f32 %v3483, %v3510
      %v3548 = vadd.f32 %v3484, %v3510
      %v3549 = vadd.f32 %v3485, %v3515
      %v3550 = vadd.f32 %v3486, %v3515
      %v3551 = vadd.f32 %v3487, %v3520
      %v3552 = vadd.f32 %v3488, %v3520
      %v3553 = vadd.f32 %v3489, %v3525
      %v3554 = vadd.f32 %v3490, %v3525
      %v3555 = vadd.f32 %v3491, %v3530
      %v3556 = vadd.f32 %v3492, %v3530
      %v3557 = vadd.f32 %v3493, %v3535
      %v3558 = vadd.f32 %v3494, %v3535
      %v3559 = vadd.f32 %v3495, %v3540
      %v3560 = vadd.f32 %v3496, %v3540
      %v3561 = vadd.f32 %v3497, %v3545
      %v3562 = vadd.f32 %v3498, %v3545
      %v3563 = vmax.f32 %v3547, 0.0
      %v3564 = vmax.f32 %v3548, 0.0
      %v3565 = vmax.f32 %v3549, 0.0
      %v3566 = vmax.f32 %v3550, 0.0
      %v3567 = vmax.f32 %v3551, 0.0
      %v3568 = vmax.f32 %v3552, 0.0
      %v3569 = vmax.f32 %v3553, 0.0
      %v3570 = vmax.f32 %v3554, 0.0
      %v3571 = vmax.f32 %v3555, 0.0
      %v3572 = vmax.f32 %v3556, 0.0
      %v3573 = vmax.f32 %v3557, 0.0
      %v3574 = vmax.f32 %v3558, 0.0
      %v3575 = vmax.f32 %v3559, 0.0
      %v3576 = vmax.f32 %v3560, 0.0
      %v3577 = vmax.f32 %v3561, 0.0
      %v3578 = vmax.f32 %v3562, 0.0
      %3579 = vrot.lane.b32.xlu0 %v3563, 17
      %v3580 = vpop.permute.xlu0 %3579
      %3581 = vrot.lane.b32.xlu0 %v3565, 17
      %v3582 = vpop.permute.xlu0 %3581
      %3583 = vrot.lane.b32.xlu0 %v3567, 17
      %v3584 = vpop.permute.xlu0 %3583
      %3585 = vrot.lane.b32.xlu0 %v3569, 17
      %v3586 = vpop.permute.xlu0 %3585
      %3587 = vrot.lane.b32.xlu0 %v3571, 17
      %v3588 = vpop.permute.xlu0 %3587
      %3589 = vrot.lane.b32.xlu0 %v3573, 17
      %v3590 = vpop.permute.xlu0 %3589
      %3591 = vrot.lane.b32.xlu0 %v3575, 17
      %v3592 = vpop.permute.xlu0 %3591
      %3593 = vrot.lane.b32.xlu0 %v3577, 17
      %v3594 = vpop.permute.xlu0 %3593
      %3595 = vrot.lane.b32.xlu0 %v3564, 17
      %v3596 = vpop.permute.xlu0 %3595
      %3597 = vrot.lane.b32.xlu0 %v3566, 17
      %v3598 = vpop.permute.xlu0 %3597
      %3599 = vrot.lane.b32.xlu0 %v3568, 17
      %v3600 = vpop.permute.xlu0 %3599
      %3601 = vrot.lane.b32.xlu0 %v3570, 17
      %v3602 = vpop.permute.xlu0 %3601
      %3603 = vrot.lane.b32.xlu0 %v3572, 17
      %v3604 = vpop.permute.xlu0 %3603
      %3605 = vrot.lane.b32.xlu0 %v3574, 17
      %v3606 = vpop.permute.xlu0 %3605
      %3607 = vrot.lane.b32.xlu0 %v3576, 17
      %v3608 = vpop.permute.xlu0 %3607
      %3609 = vrot.lane.b32.xlu0 %v3578, 17
      %v3610 = vpop.permute.xlu0 %3609
      %v3611 = vsel %vm330, %v3580, %v3596
      %v3612 = vsel %vm330, %v3582, %v3598
      %v3613 = vsel %vm330, %v3584, %v3600
      %v3614 = vsel %vm330, %v3586, %v3602
      %v3615 = vsel %vm330, %v3588, %v3604
      %v3616 = vsel %vm330, %v3590, %v3606
      %v3617 = vsel %vm330, %v3592, %v3608
      %v3618 = vsel %vm330, %v3594, %v3610
      %v3619 = vsel %vm330, %v3596, %v3580
      %v3620 = vsel %vm330, %v3598, %v3582
      %v3621 = vsel %vm330, %v3600, %v3584
      %v3622 = vsel %vm330, %v3602, %v3586
      %v3623 = vsel %vm330, %v3604, %v3588
      %v3624 = vsel %vm330, %v3606, %v3590
      %v3625 = vsel %vm330, %v3608, %v3592
      %v3626 = vsel %vm330, %v3610, %v3594
      %v3627 = vmul.f32 %v3619, %v337
      %v3628 = vmul.f32 %v3611, %v341
      %v3629 = vmul.f32 %v3620, %v337
      %v3630 = vmul.f32 %v3612, %v341
      %v3631 = vmul.f32 %v3621, %v337
      %v3632 = vmul.f32 %v3613, %v341
      %v3633 = vmul.f32 %v3622, %v337
      %v3634 = vmul.f32 %v3614, %v341
      %v3635 = vmul.f32 %v3623, %v337
      %v3636 = vmul.f32 %v3615, %v341
      %v3637 = vmul.f32 %v3624, %v337
      %v3638 = vmul.f32 %v3616, %v341
      %v3639 = vmul.f32 %v3625, %v337
      %v3640 = vmul.f32 %v3617, %v341
      %v3641 = vmul.f32 %v3626, %v337
      %v3642 = vmul.f32 %v3618, %v341
      %s3643 = scalar_lea.vmem %s4, 288
      %v3644 = vld [vmem:[%s3643] sm:$0xf]
      %v3645 = vld [vmem:[%s3643 + $0x4] sm:$0xf]
      %v3646 = vld [vmem:[%s3643 + $0x8] sm:$0xf]
      %v3647 = vld [vmem:[%s3643 + $0xc] sm:$0xf]
      %v3648 = vld [vmem:[%s3643 + $0x10] sm:$0xf]
      %v3649 = vld [vmem:[%s3643 + $0x14] sm:$0xf]
      %v3650 = vld [vmem:[%s3643 + $0x18] sm:$0xf]
      %v3651 = vld [vmem:[%s3643 + $0x1c] sm:$0xf]
      %v3652 = vpack.c.bf16 %v3629, %v3627
      %v3653 = vpack.c.bf16 %v3630, %v3628
      %v3654 = vpack.c.bf16 %v3633, %v3631
      %v3655 = vpack.c.bf16 %v3634, %v3632
      %v3656 = vpack.c.bf16 %v3637, %v3635
      %v3657 = vpack.c.bf16 %v3638, %v3636
      %v3658 = vpack.c.bf16 %v3641, %v3639
      %v3659 = vpack.c.bf16 %v3642, %v3640
      %3660 = vrot.lane.b32.xlu0 %v3563, 16
      %v3661 = vpop.permute.xlu0 %3660
      %3662 = vrot.lane.b32.xlu0 %v3565, 16
      %v3663 = vpop.permute.xlu0 %3662
      %3664 = vrot.lane.b32.xlu0 %v3567, 16
      %v3665 = vpop.permute.xlu0 %3664
      %3666 = vrot.lane.b32.xlu0 %v3569, 16
      %v3667 = vpop.permute.xlu0 %3666
      %3668 = vrot.lane.b32.xlu0 %v3571, 16
      %v3669 = vpop.permute.xlu0 %3668
      %3670 = vrot.lane.b32.xlu0 %v3573, 16
      %v3671 = vpop.permute.xlu0 %3670
      %3672 = vrot.lane.b32.xlu0 %v3575, 16
      %v3673 = vpop.permute.xlu0 %3672
      %3674 = vrot.lane.b32.xlu0 %v3577, 16
      %v3675 = vpop.permute.xlu0 %3674
      %3676 = vrot.lane.b32.xlu0 %v3564, 16
      %v3677 = vpop.permute.xlu0 %3676
      %3678 = vrot.lane.b32.xlu0 %v3566, 16
      %v3679 = vpop.permute.xlu0 %3678
      %3680 = vrot.lane.b32.xlu0 %v3568, 16
      %v3681 = vpop.permute.xlu0 %3680
      %3682 = vrot.lane.b32.xlu0 %v3570, 16
      %v3683 = vpop.permute.xlu0 %3682
      %3684 = vrot.lane.b32.xlu0 %v3572, 16
      %v3685 = vpop.permute.xlu0 %3684
      %3686 = vrot.lane.b32.xlu0 %v3574, 16
      %v3687 = vpop.permute.xlu0 %3686
      %3688 = vrot.lane.b32.xlu0 %v3576, 16
      %v3689 = vpop.permute.xlu0 %3688
      %3690 = vrot.lane.b32.xlu0 %v3578, 16
      %v3691 = vpop.permute.xlu0 %3690
      %v3692 = vsel %vm360, %v3661, %v3677
      %v3693 = vsel %vm360, %v3663, %v3679
      %v3694 = vsel %vm360, %v3665, %v3681
      %v3695 = vsel %vm360, %v3667, %v3683
      %v3696 = vsel %vm360, %v3669, %v3685
      %v3697 = vsel %vm360, %v3671, %v3687
      %v3698 = vsel %vm360, %v3673, %v3689
      %v3699 = vsel %vm360, %v3675, %v3691
      %v3700 = vsel %vm360, %v3677, %v3661
      %v3701 = vsel %vm360, %v3679, %v3663
      %v3702 = vsel %vm360, %v3681, %v3665
      %v3703 = vsel %vm360, %v3683, %v3667
      %v3704 = vsel %vm360, %v3685, %v3669
      %v3705 = vsel %vm360, %v3687, %v3671
      %v3706 = vsel %vm360, %v3689, %v3673
      %v3707 = vsel %vm360, %v3691, %v3675
      %v3708 = vmul.f32 %v3700, %v367
      %v3709 = vmul.f32 %v3692, %v371
      %v3710 = vmul.f32 %v3701, %v367
      %v3711 = vmul.f32 %v3693, %v371
      %v3712 = vmul.f32 %v3702, %v367
      %v3713 = vmul.f32 %v3694, %v371
      %v3714 = vmul.f32 %v3703, %v367
      %v3715 = vmul.f32 %v3695, %v371
      %v3716 = vmul.f32 %v3704, %v367
      %v3717 = vmul.f32 %v3696, %v371
      %v3718 = vmul.f32 %v3705, %v367
      %v3719 = vmul.f32 %v3697, %v371
      %v3720 = vmul.f32 %v3706, %v367
      %v3721 = vmul.f32 %v3698, %v371
      %v3722 = vmul.f32 %v3707, %v367
      %v3723 = vmul.f32 %v3699, %v371
      %s3724 = scalar_lea.vmem %s4, 320
      %v3725 = vld [vmem:[%s3724] sm:$0xf]
      %v3726 = vld [vmem:[%s3724 + $0x4] sm:$0xf]
      %v3727 = vld [vmem:[%s3724 + $0x8] sm:$0xf]
      %v3728 = vld [vmem:[%s3724 + $0xc] sm:$0xf]
      %v3729 = vld [vmem:[%s3724 + $0x10] sm:$0xf]
      %v3730 = vld [vmem:[%s3724 + $0x14] sm:$0xf]
      %v3731 = vld [vmem:[%s3724 + $0x18] sm:$0xf]
      %v3732 = vld [vmem:[%s3724 + $0x1c] sm:$0xf]
      %v3733 = vpack.c.bf16 %v3710, %v3708
      %v3734 = vpack.c.bf16 %v3711, %v3709
      %v3735 = vpack.c.bf16 %v3714, %v3712
      %v3736 = vpack.c.bf16 %v3715, %v3713
      %v3737 = vpack.c.bf16 %v3718, %v3716
      %v3738 = vpack.c.bf16 %v3719, %v3717
      %v3739 = vpack.c.bf16 %v3722, %v3720
      %v3740 = vpack.c.bf16 %v3723, %v3721
      %v3749 = vunpack.c.l.b16 %v3725
      %v3750 = vunpack.c.l.b16 %v3726
      %v3751 = vunpack.c.l.b16 %v3727
      %v3752 = vunpack.c.l.b16 %v3728
      %v3753 = vunpack.c.l.b16 %v3729
      %v3754 = vunpack.c.l.b16 %v3730
      %v3755 = vunpack.c.l.b16 %v3731
      %v3756 = vunpack.c.l.b16 %v3732
      %v3757 = vpack.c.b16 %v3750, %v3749
      %v3758 = vpack.c.b16 %v3752, %v3751
      %v3759 = vpack.c.b16 %v3754, %v3753
      %v3760 = vpack.c.b16 %v3756, %v3755
      %v3762 = vsel %vm1958, %v3757, 0
      %v3765 = vsel %vm1958, %v3758, 0
      %v3768 = vsel %vm1958, %v3759, 0
      %v3771 = vsel %vm1958, %v3760, 0
      %3773 = vmatprep.subr.bf16.mxu0 %v3734
      %3774 = vmatpush1.bf16.msra.mxu0 %v3733
      %3775 = vmatprep.subr.bf16.mxu0 %v3736
      %3776 = vmatpush1.bf16.msra.mxu0 %v3735
      %3777 = vmatprep.subr.bf16.mxu0 %v3738
      %3778 = vmatpush1.bf16.msra.mxu0 %v3737
      %3779 = vmatprep.subr.bf16.mxu0 %v3740
      %3780 = vmatpush1.bf16.msra.mxu0 %v3739
      %3781 = vmatprep.subr.bf16.mxu0 0
      %3782 = vmatpush1.bf16.msra.mxu0 0
      %3783 = vmatprep.subr.bf16.mxu0 0
      %3784 = vmatpush1.bf16.msra.mxu0 0
      %3785 = vmatprep.subr.bf16.mxu0 0
      %3786 = vmatpush1.bf16.msra.mxu0 0
      %3787 = vmatprep.subr.bf16.mxu0 0
      %3788 = vmatpush1.bf16.msra.mxu0 0
      %3789 = vmatprep.subr.bf16.mxu0 0
      %3790 = vmatpush1.bf16.msra.mxu0 0
      %3791 = vmatprep.subr.bf16.mxu0 0
      %3792 = vmatpush1.bf16.msra.mxu0 0
      %3793 = vmatprep.subr.bf16.mxu0 0
      %3794 = vmatpush1.bf16.msra.mxu0 0
      %3795 = vmatprep.subr.bf16.mxu0 0
      %3796 = vmatpush1.bf16.msra.mxu0 0
      %3797 = vmatprep.subr.bf16.mxu0 0
      %3798 = vmatpush1.bf16.msra.mxu0 0
      %3799 = vmatprep.subr.bf16.mxu0 0
      %3800 = vmatpush1.bf16.msra.mxu0 0
      %3801 = vmatprep.subr.bf16.mxu0 0
      %3802 = vmatpush1.bf16.msra.mxu0 0
      %3803 = vmatprep.subr.bf16.mxu0 0
      %3804 = vmatpush1.bf16.msra.mxu0 0
      %3805 = vmatprep.mubr.bf16.mxu0 0
      %3806 = vmatmul.mubr.bf16.gmra.mrb[0].mxu0 %v3762
      %v3807 = vpop.f32.mrb[0].mxu0
      %v3808 = vadd.f32 0.0, %v3807
      %v3809 = vpop.f32.mrb[0].mxu0
      %v3810 = vadd.f32 0.0, %v3809
      %v3811 = vpop.f32.mrb[0].mxu0
      %v3812 = vadd.f32 0.0, %v3811
      %v3813 = vpop.f32.mrb[0].mxu0
      %v3814 = vadd.f32 0.0, %v3813
      %3815 = vmatprep.mubr.bf16.mxu0 0
      %3816 = vmatmul.mubr.bf16.gmra.mrb[0].mxu0 %v3765
      %v3817 = vpop.f32.mrb[0].mxu0
      %v3818 = vadd.f32 0.0, %v3817
      %v3819 = vpop.f32.mrb[0].mxu0
      %v3820 = vadd.f32 0.0, %v3819
      %v3821 = vpop.f32.mrb[0].mxu0
      %v3822 = vadd.f32 0.0, %v3821
      %v3823 = vpop.f32.mrb[0].mxu0
      %v3824 = vadd.f32 0.0, %v3823
      %3825 = vmatprep.mubr.bf16.mxu0 0
      %3826 = vmatmul.mubr.bf16.gmra.mrb[0].mxu0 %v3768
      %v3827 = vpop.f32.mrb[0].mxu0
      %v3828 = vadd.f32 0.0, %v3827
      %v3829 = vpop.f32.mrb[0].mxu0
      %v3830 = vadd.f32 0.0, %v3829
      %v3831 = vpop.f32.mrb[0].mxu0
      %v3832 = vadd.f32 0.0, %v3831
      %v3833 = vpop.f32.mrb[0].mxu0
      %v3834 = vadd.f32 0.0, %v3833
      %3835 = vmatprep.mubr.bf16.mxu0 0
      %3836 = vmatmul.mubr.bf16.gmra.mrb[0].mxu0 %v3771
      %v3837 = vpop.f32.mrb[0].mxu0
      %v3838 = vadd.f32 0.0, %v3837
      %v3839 = vpop.f32.mrb[0].mxu0
      %v3840 = vadd.f32 0.0, %v3839
      %v3841 = vpop.f32.mrb[0].mxu0
      %v3842 = vadd.f32 0.0, %v3841
      %v3843 = vpop.f32.mrb[0].mxu0
      %v3844 = vadd.f32 0.0, %v3843
      %3845 = vdwg.mxu0
      %v3854 = vunpack.c.l.b16 %v3644
      %v3855 = vunpack.c.l.b16 %v3645
      %v3856 = vunpack.c.l.b16 %v3646
      %v3857 = vunpack.c.l.b16 %v3647
      %v3858 = vunpack.c.l.b16 %v3648
      %v3859 = vunpack.c.l.b16 %v3649
      %v3860 = vunpack.c.l.b16 %v3650
      %v3861 = vunpack.c.l.b16 %v3651
      %v3862 = vpack.c.b16 %v3855, %v3854
      %v3863 = vpack.c.b16 %v3857, %v3856
      %v3864 = vpack.c.b16 %v3859, %v3858
      %v3865 = vpack.c.b16 %v3861, %v3860
      %v3867 = vsel %vm1958, %v3862, 0
      %v3870 = vsel %vm1958, %v3863, 0
      %v3873 = vsel %vm1958, %v3864, 0
      %v3876 = vsel %vm1958, %v3865, 0
      %3878 = vmatprep.subr.bf16.mxu0 %v3653
      %3879 = vmatpush1.bf16.msra.mxu0 %v3652
      %3880 = vmatprep.subr.bf16.mxu0 %v3655
      %3881 = vmatpush1.bf16.msra.mxu0 %v3654
      %3882 = vmatprep.subr.bf16.mxu0 %v3657
      %3883 = vmatpush1.bf16.msra.mxu0 %v3656
      %3884 = vmatprep.subr.bf16.mxu0 %v3659
      %3885 = vmatpush1.bf16.msra.mxu0 %v3658
      %3886 = vmatprep.subr.bf16.mxu0 0
      %3887 = vmatpush1.bf16.msra.mxu0 0
      %3888 = vmatprep.subr.bf16.mxu0 0
      %3889 = vmatpush1.bf16.msra.mxu0 0
      %3890 = vmatprep.subr.bf16.mxu0 0
      %3891 = vmatpush1.bf16.msra.mxu0 0
      %3892 = vmatprep.subr.bf16.mxu0 0
      %3893 = vmatpush1.bf16.msra.mxu0 0
      %3894 = vmatprep.subr.bf16.mxu0 0
      %3895 = vmatpush1.bf16.msra.mxu0 0
      %3896 = vmatprep.subr.bf16.mxu0 0
      %3897 = vmatpush1.bf16.msra.mxu0 0
      %3898 = vmatprep.subr.bf16.mxu0 0
      %3899 = vmatpush1.bf16.msra.mxu0 0
      %3900 = vmatprep.subr.bf16.mxu0 0
      %3901 = vmatpush1.bf16.msra.mxu0 0
      %3902 = vmatprep.subr.bf16.mxu0 0
      %3903 = vmatpush1.bf16.msra.mxu0 0
      %3904 = vmatprep.subr.bf16.mxu0 0
      %3905 = vmatpush1.bf16.msra.mxu0 0
      %3906 = vmatprep.subr.bf16.mxu0 0
      %3907 = vmatpush1.bf16.msra.mxu0 0
      %3908 = vmatprep.subr.bf16.mxu0 0
      %3909 = vmatpush1.bf16.msra.mxu0 0
      %3910 = vmatprep.mubr.bf16.mxu0 0
      %3911 = vmatmul.mubr.bf16.gmra.mrb[0].mxu0 %v3867
      %v3912 = vpop.f32.mrb[0].mxu0
      %v3913 = vadd.f32 %v3808, %v3912
      %v3914 = vpop.f32.mrb[0].mxu0
      %v3915 = vadd.f32 %v3810, %v3914
      %v3916 = vpop.f32.mrb[0].mxu0
      %v3917 = vadd.f32 %v3812, %v3916
      %v3918 = vpop.f32.mrb[0].mxu0
      %v3919 = vadd.f32 %v3814, %v3918
      %3920 = vmatprep.mubr.bf16.mxu0 0
      %3921 = vmatmul.mubr.bf16.gmra.mrb[0].mxu0 %v3870
      %v3922 = vpop.f32.mrb[0].mxu0
      %v3923 = vadd.f32 %v3818, %v3922
      %v3924 = vpop.f32.mrb[0].mxu0
      %v3925 = vadd.f32 %v3820, %v3924
      %v3926 = vpop.f32.mrb[0].mxu0
      %v3927 = vadd.f32 %v3822, %v3926
      %v3928 = vpop.f32.mrb[0].mxu0
      %v3929 = vadd.f32 %v3824, %v3928
      %3930 = vmatprep.mubr.bf16.mxu0 0
      %3931 = vmatmul.mubr.bf16.gmra.mrb[0].mxu0 %v3873
      %v3932 = vpop.f32.mrb[0].mxu0
      %v3933 = vadd.f32 %v3828, %v3932
      %v3934 = vpop.f32.mrb[0].mxu0
      %v3935 = vadd.f32 %v3830, %v3934
      %v3936 = vpop.f32.mrb[0].mxu0
      %v3937 = vadd.f32 %v3832, %v3936
      %v3938 = vpop.f32.mrb[0].mxu0
      %v3939 = vadd.f32 %v3834, %v3938
      %3940 = vmatprep.mubr.bf16.mxu0 0
      %3941 = vmatmul.mubr.bf16.gmra.mrb[0].mxu0 %v3876
      %v3942 = vpop.f32.mrb[0].mxu0
      %v3943 = vadd.f32 %v3838, %v3942
      %v3944 = vpop.f32.mrb[0].mxu0
      %v3945 = vadd.f32 %v3840, %v3944
      %v3946 = vpop.f32.mrb[0].mxu0
      %v3947 = vadd.f32 %v3842, %v3946
      %v3948 = vpop.f32.mrb[0].mxu0
      %v3949 = vadd.f32 %v3844, %v3948
      %3950 = vdwg.mxu0
      %3951 = vrot.lane.b32.xlu0 %v3563, 15
      %v3952 = vpop.permute.xlu0 %3951
      %3953 = vrot.lane.b32.xlu0 %v3565, 15
      %v3954 = vpop.permute.xlu0 %3953
      %3955 = vrot.lane.b32.xlu0 %v3567, 15
      %v3956 = vpop.permute.xlu0 %3955
      %3957 = vrot.lane.b32.xlu0 %v3569, 15
      %v3958 = vpop.permute.xlu0 %3957
      %3959 = vrot.lane.b32.xlu0 %v3571, 15
      %v3960 = vpop.permute.xlu0 %3959
      %3961 = vrot.lane.b32.xlu0 %v3573, 15
      %v3962 = vpop.permute.xlu0 %3961
      %3963 = vrot.lane.b32.xlu0 %v3575, 15
      %v3964 = vpop.permute.xlu0 %3963
      %3965 = vrot.lane.b32.xlu0 %v3577, 15
      %v3966 = vpop.permute.xlu0 %3965
      %3967 = vrot.lane.b32.xlu0 %v3564, 15
      %v3968 = vpop.permute.xlu0 %3967
      %3969 = vrot.lane.b32.xlu0 %v3566, 15
      %v3970 = vpop.permute.xlu0 %3969
      %3971 = vrot.lane.b32.xlu0 %v3568, 15
      %v3972 = vpop.permute.xlu0 %3971
      %3973 = vrot.lane.b32.xlu0 %v3570, 15
      %v3974 = vpop.permute.xlu0 %3973
      %3975 = vrot.lane.b32.xlu0 %v3572, 15
      %v3976 = vpop.permute.xlu0 %3975
      %3977 = vrot.lane.b32.xlu0 %v3574, 15
      %v3978 = vpop.permute.xlu0 %3977
      %3979 = vrot.lane.b32.xlu0 %v3576, 15
      %v3980 = vpop.permute.xlu0 %3979
      %3981 = vrot.lane.b32.xlu0 %v3578, 15
      %v3982 = vpop.permute.xlu0 %3981
      %v3983 = vsel %vm615, %v3952, %v3968
      %v3984 = vsel %vm615, %v3954, %v3970
      %v3985 = vsel %vm615, %v3956, %v3972
      %v3986 = vsel %vm615, %v3958, %v3974
      %v3987 = vsel %vm615, %v3960, %v3976
      %v3988 = vsel %vm615, %v3962, %v3978
      %v3989 = vsel %vm615, %v3964, %v3980
      %v3990 = vsel %vm615, %v3966, %v3982
      %v3991 = vsel %vm615, %v3968, %v3952
      %v3992 = vsel %vm615, %v3970, %v3954
      %v3993 = vsel %vm615, %v3972, %v3956
      %v3994 = vsel %vm615, %v3974, %v3958
      %v3995 = vsel %vm615, %v3976, %v3960
      %v3996 = vsel %vm615, %v3978, %v3962
      %v3997 = vsel %vm615, %v3980, %v3964
      %v3998 = vsel %vm615, %v3982, %v3966
      %v3999 = vmul.f32 %v3991, %v622
      %v4000 = vmul.f32 %v3983, %v626
      %v4001 = vmul.f32 %v3992, %v622
      %v4002 = vmul.f32 %v3984, %v626
      %v4003 = vmul.f32 %v3993, %v622
      %v4004 = vmul.f32 %v3985, %v626
      %v4005 = vmul.f32 %v3994, %v622
      %v4006 = vmul.f32 %v3986, %v626
      %v4007 = vmul.f32 %v3995, %v622
      %v4008 = vmul.f32 %v3987, %v626
      %v4009 = vmul.f32 %v3996, %v622
      %v4010 = vmul.f32 %v3988, %v626
      %v4011 = vmul.f32 %v3997, %v622
      %v4012 = vmul.f32 %v3989, %v626
      %v4013 = vmul.f32 %v3998, %v622
      %v4014 = vmul.f32 %v3990, %v626
      %s4015 = scalar_lea.vmem %s4, 352
      %v4016 = vld [vmem:[%s4015] sm:$0xf]
      %v4017 = vld [vmem:[%s4015 + $0x4] sm:$0xf]
      %v4018 = vld [vmem:[%s4015 + $0x8] sm:$0xf]
      %v4019 = vld [vmem:[%s4015 + $0xc] sm:$0xf]
      %v4020 = vld [vmem:[%s4015 + $0x10] sm:$0xf]
      %v4021 = vld [vmem:[%s4015 + $0x14] sm:$0xf]
      %v4022 = vld [vmem:[%s4015 + $0x18] sm:$0xf]
      %v4023 = vld [vmem:[%s4015 + $0x1c] sm:$0xf]
      %v4024 = vpack.c.bf16 %v4001, %v3999
      %v4025 = vpack.c.bf16 %v4002, %v4000
      %v4026 = vpack.c.bf16 %v4005, %v4003
      %v4027 = vpack.c.bf16 %v4006, %v4004
      %v4028 = vpack.c.bf16 %v4009, %v4007
      %v4029 = vpack.c.bf16 %v4010, %v4008
      %v4030 = vpack.c.bf16 %v4013, %v4011
      %v4031 = vpack.c.bf16 %v4014, %v4012
      %v4040 = vunpack.c.l.b16 %v4016
      %v4041 = vunpack.c.l.b16 %v4017
      %v4042 = vunpack.c.l.b16 %v4018
      %v4043 = vunpack.c.l.b16 %v4019
      %v4044 = vunpack.c.l.b16 %v4020
      %v4045 = vunpack.c.l.b16 %v4021
      %v4046 = vunpack.c.l.b16 %v4022
      %v4047 = vunpack.c.l.b16 %v4023
      %v4048 = vpack.c.b16 %v4041, %v4040
      %v4049 = vpack.c.b16 %v4043, %v4042
      %v4050 = vpack.c.b16 %v4045, %v4044
      %v4051 = vpack.c.b16 %v4047, %v4046
      %v4053 = vsel %vm1958, %v4048, 0
      %v4056 = vsel %vm1958, %v4049, 0
      %v4059 = vsel %vm1958, %v4050, 0
      %v4062 = vsel %vm1958, %v4051, 0
      %4064 = vmatprep.subr.bf16.mxu0 %v4025
      %4065 = vmatpush1.bf16.msra.mxu0 %v4024
      %4066 = vmatprep.subr.bf16.mxu0 %v4027
      %4067 = vmatpush1.bf16.msra.mxu0 %v4026
      %4068 = vmatprep.subr.bf16.mxu0 %v4029
      %4069 = vmatpush1.bf16.msra.mxu0 %v4028
      %4070 = vmatprep.subr.bf16.mxu0 %v4031
      %4071 = vmatpush1.bf16.msra.mxu0 %v4030
      %4072 = vmatprep.subr.bf16.mxu0 0
      %4073 = vmatpush1.bf16.msra.mxu0 0
      %4074 = vmatprep.subr.bf16.mxu0 0
      %4075 = vmatpush1.bf16.msra.mxu0 0
      %4076 = vmatprep.subr.bf16.mxu0 0
      %4077 = vmatpush1.bf16.msra.mxu0 0
      %4078 = vmatprep.subr.bf16.mxu0 0
      %4079 = vmatpush1.bf16.msra.mxu0 0
      %4080 = vmatprep.subr.bf16.mxu0 0
      %4081 = vmatpush1.bf16.msra.mxu0 0
      %4082 = vmatprep.subr.bf16.mxu0 0
      %4083 = vmatpush1.bf16.msra.mxu0 0
      %4084 = vmatprep.subr.bf16.mxu0 0
      %4085 = vmatpush1.bf16.msra.mxu0 0
      %4086 = vmatprep.subr.bf16.mxu0 0
      %4087 = vmatpush1.bf16.msra.mxu0 0
      %4088 = vmatprep.subr.bf16.mxu0 0
      %4089 = vmatpush1.bf16.msra.mxu0 0
      %4090 = vmatprep.subr.bf16.mxu0 0
      %4091 = vmatpush1.bf16.msra.mxu0 0
      %4092 = vmatprep.subr.bf16.mxu0 0
      %4093 = vmatpush1.bf16.msra.mxu0 0
      %4094 = vmatprep.subr.bf16.mxu0 0
      %4095 = vmatpush1.bf16.msra.mxu0 0
      %4096 = vmatprep.mubr.bf16.mxu0 0
      %4097 = vmatmul.mubr.bf16.gmra.mrb[0].mxu0 %v4053
      %v4098 = vpop.f32.mrb[0].mxu0
      %v4099 = vadd.f32 0.0, %v4098
      %v4100 = vpop.f32.mrb[0].mxu0
      %v4101 = vadd.f32 0.0, %v4100
      %v4102 = vpop.f32.mrb[0].mxu0
      %v4103 = vadd.f32 0.0, %v4102
      %v4104 = vpop.f32.mrb[0].mxu0
      %v4105 = vadd.f32 0.0, %v4104
      %4106 = vmatprep.mubr.bf16.mxu0 0
      %4107 = vmatmul.mubr.bf16.gmra.mrb[0].mxu0 %v4056
      %v4108 = vpop.f32.mrb[0].mxu0
      %v4109 = vadd.f32 0.0, %v4108
      %v4110 = vpop.f32.mrb[0].mxu0
      %v4111 = vadd.f32 0.0, %v4110
      %v4112 = vpop.f32.mrb[0].mxu0
      %v4113 = vadd.f32 0.0, %v4112
      %v4114 = vpop.f32.mrb[0].mxu0
      %v4115 = vadd.f32 0.0, %v4114
      %4116 = vmatprep.mubr.bf16.mxu0 0
      %4117 = vmatmul.mubr.bf16.gmra.mrb[0].mxu0 %v4059
      %v4118 = vpop.f32.mrb[0].mxu0
      %v4119 = vadd.f32 0.0, %v4118
      %v4120 = vpop.f32.mrb[0].mxu0
      %v4121 = vadd.f32 0.0, %v4120
      %v4122 = vpop.f32.mrb[0].mxu0
      %v4123 = vadd.f32 0.0, %v4122
      %v4124 = vpop.f32.mrb[0].mxu0
      %v4125 = vadd.f32 0.0, %v4124
      %4126 = vmatprep.mubr.bf16.mxu0 0
      %4127 = vmatmul.mubr.bf16.gmra.mrb[0].mxu0 %v4062
      %v4128 = vpop.f32.mrb[0].mxu0
      %v4129 = vadd.f32 0.0, %v4128
      %v4130 = vpop.f32.mrb[0].mxu0
      %v4131 = vadd.f32 0.0, %v4130
      %v4132 = vpop.f32.mrb[0].mxu0
      %v4133 = vadd.f32 0.0, %v4132
      %v4134 = vpop.f32.mrb[0].mxu0
      %v4135 = vadd.f32 0.0, %v4134
      %4136 = vdwg.mxu0
      %v4137 = vadd.f32 %v3913, %v4099
      %v4138 = vadd.f32 %v3915, %v4101
      %v4139 = vadd.f32 %v3917, %v4103
      %v4140 = vadd.f32 %v3919, %v4105
      %v4141 = vadd.f32 %v3923, %v4109
      %v4142 = vadd.f32 %v3925, %v4111
      %v4143 = vadd.f32 %v3927, %v4113
      %v4144 = vadd.f32 %v3929, %v4115
      %v4145 = vadd.f32 %v3933, %v4119
      %v4146 = vadd.f32 %v3935, %v4121
      %v4147 = vadd.f32 %v3937, %v4123
      %v4148 = vadd.f32 %v3939, %v4125
      %v4149 = vadd.f32 %v3943, %v4129
      %v4150 = vadd.f32 %v3945, %v4131
      %v4151 = vadd.f32 %v3947, %v4133
      %v4152 = vadd.f32 %v3949, %v4135
      %4153 = vrot.lane.b32.xlu0 %v3563, 1
      %v4154 = vpop.permute.xlu0 %4153
      %4155 = vrot.lane.b32.xlu0 %v3565, 1
      %v4156 = vpop.permute.xlu0 %4155
      %4157 = vrot.lane.b32.xlu0 %v3567, 1
      %v4158 = vpop.permute.xlu0 %4157
      %4159 = vrot.lane.b32.xlu0 %v3569, 1
      %v4160 = vpop.permute.xlu0 %4159
      %4161 = vrot.lane.b32.xlu0 %v3571, 1
      %v4162 = vpop.permute.xlu0 %4161
      %4163 = vrot.lane.b32.xlu0 %v3573, 1
      %v4164 = vpop.permute.xlu0 %4163
      %4165 = vrot.lane.b32.xlu0 %v3575, 1
      %v4166 = vpop.permute.xlu0 %4165
      %4167 = vrot.lane.b32.xlu0 %v3577, 1
      %v4168 = vpop.permute.xlu0 %4167
      %4169 = vrot.lane.b32.xlu0 %v3564, 1
      %v4170 = vpop.permute.xlu0 %4169
      %4171 = vrot.lane.b32.xlu0 %v3566, 1
      %v4172 = vpop.permute.xlu0 %4171
      %4173 = vrot.lane.b32.xlu0 %v3568, 1
      %v4174 = vpop.permute.xlu0 %4173
      %4175 = vrot.lane.b32.xlu0 %v3570, 1
      %v4176 = vpop.permute.xlu0 %4175
      %4177 = vrot.lane.b32.xlu0 %v3572, 1
      %v4178 = vpop.permute.xlu0 %4177
      %4179 = vrot.lane.b32.xlu0 %v3574, 1
      %v4180 = vpop.permute.xlu0 %4179
      %4181 = vrot.lane.b32.xlu0 %v3576, 1
      %v4182 = vpop.permute.xlu0 %4181
      %4183 = vrot.lane.b32.xlu0 %v3578, 1
      %v4184 = vpop.permute.xlu0 %4183
      %v4185 = vsel %vm773, %v4154, %v4170
      %v4186 = vsel %vm773, %v4156, %v4172
      %v4187 = vsel %vm773, %v4158, %v4174
      %v4188 = vsel %vm773, %v4160, %v4176
      %v4189 = vsel %vm773, %v4162, %v4178
      %v4190 = vsel %vm773, %v4164, %v4180
      %v4191 = vsel %vm773, %v4166, %v4182
      %v4192 = vsel %vm773, %v4168, %v4184
      %v4193 = vsel %vm773, %v4170, %v4154
      %v4194 = vsel %vm773, %v4172, %v4156
      %v4195 = vsel %vm773, %v4174, %v4158
      %v4196 = vsel %vm773, %v4176, %v4160
      %v4197 = vsel %vm773, %v4178, %v4162
      %v4198 = vsel %vm773, %v4180, %v4164
      %v4199 = vsel %vm773, %v4182, %v4166
      %v4200 = vsel %vm773, %v4184, %v4168
      %v4201 = vmul.f32 %v4193, %v780
      %v4202 = vmul.f32 %v4185, %v784
      %v4203 = vmul.f32 %v4194, %v780
      %v4204 = vmul.f32 %v4186, %v784
      %v4205 = vmul.f32 %v4195, %v780
      %v4206 = vmul.f32 %v4187, %v784
      %v4207 = vmul.f32 %v4196, %v780
      %v4208 = vmul.f32 %v4188, %v784
      %v4209 = vmul.f32 %v4197, %v780
      %v4210 = vmul.f32 %v4189, %v784
      %v4211 = vmul.f32 %v4198, %v780
      %v4212 = vmul.f32 %v4190, %v784
      %v4213 = vmul.f32 %v4199, %v780
      %v4214 = vmul.f32 %v4191, %v784
      %v4215 = vmul.f32 %v4200, %v780
      %v4216 = vmul.f32 %v4192, %v784
      %s4217 = scalar_lea.vmem %s4, 384
      %v4218 = vld [vmem:[%s4217] sm:$0xf]
      %v4219 = vld [vmem:[%s4217 + $0x4] sm:$0xf]
      %v4220 = vld [vmem:[%s4217 + $0x8] sm:$0xf]
      %v4221 = vld [vmem:[%s4217 + $0xc] sm:$0xf]
      %v4222 = vld [vmem:[%s4217 + $0x10] sm:$0xf]
      %v4223 = vld [vmem:[%s4217 + $0x14] sm:$0xf]
      %v4224 = vld [vmem:[%s4217 + $0x18] sm:$0xf]
      %v4225 = vld [vmem:[%s4217 + $0x1c] sm:$0xf]
      %v4226 = vpack.c.bf16 %v4203, %v4201
      %v4227 = vpack.c.bf16 %v4204, %v4202
      %v4228 = vpack.c.bf16 %v4207, %v4205
      %v4229 = vpack.c.bf16 %v4208, %v4206
      %v4230 = vpack.c.bf16 %v4211, %v4209
      %v4231 = vpack.c.bf16 %v4212, %v4210
      %v4232 = vpack.c.bf16 %v4215, %v4213
      %v4233 = vpack.c.bf16 %v4216, %v4214
      %v4242 = vunpack.c.l.b16 %v4218
      %v4243 = vunpack.c.l.b16 %v4219
      %v4244 = vunpack.c.l.b16 %v4220
      %v4245 = vunpack.c.l.b16 %v4221
      %v4246 = vunpack.c.l.b16 %v4222
      %v4247 = vunpack.c.l.b16 %v4223
      %v4248 = vunpack.c.l.b16 %v4224
      %v4249 = vunpack.c.l.b16 %v4225
      %v4250 = vpack.c.b16 %v4243, %v4242
      %v4251 = vpack.c.b16 %v4245, %v4244
      %v4252 = vpack.c.b16 %v4247, %v4246
      %v4253 = vpack.c.b16 %v4249, %v4248
      %v4255 = vsel %vm1958, %v4250, 0
      %v4258 = vsel %vm1958, %v4251, 0
      %v4261 = vsel %vm1958, %v4252, 0
      %v4264 = vsel %vm1958, %v4253, 0
      %4266 = vmatprep.subr.bf16.mxu0 %v4227
      %4267 = vmatpush1.bf16.msra.mxu0 %v4226
      %4268 = vmatprep.subr.bf16.mxu0 %v4229
      %4269 = vmatpush1.bf16.msra.mxu0 %v4228
      %4270 = vmatprep.subr.bf16.mxu0 %v4231
      %4271 = vmatpush1.bf16.msra.mxu0 %v4230
      %4272 = vmatprep.subr.bf16.mxu0 %v4233
      %4273 = vmatpush1.bf16.msra.mxu0 %v4232
      %4274 = vmatprep.subr.bf16.mxu0 0
      %4275 = vmatpush1.bf16.msra.mxu0 0
      %4276 = vmatprep.subr.bf16.mxu0 0
      %4277 = vmatpush1.bf16.msra.mxu0 0
      %4278 = vmatprep.subr.bf16.mxu0 0
      %4279 = vmatpush1.bf16.msra.mxu0 0
      %4280 = vmatprep.subr.bf16.mxu0 0
      %4281 = vmatpush1.bf16.msra.mxu0 0
      %4282 = vmatprep.subr.bf16.mxu0 0
      %4283 = vmatpush1.bf16.msra.mxu0 0
      %4284 = vmatprep.subr.bf16.mxu0 0
      %4285 = vmatpush1.bf16.msra.mxu0 0
      %4286 = vmatprep.subr.bf16.mxu0 0
      %4287 = vmatpush1.bf16.msra.mxu0 0
      %4288 = vmatprep.subr.bf16.mxu0 0
      %4289 = vmatpush1.bf16.msra.mxu0 0
      %4290 = vmatprep.subr.bf16.mxu0 0
      %4291 = vmatpush1.bf16.msra.mxu0 0
      %4292 = vmatprep.subr.bf16.mxu0 0
      %4293 = vmatpush1.bf16.msra.mxu0 0
      %4294 = vmatprep.subr.bf16.mxu0 0
      %4295 = vmatpush1.bf16.msra.mxu0 0
      %4296 = vmatprep.subr.bf16.mxu0 0
      %4297 = vmatpush1.bf16.msra.mxu0 0
      %4298 = vmatprep.mubr.bf16.mxu0 0
      %4299 = vmatmul.mubr.bf16.gmra.mrb[0].mxu0 %v4255
      %v4300 = vpop.f32.mrb[0].mxu0
      %v4301 = vadd.f32 0.0, %v4300
      %v4302 = vpop.f32.mrb[0].mxu0
      %v4303 = vadd.f32 0.0, %v4302
      %v4304 = vpop.f32.mrb[0].mxu0
      %v4305 = vadd.f32 0.0, %v4304
      %v4306 = vpop.f32.mrb[0].mxu0
      %v4307 = vadd.f32 0.0, %v4306
      %4308 = vmatprep.mubr.bf16.mxu0 0
      %4309 = vmatmul.mubr.bf16.gmra.mrb[0].mxu0 %v4258
      %v4310 = vpop.f32.mrb[0].mxu0
      %v4311 = vadd.f32 0.0, %v4310
      %v4312 = vpop.f32.mrb[0].mxu0
      %v4313 = vadd.f32 0.0, %v4312
      %v4314 = vpop.f32.mrb[0].mxu0
      %v4315 = vadd.f32 0.0, %v4314
      %v4316 = vpop.f32.mrb[0].mxu0
      %v4317 = vadd.f32 0.0, %v4316
      %4318 = vmatprep.mubr.bf16.mxu0 0
      %4319 = vmatmul.mubr.bf16.gmra.mrb[0].mxu0 %v4261
      %v4320 = vpop.f32.mrb[0].mxu0
      %v4321 = vadd.f32 0.0, %v4320
      %v4322 = vpop.f32.mrb[0].mxu0
      %v4323 = vadd.f32 0.0, %v4322
      %v4324 = vpop.f32.mrb[0].mxu0
      %v4325 = vadd.f32 0.0, %v4324
      %v4326 = vpop.f32.mrb[0].mxu0
      %v4327 = vadd.f32 0.0, %v4326
      %4328 = vmatprep.mubr.bf16.mxu0 0
      %4329 = vmatmul.mubr.bf16.gmra.mrb[0].mxu0 %v4264
      %v4330 = vpop.f32.mrb[0].mxu0
      %v4331 = vadd.f32 0.0, %v4330
      %v4332 = vpop.f32.mrb[0].mxu0
      %v4333 = vadd.f32 0.0, %v4332
      %v4334 = vpop.f32.mrb[0].mxu0
      %v4335 = vadd.f32 0.0, %v4334
      %v4336 = vpop.f32.mrb[0].mxu0
      %v4337 = vadd.f32 0.0, %v4336
      %4338 = vdwg.mxu0
      %v4339 = vadd.f32 %v4137, %v4301
      %v4340 = vadd.f32 %v4138, %v4303
      %v4341 = vadd.f32 %v4139, %v4305
      %v4342 = vadd.f32 %v4140, %v4307
      %v4343 = vadd.f32 %v4141, %v4311
      %v4344 = vadd.f32 %v4142, %v4313
      %v4345 = vadd.f32 %v4143, %v4315
      %v4346 = vadd.f32 %v4144, %v4317
      %v4347 = vadd.f32 %v4145, %v4321
      %v4348 = vadd.f32 %v4146, %v4323
      %v4349 = vadd.f32 %v4147, %v4325
      %v4350 = vadd.f32 %v4148, %v4327
      %v4351 = vadd.f32 %v4149, %v4331
      %v4352 = vadd.f32 %v4150, %v4333
      %v4353 = vadd.f32 %v4151, %v4335
      %v4354 = vadd.f32 %v4152, %v4337
      %s4355 = scalar_lea.vmem %s4, 416
      %v4356 = vld [vmem:[%s4355] sm:$0xf]
      %v4357 = vld [vmem:[%s4355 + $0x4] sm:$0xf]
      %v4358 = vld [vmem:[%s4355 + $0x8] sm:$0xf]
      %v4359 = vld [vmem:[%s4355 + $0xc] sm:$0xf]
      %v4360 = vld [vmem:[%s4355 + $0x10] sm:$0xf]
      %v4361 = vld [vmem:[%s4355 + $0x14] sm:$0xf]
      %v4362 = vld [vmem:[%s4355 + $0x18] sm:$0xf]
      %v4363 = vld [vmem:[%s4355 + $0x1c] sm:$0xf]
      %v4364 = vpack.c.bf16 %v3565, %v3563
      %v4365 = vpack.c.bf16 %v3566, %v3564
      %v4366 = vpack.c.bf16 %v3569, %v3567
      %v4367 = vpack.c.bf16 %v3570, %v3568
      %v4368 = vpack.c.bf16 %v3573, %v3571
      %v4369 = vpack.c.bf16 %v3574, %v3572
      %v4370 = vpack.c.bf16 %v3577, %v3575
      %v4371 = vpack.c.bf16 %v3578, %v3576
      %v4380 = vunpack.c.l.b16 %v4356
      %v4381 = vunpack.c.l.b16 %v4357
      %v4382 = vunpack.c.l.b16 %v4358
      %v4383 = vunpack.c.l.b16 %v4359
      %v4384 = vunpack.c.l.b16 %v4360
      %v4385 = vunpack.c.l.b16 %v4361
      %v4386 = vunpack.c.l.b16 %v4362
      %v4387 = vunpack.c.l.b16 %v4363
      %v4388 = vpack.c.b16 %v4381, %v4380
      %v4389 = vpack.c.b16 %v4383, %v4382
      %v4390 = vpack.c.b16 %v4385, %v4384
      %v4391 = vpack.c.b16 %v4387, %v4386
      %v4393 = vsel %vm1958, %v4388, 0
      %v4396 = vsel %vm1958, %v4389, 0
      %v4399 = vsel %vm1958, %v4390, 0
      %v4402 = vsel %vm1958, %v4391, 0
      %4404 = vmatprep.subr.bf16.mxu0 %v4365
      %4405 = vmatpush1.bf16.msra.mxu0 %v4364
      %4406 = vmatprep.subr.bf16.mxu0 %v4367
      %4407 = vmatpush1.bf16.msra.mxu0 %v4366
      %4408 = vmatprep.subr.bf16.mxu0 %v4369
      %4409 = vmatpush1.bf16.msra.mxu0 %v4368
      %4410 = vmatprep.subr.bf16.mxu0 %v4371
      %4411 = vmatpush1.bf16.msra.mxu0 %v4370
      %4412 = vmatprep.subr.bf16.mxu0 0
      %4413 = vmatpush1.bf16.msra.mxu0 0
      %4414 = vmatprep.subr.bf16.mxu0 0
      %4415 = vmatpush1.bf16.msra.mxu0 0
      %4416 = vmatprep.subr.bf16.mxu0 0
      %4417 = vmatpush1.bf16.msra.mxu0 0
      %4418 = vmatprep.subr.bf16.mxu0 0
      %4419 = vmatpush1.bf16.msra.mxu0 0
      %4420 = vmatprep.subr.bf16.mxu0 0
      %4421 = vmatpush1.bf16.msra.mxu0 0
      %4422 = vmatprep.subr.bf16.mxu0 0
      %4423 = vmatpush1.bf16.msra.mxu0 0
      %4424 = vmatprep.subr.bf16.mxu0 0
      %4425 = vmatpush1.bf16.msra.mxu0 0
      %4426 = vmatprep.subr.bf16.mxu0 0
      %4427 = vmatpush1.bf16.msra.mxu0 0
      %4428 = vmatprep.subr.bf16.mxu0 0
      %4429 = vmatpush1.bf16.msra.mxu0 0
      %4430 = vmatprep.subr.bf16.mxu0 0
      %4431 = vmatpush1.bf16.msra.mxu0 0
      %4432 = vmatprep.subr.bf16.mxu0 0
      %4433 = vmatpush1.bf16.msra.mxu0 0
      %4434 = vmatprep.subr.bf16.mxu0 0
      %4435 = vmatpush1.bf16.msra.mxu0 0
      %4436 = vmatprep.mubr.bf16.mxu0 0
      %4437 = vmatmul.mubr.bf16.gmra.mrb[0].mxu0 %v4393
      %v4438 = vpop.f32.mrb[0].mxu0
      %v4439 = vadd.f32 0.0, %v4438
      %v4440 = vpop.f32.mrb[0].mxu0
      %v4441 = vadd.f32 0.0, %v4440
      %v4442 = vpop.f32.mrb[0].mxu0
      %v4443 = vadd.f32 0.0, %v4442
      %v4444 = vpop.f32.mrb[0].mxu0
      %v4445 = vadd.f32 0.0, %v4444
      %4446 = vmatprep.mubr.bf16.mxu0 0
      %4447 = vmatmul.mubr.bf16.gmra.mrb[0].mxu0 %v4396
      %v4448 = vpop.f32.mrb[0].mxu0
      %v4449 = vadd.f32 0.0, %v4448
      %v4450 = vpop.f32.mrb[0].mxu0
      %v4451 = vadd.f32 0.0, %v4450
      %v4452 = vpop.f32.mrb[0].mxu0
      %v4453 = vadd.f32 0.0, %v4452
      %v4454 = vpop.f32.mrb[0].mxu0
      %v4455 = vadd.f32 0.0, %v4454
      %4456 = vmatprep.mubr.bf16.mxu0 0
      %4457 = vmatmul.mubr.bf16.gmra.mrb[0].mxu0 %v4399
      %v4458 = vpop.f32.mrb[0].mxu0
      %v4459 = vadd.f32 0.0, %v4458
      %v4460 = vpop.f32.mrb[0].mxu0
      %v4461 = vadd.f32 0.0, %v4460
      %v4462 = vpop.f32.mrb[0].mxu0
      %v4463 = vadd.f32 0.0, %v4462
      %v4464 = vpop.f32.mrb[0].mxu0
      %v4465 = vadd.f32 0.0, %v4464
      %4466 = vmatprep.mubr.bf16.mxu0 0
      %4467 = vmatmul.mubr.bf16.gmra.mrb[0].mxu0 %v4402
      %v4468 = vpop.f32.mrb[0].mxu0
      %v4469 = vadd.f32 0.0, %v4468
      %v4470 = vpop.f32.mrb[0].mxu0
      %v4471 = vadd.f32 0.0, %v4470
      %v4472 = vpop.f32.mrb[0].mxu0
      %v4473 = vadd.f32 0.0, %v4472
      %v4474 = vpop.f32.mrb[0].mxu0
      %v4475 = vadd.f32 0.0, %v4474
      %4476 = vdwg.mxu0
      %v4477 = vadd.f32 %v4339, %v4439
      %v4478 = vadd.f32 %v4340, %v4441
      %v4479 = vadd.f32 %v4341, %v4443
      %v4480 = vadd.f32 %v4342, %v4445
      %v4481 = vadd.f32 %v4343, %v4449
      %v4482 = vadd.f32 %v4344, %v4451
      %v4483 = vadd.f32 %v4345, %v4453
      %v4484 = vadd.f32 %v4346, %v4455
      %v4485 = vadd.f32 %v4347, %v4459
      %v4486 = vadd.f32 %v4348, %v4461
      %v4487 = vadd.f32 %v4349, %v4463
      %v4488 = vadd.f32 %v4350, %v4465
      %v4489 = vadd.f32 %v4351, %v4469
      %v4490 = vadd.f32 %v4352, %v4471
      %v4491 = vadd.f32 %v4353, %v4473
      %v4492 = vadd.f32 %v4354, %v4475
      %4493 = vrot.lane.b32.xlu0 %v3563, 127
      %v4494 = vpop.permute.xlu0 %4493
      %4495 = vrot.lane.b32.xlu0 %v3565, 127
      %v4496 = vpop.permute.xlu0 %4495
      %4497 = vrot.lane.b32.xlu0 %v3567, 127
      %v4498 = vpop.permute.xlu0 %4497
      %4499 = vrot.lane.b32.xlu0 %v3569, 127
      %v4500 = vpop.permute.xlu0 %4499
      %4501 = vrot.lane.b32.xlu0 %v3571, 127
      %v4502 = vpop.permute.xlu0 %4501
      %4503 = vrot.lane.b32.xlu0 %v3573, 127
      %v4504 = vpop.permute.xlu0 %4503
      %4505 = vrot.lane.b32.xlu0 %v3575, 127
      %v4506 = vpop.permute.xlu0 %4505
      %4507 = vrot.lane.b32.xlu0 %v3577, 127
      %v4508 = vpop.permute.xlu0 %4507
      %4509 = vrot.lane.b32.xlu0 %v3564, 127
      %v4510 = vpop.permute.xlu0 %4509
      %4511 = vrot.lane.b32.xlu0 %v3566, 127
      %v4512 = vpop.permute.xlu0 %4511
      %4513 = vrot.lane.b32.xlu0 %v3568, 127
      %v4514 = vpop.permute.xlu0 %4513
      %4515 = vrot.lane.b32.xlu0 %v3570, 127
      %v4516 = vpop.permute.xlu0 %4515
      %4517 = vrot.lane.b32.xlu0 %v3572, 127
      %v4518 = vpop.permute.xlu0 %4517
      %4519 = vrot.lane.b32.xlu0 %v3574, 127
      %v4520 = vpop.permute.xlu0 %4519
      %4521 = vrot.lane.b32.xlu0 %v3576, 127
      %v4522 = vpop.permute.xlu0 %4521
      %4523 = vrot.lane.b32.xlu0 %v3578, 127
      %v4524 = vpop.permute.xlu0 %4523
      %v4525 = vsel %vm1069, %v4494, %v4510
      %v4526 = vsel %vm1069, %v4496, %v4512
      %v4527 = vsel %vm1069, %v4498, %v4514
      %v4528 = vsel %vm1069, %v4500, %v4516
      %v4529 = vsel %vm1069, %v4502, %v4518
      %v4530 = vsel %vm1069, %v4504, %v4520
      %v4531 = vsel %vm1069, %v4506, %v4522
      %v4532 = vsel %vm1069, %v4508, %v4524
      %v4533 = vsel %vm1069, %v4510, %v4494
      %v4534 = vsel %vm1069, %v4512, %v4496
      %v4535 = vsel %vm1069, %v4514, %v4498
      %v4536 = vsel %vm1069, %v4516, %v4500
      %v4537 = vsel %vm1069, %v4518, %v4502
      %v4538 = vsel %vm1069, %v4520, %v4504
      %v4539 = vsel %vm1069, %v4522, %v4506
      %v4540 = vsel %vm1069, %v4524, %v4508
      %v4541 = vmul.f32 %v4525, %v1076
      %v4542 = vmul.f32 %v4533, %v1080
      %v4543 = vmul.f32 %v4526, %v1076
      %v4544 = vmul.f32 %v4534, %v1080
      %v4545 = vmul.f32 %v4527, %v1076
      %v4546 = vmul.f32 %v4535, %v1080
      %v4547 = vmul.f32 %v4528, %v1076
      %v4548 = vmul.f32 %v4536, %v1080
      %v4549 = vmul.f32 %v4529, %v1076
      %v4550 = vmul.f32 %v4537, %v1080
      %v4551 = vmul.f32 %v4530, %v1076
      %v4552 = vmul.f32 %v4538, %v1080
      %v4553 = vmul.f32 %v4531, %v1076
      %v4554 = vmul.f32 %v4539, %v1080
      %v4555 = vmul.f32 %v4532, %v1076
      %v4556 = vmul.f32 %v4540, %v1080
      %s4557 = scalar_lea.vmem %s4, 448
      %v4558 = vld [vmem:[%s4557] sm:$0xf]
      %v4559 = vld [vmem:[%s4557 + $0x4] sm:$0xf]
      %v4560 = vld [vmem:[%s4557 + $0x8] sm:$0xf]
      %v4561 = vld [vmem:[%s4557 + $0xc] sm:$0xf]
      %v4562 = vld [vmem:[%s4557 + $0x10] sm:$0xf]
      %v4563 = vld [vmem:[%s4557 + $0x14] sm:$0xf]
      %v4564 = vld [vmem:[%s4557 + $0x18] sm:$0xf]
      %v4565 = vld [vmem:[%s4557 + $0x1c] sm:$0xf]
      %v4566 = vpack.c.bf16 %v4543, %v4541
      %v4567 = vpack.c.bf16 %v4544, %v4542
      %v4568 = vpack.c.bf16 %v4547, %v4545
      %v4569 = vpack.c.bf16 %v4548, %v4546
      %v4570 = vpack.c.bf16 %v4551, %v4549
      %v4571 = vpack.c.bf16 %v4552, %v4550
      %v4572 = vpack.c.bf16 %v4555, %v4553
      %v4573 = vpack.c.bf16 %v4556, %v4554
      %v4582 = vunpack.c.l.b16 %v4558
      %v4583 = vunpack.c.l.b16 %v4559
      %v4584 = vunpack.c.l.b16 %v4560
      %v4585 = vunpack.c.l.b16 %v4561
      %v4586 = vunpack.c.l.b16 %v4562
      %v4587 = vunpack.c.l.b16 %v4563
      %v4588 = vunpack.c.l.b16 %v4564
      %v4589 = vunpack.c.l.b16 %v4565
      %v4590 = vpack.c.b16 %v4583, %v4582
      %v4591 = vpack.c.b16 %v4585, %v4584
      %v4592 = vpack.c.b16 %v4587, %v4586
      %v4593 = vpack.c.b16 %v4589, %v4588
      %v4595 = vsel %vm1958, %v4590, 0
      %v4598 = vsel %vm1958, %v4591, 0
      %v4601 = vsel %vm1958, %v4592, 0
      %v4604 = vsel %vm1958, %v4593, 0
      %4606 = vmatprep.subr.bf16.mxu0 %v4567
      %4607 = vmatpush1.bf16.msra.mxu0 %v4566
      %4608 = vmatprep.subr.bf16.mxu0 %v4569
      %4609 = vmatpush1.bf16.msra.mxu0 %v4568
      %4610 = vmatprep.subr.bf16.mxu0 %v4571
      %4611 = vmatpush1.bf16.msra.mxu0 %v4570
      %4612 = vmatprep.subr.bf16.mxu0 %v4573
      %4613 = vmatpush1.bf16.msra.mxu0 %v4572
      %4614 = vmatprep.subr.bf16.mxu0 0
      %4615 = vmatpush1.bf16.msra.mxu0 0
      %4616 = vmatprep.subr.bf16.mxu0 0
      %4617 = vmatpush1.bf16.msra.mxu0 0
      %4618 = vmatprep.subr.bf16.mxu0 0
      %4619 = vmatpush1.bf16.msra.mxu0 0
      %4620 = vmatprep.subr.bf16.mxu0 0
      %4621 = vmatpush1.bf16.msra.mxu0 0
      %4622 = vmatprep.subr.bf16.mxu0 0
      %4623 = vmatpush1.bf16.msra.mxu0 0
      %4624 = vmatprep.subr.bf16.mxu0 0
      %4625 = vmatpush1.bf16.msra.mxu0 0
      %4626 = vmatprep.subr.bf16.mxu0 0
      %4627 = vmatpush1.bf16.msra.mxu0 0
      %4628 = vmatprep.subr.bf16.mxu0 0
      %4629 = vmatpush1.bf16.msra.mxu0 0
      %4630 = vmatprep.subr.bf16.mxu0 0
      %4631 = vmatpush1.bf16.msra.mxu0 0
      %4632 = vmatprep.subr.bf16.mxu0 0
      %4633 = vmatpush1.bf16.msra.mxu0 0
      %4634 = vmatprep.subr.bf16.mxu0 0
      %4635 = vmatpush1.bf16.msra.mxu0 0
      %4636 = vmatprep.subr.bf16.mxu0 0
      %4637 = vmatpush1.bf16.msra.mxu0 0
      %4638 = vmatprep.mubr.bf16.mxu0 0
      %4639 = vmatmul.mubr.bf16.gmra.mrb[0].mxu0 %v4595
      %v4640 = vpop.f32.mrb[0].mxu0
      %v4641 = vadd.f32 0.0, %v4640
      %v4642 = vpop.f32.mrb[0].mxu0
      %v4643 = vadd.f32 0.0, %v4642
      %v4644 = vpop.f32.mrb[0].mxu0
      %v4645 = vadd.f32 0.0, %v4644
      %v4646 = vpop.f32.mrb[0].mxu0
      %v4647 = vadd.f32 0.0, %v4646
      %4648 = vmatprep.mubr.bf16.mxu0 0
      %4649 = vmatmul.mubr.bf16.gmra.mrb[0].mxu0 %v4598
      %v4650 = vpop.f32.mrb[0].mxu0
      %v4651 = vadd.f32 0.0, %v4650
      %v4652 = vpop.f32.mrb[0].mxu0
      %v4653 = vadd.f32 0.0, %v4652
      %v4654 = vpop.f32.mrb[0].mxu0
      %v4655 = vadd.f32 0.0, %v4654
      %v4656 = vpop.f32.mrb[0].mxu0
      %v4657 = vadd.f32 0.0, %v4656
      %4658 = vmatprep.mubr.bf16.mxu0 0
      %4659 = vmatmul.mubr.bf16.gmra.mrb[0].mxu0 %v4601
      %v4660 = vpop.f32.mrb[0].mxu0
      %v4661 = vadd.f32 0.0, %v4660
      %v4662 = vpop.f32.mrb[0].mxu0
      %v4663 = vadd.f32 0.0, %v4662
      %v4664 = vpop.f32.mrb[0].mxu0
      %v4665 = vadd.f32 0.0, %v4664
      %v4666 = vpop.f32.mrb[0].mxu0
      %v4667 = vadd.f32 0.0, %v4666
      %4668 = vmatprep.mubr.bf16.mxu0 0
      %4669 = vmatmul.mubr.bf16.gmra.mrb[0].mxu0 %v4604
      %v4670 = vpop.f32.mrb[0].mxu0
      %v4671 = vadd.f32 0.0, %v4670
      %v4672 = vpop.f32.mrb[0].mxu0
      %v4673 = vadd.f32 0.0, %v4672
      %v4674 = vpop.f32.mrb[0].mxu0
      %v4675 = vadd.f32 0.0, %v4674
      %v4676 = vpop.f32.mrb[0].mxu0
      %v4677 = vadd.f32 0.0, %v4676
      %4678 = vdwg.mxu0
      %v4679 = vadd.f32 %v4477, %v4641
      %v4680 = vadd.f32 %v4478, %v4643
      %v4681 = vadd.f32 %v4479, %v4645
      %v4682 = vadd.f32 %v4480, %v4647
      %v4683 = vadd.f32 %v4481, %v4651
      %v4684 = vadd.f32 %v4482, %v4653
      %v4685 = vadd.f32 %v4483, %v4655
      %v4686 = vadd.f32 %v4484, %v4657
      %v4687 = vadd.f32 %v4485, %v4661
      %v4688 = vadd.f32 %v4486, %v4663
      %v4689 = vadd.f32 %v4487, %v4665
      %v4690 = vadd.f32 %v4488, %v4667
      %v4691 = vadd.f32 %v4489, %v4671
      %v4692 = vadd.f32 %v4490, %v4673
      %v4693 = vadd.f32 %v4491, %v4675
      %v4694 = vadd.f32 %v4492, %v4677
      %4695 = vrot.lane.b32.xlu0 %v3563, 113
      %v4696 = vpop.permute.xlu0 %4695
      %4697 = vrot.lane.b32.xlu0 %v3565, 113
      %v4698 = vpop.permute.xlu0 %4697
      %4699 = vrot.lane.b32.xlu0 %v3567, 113
      %v4700 = vpop.permute.xlu0 %4699
      %4701 = vrot.lane.b32.xlu0 %v3569, 113
      %v4702 = vpop.permute.xlu0 %4701
      %4703 = vrot.lane.b32.xlu0 %v3571, 113
      %v4704 = vpop.permute.xlu0 %4703
      %4705 = vrot.lane.b32.xlu0 %v3573, 113
      %v4706 = vpop.permute.xlu0 %4705
      %4707 = vrot.lane.b32.xlu0 %v3575, 113
      %v4708 = vpop.permute.xlu0 %4707
      %4709 = vrot.lane.b32.xlu0 %v3577, 113
      %v4710 = vpop.permute.xlu0 %4709
      %4711 = vrot.lane.b32.xlu0 %v3564, 113
      %v4712 = vpop.permute.xlu0 %4711
      %4713 = vrot.lane.b32.xlu0 %v3566, 113
      %v4714 = vpop.permute.xlu0 %4713
      %4715 = vrot.lane.b32.xlu0 %v3568, 113
      %v4716 = vpop.permute.xlu0 %4715
      %4717 = vrot.lane.b32.xlu0 %v3570, 113
      %v4718 = vpop.permute.xlu0 %4717
      %4719 = vrot.lane.b32.xlu0 %v3572, 113
      %v4720 = vpop.permute.xlu0 %4719
      %4721 = vrot.lane.b32.xlu0 %v3574, 113
      %v4722 = vpop.permute.xlu0 %4721
      %4723 = vrot.lane.b32.xlu0 %v3576, 113
      %v4724 = vpop.permute.xlu0 %4723
      %4725 = vrot.lane.b32.xlu0 %v3578, 113
      %v4726 = vpop.permute.xlu0 %4725
      %v4727 = vsel %vm1227, %v4696, %v4712
      %v4728 = vsel %vm1227, %v4698, %v4714
      %v4729 = vsel %vm1227, %v4700, %v4716
      %v4730 = vsel %vm1227, %v4702, %v4718
      %v4731 = vsel %vm1227, %v4704, %v4720
      %v4732 = vsel %vm1227, %v4706, %v4722
      %v4733 = vsel %vm1227, %v4708, %v4724
      %v4734 = vsel %vm1227, %v4710, %v4726
      %v4735 = vsel %vm1227, %v4712, %v4696
      %v4736 = vsel %vm1227, %v4714, %v4698
      %v4737 = vsel %vm1227, %v4716, %v4700
      %v4738 = vsel %vm1227, %v4718, %v4702
      %v4739 = vsel %vm1227, %v4720, %v4704
      %v4740 = vsel %vm1227, %v4722, %v4706
      %v4741 = vsel %vm1227, %v4724, %v4708
      %v4742 = vsel %vm1227, %v4726, %v4710
      %v4743 = vmul.f32 %v4727, %v1234
      %v4744 = vmul.f32 %v4735, %v1238
      %v4745 = vmul.f32 %v4728, %v1234
      %v4746 = vmul.f32 %v4736, %v1238
      %v4747 = vmul.f32 %v4729, %v1234
      %v4748 = vmul.f32 %v4737, %v1238
      %v4749 = vmul.f32 %v4730, %v1234
      %v4750 = vmul.f32 %v4738, %v1238
      %v4751 = vmul.f32 %v4731, %v1234
      %v4752 = vmul.f32 %v4739, %v1238
      %v4753 = vmul.f32 %v4732, %v1234
      %v4754 = vmul.f32 %v4740, %v1238
      %v4755 = vmul.f32 %v4733, %v1234
      %v4756 = vmul.f32 %v4741, %v1238
      %v4757 = vmul.f32 %v4734, %v1234
      %v4758 = vmul.f32 %v4742, %v1238
      %s4759 = scalar_lea.vmem %s4, 480
      %v4760 = vld [vmem:[%s4759] sm:$0xf]
      %v4761 = vld [vmem:[%s4759 + $0x4] sm:$0xf]
      %v4762 = vld [vmem:[%s4759 + $0x8] sm:$0xf]
      %v4763 = vld [vmem:[%s4759 + $0xc] sm:$0xf]
      %v4764 = vld [vmem:[%s4759 + $0x10] sm:$0xf]
      %v4765 = vld [vmem:[%s4759 + $0x14] sm:$0xf]
      %v4766 = vld [vmem:[%s4759 + $0x18] sm:$0xf]
      %v4767 = vld [vmem:[%s4759 + $0x1c] sm:$0xf]
      %v4768 = vpack.c.bf16 %v4745, %v4743
      %v4769 = vpack.c.bf16 %v4746, %v4744
      %v4770 = vpack.c.bf16 %v4749, %v4747
      %v4771 = vpack.c.bf16 %v4750, %v4748
      %v4772 = vpack.c.bf16 %v4753, %v4751
      %v4773 = vpack.c.bf16 %v4754, %v4752
      %v4774 = vpack.c.bf16 %v4757, %v4755
      %v4775 = vpack.c.bf16 %v4758, %v4756
      %v4784 = vunpack.c.l.b16 %v4760
      %v4785 = vunpack.c.l.b16 %v4761
      %v4786 = vunpack.c.l.b16 %v4762
      %v4787 = vunpack.c.l.b16 %v4763
      %v4788 = vunpack.c.l.b16 %v4764
      %v4789 = vunpack.c.l.b16 %v4765
      %v4790 = vunpack.c.l.b16 %v4766
      %v4791 = vunpack.c.l.b16 %v4767
      %v4792 = vpack.c.b16 %v4785, %v4784
      %v4793 = vpack.c.b16 %v4787, %v4786
      %v4794 = vpack.c.b16 %v4789, %v4788
      %v4795 = vpack.c.b16 %v4791, %v4790
      %v4797 = vsel %vm1958, %v4792, 0
      %v4800 = vsel %vm1958, %v4793, 0
      %v4803 = vsel %vm1958, %v4794, 0
      %v4806 = vsel %vm1958, %v4795, 0
      %4808 = vmatprep.subr.bf16.mxu0 %v4769
      %4809 = vmatpush1.bf16.msra.mxu0 %v4768
      %4810 = vmatprep.subr.bf16.mxu0 %v4771
      %4811 = vmatpush1.bf16.msra.mxu0 %v4770
      %4812 = vmatprep.subr.bf16.mxu0 %v4773
      %4813 = vmatpush1.bf16.msra.mxu0 %v4772
      %4814 = vmatprep.subr.bf16.mxu0 %v4775
      %4815 = vmatpush1.bf16.msra.mxu0 %v4774
      %4816 = vmatprep.subr.bf16.mxu0 0
      %4817 = vmatpush1.bf16.msra.mxu0 0
      %4818 = vmatprep.subr.bf16.mxu0 0
      %4819 = vmatpush1.bf16.msra.mxu0 0
      %4820 = vmatprep.subr.bf16.mxu0 0
      %4821 = vmatpush1.bf16.msra.mxu0 0
      %4822 = vmatprep.subr.bf16.mxu0 0
      %4823 = vmatpush1.bf16.msra.mxu0 0
      %4824 = vmatprep.subr.bf16.mxu0 0
      %4825 = vmatpush1.bf16.msra.mxu0 0
      %4826 = vmatprep.subr.bf16.mxu0 0
      %4827 = vmatpush1.bf16.msra.mxu0 0
      %4828 = vmatprep.subr.bf16.mxu0 0
      %4829 = vmatpush1.bf16.msra.mxu0 0
      %4830 = vmatprep.subr.bf16.mxu0 0
      %4831 = vmatpush1.bf16.msra.mxu0 0
      %4832 = vmatprep.subr.bf16.mxu0 0
      %4833 = vmatpush1.bf16.msra.mxu0 0
      %4834 = vmatprep.subr.bf16.mxu0 0
      %4835 = vmatpush1.bf16.msra.mxu0 0
      %4836 = vmatprep.subr.bf16.mxu0 0
      %4837 = vmatpush1.bf16.msra.mxu0 0
      %4838 = vmatprep.subr.bf16.mxu0 0
      %4839 = vmatpush1.bf16.msra.mxu0 0
      %4840 = vmatprep.mubr.bf16.mxu0 0
      %4841 = vmatmul.mubr.bf16.gmra.mrb[0].mxu0 %v4797
      %v4842 = vpop.f32.mrb[0].mxu0
      %v4843 = vadd.f32 0.0, %v4842
      %v4844 = vpop.f32.mrb[0].mxu0
      %v4845 = vadd.f32 0.0, %v4844
      %v4846 = vpop.f32.mrb[0].mxu0
      %v4847 = vadd.f32 0.0, %v4846
      %v4848 = vpop.f32.mrb[0].mxu0
      %v4849 = vadd.f32 0.0, %v4848
      %4850 = vmatprep.mubr.bf16.mxu0 0
      %4851 = vmatmul.mubr.bf16.gmra.mrb[0].mxu0 %v4800
      %v4852 = vpop.f32.mrb[0].mxu0
      %v4853 = vadd.f32 0.0, %v4852
      %v4854 = vpop.f32.mrb[0].mxu0
      %v4855 = vadd.f32 0.0, %v4854
      %v4856 = vpop.f32.mrb[0].mxu0
      %v4857 = vadd.f32 0.0, %v4856
      %v4858 = vpop.f32.mrb[0].mxu0
      %v4859 = vadd.f32 0.0, %v4858
      %4860 = vmatprep.mubr.bf16.mxu0 0
      %4861 = vmatmul.mubr.bf16.gmra.mrb[0].mxu0 %v4803
      %v4862 = vpop.f32.mrb[0].mxu0
      %v4863 = vadd.f32 0.0, %v4862
      %v4864 = vpop.f32.mrb[0].mxu0
      %v4865 = vadd.f32 0.0, %v4864
      %v4866 = vpop.f32.mrb[0].mxu0
      %v4867 = vadd.f32 0.0, %v4866
      %v4868 = vpop.f32.mrb[0].mxu0
      %v4869 = vadd.f32 0.0, %v4868
      %4870 = vmatprep.mubr.bf16.mxu0 0
      %4871 = vmatmul.mubr.bf16.gmra.mrb[0].mxu0 %v4806
      %v4872 = vpop.f32.mrb[0].mxu0
      %v4873 = vadd.f32 0.0, %v4872
      %v4874 = vpop.f32.mrb[0].mxu0
      %v4875 = vadd.f32 0.0, %v4874
      %v4876 = vpop.f32.mrb[0].mxu0
      %v4877 = vadd.f32 0.0, %v4876
      %v4878 = vpop.f32.mrb[0].mxu0
      %v4879 = vadd.f32 0.0, %v4878
      %4880 = vdwg.mxu0
      %v4881 = vadd.f32 %v4679, %v4843
      %v4882 = vadd.f32 %v4680, %v4845
      %v4883 = vadd.f32 %v4681, %v4847
      %v4884 = vadd.f32 %v4682, %v4849
      %v4885 = vadd.f32 %v4683, %v4853
      %v4886 = vadd.f32 %v4684, %v4855
      %v4887 = vadd.f32 %v4685, %v4857
      %v4888 = vadd.f32 %v4686, %v4859
      %v4889 = vadd.f32 %v4687, %v4863
      %v4890 = vadd.f32 %v4688, %v4865
      %v4891 = vadd.f32 %v4689, %v4867
      %v4892 = vadd.f32 %v4690, %v4869
      %v4893 = vadd.f32 %v4691, %v4873
      %v4894 = vadd.f32 %v4692, %v4875
      %v4895 = vadd.f32 %v4693, %v4877
      %v4896 = vadd.f32 %v4694, %v4879
      %4897 = vrot.lane.b32.xlu0 %v3563, 112
      %v4898 = vpop.permute.xlu0 %4897
      %4899 = vrot.lane.b32.xlu0 %v3565, 112
      %v4900 = vpop.permute.xlu0 %4899
      %4901 = vrot.lane.b32.xlu0 %v3567, 112
      %v4902 = vpop.permute.xlu0 %4901
      %4903 = vrot.lane.b32.xlu0 %v3569, 112
      %v4904 = vpop.permute.xlu0 %4903
      %4905 = vrot.lane.b32.xlu0 %v3571, 112
      %v4906 = vpop.permute.xlu0 %4905
      %4907 = vrot.lane.b32.xlu0 %v3573, 112
      %v4908 = vpop.permute.xlu0 %4907
      %4909 = vrot.lane.b32.xlu0 %v3575, 112
      %v4910 = vpop.permute.xlu0 %4909
      %4911 = vrot.lane.b32.xlu0 %v3577, 112
      %v4912 = vpop.permute.xlu0 %4911
      %4913 = vrot.lane.b32.xlu0 %v3564, 112
      %v4914 = vpop.permute.xlu0 %4913
      %4915 = vrot.lane.b32.xlu0 %v3566, 112
      %v4916 = vpop.permute.xlu0 %4915
      %4917 = vrot.lane.b32.xlu0 %v3568, 112
      %v4918 = vpop.permute.xlu0 %4917
      %4919 = vrot.lane.b32.xlu0 %v3570, 112
      %v4920 = vpop.permute.xlu0 %4919
      %4921 = vrot.lane.b32.xlu0 %v3572, 112
      %v4922 = vpop.permute.xlu0 %4921
      %4923 = vrot.lane.b32.xlu0 %v3574, 112
      %v4924 = vpop.permute.xlu0 %4923
      %4925 = vrot.lane.b32.xlu0 %v3576, 112
      %v4926 = vpop.permute.xlu0 %4925
      %4927 = vrot.lane.b32.xlu0 %v3578, 112
      %v4928 = vpop.permute.xlu0 %4927
      %v4929 = vsel %vm1385, %v4898, %v4914
      %v4930 = vsel %vm1385, %v4900, %v4916
      %v4931 = vsel %vm1385, %v4902, %v4918
      %v4932 = vsel %vm1385, %v4904, %v4920
      %v4933 = vsel %vm1385, %v4906, %v4922
      %v4934 = vsel %vm1385, %v4908, %v4924
      %v4935 = vsel %vm1385, %v4910, %v4926
      %v4936 = vsel %vm1385, %v4912, %v4928
      %v4937 = vsel %vm1385, %v4914, %v4898
      %v4938 = vsel %vm1385, %v4916, %v4900
      %v4939 = vsel %vm1385, %v4918, %v4902
      %v4940 = vsel %vm1385, %v4920, %v4904
      %v4941 = vsel %vm1385, %v4922, %v4906
      %v4942 = vsel %vm1385, %v4924, %v4908
      %v4943 = vsel %vm1385, %v4926, %v4910
      %v4944 = vsel %vm1385, %v4928, %v4912
      %v4945 = vmul.f32 %v4929, %v1392
      %v4946 = vmul.f32 %v4937, %v1396
      %v4947 = vmul.f32 %v4930, %v1392
      %v4948 = vmul.f32 %v4938, %v1396
      %v4949 = vmul.f32 %v4931, %v1392
      %v4950 = vmul.f32 %v4939, %v1396
      %v4951 = vmul.f32 %v4932, %v1392
      %v4952 = vmul.f32 %v4940, %v1396
      %v4953 = vmul.f32 %v4933, %v1392
      %v4954 = vmul.f32 %v4941, %v1396
      %v4955 = vmul.f32 %v4934, %v1392
      %v4956 = vmul.f32 %v4942, %v1396
      %v4957 = vmul.f32 %v4935, %v1392
      %v4958 = vmul.f32 %v4943, %v1396
      %v4959 = vmul.f32 %v4936, %v1392
      %v4960 = vmul.f32 %v4944, %v1396
      %s4961 = scalar_lea.vmem %s4, 512
      %v4962 = vld [vmem:[%s4961] sm:$0xf]
      %v4963 = vld [vmem:[%s4961 + $0x4] sm:$0xf]
      %v4964 = vld [vmem:[%s4961 + $0x8] sm:$0xf]
      %v4965 = vld [vmem:[%s4961 + $0xc] sm:$0xf]
      %v4966 = vld [vmem:[%s4961 + $0x10] sm:$0xf]
      %v4967 = vld [vmem:[%s4961 + $0x14] sm:$0xf]
      %v4968 = vld [vmem:[%s4961 + $0x18] sm:$0xf]
      %v4969 = vld [vmem:[%s4961 + $0x1c] sm:$0xf]
      %v4970 = vpack.c.bf16 %v4947, %v4945
      %v4971 = vpack.c.bf16 %v4948, %v4946
      %v4972 = vpack.c.bf16 %v4951, %v4949
      %v4973 = vpack.c.bf16 %v4952, %v4950
      %v4974 = vpack.c.bf16 %v4955, %v4953
      %v4975 = vpack.c.bf16 %v4956, %v4954
      %v4976 = vpack.c.bf16 %v4959, %v4957
      %v4977 = vpack.c.bf16 %v4960, %v4958
      %v4986 = vunpack.c.l.b16 %v4962
      %v4987 = vunpack.c.l.b16 %v4963
      %v4988 = vunpack.c.l.b16 %v4964
      %v4989 = vunpack.c.l.b16 %v4965
      %v4990 = vunpack.c.l.b16 %v4966
      %v4991 = vunpack.c.l.b16 %v4967
      %v4992 = vunpack.c.l.b16 %v4968
      %v4993 = vunpack.c.l.b16 %v4969
      %v4994 = vpack.c.b16 %v4987, %v4986
      %v4995 = vpack.c.b16 %v4989, %v4988
      %v4996 = vpack.c.b16 %v4991, %v4990
      %v4997 = vpack.c.b16 %v4993, %v4992
      %v4999 = vsel %vm1958, %v4994, 0
      %v5002 = vsel %vm1958, %v4995, 0
      %v5005 = vsel %vm1958, %v4996, 0
      %v5008 = vsel %vm1958, %v4997, 0
      %5010 = vmatprep.subr.bf16.mxu0 %v4971
      %5011 = vmatpush1.bf16.msra.mxu0 %v4970
      %5012 = vmatprep.subr.bf16.mxu0 %v4973
      %5013 = vmatpush1.bf16.msra.mxu0 %v4972
      %5014 = vmatprep.subr.bf16.mxu0 %v4975
      %5015 = vmatpush1.bf16.msra.mxu0 %v4974
      %5016 = vmatprep.subr.bf16.mxu0 %v4977
      %5017 = vmatpush1.bf16.msra.mxu0 %v4976
      %5018 = vmatprep.subr.bf16.mxu0 0
      %5019 = vmatpush1.bf16.msra.mxu0 0
      %5020 = vmatprep.subr.bf16.mxu0 0
      %5021 = vmatpush1.bf16.msra.mxu0 0
      %5022 = vmatprep.subr.bf16.mxu0 0
      %5023 = vmatpush1.bf16.msra.mxu0 0
      %5024 = vmatprep.subr.bf16.mxu0 0
      %5025 = vmatpush1.bf16.msra.mxu0 0
      %5026 = vmatprep.subr.bf16.mxu0 0
      %5027 = vmatpush1.bf16.msra.mxu0 0
      %5028 = vmatprep.subr.bf16.mxu0 0
      %5029 = vmatpush1.bf16.msra.mxu0 0
      %5030 = vmatprep.subr.bf16.mxu0 0
      %5031 = vmatpush1.bf16.msra.mxu0 0
      %5032 = vmatprep.subr.bf16.mxu0 0
      %5033 = vmatpush1.bf16.msra.mxu0 0
      %5034 = vmatprep.subr.bf16.mxu0 0
      %5035 = vmatpush1.bf16.msra.mxu0 0
      %5036 = vmatprep.subr.bf16.mxu0 0
      %5037 = vmatpush1.bf16.msra.mxu0 0
      %5038 = vmatprep.subr.bf16.mxu0 0
      %5039 = vmatpush1.bf16.msra.mxu0 0
      %5040 = vmatprep.subr.bf16.mxu0 0
      %5041 = vmatpush1.bf16.msra.mxu0 0
      %5042 = vmatprep.mubr.bf16.mxu0 0
      %5043 = vmatmul.mubr.bf16.gmra.mrb[0].mxu0 %v4999
      %v5044 = vpop.f32.mrb[0].mxu0
      %v5045 = vadd.f32 0.0, %v5044
      %v5046 = vpop.f32.mrb[0].mxu0
      %v5047 = vadd.f32 0.0, %v5046
      %v5048 = vpop.f32.mrb[0].mxu0
      %v5049 = vadd.f32 0.0, %v5048
      %v5050 = vpop.f32.mrb[0].mxu0
      %v5051 = vadd.f32 0.0, %v5050
      %5052 = vmatprep.mubr.bf16.mxu0 0
      %5053 = vmatmul.mubr.bf16.gmra.mrb[0].mxu0 %v5002
      %v5054 = vpop.f32.mrb[0].mxu0
      %v5055 = vadd.f32 0.0, %v5054
      %v5056 = vpop.f32.mrb[0].mxu0
      %v5057 = vadd.f32 0.0, %v5056
      %v5058 = vpop.f32.mrb[0].mxu0
      %v5059 = vadd.f32 0.0, %v5058
      %v5060 = vpop.f32.mrb[0].mxu0
      %v5061 = vadd.f32 0.0, %v5060
      %5062 = vmatprep.mubr.bf16.mxu0 0
      %5063 = vmatmul.mubr.bf16.gmra.mrb[0].mxu0 %v5005
      %v5064 = vpop.f32.mrb[0].mxu0
      %v5065 = vadd.f32 0.0, %v5064
      %v5066 = vpop.f32.mrb[0].mxu0
      %v5067 = vadd.f32 0.0, %v5066
      %v5068 = vpop.f32.mrb[0].mxu0
      %v5069 = vadd.f32 0.0, %v5068
      %v5070 = vpop.f32.mrb[0].mxu0
      %v5071 = vadd.f32 0.0, %v5070
      %5072 = vmatprep.mubr.bf16.mxu0 0
      %5073 = vmatmul.mubr.bf16.gmra.mrb[0].mxu0 %v5008
      %v5074 = vpop.f32.mrb[0].mxu0
      %v5075 = vadd.f32 0.0, %v5074
      %v5076 = vpop.f32.mrb[0].mxu0
      %v5077 = vadd.f32 0.0, %v5076
      %v5078 = vpop.f32.mrb[0].mxu0
      %v5079 = vadd.f32 0.0, %v5078
      %v5080 = vpop.f32.mrb[0].mxu0
      %v5081 = vadd.f32 0.0, %v5080
      %5082 = vdwg.mxu0
      %v5083 = vadd.f32 %v4881, %v5045
      %v5084 = vadd.f32 %v4882, %v5047
      %v5085 = vadd.f32 %v4883, %v5049
      %v5086 = vadd.f32 %v4884, %v5051
      %v5087 = vadd.f32 %v4885, %v5055
      %v5088 = vadd.f32 %v4886, %v5057
      %v5089 = vadd.f32 %v4887, %v5059
      %v5090 = vadd.f32 %v4888, %v5061
      %v5091 = vadd.f32 %v4889, %v5065
      %v5092 = vadd.f32 %v4890, %v5067
      %v5093 = vadd.f32 %v4891, %v5069
      %v5094 = vadd.f32 %v4892, %v5071
      %v5095 = vadd.f32 %v4893, %v5075
      %v5096 = vadd.f32 %v4894, %v5077
      %v5097 = vadd.f32 %v4895, %v5079
      %v5098 = vadd.f32 %v4896, %v5081
      %5099 = vrot.lane.b32.xlu0 %v3563, 111
      %v5100 = vpop.permute.xlu0 %5099
      %5101 = vrot.lane.b32.xlu0 %v3565, 111
      %v5102 = vpop.permute.xlu0 %5101
      %5103 = vrot.lane.b32.xlu0 %v3567, 111
      %v5104 = vpop.permute.xlu0 %5103
      %5105 = vrot.lane.b32.xlu0 %v3569, 111
      %v5106 = vpop.permute.xlu0 %5105
      %5107 = vrot.lane.b32.xlu0 %v3571, 111
      %v5108 = vpop.permute.xlu0 %5107
      %5109 = vrot.lane.b32.xlu0 %v3573, 111
      %v5110 = vpop.permute.xlu0 %5109
      %5111 = vrot.lane.b32.xlu0 %v3575, 111
      %v5112 = vpop.permute.xlu0 %5111
      %5113 = vrot.lane.b32.xlu0 %v3577, 111
      %v5114 = vpop.permute.xlu0 %5113
      %5115 = vrot.lane.b32.xlu0 %v3564, 111
      %v5116 = vpop.permute.xlu0 %5115
      %5117 = vrot.lane.b32.xlu0 %v3566, 111
      %v5118 = vpop.permute.xlu0 %5117
      %5119 = vrot.lane.b32.xlu0 %v3568, 111
      %v5120 = vpop.permute.xlu0 %5119
      %5121 = vrot.lane.b32.xlu0 %v3570, 111
      %v5122 = vpop.permute.xlu0 %5121
      %5123 = vrot.lane.b32.xlu0 %v3572, 111
      %v5124 = vpop.permute.xlu0 %5123
      %5125 = vrot.lane.b32.xlu0 %v3574, 111
      %v5126 = vpop.permute.xlu0 %5125
      %5127 = vrot.lane.b32.xlu0 %v3576, 111
      %v5128 = vpop.permute.xlu0 %5127
      %5129 = vrot.lane.b32.xlu0 %v3578, 111
      %v5130 = vpop.permute.xlu0 %5129
      %v5131 = vsel %vm1543, %v5100, %v5116
      %v5132 = vsel %vm1543, %v5102, %v5118
      %v5133 = vsel %vm1543, %v5104, %v5120
      %v5134 = vsel %vm1543, %v5106, %v5122
      %v5135 = vsel %vm1543, %v5108, %v5124
      %v5136 = vsel %vm1543, %v5110, %v5126
      %v5137 = vsel %vm1543, %v5112, %v5128
      %v5138 = vsel %vm1543, %v5114, %v5130
      %v5139 = vsel %vm1543, %v5116, %v5100
      %v5140 = vsel %vm1543, %v5118, %v5102
      %v5141 = vsel %vm1543, %v5120, %v5104
      %v5142 = vsel %vm1543, %v5122, %v5106
      %v5143 = vsel %vm1543, %v5124, %v5108
      %v5144 = vsel %vm1543, %v5126, %v5110
      %v5145 = vsel %vm1543, %v5128, %v5112
      %v5146 = vsel %vm1543, %v5130, %v5114
      %v5147 = vmul.f32 %v5131, %v1550
      %v5148 = vmul.f32 %v5139, %v1554
      %v5149 = vmul.f32 %v5132, %v1550
      %v5150 = vmul.f32 %v5140, %v1554
      %v5151 = vmul.f32 %v5133, %v1550
      %v5152 = vmul.f32 %v5141, %v1554
      %v5153 = vmul.f32 %v5134, %v1550
      %v5154 = vmul.f32 %v5142, %v1554
      %v5155 = vmul.f32 %v5135, %v1550
      %v5156 = vmul.f32 %v5143, %v1554
      %v5157 = vmul.f32 %v5136, %v1550
      %v5158 = vmul.f32 %v5144, %v1554
      %v5159 = vmul.f32 %v5137, %v1550
      %v5160 = vmul.f32 %v5145, %v1554
      %v5161 = vmul.f32 %v5138, %v1550
      %v5162 = vmul.f32 %v5146, %v1554
      %s5163 = scalar_lea.vmem %s4, 544
      %v5164 = vld [vmem:[%s5163] sm:$0xf]
      %v5165 = vld [vmem:[%s5163 + $0x4] sm:$0xf]
      %v5166 = vld [vmem:[%s5163 + $0x8] sm:$0xf]
      %v5167 = vld [vmem:[%s5163 + $0xc] sm:$0xf]
      %v5168 = vld [vmem:[%s5163 + $0x10] sm:$0xf]
      %v5169 = vld [vmem:[%s5163 + $0x14] sm:$0xf]
      %v5170 = vld [vmem:[%s5163 + $0x18] sm:$0xf]
      %v5171 = vld [vmem:[%s5163 + $0x1c] sm:$0xf]
      %v5172 = vpack.c.bf16 %v5149, %v5147
      %v5173 = vpack.c.bf16 %v5150, %v5148
      %v5174 = vpack.c.bf16 %v5153, %v5151
      %v5175 = vpack.c.bf16 %v5154, %v5152
      %v5176 = vpack.c.bf16 %v5157, %v5155
      %v5177 = vpack.c.bf16 %v5158, %v5156
      %v5178 = vpack.c.bf16 %v5161, %v5159
      %v5179 = vpack.c.bf16 %v5162, %v5160
      %v5188 = vunpack.c.l.b16 %v5164
      %v5189 = vunpack.c.l.b16 %v5165
      %v5190 = vunpack.c.l.b16 %v5166
      %v5191 = vunpack.c.l.b16 %v5167
      %v5192 = vunpack.c.l.b16 %v5168
      %v5193 = vunpack.c.l.b16 %v5169
      %v5194 = vunpack.c.l.b16 %v5170
      %v5195 = vunpack.c.l.b16 %v5171
      %v5196 = vpack.c.b16 %v5189, %v5188
      %v5197 = vpack.c.b16 %v5191, %v5190
      %v5198 = vpack.c.b16 %v5193, %v5192
      %v5199 = vpack.c.b16 %v5195, %v5194
      %v5201 = vsel %vm1958, %v5196, 0
      %v5204 = vsel %vm1958, %v5197, 0
      %v5207 = vsel %vm1958, %v5198, 0
      %v5210 = vsel %vm1958, %v5199, 0
      %5212 = vmatprep.subr.bf16.mxu0 %v5173
      %5213 = vmatpush1.bf16.msra.mxu0 %v5172
      %5214 = vmatprep.subr.bf16.mxu0 %v5175
      %5215 = vmatpush1.bf16.msra.mxu0 %v5174
      %5216 = vmatprep.subr.bf16.mxu0 %v5177
      %5217 = vmatpush1.bf16.msra.mxu0 %v5176
      %5218 = vmatprep.subr.bf16.mxu0 %v5179
      %5219 = vmatpush1.bf16.msra.mxu0 %v5178
      %5220 = vmatprep.subr.bf16.mxu0 0
      %5221 = vmatpush1.bf16.msra.mxu0 0
      %5222 = vmatprep.subr.bf16.mxu0 0
      %5223 = vmatpush1.bf16.msra.mxu0 0
      %5224 = vmatprep.subr.bf16.mxu0 0
      %5225 = vmatpush1.bf16.msra.mxu0 0
      %5226 = vmatprep.subr.bf16.mxu0 0
      %5227 = vmatpush1.bf16.msra.mxu0 0
      %5228 = vmatprep.subr.bf16.mxu0 0
      %5229 = vmatpush1.bf16.msra.mxu0 0
      %5230 = vmatprep.subr.bf16.mxu0 0
      %5231 = vmatpush1.bf16.msra.mxu0 0
      %5232 = vmatprep.subr.bf16.mxu0 0
      %5233 = vmatpush1.bf16.msra.mxu0 0
      %5234 = vmatprep.subr.bf16.mxu0 0
      %5235 = vmatpush1.bf16.msra.mxu0 0
      %5236 = vmatprep.subr.bf16.mxu0 0
      %5237 = vmatpush1.bf16.msra.mxu0 0
      %5238 = vmatprep.subr.bf16.mxu0 0
      %5239 = vmatpush1.bf16.msra.mxu0 0
      %5240 = vmatprep.subr.bf16.mxu0 0
      %5241 = vmatpush1.bf16.msra.mxu0 0
      %5242 = vmatprep.subr.bf16.mxu0 0
      %5243 = vmatpush1.bf16.msra.mxu0 0
      %5244 = vmatprep.mubr.bf16.mxu0 0
      %5245 = vmatmul.mubr.bf16.gmra.mrb[0].mxu0 %v5201
      %v5246 = vpop.f32.mrb[0].mxu0
      %v5247 = vadd.f32 0.0, %v5246
      %v5248 = vpop.f32.mrb[0].mxu0
      %v5249 = vadd.f32 0.0, %v5248
      %v5250 = vpop.f32.mrb[0].mxu0
      %v5251 = vadd.f32 0.0, %v5250
      %v5252 = vpop.f32.mrb[0].mxu0
      %v5253 = vadd.f32 0.0, %v5252
      %5254 = vmatprep.mubr.bf16.mxu0 0
      %5255 = vmatmul.mubr.bf16.gmra.mrb[0].mxu0 %v5204
      %v5256 = vpop.f32.mrb[0].mxu0
      %v5257 = vadd.f32 0.0, %v5256
      %v5258 = vpop.f32.mrb[0].mxu0
      %v5259 = vadd.f32 0.0, %v5258
      %v5260 = vpop.f32.mrb[0].mxu0
      %v5261 = vadd.f32 0.0, %v5260
      %v5262 = vpop.f32.mrb[0].mxu0
      %v5263 = vadd.f32 0.0, %v5262
      %5264 = vmatprep.mubr.bf16.mxu0 0
      %5265 = vmatmul.mubr.bf16.gmra.mrb[0].mxu0 %v5207
      %v5266 = vpop.f32.mrb[0].mxu0
      %v5267 = vadd.f32 0.0, %v5266
      %v5268 = vpop.f32.mrb[0].mxu0
      %v5269 = vadd.f32 0.0, %v5268
      %v5270 = vpop.f32.mrb[0].mxu0
      %v5271 = vadd.f32 0.0, %v5270
      %v5272 = vpop.f32.mrb[0].mxu0
      %v5273 = vadd.f32 0.0, %v5272
      %5274 = vmatprep.mubr.bf16.mxu0 0
      %5275 = vmatmul.mubr.bf16.gmra.mrb[0].mxu0 %v5210
      %v5276 = vpop.f32.mrb[0].mxu0
      %v5277 = vadd.f32 0.0, %v5276
      %v5278 = vpop.f32.mrb[0].mxu0
      %v5279 = vadd.f32 0.0, %v5278
      %v5280 = vpop.f32.mrb[0].mxu0
      %v5281 = vadd.f32 0.0, %v5280
      %v5282 = vpop.f32.mrb[0].mxu0
      %v5283 = vadd.f32 0.0, %v5282
      %5284 = vdwg.mxu0
      %v5285 = vadd.f32 %v5083, %v5247
      %v5286 = vadd.f32 %v5084, %v5249
      %v5287 = vadd.f32 %v5085, %v5251
      %v5288 = vadd.f32 %v5086, %v5253
      %v5289 = vadd.f32 %v5087, %v5257
      %v5290 = vadd.f32 %v5088, %v5259
      %v5291 = vadd.f32 %v5089, %v5261
      %v5292 = vadd.f32 %v5090, %v5263
      %v5293 = vadd.f32 %v5091, %v5267
      %v5294 = vadd.f32 %v5092, %v5269
      %v5295 = vadd.f32 %v5093, %v5271
      %v5296 = vadd.f32 %v5094, %v5273
      %v5297 = vadd.f32 %v5095, %v5277
      %v5298 = vadd.f32 %v5096, %v5279
      %v5299 = vadd.f32 %v5097, %v5281
      %v5300 = vadd.f32 %v5098, %v5283
      %s5301 = scalar_lea.vmem %s5, 64
      %v5302 = vld [vmem:[%s5301] sm:$0xff]
      %v5303 = vld [vmem:[%s5301 + $0x8] sm:$0xff]
      %v5304 = vld [vmem:[%s5301 + $0x10] sm:$0xff]
      %v5305 = vld [vmem:[%s5301 + $0x18] sm:$0xff]
      %v5306 = vld [vmem:[%s5301 + $0x20] sm:$0xff]
      %v5307 = vld [vmem:[%s5301 + $0x28] sm:$0xff]
      %v5308 = vld [vmem:[%s5301 + $0x30] sm:$0xff]
      %v5309 = vld [vmem:[%s5301 + $0x38] sm:$0xff]
      %5311 = vset.pattern.permute.xlu0 0
      %5312 = vperm.xlu0 %5311, %v5302
      %v5313 = vpop.permute.xlu0 %5312
      %5316 = vset.pattern.permute.xlu0 0
      %5317 = vperm.xlu0 %5316, %v5303
      %v5318 = vpop.permute.xlu0 %5317
      %5321 = vset.pattern.permute.xlu0 0
      %5322 = vperm.xlu0 %5321, %v5304
      %v5323 = vpop.permute.xlu0 %5322
      %5326 = vset.pattern.permute.xlu0 0
      %5327 = vperm.xlu0 %5326, %v5305
      %v5328 = vpop.permute.xlu0 %5327
      %5331 = vset.pattern.permute.xlu0 0
      %5332 = vperm.xlu0 %5331, %v5306
      %v5333 = vpop.permute.xlu0 %5332
      %5336 = vset.pattern.permute.xlu0 0
      %5337 = vperm.xlu0 %5336, %v5307
      %v5338 = vpop.permute.xlu0 %5337
      %5341 = vset.pattern.permute.xlu0 0
      %5342 = vperm.xlu0 %5341, %v5308
      %v5343 = vpop.permute.xlu0 %5342
      %5346 = vset.pattern.permute.xlu0 0
      %5347 = vperm.xlu0 %5346, %v5309
      %v5348 = vpop.permute.xlu0 %5347
      %v5350 = vadd.f32 %v5285, %v5313
      %v5351 = vadd.f32 %v5286, %v5313
      %v5352 = vadd.f32 %v5287, %v5318
      %v5353 = vadd.f32 %v5288, %v5318
      %v5354 = vadd.f32 %v5289, %v5323
      %v5355 = vadd.f32 %v5290, %v5323
      %v5356 = vadd.f32 %v5291, %v5328
      %v5357 = vadd.f32 %v5292, %v5328
      %v5358 = vadd.f32 %v5293, %v5333
      %v5359 = vadd.f32 %v5294, %v5333
      %v5360 = vadd.f32 %v5295, %v5338
      %v5361 = vadd.f32 %v5296, %v5338
      %v5362 = vadd.f32 %v5297, %v5343
      %v5363 = vadd.f32 %v5298, %v5343
      %v5364 = vadd.f32 %v5299, %v5348
      %v5365 = vadd.f32 %v5300, %v5348
      %v5366 = vmax.f32 %v5350, 0.0
      %v5367 = vmax.f32 %v5351, 0.0
      %v5368 = vmax.f32 %v5352, 0.0
      %v5369 = vmax.f32 %v5353, 0.0
      %v5370 = vmax.f32 %v5354, 0.0
      %v5371 = vmax.f32 %v5355, 0.0
      %v5372 = vmax.f32 %v5356, 0.0
      %v5373 = vmax.f32 %v5357, 0.0
      %v5374 = vmax.f32 %v5358, 0.0
      %v5375 = vmax.f32 %v5359, 0.0
      %v5376 = vmax.f32 %v5360, 0.0
      %v5377 = vmax.f32 %v5361, 0.0
      %v5378 = vmax.f32 %v5362, 0.0
      %v5379 = vmax.f32 %v5363, 0.0
      %v5380 = vmax.f32 %v5364, 0.0
      %v5381 = vmax.f32 %v5365, 0.0
      %5382 = vrot.lane.b32.xlu0 %v5366, 17
      %v5383 = vpop.permute.xlu0 %5382
      %5384 = vrot.lane.b32.xlu0 %v5368, 17
      %v5385 = vpop.permute.xlu0 %5384
      %5386 = vrot.lane.b32.xlu0 %v5370, 17
      %v5387 = vpop.permute.xlu0 %5386
      %5388 = vrot.lane.b32.xlu0 %v5372, 17
      %v5389 = vpop.permute.xlu0 %5388
      %5390 = vrot.lane.b32.xlu0 %v5374, 17
      %v5391 = vpop.permute.xlu0 %5390
      %5392 = vrot.lane.b32.xlu0 %v5376, 17
      %v5393 = vpop.permute.xlu0 %5392
      %5394 = vrot.lane.b32.xlu0 %v5378, 17
      %v5395 = vpop.permute.xlu0 %5394
      %5396 = vrot.lane.b32.xlu0 %v5380, 17
      %v5397 = vpop.permute.xlu0 %5396
      %5398 = vrot.lane.b32.xlu0 %v5367, 17
      %v5399 = vpop.permute.xlu0 %5398
      %5400 = vrot.lane.b32.xlu0 %v5369, 17
      %v5401 = vpop.permute.xlu0 %5400
      %5402 = vrot.lane.b32.xlu0 %v5371, 17
      %v5403 = vpop.permute.xlu0 %5402
      %5404 = vrot.lane.b32.xlu0 %v5373, 17
      %v5405 = vpop.permute.xlu0 %5404
      %5406 = vrot.lane.b32.xlu0 %v5375, 17
      %v5407 = vpop.permute.xlu0 %5406
      %5408 = vrot.lane.b32.xlu0 %v5377, 17
      %v5409 = vpop.permute.xlu0 %5408
      %5410 = vrot.lane.b32.xlu0 %v5379, 17
      %v5411 = vpop.permute.xlu0 %5410
      %5412 = vrot.lane.b32.xlu0 %v5381, 17
      %v5413 = vpop.permute.xlu0 %5412
      %v5414 = vsel %vm330, %v5383, %v5399
      %v5415 = vsel %vm330, %v5385, %v5401
      %v5416 = vsel %vm330, %v5387, %v5403
      %v5417 = vsel %vm330, %v5389, %v5405
      %v5418 = vsel %vm330, %v5391, %v5407
      %v5419 = vsel %vm330, %v5393, %v5409
      %v5420 = vsel %vm330, %v5395, %v5411
      %v5421 = vsel %vm330, %v5397, %v5413
      %v5422 = vsel %vm330, %v5399, %v5383
      %v5423 = vsel %vm330, %v5401, %v5385
      %v5424 = vsel %vm330, %v5403, %v5387
      %v5425 = vsel %vm330, %v5405, %v5389
      %v5426 = vsel %vm330, %v5407, %v5391
      %v5427 = vsel %vm330, %v5409, %v5393
      %v5428 = vsel %vm330, %v5411, %v5395
      %v5429 = vsel %vm330, %v5413, %v5397
      %v5430 = vmul.f32 %v5422, %v337
      %v5431 = vmul.f32 %v5414, %v341
      %v5432 = vmul.f32 %v5423, %v337
      %v5433 = vmul.f32 %v5415, %v341
      %v5434 = vmul.f32 %v5424, %v337
      %v5435 = vmul.f32 %v5416, %v341
      %v5436 = vmul.f32 %v5425, %v337
      %v5437 = vmul.f32 %v5417, %v341
      %v5438 = vmul.f32 %v5426, %v337
      %v5439 = vmul.f32 %v5418, %v341
      %v5440 = vmul.f32 %v5427, %v337
      %v5441 = vmul.f32 %v5419, %v341
      %v5442 = vmul.f32 %v5428, %v337
      %v5443 = vmul.f32 %v5420, %v341
      %v5444 = vmul.f32 %v5429, %v337
      %v5445 = vmul.f32 %v5421, %v341
      %s5446 = scalar_lea.vmem %s4, 576
      %v5447 = vld [vmem:[%s5446] sm:$0xf]
      %v5448 = vld [vmem:[%s5446 + $0x4] sm:$0xf]
      %v5449 = vld [vmem:[%s5446 + $0x8] sm:$0xf]
      %v5450 = vld [vmem:[%s5446 + $0xc] sm:$0xf]
      %v5451 = vld [vmem:[%s5446 + $0x10] sm:$0xf]
      %v5452 = vld [vmem:[%s5446 + $0x14] sm:$0xf]
      %v5453 = vld [vmem:[%s5446 + $0x18] sm:$0xf]
      %v5454 = vld [vmem:[%s5446 + $0x1c] sm:$0xf]
      %v5455 = vpack.c.bf16 %v5432, %v5430
      %v5456 = vpack.c.bf16 %v5433, %v5431
      %v5457 = vpack.c.bf16 %v5436, %v5434
      %v5458 = vpack.c.bf16 %v5437, %v5435
      %v5459 = vpack.c.bf16 %v5440, %v5438
      %v5460 = vpack.c.bf16 %v5441, %v5439
      %v5461 = vpack.c.bf16 %v5444, %v5442
      %v5462 = vpack.c.bf16 %v5445, %v5443
      %5463 = vrot.lane.b32.xlu0 %v5366, 16
      %v5464 = vpop.permute.xlu0 %5463
      %5465 = vrot.lane.b32.xlu0 %v5368, 16
      %v5466 = vpop.permute.xlu0 %5465
      %5467 = vrot.lane.b32.xlu0 %v5370, 16
      %v5468 = vpop.permute.xlu0 %5467
      %5469 = vrot.lane.b32.xlu0 %v5372, 16
      %v5470 = vpop.permute.xlu0 %5469
      %5471 = vrot.lane.b32.xlu0 %v5374, 16
      %v5472 = vpop.permute.xlu0 %5471
      %5473 = vrot.lane.b32.xlu0 %v5376, 16
      %v5474 = vpop.permute.xlu0 %5473
      %5475 = vrot.lane.b32.xlu0 %v5378, 16
      %v5476 = vpop.permute.xlu0 %5475
      %5477 = vrot.lane.b32.xlu0 %v5380, 16
      %v5478 = vpop.permute.xlu0 %5477
      %5479 = vrot.lane.b32.xlu0 %v5367, 16
      %v5480 = vpop.permute.xlu0 %5479
      %5481 = vrot.lane.b32.xlu0 %v5369, 16
      %v5482 = vpop.permute.xlu0 %5481
      %5483 = vrot.lane.b32.xlu0 %v5371, 16
      %v5484 = vpop.permute.xlu0 %5483
      %5485 = vrot.lane.b32.xlu0 %v5373, 16
      %v5486 = vpop.permute.xlu0 %5485
      %5487 = vrot.lane.b32.xlu0 %v5375, 16
      %v5488 = vpop.permute.xlu0 %5487
      %5489 = vrot.lane.b32.xlu0 %v5377, 16
      %v5490 = vpop.permute.xlu0 %5489
      %5491 = vrot.lane.b32.xlu0 %v5379, 16
      %v5492 = vpop.permute.xlu0 %5491
      %5493 = vrot.lane.b32.xlu0 %v5381, 16
      %v5494 = vpop.permute.xlu0 %5493
      %v5495 = vsel %vm360, %v5464, %v5480
      %v5496 = vsel %vm360, %v5466, %v5482
      %v5497 = vsel %vm360, %v5468, %v5484
      %v5498 = vsel %vm360, %v5470, %v5486
      %v5499 = vsel %vm360, %v5472, %v5488
      %v5500 = vsel %vm360, %v5474, %v5490
      %v5501 = vsel %vm360, %v5476, %v5492
      %v5502 = vsel %vm360, %v5478, %v5494
      %v5503 = vsel %vm360, %v5480, %v5464
      %v5504 = vsel %vm360, %v5482, %v5466
      %v5505 = vsel %vm360, %v5484, %v5468
      %v5506 = vsel %vm360, %v5486, %v5470
      %v5507 = vsel %vm360, %v5488, %v5472
      %v5508 = vsel %vm360, %v5490, %v5474
      %v5509 = vsel %vm360, %v5492, %v5476
      %v5510 = vsel %vm360, %v5494, %v5478
      %v5511 = vmul.f32 %v5503, %v367
      %v5512 = vmul.f32 %v5495, %v371
      %v5513 = vmul.f32 %v5504, %v367
      %v5514 = vmul.f32 %v5496, %v371
      %v5515 = vmul.f32 %v5505, %v367
      %v5516 = vmul.f32 %v5497, %v371
      %v5517 = vmul.f32 %v5506, %v367
      %v5518 = vmul.f32 %v5498, %v371
      %v5519 = vmul.f32 %v5507, %v367
      %v5520 = vmul.f32 %v5499, %v371
      %v5521 = vmul.f32 %v5508, %v367
      %v5522 = vmul.f32 %v5500, %v371
      %v5523 = vmul.f32 %v5509, %v367
      %v5524 = vmul.f32 %v5501, %v371
      %v5525 = vmul.f32 %v5510, %v367
      %v5526 = vmul.f32 %v5502, %v371
      %s5527 = scalar_lea.vmem %s4, 608
      %v5528 = vld [vmem:[%s5527] sm:$0xf]
      %v5529 = vld [vmem:[%s5527 + $0x4] sm:$0xf]
      %v5530 = vld [vmem:[%s5527 + $0x8] sm:$0xf]
      %v5531 = vld [vmem:[%s5527 + $0xc] sm:$0xf]
      %v5532 = vld [vmem:[%s5527 + $0x10] sm:$0xf]
      %v5533 = vld [vmem:[%s5527 + $0x14] sm:$0xf]
      %v5534 = vld [vmem:[%s5527 + $0x18] sm:$0xf]
      %v5535 = vld [vmem:[%s5527 + $0x1c] sm:$0xf]
      %v5536 = vpack.c.bf16 %v5513, %v5511
      %v5537 = vpack.c.bf16 %v5514, %v5512
      %v5538 = vpack.c.bf16 %v5517, %v5515
      %v5539 = vpack.c.bf16 %v5518, %v5516
      %v5540 = vpack.c.bf16 %v5521, %v5519
      %v5541 = vpack.c.bf16 %v5522, %v5520
      %v5542 = vpack.c.bf16 %v5525, %v5523
      %v5543 = vpack.c.bf16 %v5526, %v5524
      %v5552 = vunpack.c.l.b16 %v5528
      %v5553 = vunpack.c.l.b16 %v5529
      %v5554 = vunpack.c.l.b16 %v5530
      %v5555 = vunpack.c.l.b16 %v5531
      %v5556 = vunpack.c.l.b16 %v5532
      %v5557 = vunpack.c.l.b16 %v5533
      %v5558 = vunpack.c.l.b16 %v5534
      %v5559 = vunpack.c.l.b16 %v5535
      %v5560 = vpack.c.b16 %v5553, %v5552
      %v5561 = vpack.c.b16 %v5555, %v5554
      %v5562 = vpack.c.b16 %v5557, %v5556
      %v5563 = vpack.c.b16 %v5559, %v5558
      %v5565 = vsel %vm1958, %v5560, 0
      %v5568 = vsel %vm1958, %v5561, 0
      %v5571 = vsel %vm1958, %v5562, 0
      %v5574 = vsel %vm1958, %v5563, 0
      %5576 = vmatprep.subr.bf16.mxu0 %v5537
      %5577 = vmatpush1.bf16.msra.mxu0 %v5536
      %5578 = vmatprep.subr.bf16.mxu0 %v5539
      %5579 = vmatpush1.bf16.msra.mxu0 %v5538
      %5580 = vmatprep.subr.bf16.mxu0 %v5541
      %5581 = vmatpush1.bf16.msra.mxu0 %v5540
      %5582 = vmatprep.subr.bf16.mxu0 %v5543
      %5583 = vmatpush1.bf16.msra.mxu0 %v5542
      %5584 = vmatprep.subr.bf16.mxu0 0
      %5585 = vmatpush1.bf16.msra.mxu0 0
      %5586 = vmatprep.subr.bf16.mxu0 0
      %5587 = vmatpush1.bf16.msra.mxu0 0
      %5588 = vmatprep.subr.bf16.mxu0 0
      %5589 = vmatpush1.bf16.msra.mxu0 0
      %5590 = vmatprep.subr.bf16.mxu0 0
      %5591 = vmatpush1.bf16.msra.mxu0 0
      %5592 = vmatprep.subr.bf16.mxu0 0
      %5593 = vmatpush1.bf16.msra.mxu0 0
      %5594 = vmatprep.subr.bf16.mxu0 0
      %5595 = vmatpush1.bf16.msra.mxu0 0
      %5596 = vmatprep.subr.bf16.mxu0 0
      %5597 = vmatpush1.bf16.msra.mxu0 0
      %5598 = vmatprep.subr.bf16.mxu0 0
      %5599 = vmatpush1.bf16.msra.mxu0 0
      %5600 = vmatprep.subr.bf16.mxu0 0
      %5601 = vmatpush1.bf16.msra.mxu0 0
      %5602 = vmatprep.subr.bf16.mxu0 0
      %5603 = vmatpush1.bf16.msra.mxu0 0
      %5604 = vmatprep.subr.bf16.mxu0 0
      %5605 = vmatpush1.bf16.msra.mxu0 0
      %5606 = vmatprep.subr.bf16.mxu0 0
      %5607 = vmatpush1.bf16.msra.mxu0 0
      %5608 = vmatprep.mubr.bf16.mxu0 0
      %5609 = vmatmul.mubr.bf16.gmra.mrb[0].mxu0 %v5565
      %v5610 = vpop.f32.mrb[0].mxu0
      %v5611 = vadd.f32 0.0, %v5610
      %v5612 = vpop.f32.mrb[0].mxu0
      %v5613 = vadd.f32 0.0, %v5612
      %v5614 = vpop.f32.mrb[0].mxu0
      %v5615 = vadd.f32 0.0, %v5614
      %v5616 = vpop.f32.mrb[0].mxu0
      %v5617 = vadd.f32 0.0, %v5616
      %5618 = vmatprep.mubr.bf16.mxu0 0
      %5619 = vmatmul.mubr.bf16.gmra.mrb[0].mxu0 %v5568
      %v5620 = vpop.f32.mrb[0].mxu0
      %v5621 = vadd.f32 0.0, %v5620
      %v5622 = vpop.f32.mrb[0].mxu0
      %v5623 = vadd.f32 0.0, %v5622
      %v5624 = vpop.f32.mrb[0].mxu0
      %v5625 = vadd.f32 0.0, %v5624
      %v5626 = vpop.f32.mrb[0].mxu0
      %v5627 = vadd.f32 0.0, %v5626
      %5628 = vmatprep.mubr.bf16.mxu0 0
      %5629 = vmatmul.mubr.bf16.gmra.mrb[0].mxu0 %v5571
      %v5630 = vpop.f32.mrb[0].mxu0
      %v5631 = vadd.f32 0.0, %v5630
      %v5632 = vpop.f32.mrb[0].mxu0
      %v5633 = vadd.f32 0.0, %v5632
      %v5634 = vpop.f32.mrb[0].mxu0
      %v5635 = vadd.f32 0.0, %v5634
      %v5636 = vpop.f32.mrb[0].mxu0
      %v5637 = vadd.f32 0.0, %v5636
      %5638 = vmatprep.mubr.bf16.mxu0 0
      %5639 = vmatmul.mubr.bf16.gmra.mrb[0].mxu0 %v5574
      %v5640 = vpop.f32.mrb[0].mxu0
      %v5641 = vadd.f32 0.0, %v5640
      %v5642 = vpop.f32.mrb[0].mxu0
      %v5643 = vadd.f32 0.0, %v5642
      %v5644 = vpop.f32.mrb[0].mxu0
      %v5645 = vadd.f32 0.0, %v5644
      %v5646 = vpop.f32.mrb[0].mxu0
      %v5647 = vadd.f32 0.0, %v5646
      %5648 = vdwg.mxu0
      %v5657 = vunpack.c.l.b16 %v5447
      %v5658 = vunpack.c.l.b16 %v5448
      %v5659 = vunpack.c.l.b16 %v5449
      %v5660 = vunpack.c.l.b16 %v5450
      %v5661 = vunpack.c.l.b16 %v5451
      %v5662 = vunpack.c.l.b16 %v5452
      %v5663 = vunpack.c.l.b16 %v5453
      %v5664 = vunpack.c.l.b16 %v5454
      %v5665 = vpack.c.b16 %v5658, %v5657
      %v5666 = vpack.c.b16 %v5660, %v5659
      %v5667 = vpack.c.b16 %v5662, %v5661
      %v5668 = vpack.c.b16 %v5664, %v5663
      %v5670 = vsel %vm1958, %v5665, 0
      %v5673 = vsel %vm1958, %v5666, 0
      %v5676 = vsel %vm1958, %v5667, 0
      %v5679 = vsel %vm1958, %v5668, 0
      %5681 = vmatprep.subr.bf16.mxu0 %v5456
      %5682 = vmatpush1.bf16.msra.mxu0 %v5455
      %5683 = vmatprep.subr.bf16.mxu0 %v5458
      %5684 = vmatpush1.bf16.msra.mxu0 %v5457
      %5685 = vmatprep.subr.bf16.mxu0 %v5460
      %5686 = vmatpush1.bf16.msra.mxu0 %v5459
      %5687 = vmatprep.subr.bf16.mxu0 %v5462
      %5688 = vmatpush1.bf16.msra.mxu0 %v5461
      %5689 = vmatprep.subr.bf16.mxu0 0
      %5690 = vmatpush1.bf16.msra.mxu0 0
      %5691 = vmatprep.subr.bf16.mxu0 0
      %5692 = vmatpush1.bf16.msra.mxu0 0
      %5693 = vmatprep.subr.bf16.mxu0 0
      %5694 = vmatpush1.bf16.msra.mxu0 0
      %5695 = vmatprep.subr.bf16.mxu0 0
      %5696 = vmatpush1.bf16.msra.mxu0 0
      %5697 = vmatprep.subr.bf16.mxu0 0
      %5698 = vmatpush1.bf16.msra.mxu0 0
      %5699 = vmatprep.subr.bf16.mxu0 0
      %5700 = vmatpush1.bf16.msra.mxu0 0
      %5701 = vmatprep.subr.bf16.mxu0 0
      %5702 = vmatpush1.bf16.msra.mxu0 0
      %5703 = vmatprep.subr.bf16.mxu0 0
      %5704 = vmatpush1.bf16.msra.mxu0 0
      %5705 = vmatprep.subr.bf16.mxu0 0
      %5706 = vmatpush1.bf16.msra.mxu0 0
      %5707 = vmatprep.subr.bf16.mxu0 0
      %5708 = vmatpush1.bf16.msra.mxu0 0
      %5709 = vmatprep.subr.bf16.mxu0 0
      %5710 = vmatpush1.bf16.msra.mxu0 0
      %5711 = vmatprep.subr.bf16.mxu0 0
      %5712 = vmatpush1.bf16.msra.mxu0 0
      %5713 = vmatprep.mubr.bf16.mxu0 0
      %5714 = vmatmul.mubr.bf16.gmra.mrb[0].mxu0 %v5670
      %v5715 = vpop.f32.mrb[0].mxu0
      %v5716 = vadd.f32 %v5611, %v5715
      %v5717 = vpop.f32.mrb[0].mxu0
      %v5718 = vadd.f32 %v5613, %v5717
      %v5719 = vpop.f32.mrb[0].mxu0
      %v5720 = vadd.f32 %v5615, %v5719
      %v5721 = vpop.f32.mrb[0].mxu0
      %v5722 = vadd.f32 %v5617, %v5721
      %5723 = vmatprep.mubr.bf16.mxu0 0
      %5724 = vmatmul.mubr.bf16.gmra.mrb[0].mxu0 %v5673
      %v5725 = vpop.f32.mrb[0].mxu0
      %v5726 = vadd.f32 %v5621, %v5725
      %v5727 = vpop.f32.mrb[0].mxu0
      %v5728 = vadd.f32 %v5623, %v5727
      %v5729 = vpop.f32.mrb[0].mxu0
      %v5730 = vadd.f32 %v5625, %v5729
      %v5731 = vpop.f32.mrb[0].mxu0
      %v5732 = vadd.f32 %v5627, %v5731
      %5733 = vmatprep.mubr.bf16.mxu0 0
      %5734 = vmatmul.mubr.bf16.gmra.mrb[0].mxu0 %v5676
      %v5735 = vpop.f32.mrb[0].mxu0
      %v5736 = vadd.f32 %v5631, %v5735
      %v5737 = vpop.f32.mrb[0].mxu0
      %v5738 = vadd.f32 %v5633, %v5737
      %v5739 = vpop.f32.mrb[0].mxu0
      %v5740 = vadd.f32 %v5635, %v5739
      %v5741 = vpop.f32.mrb[0].mxu0
      %v5742 = vadd.f32 %v5637, %v5741
      %5743 = vmatprep.mubr.bf16.mxu0 0
      %5744 = vmatmul.mubr.bf16.gmra.mrb[0].mxu0 %v5679
      %v5745 = vpop.f32.mrb[0].mxu0
      %v5746 = vadd.f32 %v5641, %v5745
      %v5747 = vpop.f32.mrb[0].mxu0
      %v5748 = vadd.f32 %v5643, %v5747
      %v5749 = vpop.f32.mrb[0].mxu0
      %v5750 = vadd.f32 %v5645, %v5749
      %v5751 = vpop.f32.mrb[0].mxu0
      %v5752 = vadd.f32 %v5647, %v5751
      %5753 = vdwg.mxu0
      %5754 = vrot.lane.b32.xlu0 %v5366, 15
      %v5755 = vpop.permute.xlu0 %5754
      %5756 = vrot.lane.b32.xlu0 %v5368, 15
      %v5757 = vpop.permute.xlu0 %5756
      %5758 = vrot.lane.b32.xlu0 %v5370, 15
      %v5759 = vpop.permute.xlu0 %5758
      %5760 = vrot.lane.b32.xlu0 %v5372, 15
      %v5761 = vpop.permute.xlu0 %5760
      %5762 = vrot.lane.b32.xlu0 %v5374, 15
      %v5763 = vpop.permute.xlu0 %5762
      %5764 = vrot.lane.b32.xlu0 %v5376, 15
      %v5765 = vpop.permute.xlu0 %5764
      %5766 = vrot.lane.b32.xlu0 %v5378, 15
      %v5767 = vpop.permute.xlu0 %5766
      %5768 = vrot.lane.b32.xlu0 %v5380, 15
      %v5769 = vpop.permute.xlu0 %5768
      %5770 = vrot.lane.b32.xlu0 %v5367, 15
      %v5771 = vpop.permute.xlu0 %5770
      %5772 = vrot.lane.b32.xlu0 %v5369, 15
      %v5773 = vpop.permute.xlu0 %5772
      %5774 = vrot.lane.b32.xlu0 %v5371, 15
      %v5775 = vpop.permute.xlu0 %5774
      %5776 = vrot.lane.b32.xlu0 %v5373, 15
      %v5777 = vpop.permute.xlu0 %5776
      %5778 = vrot.lane.b32.xlu0 %v5375, 15
      %v5779 = vpop.permute.xlu0 %5778
      %5780 = vrot.lane.b32.xlu0 %v5377, 15
      %v5781 = vpop.permute.xlu0 %5780
      %5782 = vrot.lane.b32.xlu0 %v5379, 15
      %v5783 = vpop.permute.xlu0 %5782
      %5784 = vrot.lane.b32.xlu0 %v5381, 15
      %v5785 = vpop.permute.xlu0 %5784
      %v5786 = vsel %vm615, %v5755, %v5771
      %v5787 = vsel %vm615, %v5757, %v5773
      %v5788 = vsel %vm615, %v5759, %v5775
      %v5789 = vsel %vm615, %v5761, %v5777
      %v5790 = vsel %vm615, %v5763, %v5779
      %v5791 = vsel %vm615, %v5765, %v5781
      %v5792 = vsel %vm615, %v5767, %v5783
      %v5793 = vsel %vm615, %v5769, %v5785
      %v5794 = vsel %vm615, %v5771, %v5755
      %v5795 = vsel %vm615, %v5773, %v5757
      %v5796 = vsel %vm615, %v5775, %v5759
      %v5797 = vsel %vm615, %v5777, %v5761
      %v5798 = vsel %vm615, %v5779, %v5763
      %v5799 = vsel %vm615, %v5781, %v5765
      %v5800 = vsel %vm615, %v5783, %v5767
      %v5801 = vsel %vm615, %v5785, %v5769
      %v5802 = vmul.f32 %v5794, %v622
      %v5803 = vmul.f32 %v5786, %v626
      %v5804 = vmul.f32 %v5795, %v622
      %v5805 = vmul.f32 %v5787, %v626
      %v5806 = vmul.f32 %v5796, %v622
      %v5807 = vmul.f32 %v5788, %v626
      %v5808 = vmul.f32 %v5797, %v622
      %v5809 = vmul.f32 %v5789, %v626
      %v5810 = vmul.f32 %v5798, %v622
      %v5811 = vmul.f32 %v5790, %v626
      %v5812 = vmul.f32 %v5799, %v622
      %v5813 = vmul.f32 %v5791, %v626
      %v5814 = vmul.f32 %v5800, %v622
      %v5815 = vmul.f32 %v5792, %v626
      %v5816 = vmul.f32 %v5801, %v622
      %v5817 = vmul.f32 %v5793, %v626
      %s5818 = scalar_lea.vmem %s4, 640
      %v5819 = vld [vmem:[%s5818] sm:$0xf]
      %v5820 = vld [vmem:[%s5818 + $0x4] sm:$0xf]
      %v5821 = vld [vmem:[%s5818 + $0x8] sm:$0xf]
      %v5822 = vld [vmem:[%s5818 + $0xc] sm:$0xf]
      %v5823 = vld [vmem:[%s5818 + $0x10] sm:$0xf]
      %v5824 = vld [vmem:[%s5818 + $0x14] sm:$0xf]
      %v5825 = vld [vmem:[%s5818 + $0x18] sm:$0xf]
      %v5826 = vld [vmem:[%s5818 + $0x1c] sm:$0xf]
      %v5827 = vpack.c.bf16 %v5804, %v5802
      %v5828 = vpack.c.bf16 %v5805, %v5803
      %v5829 = vpack.c.bf16 %v5808, %v5806
      %v5830 = vpack.c.bf16 %v5809, %v5807
      %v5831 = vpack.c.bf16 %v5812, %v5810
      %v5832 = vpack.c.bf16 %v5813, %v5811
      %v5833 = vpack.c.bf16 %v5816, %v5814
      %v5834 = vpack.c.bf16 %v5817, %v5815
      %v5843 = vunpack.c.l.b16 %v5819
      %v5844 = vunpack.c.l.b16 %v5820
      %v5845 = vunpack.c.l.b16 %v5821
      %v5846 = vunpack.c.l.b16 %v5822
      %v5847 = vunpack.c.l.b16 %v5823
      %v5848 = vunpack.c.l.b16 %v5824
      %v5849 = vunpack.c.l.b16 %v5825
      %v5850 = vunpack.c.l.b16 %v5826
      %v5851 = vpack.c.b16 %v5844, %v5843
      %v5852 = vpack.c.b16 %v5846, %v5845
      %v5853 = vpack.c.b16 %v5848, %v5847
      %v5854 = vpack.c.b16 %v5850, %v5849
      %v5856 = vsel %vm1958, %v5851, 0
      %v5859 = vsel %vm1958, %v5852, 0
      %v5862 = vsel %vm1958, %v5853, 0
      %v5865 = vsel %vm1958, %v5854, 0
      %5867 = vmatprep.subr.bf16.mxu0 %v5828
      %5868 = vmatpush1.bf16.msra.mxu0 %v5827
      %5869 = vmatprep.subr.bf16.mxu0 %v5830
      %5870 = vmatpush1.bf16.msra.mxu0 %v5829
      %5871 = vmatprep.subr.bf16.mxu0 %v5832
      %5872 = vmatpush1.bf16.msra.mxu0 %v5831
      %5873 = vmatprep.subr.bf16.mxu0 %v5834
      %5874 = vmatpush1.bf16.msra.mxu0 %v5833
      %5875 = vmatprep.subr.bf16.mxu0 0
      %5876 = vmatpush1.bf16.msra.mxu0 0
      %5877 = vmatprep.subr.bf16.mxu0 0
      %5878 = vmatpush1.bf16.msra.mxu0 0
      %5879 = vmatprep.subr.bf16.mxu0 0
      %5880 = vmatpush1.bf16.msra.mxu0 0
      %5881 = vmatprep.subr.bf16.mxu0 0
      %5882 = vmatpush1.bf16.msra.mxu0 0
      %5883 = vmatprep.subr.bf16.mxu0 0
      %5884 = vmatpush1.bf16.msra.mxu0 0
      %5885 = vmatprep.subr.bf16.mxu0 0
      %5886 = vmatpush1.bf16.msra.mxu0 0
      %5887 = vmatprep.subr.bf16.mxu0 0
      %5888 = vmatpush1.bf16.msra.mxu0 0
      %5889 = vmatprep.subr.bf16.mxu0 0
      %5890 = vmatpush1.bf16.msra.mxu0 0
      %5891 = vmatprep.subr.bf16.mxu0 0
      %5892 = vmatpush1.bf16.msra.mxu0 0
      %5893 = vmatprep.subr.bf16.mxu0 0
      %5894 = vmatpush1.bf16.msra.mxu0 0
      %5895 = vmatprep.subr.bf16.mxu0 0
      %5896 = vmatpush1.bf16.msra.mxu0 0
      %5897 = vmatprep.subr.bf16.mxu0 0
      %5898 = vmatpush1.bf16.msra.mxu0 0
      %5899 = vmatprep.mubr.bf16.mxu0 0
      %5900 = vmatmul.mubr.bf16.gmra.mrb[0].mxu0 %v5856
      %v5901 = vpop.f32.mrb[0].mxu0
      %v5902 = vadd.f32 0.0, %v5901
      %v5903 = vpop.f32.mrb[0].mxu0
      %v5904 = vadd.f32 0.0, %v5903
      %v5905 = vpop.f32.mrb[0].mxu0
      %v5906 = vadd.f32 0.0, %v5905
      %v5907 = vpop.f32.mrb[0].mxu0
      %v5908 = vadd.f32 0.0, %v5907
      %5909 = vmatprep.mubr.bf16.mxu0 0
      %5910 = vmatmul.mubr.bf16.gmra.mrb[0].mxu0 %v5859
      %v5911 = vpop.f32.mrb[0].mxu0
      %v5912 = vadd.f32 0.0, %v5911
      %v5913 = vpop.f32.mrb[0].mxu0
      %v5914 = vadd.f32 0.0, %v5913
      %v5915 = vpop.f32.mrb[0].mxu0
      %v5916 = vadd.f32 0.0, %v5915
      %v5917 = vpop.f32.mrb[0].mxu0
      %v5918 = vadd.f32 0.0, %v5917
      %5919 = vmatprep.mubr.bf16.mxu0 0
      %5920 = vmatmul.mubr.bf16.gmra.mrb[0].mxu0 %v5862
      %v5921 = vpop.f32.mrb[0].mxu0
      %v5922 = vadd.f32 0.0, %v5921
      %v5923 = vpop.f32.mrb[0].mxu0
      %v5924 = vadd.f32 0.0, %v5923
      %v5925 = vpop.f32.mrb[0].mxu0
      %v5926 = vadd.f32 0.0, %v5925
      %v5927 = vpop.f32.mrb[0].mxu0
      %v5928 = vadd.f32 0.0, %v5927
      %5929 = vmatprep.mubr.bf16.mxu0 0
      %5930 = vmatmul.mubr.bf16.gmra.mrb[0].mxu0 %v5865
      %v5931 = vpop.f32.mrb[0].mxu0
      %v5932 = vadd.f32 0.0, %v5931
      %v5933 = vpop.f32.mrb[0].mxu0
      %v5934 = vadd.f32 0.0, %v5933
      %v5935 = vpop.f32.mrb[0].mxu0
      %v5936 = vadd.f32 0.0, %v5935
      %v5937 = vpop.f32.mrb[0].mxu0
      %v5938 = vadd.f32 0.0, %v5937
      %5939 = vdwg.mxu0
      %v5940 = vadd.f32 %v5716, %v5902
      %v5941 = vadd.f32 %v5718, %v5904
      %v5942 = vadd.f32 %v5720, %v5906
      %v5943 = vadd.f32 %v5722, %v5908
      %v5944 = vadd.f32 %v5726, %v5912
      %v5945 = vadd.f32 %v5728, %v5914
      %v5946 = vadd.f32 %v5730, %v5916
      %v5947 = vadd.f32 %v5732, %v5918
      %v5948 = vadd.f32 %v5736, %v5922
      %v5949 = vadd.f32 %v5738, %v5924
      %v5950 = vadd.f32 %v5740, %v5926
      %v5951 = vadd.f32 %v5742, %v5928
      %v5952 = vadd.f32 %v5746, %v5932
      %v5953 = vadd.f32 %v5748, %v5934
      %v5954 = vadd.f32 %v5750, %v5936
      %v5955 = vadd.f32 %v5752, %v5938
      %5956 = vrot.lane.b32.xlu0 %v5366, 1
      %v5957 = vpop.permute.xlu0 %5956
      %5958 = vrot.lane.b32.xlu0 %v5368, 1
      %v5959 = vpop.permute.xlu0 %5958
      %5960 = vrot.lane.b32.xlu0 %v5370, 1
      %v5961 = vpop.permute.xlu0 %5960
      %5962 = vrot.lane.b32.xlu0 %v5372, 1
      %v5963 = vpop.permute.xlu0 %5962
      %5964 = vrot.lane.b32.xlu0 %v5374, 1
      %v5965 = vpop.permute.xlu0 %5964
      %5966 = vrot.lane.b32.xlu0 %v5376, 1
      %v5967 = vpop.permute.xlu0 %5966
      %5968 = vrot.lane.b32.xlu0 %v5378, 1
      %v5969 = vpop.permute.xlu0 %5968
      %5970 = vrot.lane.b32.xlu0 %v5380, 1
      %v5971 = vpop.permute.xlu0 %5970
      %5972 = vrot.lane.b32.xlu0 %v5367, 1
      %v5973 = vpop.permute.xlu0 %5972
      %5974 = vrot.lane.b32.xlu0 %v5369, 1
      %v5975 = vpop.permute.xlu0 %5974
      %5976 = vrot.lane.b32.xlu0 %v5371, 1
      %v5977 = vpop.permute.xlu0 %5976
      %5978 = vrot.lane.b32.xlu0 %v5373, 1
      %v5979 = vpop.permute.xlu0 %5978
      %5980 = vrot.lane.b32.xlu0 %v5375, 1
      %v5981 = vpop.permute.xlu0 %5980
      %5982 = vrot.lane.b32.xlu0 %v5377, 1
      %v5983 = vpop.permute.xlu0 %5982
      %5984 = vrot.lane.b32.xlu0 %v5379, 1
      %v5985 = vpop.permute.xlu0 %5984
      %5986 = vrot.lane.b32.xlu0 %v5381, 1
      %v5987 = vpop.permute.xlu0 %5986
      %v5988 = vsel %vm773, %v5957, %v5973
      %v5989 = vsel %vm773, %v5959, %v5975
      %v5990 = vsel %vm773, %v5961, %v5977
      %v5991 = vsel %vm773, %v5963, %v5979
      %v5992 = vsel %vm773, %v5965, %v5981
      %v5993 = vsel %vm773, %v5967, %v5983
      %v5994 = vsel %vm773, %v5969, %v5985
      %v5995 = vsel %vm773, %v5971, %v5987
      %v5996 = vsel %vm773, %v5973, %v5957
      %v5997 = vsel %vm773, %v5975, %v5959
      %v5998 = vsel %vm773, %v5977, %v5961
      %v5999 = vsel %vm773, %v5979, %v5963
      %v6000 = vsel %vm773, %v5981, %v5965
      %v6001 = vsel %vm773, %v5983, %v5967
      %v6002 = vsel %vm773, %v5985, %v5969
      %v6003 = vsel %vm773, %v5987, %v5971
      %v6004 = vmul.f32 %v5996, %v780
      %v6005 = vmul.f32 %v5988, %v784
      %v6006 = vmul.f32 %v5997, %v780
      %v6007 = vmul.f32 %v5989, %v784
      %v6008 = vmul.f32 %v5998, %v780
      %v6009 = vmul.f32 %v5990, %v784
      %v6010 = vmul.f32 %v5999, %v780
      %v6011 = vmul.f32 %v5991, %v784
      %v6012 = vmul.f32 %v6000, %v780
      %v6013 = vmul.f32 %v5992, %v784
      %v6014 = vmul.f32 %v6001, %v780
      %v6015 = vmul.f32 %v5993, %v784
      %v6016 = vmul.f32 %v6002, %v780
      %v6017 = vmul.f32 %v5994, %v784
      %v6018 = vmul.f32 %v6003, %v780
      %v6019 = vmul.f32 %v5995, %v784
      %s6020 = scalar_lea.vmem %s4, 672
      %v6021 = vld [vmem:[%s6020] sm:$0xf]
      %v6022 = vld [vmem:[%s6020 + $0x4] sm:$0xf]
      %v6023 = vld [vmem:[%s6020 + $0x8] sm:$0xf]
      %v6024 = vld [vmem:[%s6020 + $0xc] sm:$0xf]
      %v6025 = vld [vmem:[%s6020 + $0x10] sm:$0xf]
      %v6026 = vld [vmem:[%s6020 + $0x14] sm:$0xf]
      %v6027 = vld [vmem:[%s6020 + $0x18] sm:$0xf]
      %v6028 = vld [vmem:[%s6020 + $0x1c] sm:$0xf]
      %v6029 = vpack.c.bf16 %v6006, %v6004
      %v6030 = vpack.c.bf16 %v6007, %v6005
      %v6031 = vpack.c.bf16 %v6010, %v6008
      %v6032 = vpack.c.bf16 %v6011, %v6009
      %v6033 = vpack.c.bf16 %v6014, %v6012
      %v6034 = vpack.c.bf16 %v6015, %v6013
      %v6035 = vpack.c.bf16 %v6018, %v6016
      %v6036 = vpack.c.bf16 %v6019, %v6017
      %v6045 = vunpack.c.l.b16 %v6021
      %v6046 = vunpack.c.l.b16 %v6022
      %v6047 = vunpack.c.l.b16 %v6023
      %v6048 = vunpack.c.l.b16 %v6024
      %v6049 = vunpack.c.l.b16 %v6025
      %v6050 = vunpack.c.l.b16 %v6026
      %v6051 = vunpack.c.l.b16 %v6027
      %v6052 = vunpack.c.l.b16 %v6028
      %v6053 = vpack.c.b16 %v6046, %v6045
      %v6054 = vpack.c.b16 %v6048, %v6047
      %v6055 = vpack.c.b16 %v6050, %v6049
      %v6056 = vpack.c.b16 %v6052, %v6051
      %v6058 = vsel %vm1958, %v6053, 0
      %v6061 = vsel %vm1958, %v6054, 0
      %v6064 = vsel %vm1958, %v6055, 0
      %v6067 = vsel %vm1958, %v6056, 0
      %6069 = vmatprep.subr.bf16.mxu0 %v6030
      %6070 = vmatpush1.bf16.msra.mxu0 %v6029
      %6071 = vmatprep.subr.bf16.mxu0 %v6032
      %6072 = vmatpush1.bf16.msra.mxu0 %v6031
      %6073 = vmatprep.subr.bf16.mxu0 %v6034
      %6074 = vmatpush1.bf16.msra.mxu0 %v6033
      %6075 = vmatprep.subr.bf16.mxu0 %v6036
      %6076 = vmatpush1.bf16.msra.mxu0 %v6035
      %6077 = vmatprep.subr.bf16.mxu0 0
      %6078 = vmatpush1.bf16.msra.mxu0 0
      %6079 = vmatprep.subr.bf16.mxu0 0
      %6080 = vmatpush1.bf16.msra.mxu0 0
      %6081 = vmatprep.subr.bf16.mxu0 0
      %6082 = vmatpush1.bf16.msra.mxu0 0
      %6083 = vmatprep.subr.bf16.mxu0 0
      %6084 = vmatpush1.bf16.msra.mxu0 0
      %6085 = vmatprep.subr.bf16.mxu0 0
      %6086 = vmatpush1.bf16.msra.mxu0 0
      %6087 = vmatprep.subr.bf16.mxu0 0
      %6088 = vmatpush1.bf16.msra.mxu0 0
      %6089 = vmatprep.subr.bf16.mxu0 0
      %6090 = vmatpush1.bf16.msra.mxu0 0
      %6091 = vmatprep.subr.bf16.mxu0 0
      %6092 = vmatpush1.bf16.msra.mxu0 0
      %6093 = vmatprep.subr.bf16.mxu0 0
      %6094 = vmatpush1.bf16.msra.mxu0 0
      %6095 = vmatprep.subr.bf16.mxu0 0
      %6096 = vmatpush1.bf16.msra.mxu0 0
      %6097 = vmatprep.subr.bf16.mxu0 0
      %6098 = vmatpush1.bf16.msra.mxu0 0
      %6099 = vmatprep.subr.bf16.mxu0 0
      %6100 = vmatpush1.bf16.msra.mxu0 0
      %6101 = vmatprep.mubr.bf16.mxu0 0
      %6102 = vmatmul.mubr.bf16.gmra.mrb[0].mxu0 %v6058
      %v6103 = vpop.f32.mrb[0].mxu0
      %v6104 = vadd.f32 0.0, %v6103
      %v6105 = vpop.f32.mrb[0].mxu0
      %v6106 = vadd.f32 0.0, %v6105
      %v6107 = vpop.f32.mrb[0].mxu0
      %v6108 = vadd.f32 0.0, %v6107
      %v6109 = vpop.f32.mrb[0].mxu0
      %v6110 = vadd.f32 0.0, %v6109
      %6111 = vmatprep.mubr.bf16.mxu0 0
      %6112 = vmatmul.mubr.bf16.gmra.mrb[0].mxu0 %v6061
      %v6113 = vpop.f32.mrb[0].mxu0
      %v6114 = vadd.f32 0.0, %v6113
      %v6115 = vpop.f32.mrb[0].mxu0
      %v6116 = vadd.f32 0.0, %v6115
      %v6117 = vpop.f32.mrb[0].mxu0
      %v6118 = vadd.f32 0.0, %v6117
      %v6119 = vpop.f32.mrb[0].mxu0
      %v6120 = vadd.f32 0.0, %v6119
      %6121 = vmatprep.mubr.bf16.mxu0 0
      %6122 = vmatmul.mubr.bf16.gmra.mrb[0].mxu0 %v6064
      %v6123 = vpop.f32.mrb[0].mxu0
      %v6124 = vadd.f32 0.0, %v6123
      %v6125 = vpop.f32.mrb[0].mxu0
      %v6126 = vadd.f32 0.0, %v6125
      %v6127 = vpop.f32.mrb[0].mxu0
      %v6128 = vadd.f32 0.0, %v6127
      %v6129 = vpop.f32.mrb[0].mxu0
      %v6130 = vadd.f32 0.0, %v6129
      %6131 = vmatprep.mubr.bf16.mxu0 0
      %6132 = vmatmul.mubr.bf16.gmra.mrb[0].mxu0 %v6067
      %v6133 = vpop.f32.mrb[0].mxu0
      %v6134 = vadd.f32 0.0, %v6133
      %v6135 = vpop.f32.mrb[0].mxu0
      %v6136 = vadd.f32 0.0, %v6135
      %v6137 = vpop.f32.mrb[0].mxu0
      %v6138 = vadd.f32 0.0, %v6137
      %v6139 = vpop.f32.mrb[0].mxu0
      %v6140 = vadd.f32 0.0, %v6139
      %6141 = vdwg.mxu0
      %v6142 = vadd.f32 %v5940, %v6104
      %v6143 = vadd.f32 %v5941, %v6106
      %v6144 = vadd.f32 %v5942, %v6108
      %v6145 = vadd.f32 %v5943, %v6110
      %v6146 = vadd.f32 %v5944, %v6114
      %v6147 = vadd.f32 %v5945, %v6116
      %v6148 = vadd.f32 %v5946, %v6118
      %v6149 = vadd.f32 %v5947, %v6120
      %v6150 = vadd.f32 %v5948, %v6124
      %v6151 = vadd.f32 %v5949, %v6126
      %v6152 = vadd.f32 %v5950, %v6128
      %v6153 = vadd.f32 %v5951, %v6130
      %v6154 = vadd.f32 %v5952, %v6134
      %v6155 = vadd.f32 %v5953, %v6136
      %v6156 = vadd.f32 %v5954, %v6138
      %v6157 = vadd.f32 %v5955, %v6140
      %s6158 = scalar_lea.vmem %s4, 704
      %v6159 = vld [vmem:[%s6158] sm:$0xf]
      %v6160 = vld [vmem:[%s6158 + $0x4] sm:$0xf]
      %v6161 = vld [vmem:[%s6158 + $0x8] sm:$0xf]
      %v6162 = vld [vmem:[%s6158 + $0xc] sm:$0xf]
      %v6163 = vld [vmem:[%s6158 + $0x10] sm:$0xf]
      %v6164 = vld [vmem:[%s6158 + $0x14] sm:$0xf]
      %v6165 = vld [vmem:[%s6158 + $0x18] sm:$0xf]
      %v6166 = vld [vmem:[%s6158 + $0x1c] sm:$0xf]
      %v6167 = vpack.c.bf16 %v5368, %v5366
      %v6168 = vpack.c.bf16 %v5369, %v5367
      %v6169 = vpack.c.bf16 %v5372, %v5370
      %v6170 = vpack.c.bf16 %v5373, %v5371
      %v6171 = vpack.c.bf16 %v5376, %v5374
      %v6172 = vpack.c.bf16 %v5377, %v5375
      %v6173 = vpack.c.bf16 %v5380, %v5378
      %v6174 = vpack.c.bf16 %v5381, %v5379
      %v6183 = vunpack.c.l.b16 %v6159
      %v6184 = vunpack.c.l.b16 %v6160
      %v6185 = vunpack.c.l.b16 %v6161
      %v6186 = vunpack.c.l.b16 %v6162
      %v6187 = vunpack.c.l.b16 %v6163
      %v6188 = vunpack.c.l.b16 %v6164
      %v6189 = vunpack.c.l.b16 %v6165
      %v6190 = vunpack.c.l.b16 %v6166
      %v6191 = vpack.c.b16 %v6184, %v6183
      %v6192 = vpack.c.b16 %v6186, %v6185
      %v6193 = vpack.c.b16 %v6188, %v6187
      %v6194 = vpack.c.b16 %v6190, %v6189
      %v6196 = vsel %vm1958, %v6191, 0
      %v6199 = vsel %vm1958, %v6192, 0
      %v6202 = vsel %vm1958, %v6193, 0
      %v6205 = vsel %vm1958, %v6194, 0
      %6207 = vmatprep.subr.bf16.mxu0 %v6168
      %6208 = vmatpush1.bf16.msra.mxu0 %v6167
      %6209 = vmatprep.subr.bf16.mxu0 %v6170
      %6210 = vmatpush1.bf16.msra.mxu0 %v6169
      %6211 = vmatprep.subr.bf16.mxu0 %v6172
      %6212 = vmatpush1.bf16.msra.mxu0 %v6171
      %6213 = vmatprep.subr.bf16.mxu0 %v6174
      %6214 = vmatpush1.bf16.msra.mxu0 %v6173
      %6215 = vmatprep.subr.bf16.mxu0 0
      %6216 = vmatpush1.bf16.msra.mxu0 0
      %6217 = vmatprep.subr.bf16.mxu0 0
      %6218 = vmatpush1.bf16.msra.mxu0 0
      %6219 = vmatprep.subr.bf16.mxu0 0
      %6220 = vmatpush1.bf16.msra.mxu0 0
      %6221 = vmatprep.subr.bf16.mxu0 0
      %6222 = vmatpush1.bf16.msra.mxu0 0
      %6223 = vmatprep.subr.bf16.mxu0 0
      %6224 = vmatpush1.bf16.msra.mxu0 0
      %6225 = vmatprep.subr.bf16.mxu0 0
      %6226 = vmatpush1.bf16.msra.mxu0 0
      %6227 = vmatprep.subr.bf16.mxu0 0
      %6228 = vmatpush1.bf16.msra.mxu0 0
      %6229 = vmatprep.subr.bf16.mxu0 0
      %6230 = vmatpush1.bf16.msra.mxu0 0
      %6231 = vmatprep.subr.bf16.mxu0 0
      %6232 = vmatpush1.bf16.msra.mxu0 0
      %6233 = vmatprep.subr.bf16.mxu0 0
      %6234 = vmatpush1.bf16.msra.mxu0 0
      %6235 = vmatprep.subr.bf16.mxu0 0
      %6236 = vmatpush1.bf16.msra.mxu0 0
      %6237 = vmatprep.subr.bf16.mxu0 0
      %6238 = vmatpush1.bf16.msra.mxu0 0
      %6239 = vmatprep.mubr.bf16.mxu0 0
      %6240 = vmatmul.mubr.bf16.gmra.mrb[0].mxu0 %v6196
      %v6241 = vpop.f32.mrb[0].mxu0
      %v6242 = vadd.f32 0.0, %v6241
      %v6243 = vpop.f32.mrb[0].mxu0
      %v6244 = vadd.f32 0.0, %v6243
      %v6245 = vpop.f32.mrb[0].mxu0
      %v6246 = vadd.f32 0.0, %v6245
      %v6247 = vpop.f32.mrb[0].mxu0
      %v6248 = vadd.f32 0.0, %v6247
      %6249 = vmatprep.mubr.bf16.mxu0 0
      %6250 = vmatmul.mubr.bf16.gmra.mrb[0].mxu0 %v6199
      %v6251 = vpop.f32.mrb[0].mxu0
      %v6252 = vadd.f32 0.0, %v6251
      %v6253 = vpop.f32.mrb[0].mxu0
      %v6254 = vadd.f32 0.0, %v6253
      %v6255 = vpop.f32.mrb[0].mxu0
      %v6256 = vadd.f32 0.0, %v6255
      %v6257 = vpop.f32.mrb[0].mxu0
      %v6258 = vadd.f32 0.0, %v6257
      %6259 = vmatprep.mubr.bf16.mxu0 0
      %6260 = vmatmul.mubr.bf16.gmra.mrb[0].mxu0 %v6202
      %v6261 = vpop.f32.mrb[0].mxu0
      %v6262 = vadd.f32 0.0, %v6261
      %v6263 = vpop.f32.mrb[0].mxu0
      %v6264 = vadd.f32 0.0, %v6263
      %v6265 = vpop.f32.mrb[0].mxu0
      %v6266 = vadd.f32 0.0, %v6265
      %v6267 = vpop.f32.mrb[0].mxu0
      %v6268 = vadd.f32 0.0, %v6267
      %6269 = vmatprep.mubr.bf16.mxu0 0
      %6270 = vmatmul.mubr.bf16.gmra.mrb[0].mxu0 %v6205
      %v6271 = vpop.f32.mrb[0].mxu0
      %v6272 = vadd.f32 0.0, %v6271
      %v6273 = vpop.f32.mrb[0].mxu0
      %v6274 = vadd.f32 0.0, %v6273
      %v6275 = vpop.f32.mrb[0].mxu0
      %v6276 = vadd.f32 0.0, %v6275
      %v6277 = vpop.f32.mrb[0].mxu0
      %v6278 = vadd.f32 0.0, %v6277
      %6279 = vdwg.mxu0
      %v6280 = vadd.f32 %v6142, %v6242
      %v6281 = vadd.f32 %v6143, %v6244
      %v6282 = vadd.f32 %v6144, %v6246
      %v6283 = vadd.f32 %v6145, %v6248
      %v6284 = vadd.f32 %v6146, %v6252
      %v6285 = vadd.f32 %v6147, %v6254
      %v6286 = vadd.f32 %v6148, %v6256
      %v6287 = vadd.f32 %v6149, %v6258
      %v6288 = vadd.f32 %v6150, %v6262
      %v6289 = vadd.f32 %v6151, %v6264
      %v6290 = vadd.f32 %v6152, %v6266
      %v6291 = vadd.f32 %v6153, %v6268
      %v6292 = vadd.f32 %v6154, %v6272
      %v6293 = vadd.f32 %v6155, %v6274
      %v6294 = vadd.f32 %v6156, %v6276
      %v6295 = vadd.f32 %v6157, %v6278
      %6296 = vrot.lane.b32.xlu0 %v5366, 127
      %v6297 = vpop.permute.xlu0 %6296
      %6298 = vrot.lane.b32.xlu0 %v5368, 127
      %v6299 = vpop.permute.xlu0 %6298
      %6300 = vrot.lane.b32.xlu0 %v5370, 127
      %v6301 = vpop.permute.xlu0 %6300
      %6302 = vrot.lane.b32.xlu0 %v5372, 127
      %v6303 = vpop.permute.xlu0 %6302
      %6304 = vrot.lane.b32.xlu0 %v5374, 127
      %v6305 = vpop.permute.xlu0 %6304
      %6306 = vrot.lane.b32.xlu0 %v5376, 127
      %v6307 = vpop.permute.xlu0 %6306
      %6308 = vrot.lane.b32.xlu0 %v5378, 127
      %v6309 = vpop.permute.xlu0 %6308
      %6310 = vrot.lane.b32.xlu0 %v5380, 127
      %v6311 = vpop.permute.xlu0 %6310
      %6312 = vrot.lane.b32.xlu0 %v5367, 127
      %v6313 = vpop.permute.xlu0 %6312
      %6314 = vrot.lane.b32.xlu0 %v5369, 127
      %v6315 = vpop.permute.xlu0 %6314
      %6316 = vrot.lane.b32.xlu0 %v5371, 127
      %v6317 = vpop.permute.xlu0 %6316
      %6318 = vrot.lane.b32.xlu0 %v5373, 127
      %v6319 = vpop.permute.xlu0 %6318
      %6320 = vrot.lane.b32.xlu0 %v5375, 127
      %v6321 = vpop.permute.xlu0 %6320
      %6322 = vrot.lane.b32.xlu0 %v5377, 127
      %v6323 = vpop.permute.xlu0 %6322
      %6324 = vrot.lane.b32.xlu0 %v5379, 127
      %v6325 = vpop.permute.xlu0 %6324
      %6326 = vrot.lane.b32.xlu0 %v5381, 127
      %v6327 = vpop.permute.xlu0 %6326
      %v6328 = vsel %vm1069, %v6297, %v6313
      %v6329 = vsel %vm1069, %v6299, %v6315
      %v6330 = vsel %vm1069, %v6301, %v6317
      %v6331 = vsel %vm1069, %v6303, %v6319
      %v6332 = vsel %vm1069, %v6305, %v6321
      %v6333 = vsel %vm1069, %v6307, %v6323
      %v6334 = vsel %vm1069, %v6309, %v6325
      %v6335 = vsel %vm1069, %v6311, %v6327
      %v6336 = vsel %vm1069, %v6313, %v6297
      %v6337 = vsel %vm1069, %v6315, %v6299
      %v6338 = vsel %vm1069, %v6317, %v6301
      %v6339 = vsel %vm1069, %v6319, %v6303
      %v6340 = vsel %vm1069, %v6321, %v6305
      %v6341 = vsel %vm1069, %v6323, %v6307
      %v6342 = vsel %vm1069, %v6325, %v6309
      %v6343 = vsel %vm1069, %v6327, %v6311
      %v6344 = vmul.f32 %v6328, %v1076
      %v6345 = vmul.f32 %v6336, %v1080
      %v6346 = vmul.f32 %v6329, %v1076
      %v6347 = vmul.f32 %v6337, %v1080
      %v6348 = vmul.f32 %v6330, %v1076
      %v6349 = vmul.f32 %v6338, %v1080
      %v6350 = vmul.f32 %v6331, %v1076
      %v6351 = vmul.f32 %v6339, %v1080
      %v6352 = vmul.f32 %v6332, %v1076
      %v6353 = vmul.f32 %v6340, %v1080
      %v6354 = vmul.f32 %v6333, %v1076
      %v6355 = vmul.f32 %v6341, %v1080
      %v6356 = vmul.f32 %v6334, %v1076
      %v6357 = vmul.f32 %v6342, %v1080
      %v6358 = vmul.f32 %v6335, %v1076
      %v6359 = vmul.f32 %v6343, %v1080
      %s6360 = scalar_lea.vmem %s4, 736
      %v6361 = vld [vmem:[%s6360] sm:$0xf]
      %v6362 = vld [vmem:[%s6360 + $0x4] sm:$0xf]
      %v6363 = vld [vmem:[%s6360 + $0x8] sm:$0xf]
      %v6364 = vld [vmem:[%s6360 + $0xc] sm:$0xf]
      %v6365 = vld [vmem:[%s6360 + $0x10] sm:$0xf]
      %v6366 = vld [vmem:[%s6360 + $0x14] sm:$0xf]
      %v6367 = vld [vmem:[%s6360 + $0x18] sm:$0xf]
      %v6368 = vld [vmem:[%s6360 + $0x1c] sm:$0xf]
      %v6369 = vpack.c.bf16 %v6346, %v6344
      %v6370 = vpack.c.bf16 %v6347, %v6345
      %v6371 = vpack.c.bf16 %v6350, %v6348
      %v6372 = vpack.c.bf16 %v6351, %v6349
      %v6373 = vpack.c.bf16 %v6354, %v6352
      %v6374 = vpack.c.bf16 %v6355, %v6353
      %v6375 = vpack.c.bf16 %v6358, %v6356
      %v6376 = vpack.c.bf16 %v6359, %v6357
      %v6385 = vunpack.c.l.b16 %v6361
      %v6386 = vunpack.c.l.b16 %v6362
      %v6387 = vunpack.c.l.b16 %v6363
      %v6388 = vunpack.c.l.b16 %v6364
      %v6389 = vunpack.c.l.b16 %v6365
      %v6390 = vunpack.c.l.b16 %v6366
      %v6391 = vunpack.c.l.b16 %v6367
      %v6392 = vunpack.c.l.b16 %v6368
      %v6393 = vpack.c.b16 %v6386, %v6385
      %v6394 = vpack.c.b16 %v6388, %v6387
      %v6395 = vpack.c.b16 %v6390, %v6389
      %v6396 = vpack.c.b16 %v6392, %v6391
      %v6398 = vsel %vm1958, %v6393, 0
      %v6401 = vsel %vm1958, %v6394, 0
      %v6404 = vsel %vm1958, %v6395, 0
      %v6407 = vsel %vm1958, %v6396, 0
      %6409 = vmatprep.subr.bf16.mxu0 %v6370
      %6410 = vmatpush1.bf16.msra.mxu0 %v6369
      %6411 = vmatprep.subr.bf16.mxu0 %v6372
      %6412 = vmatpush1.bf16.msra.mxu0 %v6371
      %6413 = vmatprep.subr.bf16.mxu0 %v6374
      %6414 = vmatpush1.bf16.msra.mxu0 %v6373
      %6415 = vmatprep.subr.bf16.mxu0 %v6376
      %6416 = vmatpush1.bf16.msra.mxu0 %v6375
      %6417 = vmatprep.subr.bf16.mxu0 0
      %6418 = vmatpush1.bf16.msra.mxu0 0
      %6419 = vmatprep.subr.bf16.mxu0 0
      %6420 = vmatpush1.bf16.msra.mxu0 0
      %6421 = vmatprep.subr.bf16.mxu0 0
      %6422 = vmatpush1.bf16.msra.mxu0 0
      %6423 = vmatprep.subr.bf16.mxu0 0
      %6424 = vmatpush1.bf16.msra.mxu0 0
      %6425 = vmatprep.subr.bf16.mxu0 0
      %6426 = vmatpush1.bf16.msra.mxu0 0
      %6427 = vmatprep.subr.bf16.mxu0 0
      %6428 = vmatpush1.bf16.msra.mxu0 0
      %6429 = vmatprep.subr.bf16.mxu0 0
      %6430 = vmatpush1.bf16.msra.mxu0 0
      %6431 = vmatprep.subr.bf16.mxu0 0
      %6432 = vmatpush1.bf16.msra.mxu0 0
      %6433 = vmatprep.subr.bf16.mxu0 0
      %6434 = vmatpush1.bf16.msra.mxu0 0
      %6435 = vmatprep.subr.bf16.mxu0 0
      %6436 = vmatpush1.bf16.msra.mxu0 0
      %6437 = vmatprep.subr.bf16.mxu0 0
      %6438 = vmatpush1.bf16.msra.mxu0 0
      %6439 = vmatprep.subr.bf16.mxu0 0
      %6440 = vmatpush1.bf16.msra.mxu0 0
      %6441 = vmatprep.mubr.bf16.mxu0 0
      %6442 = vmatmul.mubr.bf16.gmra.mrb[0].mxu0 %v6398
      %v6443 = vpop.f32.mrb[0].mxu0
      %v6444 = vadd.f32 0.0, %v6443
      %v6445 = vpop.f32.mrb[0].mxu0
      %v6446 = vadd.f32 0.0, %v6445
      %v6447 = vpop.f32.mrb[0].mxu0
      %v6448 = vadd.f32 0.0, %v6447
      %v6449 = vpop.f32.mrb[0].mxu0
      %v6450 = vadd.f32 0.0, %v6449
      %6451 = vmatprep.mubr.bf16.mxu0 0
      %6452 = vmatmul.mubr.bf16.gmra.mrb[0].mxu0 %v6401
      %v6453 = vpop.f32.mrb[0].mxu0
      %v6454 = vadd.f32 0.0, %v6453
      %v6455 = vpop.f32.mrb[0].mxu0
      %v6456 = vadd.f32 0.0, %v6455
      %v6457 = vpop.f32.mrb[0].mxu0
      %v6458 = vadd.f32 0.0, %v6457
      %v6459 = vpop.f32.mrb[0].mxu0
      %v6460 = vadd.f32 0.0, %v6459
      %6461 = vmatprep.mubr.bf16.mxu0 0
      %6462 = vmatmul.mubr.bf16.gmra.mrb[0].mxu0 %v6404
      %v6463 = vpop.f32.mrb[0].mxu0
      %v6464 = vadd.f32 0.0, %v6463
      %v6465 = vpop.f32.mrb[0].mxu0
      %v6466 = vadd.f32 0.0, %v6465
      %v6467 = vpop.f32.mrb[0].mxu0
      %v6468 = vadd.f32 0.0, %v6467
      %v6469 = vpop.f32.mrb[0].mxu0
      %v6470 = vadd.f32 0.0, %v6469
      %6471 = vmatprep.mubr.bf16.mxu0 0
      %6472 = vmatmul.mubr.bf16.gmra.mrb[0].mxu0 %v6407
      %v6473 = vpop.f32.mrb[0].mxu0
      %v6474 = vadd.f32 0.0, %v6473
      %v6475 = vpop.f32.mrb[0].mxu0
      %v6476 = vadd.f32 0.0, %v6475
      %v6477 = vpop.f32.mrb[0].mxu0
      %v6478 = vadd.f32 0.0, %v6477
      %v6479 = vpop.f32.mrb[0].mxu0
      %v6480 = vadd.f32 0.0, %v6479
      %6481 = vdwg.mxu0
      %v6482 = vadd.f32 %v6280, %v6444
      %v6483 = vadd.f32 %v6281, %v6446
      %v6484 = vadd.f32 %v6282, %v6448
      %v6485 = vadd.f32 %v6283, %v6450
      %v6486 = vadd.f32 %v6284, %v6454
      %v6487 = vadd.f32 %v6285, %v6456
      %v6488 = vadd.f32 %v6286, %v6458
      %v6489 = vadd.f32 %v6287, %v6460
      %v6490 = vadd.f32 %v6288, %v6464
      %v6491 = vadd.f32 %v6289, %v6466
      %v6492 = vadd.f32 %v6290, %v6468
      %v6493 = vadd.f32 %v6291, %v6470
      %v6494 = vadd.f32 %v6292, %v6474
      %v6495 = vadd.f32 %v6293, %v6476
      %v6496 = vadd.f32 %v6294, %v6478
      %v6497 = vadd.f32 %v6295, %v6480
      %6498 = vrot.lane.b32.xlu0 %v5366, 113
      %v6499 = vpop.permute.xlu0 %6498
      %6500 = vrot.lane.b32.xlu0 %v5368, 113
      %v6501 = vpop.permute.xlu0 %6500
      %6502 = vrot.lane.b32.xlu0 %v5370, 113
      %v6503 = vpop.permute.xlu0 %6502
      %6504 = vrot.lane.b32.xlu0 %v5372, 113
      %v6505 = vpop.permute.xlu0 %6504
      %6506 = vrot.lane.b32.xlu0 %v5374, 113
      %v6507 = vpop.permute.xlu0 %6506
      %6508 = vrot.lane.b32.xlu0 %v5376, 113
      %v6509 = vpop.permute.xlu0 %6508
      %6510 = vrot.lane.b32.xlu0 %v5378, 113
      %v6511 = vpop.permute.xlu0 %6510
      %6512 = vrot.lane.b32.xlu0 %v5380, 113
      %v6513 = vpop.permute.xlu0 %6512
      %6514 = vrot.lane.b32.xlu0 %v5367, 113
      %v6515 = vpop.permute.xlu0 %6514
      %6516 = vrot.lane.b32.xlu0 %v5369, 113
      %v6517 = vpop.permute.xlu0 %6516
      %6518 = vrot.lane.b32.xlu0 %v5371, 113
      %v6519 = vpop.permute.xlu0 %6518
      %6520 = vrot.lane.b32.xlu0 %v5373, 113
      %v6521 = vpop.permute.xlu0 %6520
      %6522 = vrot.lane.b32.xlu0 %v5375, 113
      %v6523 = vpop.permute.xlu0 %6522
      %6524 = vrot.lane.b32.xlu0 %v5377, 113
      %v6525 = vpop.permute.xlu0 %6524
      %6526 = vrot.lane.b32.xlu0 %v5379, 113
      %v6527 = vpop.permute.xlu0 %6526
      %6528 = vrot.lane.b32.xlu0 %v5381, 113
      %v6529 = vpop.permute.xlu0 %6528
      %v6530 = vsel %vm1227, %v6499, %v6515
      %v6531 = vsel %vm1227, %v6501, %v6517
      %v6532 = vsel %vm1227, %v6503, %v6519
      %v6533 = vsel %vm1227, %v6505, %v6521
      %v6534 = vsel %vm1227, %v6507, %v6523
      %v6535 = vsel %vm1227, %v6509, %v6525
      %v6536 = vsel %vm1227, %v6511, %v6527
      %v6537 = vsel %vm1227, %v6513, %v6529
      %v6538 = vsel %vm1227, %v6515, %v6499
      %v6539 = vsel %vm1227, %v6517, %v6501
      %v6540 = vsel %vm1227, %v6519, %v6503
      %v6541 = vsel %vm1227, %v6521, %v6505
      %v6542 = vsel %vm1227, %v6523, %v6507
      %v6543 = vsel %vm1227, %v6525, %v6509
      %v6544 = vsel %vm1227, %v6527, %v6511
      %v6545 = vsel %vm1227, %v6529, %v6513
      %v6546 = vmul.f32 %v6530, %v1234
      %v6547 = vmul.f32 %v6538, %v1238
      %v6548 = vmul.f32 %v6531, %v1234
      %v6549 = vmul.f32 %v6539, %v1238
      %v6550 = vmul.f32 %v6532, %v1234
      %v6551 = vmul.f32 %v6540, %v1238
      %v6552 = vmul.f32 %v6533, %v1234
      %v6553 = vmul.f32 %v6541, %v1238
      %v6554 = vmul.f32 %v6534, %v1234
      %v6555 = vmul.f32 %v6542, %v1238
      %v6556 = vmul.f32 %v6535, %v1234
      %v6557 = vmul.f32 %v6543, %v1238
      %v6558 = vmul.f32 %v6536, %v1234
      %v6559 = vmul.f32 %v6544, %v1238
      %v6560 = vmul.f32 %v6537, %v1234
      %v6561 = vmul.f32 %v6545, %v1238
      %s6562 = scalar_lea.vmem %s4, 768
      %v6563 = vld [vmem:[%s6562] sm:$0xf]
      %v6564 = vld [vmem:[%s6562 + $0x4] sm:$0xf]
      %v6565 = vld [vmem:[%s6562 + $0x8] sm:$0xf]
      %v6566 = vld [vmem:[%s6562 + $0xc] sm:$0xf]
      %v6567 = vld [vmem:[%s6562 + $0x10] sm:$0xf]
      %v6568 = vld [vmem:[%s6562 + $0x14] sm:$0xf]
      %v6569 = vld [vmem:[%s6562 + $0x18] sm:$0xf]
      %v6570 = vld [vmem:[%s6562 + $0x1c] sm:$0xf]
      %v6571 = vpack.c.bf16 %v6548, %v6546
      %v6572 = vpack.c.bf16 %v6549, %v6547
      %v6573 = vpack.c.bf16 %v6552, %v6550
      %v6574 = vpack.c.bf16 %v6553, %v6551
      %v6575 = vpack.c.bf16 %v6556, %v6554
      %v6576 = vpack.c.bf16 %v6557, %v6555
      %v6577 = vpack.c.bf16 %v6560, %v6558
      %v6578 = vpack.c.bf16 %v6561, %v6559
      %v6587 = vunpack.c.l.b16 %v6563
      %v6588 = vunpack.c.l.b16 %v6564
      %v6589 = vunpack.c.l.b16 %v6565
      %v6590 = vunpack.c.l.b16 %v6566
      %v6591 = vunpack.c.l.b16 %v6567
      %v6592 = vunpack.c.l.b16 %v6568
      %v6593 = vunpack.c.l.b16 %v6569
      %v6594 = vunpack.c.l.b16 %v6570
      %v6595 = vpack.c.b16 %v6588, %v6587
      %v6596 = vpack.c.b16 %v6590, %v6589
      %v6597 = vpack.c.b16 %v6592, %v6591
      %v6598 = vpack.c.b16 %v6594, %v6593
      %v6600 = vsel %vm1958, %v6595, 0
      %v6603 = vsel %vm1958, %v6596, 0
      %v6606 = vsel %vm1958, %v6597, 0
      %v6609 = vsel %vm1958, %v6598, 0
      %6611 = vmatprep.subr.bf16.mxu0 %v6572
      %6612 = vmatpush1.bf16.msra.mxu0 %v6571
      %6613 = vmatprep.subr.bf16.mxu0 %v6574
      %6614 = vmatpush1.bf16.msra.mxu0 %v6573
      %6615 = vmatprep.subr.bf16.mxu0 %v6576
      %6616 = vmatpush1.bf16.msra.mxu0 %v6575
      %6617 = vmatprep.subr.bf16.mxu0 %v6578
      %6618 = vmatpush1.bf16.msra.mxu0 %v6577
      %6619 = vmatprep.subr.bf16.mxu0 0
      %6620 = vmatpush1.bf16.msra.mxu0 0
      %6621 = vmatprep.subr.bf16.mxu0 0
      %6622 = vmatpush1.bf16.msra.mxu0 0
      %6623 = vmatprep.subr.bf16.mxu0 0
      %6624 = vmatpush1.bf16.msra.mxu0 0
      %6625 = vmatprep.subr.bf16.mxu0 0
      %6626 = vmatpush1.bf16.msra.mxu0 0
      %6627 = vmatprep.subr.bf16.mxu0 0
      %6628 = vmatpush1.bf16.msra.mxu0 0
      %6629 = vmatprep.subr.bf16.mxu0 0
      %6630 = vmatpush1.bf16.msra.mxu0 0
      %6631 = vmatprep.subr.bf16.mxu0 0
      %6632 = vmatpush1.bf16.msra.mxu0 0
      %6633 = vmatprep.subr.bf16.mxu0 0
      %6634 = vmatpush1.bf16.msra.mxu0 0
      %6635 = vmatprep.subr.bf16.mxu0 0
      %6636 = vmatpush1.bf16.msra.mxu0 0
      %6637 = vmatprep.subr.bf16.mxu0 0
      %6638 = vmatpush1.bf16.msra.mxu0 0
      %6639 = vmatprep.subr.bf16.mxu0 0
      %6640 = vmatpush1.bf16.msra.mxu0 0
      %6641 = vmatprep.subr.bf16.mxu0 0
      %6642 = vmatpush1.bf16.msra.mxu0 0
      %6643 = vmatprep.mubr.bf16.mxu0 0
      %6644 = vmatmul.mubr.bf16.gmra.mrb[0].mxu0 %v6600
      %v6645 = vpop.f32.mrb[0].mxu0
      %v6646 = vadd.f32 0.0, %v6645
      %v6647 = vpop.f32.mrb[0].mxu0
      %v6648 = vadd.f32 0.0, %v6647
      %v6649 = vpop.f32.mrb[0].mxu0
      %v6650 = vadd.f32 0.0, %v6649
      %v6651 = vpop.f32.mrb[0].mxu0
      %v6652 = vadd.f32 0.0, %v6651
      %6653 = vmatprep.mubr.bf16.mxu0 0
      %6654 = vmatmul.mubr.bf16.gmra.mrb[0].mxu0 %v6603
      %v6655 = vpop.f32.mrb[0].mxu0
      %v6656 = vadd.f32 0.0, %v6655
      %v6657 = vpop.f32.mrb[0].mxu0
      %v6658 = vadd.f32 0.0, %v6657
      %v6659 = vpop.f32.mrb[0].mxu0
      %v6660 = vadd.f32 0.0, %v6659
      %v6661 = vpop.f32.mrb[0].mxu0
      %v6662 = vadd.f32 0.0, %v6661
      %6663 = vmatprep.mubr.bf16.mxu0 0
      %6664 = vmatmul.mubr.bf16.gmra.mrb[0].mxu0 %v6606
      %v6665 = vpop.f32.mrb[0].mxu0
      %v6666 = vadd.f32 0.0, %v6665
      %v6667 = vpop.f32.mrb[0].mxu0
      %v6668 = vadd.f32 0.0, %v6667
      %v6669 = vpop.f32.mrb[0].mxu0
      %v6670 = vadd.f32 0.0, %v6669
      %v6671 = vpop.f32.mrb[0].mxu0
      %v6672 = vadd.f32 0.0, %v6671
      %6673 = vmatprep.mubr.bf16.mxu0 0
      %6674 = vmatmul.mubr.bf16.gmra.mrb[0].mxu0 %v6609
      %v6675 = vpop.f32.mrb[0].mxu0
      %v6676 = vadd.f32 0.0, %v6675
      %v6677 = vpop.f32.mrb[0].mxu0
      %v6678 = vadd.f32 0.0, %v6677
      %v6679 = vpop.f32.mrb[0].mxu0
      %v6680 = vadd.f32 0.0, %v6679
      %v6681 = vpop.f32.mrb[0].mxu0
      %v6682 = vadd.f32 0.0, %v6681
      %6683 = vdwg.mxu0
      %v6684 = vadd.f32 %v6482, %v6646
      %v6685 = vadd.f32 %v6483, %v6648
      %v6686 = vadd.f32 %v6484, %v6650
      %v6687 = vadd.f32 %v6485, %v6652
      %v6688 = vadd.f32 %v6486, %v6656
      %v6689 = vadd.f32 %v6487, %v6658
      %v6690 = vadd.f32 %v6488, %v6660
      %v6691 = vadd.f32 %v6489, %v6662
      %v6692 = vadd.f32 %v6490, %v6666
      %v6693 = vadd.f32 %v6491, %v6668
      %v6694 = vadd.f32 %v6492, %v6670
      %v6695 = vadd.f32 %v6493, %v6672
      %v6696 = vadd.f32 %v6494, %v6676
      %v6697 = vadd.f32 %v6495, %v6678
      %v6698 = vadd.f32 %v6496, %v6680
      %v6699 = vadd.f32 %v6497, %v6682
      %6700 = vrot.lane.b32.xlu0 %v5366, 112
      %v6701 = vpop.permute.xlu0 %6700
      %6702 = vrot.lane.b32.xlu0 %v5368, 112
      %v6703 = vpop.permute.xlu0 %6702
      %6704 = vrot.lane.b32.xlu0 %v5370, 112
      %v6705 = vpop.permute.xlu0 %6704
      %6706 = vrot.lane.b32.xlu0 %v5372, 112
      %v6707 = vpop.permute.xlu0 %6706
      %6708 = vrot.lane.b32.xlu0 %v5374, 112
      %v6709 = vpop.permute.xlu0 %6708
      %6710 = vrot.lane.b32.xlu0 %v5376, 112
      %v6711 = vpop.permute.xlu0 %6710
      %6712 = vrot.lane.b32.xlu0 %v5378, 112
      %v6713 = vpop.permute.xlu0 %6712
      %6714 = vrot.lane.b32.xlu0 %v5380, 112
      %v6715 = vpop.permute.xlu0 %6714
      %6716 = vrot.lane.b32.xlu0 %v5367, 112
      %v6717 = vpop.permute.xlu0 %6716
      %6718 = vrot.lane.b32.xlu0 %v5369, 112
      %v6719 = vpop.permute.xlu0 %6718
      %6720 = vrot.lane.b32.xlu0 %v5371, 112
      %v6721 = vpop.permute.xlu0 %6720
      %6722 = vrot.lane.b32.xlu0 %v5373, 112
      %v6723 = vpop.permute.xlu0 %6722
      %6724 = vrot.lane.b32.xlu0 %v5375, 112
      %v6725 = vpop.permute.xlu0 %6724
      %6726 = vrot.lane.b32.xlu0 %v5377, 112
      %v6727 = vpop.permute.xlu0 %6726
      %6728 = vrot.lane.b32.xlu0 %v5379, 112
      %v6729 = vpop.permute.xlu0 %6728
      %6730 = vrot.lane.b32.xlu0 %v5381, 112
      %v6731 = vpop.permute.xlu0 %6730
      %v6732 = vsel %vm1385, %v6701, %v6717
      %v6733 = vsel %vm1385, %v6703, %v6719
      %v6734 = vsel %vm1385, %v6705, %v6721
      %v6735 = vsel %vm1385, %v6707, %v6723
      %v6736 = vsel %vm1385, %v6709, %v6725
      %v6737 = vsel %vm1385, %v6711, %v6727
      %v6738 = vsel %vm1385, %v6713, %v6729
      %v6739 = vsel %vm1385, %v6715, %v6731
      %v6740 = vsel %vm1385, %v6717, %v6701
      %v6741 = vsel %vm1385, %v6719, %v6703
      %v6742 = vsel %vm1385, %v6721, %v6705
      %v6743 = vsel %vm1385, %v6723, %v6707
      %v6744 = vsel %vm1385, %v6725, %v6709
      %v6745 = vsel %vm1385, %v6727, %v6711
      %v6746 = vsel %vm1385, %v6729, %v6713
      %v6747 = vsel %vm1385, %v6731, %v6715
      %v6748 = vmul.f32 %v6732, %v1392
      %v6749 = vmul.f32 %v6740, %v1396
      %v6750 = vmul.f32 %v6733, %v1392
      %v6751 = vmul.f32 %v6741, %v1396
      %v6752 = vmul.f32 %v6734, %v1392
      %v6753 = vmul.f32 %v6742, %v1396
      %v6754 = vmul.f32 %v6735, %v1392
      %v6755 = vmul.f32 %v6743, %v1396
      %v6756 = vmul.f32 %v6736, %v1392
      %v6757 = vmul.f32 %v6744, %v1396
      %v6758 = vmul.f32 %v6737, %v1392
      %v6759 = vmul.f32 %v6745, %v1396
      %v6760 = vmul.f32 %v6738, %v1392
      %v6761 = vmul.f32 %v6746, %v1396
      %v6762 = vmul.f32 %v6739, %v1392
      %v6763 = vmul.f32 %v6747, %v1396
      %s6764 = scalar_lea.vmem %s4, 800
      %v6765 = vld [vmem:[%s6764] sm:$0xf]
      %v6766 = vld [vmem:[%s6764 + $0x4] sm:$0xf]
      %v6767 = vld [vmem:[%s6764 + $0x8] sm:$0xf]
      %v6768 = vld [vmem:[%s6764 + $0xc] sm:$0xf]
      %v6769 = vld [vmem:[%s6764 + $0x10] sm:$0xf]
      %v6770 = vld [vmem:[%s6764 + $0x14] sm:$0xf]
      %v6771 = vld [vmem:[%s6764 + $0x18] sm:$0xf]
      %v6772 = vld [vmem:[%s6764 + $0x1c] sm:$0xf]
      %v6773 = vpack.c.bf16 %v6750, %v6748
      %v6774 = vpack.c.bf16 %v6751, %v6749
      %v6775 = vpack.c.bf16 %v6754, %v6752
      %v6776 = vpack.c.bf16 %v6755, %v6753
      %v6777 = vpack.c.bf16 %v6758, %v6756
      %v6778 = vpack.c.bf16 %v6759, %v6757
      %v6779 = vpack.c.bf16 %v6762, %v6760
      %v6780 = vpack.c.bf16 %v6763, %v6761
      %v6789 = vunpack.c.l.b16 %v6765
      %v6790 = vunpack.c.l.b16 %v6766
      %v6791 = vunpack.c.l.b16 %v6767
      %v6792 = vunpack.c.l.b16 %v6768
      %v6793 = vunpack.c.l.b16 %v6769
      %v6794 = vunpack.c.l.b16 %v6770
      %v6795 = vunpack.c.l.b16 %v6771
      %v6796 = vunpack.c.l.b16 %v6772
      %v6797 = vpack.c.b16 %v6790, %v6789
      %v6798 = vpack.c.b16 %v6792, %v6791
      %v6799 = vpack.c.b16 %v6794, %v6793
      %v6800 = vpack.c.b16 %v6796, %v6795
      %v6802 = vsel %vm1958, %v6797, 0
      %v6805 = vsel %vm1958, %v6798, 0
      %v6808 = vsel %vm1958, %v6799, 0
      %v6811 = vsel %vm1958, %v6800, 0
      %6813 = vmatprep.subr.bf16.mxu0 %v6774
      %6814 = vmatpush1.bf16.msra.mxu0 %v6773
      %6815 = vmatprep.subr.bf16.mxu0 %v6776
      %6816 = vmatpush1.bf16.msra.mxu0 %v6775
      %6817 = vmatprep.subr.bf16.mxu0 %v6778
      %6818 = vmatpush1.bf16.msra.mxu0 %v6777
      %6819 = vmatprep.subr.bf16.mxu0 %v6780
      %6820 = vmatpush1.bf16.msra.mxu0 %v6779
      %6821 = vmatprep.subr.bf16.mxu0 0
      %6822 = vmatpush1.bf16.msra.mxu0 0
      %6823 = vmatprep.subr.bf16.mxu0 0
      %6824 = vmatpush1.bf16.msra.mxu0 0
      %6825 = vmatprep.subr.bf16.mxu0 0
      %6826 = vmatpush1.bf16.msra.mxu0 0
      %6827 = vmatprep.subr.bf16.mxu0 0
      %6828 = vmatpush1.bf16.msra.mxu0 0
      %6829 = vmatprep.subr.bf16.mxu0 0
      %6830 = vmatpush1.bf16.msra.mxu0 0
      %6831 = vmatprep.subr.bf16.mxu0 0
      %6832 = vmatpush1.bf16.msra.mxu0 0
      %6833 = vmatprep.subr.bf16.mxu0 0
      %6834 = vmatpush1.bf16.msra.mxu0 0
      %6835 = vmatprep.subr.bf16.mxu0 0
      %6836 = vmatpush1.bf16.msra.mxu0 0
      %6837 = vmatprep.subr.bf16.mxu0 0
      %6838 = vmatpush1.bf16.msra.mxu0 0
      %6839 = vmatprep.subr.bf16.mxu0 0
      %6840 = vmatpush1.bf16.msra.mxu0 0
      %6841 = vmatprep.subr.bf16.mxu0 0
      %6842 = vmatpush1.bf16.msra.mxu0 0
      %6843 = vmatprep.subr.bf16.mxu0 0
      %6844 = vmatpush1.bf16.msra.mxu0 0
      %6845 = vmatprep.mubr.bf16.mxu0 0
      %6846 = vmatmul.mubr.bf16.gmra.mrb[0].mxu0 %v6802
      %v6847 = vpop.f32.mrb[0].mxu0
      %v6848 = vadd.f32 0.0, %v6847
      %v6849 = vpop.f32.mrb[0].mxu0
      %v6850 = vadd.f32 0.0, %v6849
      %v6851 = vpop.f32.mrb[0].mxu0
      %v6852 = vadd.f32 0.0, %v6851
      %v6853 = vpop.f32.mrb[0].mxu0
      %v6854 = vadd.f32 0.0, %v6853
      %6855 = vmatprep.mubr.bf16.mxu0 0
      %6856 = vmatmul.mubr.bf16.gmra.mrb[0].mxu0 %v6805
      %v6857 = vpop.f32.mrb[0].mxu0
      %v6858 = vadd.f32 0.0, %v6857
      %v6859 = vpop.f32.mrb[0].mxu0
      %v6860 = vadd.f32 0.0, %v6859
      %v6861 = vpop.f32.mrb[0].mxu0
      %v6862 = vadd.f32 0.0, %v6861
      %v6863 = vpop.f32.mrb[0].mxu0
      %v6864 = vadd.f32 0.0, %v6863
      %6865 = vmatprep.mubr.bf16.mxu0 0
      %6866 = vmatmul.mubr.bf16.gmra.mrb[0].mxu0 %v6808
      %v6867 = vpop.f32.mrb[0].mxu0
      %v6868 = vadd.f32 0.0, %v6867
      %v6869 = vpop.f32.mrb[0].mxu0
      %v6870 = vadd.f32 0.0, %v6869
      %v6871 = vpop.f32.mrb[0].mxu0
      %v6872 = vadd.f32 0.0, %v6871
      %v6873 = vpop.f32.mrb[0].mxu0
      %v6874 = vadd.f32 0.0, %v6873
      %6875 = vmatprep.mubr.bf16.mxu0 0
      %6876 = vmatmul.mubr.bf16.gmra.mrb[0].mxu0 %v6811
      %v6877 = vpop.f32.mrb[0].mxu0
      %v6878 = vadd.f32 0.0, %v6877
      %v6879 = vpop.f32.mrb[0].mxu0
      %v6880 = vadd.f32 0.0, %v6879
      %v6881 = vpop.f32.mrb[0].mxu0
      %v6882 = vadd.f32 0.0, %v6881
      %v6883 = vpop.f32.mrb[0].mxu0
      %v6884 = vadd.f32 0.0, %v6883
      %6885 = vdwg.mxu0
      %v6886 = vadd.f32 %v6684, %v6848
      %v6887 = vadd.f32 %v6685, %v6850
      %v6888 = vadd.f32 %v6686, %v6852
      %v6889 = vadd.f32 %v6687, %v6854
      %v6890 = vadd.f32 %v6688, %v6858
      %v6891 = vadd.f32 %v6689, %v6860
      %v6892 = vadd.f32 %v6690, %v6862
      %v6893 = vadd.f32 %v6691, %v6864
      %v6894 = vadd.f32 %v6692, %v6868
      %v6895 = vadd.f32 %v6693, %v6870
      %v6896 = vadd.f32 %v6694, %v6872
      %v6897 = vadd.f32 %v6695, %v6874
      %v6898 = vadd.f32 %v6696, %v6878
      %v6899 = vadd.f32 %v6697, %v6880
      %v6900 = vadd.f32 %v6698, %v6882
      %v6901 = vadd.f32 %v6699, %v6884
      %6902 = vrot.lane.b32.xlu0 %v5366, 111
      %v6903 = vpop.permute.xlu0 %6902
      %6904 = vrot.lane.b32.xlu0 %v5368, 111
      %v6905 = vpop.permute.xlu0 %6904
      %6906 = vrot.lane.b32.xlu0 %v5370, 111
      %v6907 = vpop.permute.xlu0 %6906
      %6908 = vrot.lane.b32.xlu0 %v5372, 111
      %v6909 = vpop.permute.xlu0 %6908
      %6910 = vrot.lane.b32.xlu0 %v5374, 111
      %v6911 = vpop.permute.xlu0 %6910
      %6912 = vrot.lane.b32.xlu0 %v5376, 111
      %v6913 = vpop.permute.xlu0 %6912
      %6914 = vrot.lane.b32.xlu0 %v5378, 111
      %v6915 = vpop.permute.xlu0 %6914
      %6916 = vrot.lane.b32.xlu0 %v5380, 111
      %v6917 = vpop.permute.xlu0 %6916
      %6918 = vrot.lane.b32.xlu0 %v5367, 111
      %v6919 = vpop.permute.xlu0 %6918
      %6920 = vrot.lane.b32.xlu0 %v5369, 111
      %v6921 = vpop.permute.xlu0 %6920
      %6922 = vrot.lane.b32.xlu0 %v5371, 111
      %v6923 = vpop.permute.xlu0 %6922
      %6924 = vrot.lane.b32.xlu0 %v5373, 111
      %v6925 = vpop.permute.xlu0 %6924
      %6926 = vrot.lane.b32.xlu0 %v5375, 111
      %v6927 = vpop.permute.xlu0 %6926
      %6928 = vrot.lane.b32.xlu0 %v5377, 111
      %v6929 = vpop.permute.xlu0 %6928
      %6930 = vrot.lane.b32.xlu0 %v5379, 111
      %v6931 = vpop.permute.xlu0 %6930
      %6932 = vrot.lane.b32.xlu0 %v5381, 111
      %v6933 = vpop.permute.xlu0 %6932
      %v6934 = vsel %vm1543, %v6903, %v6919
      %v6935 = vsel %vm1543, %v6905, %v6921
      %v6936 = vsel %vm1543, %v6907, %v6923
      %v6937 = vsel %vm1543, %v6909, %v6925
      %v6938 = vsel %vm1543, %v6911, %v6927
      %v6939 = vsel %vm1543, %v6913, %v6929
      %v6940 = vsel %vm1543, %v6915, %v6931
      %v6941 = vsel %vm1543, %v6917, %v6933
      %v6942 = vsel %vm1543, %v6919, %v6903
      %v6943 = vsel %vm1543, %v6921, %v6905
      %v6944 = vsel %vm1543, %v6923, %v6907
      %v6945 = vsel %vm1543, %v6925, %v6909
      %v6946 = vsel %vm1543, %v6927, %v6911
      %v6947 = vsel %vm1543, %v6929, %v6913
      %v6948 = vsel %vm1543, %v6931, %v6915
      %v6949 = vsel %vm1543, %v6933, %v6917
      %v6950 = vmul.f32 %v6934, %v1550
      %v6951 = vmul.f32 %v6942, %v1554
      %v6952 = vmul.f32 %v6935, %v1550
      %v6953 = vmul.f32 %v6943, %v1554
      %v6954 = vmul.f32 %v6936, %v1550
      %v6955 = vmul.f32 %v6944, %v1554
      %v6956 = vmul.f32 %v6937, %v1550
      %v6957 = vmul.f32 %v6945, %v1554
      %v6958 = vmul.f32 %v6938, %v1550
      %v6959 = vmul.f32 %v6946, %v1554
      %v6960 = vmul.f32 %v6939, %v1550
      %v6961 = vmul.f32 %v6947, %v1554
      %v6962 = vmul.f32 %v6940, %v1550
      %v6963 = vmul.f32 %v6948, %v1554
      %v6964 = vmul.f32 %v6941, %v1550
      %v6965 = vmul.f32 %v6949, %v1554
      %s6966 = scalar_lea.vmem %s4, 832
      %v6967 = vld [vmem:[%s6966] sm:$0xf]
      %v6968 = vld [vmem:[%s6966 + $0x4] sm:$0xf]
      %v6969 = vld [vmem:[%s6966 + $0x8] sm:$0xf]
      %v6970 = vld [vmem:[%s6966 + $0xc] sm:$0xf]
      %v6971 = vld [vmem:[%s6966 + $0x10] sm:$0xf]
      %v6972 = vld [vmem:[%s6966 + $0x14] sm:$0xf]
      %v6973 = vld [vmem:[%s6966 + $0x18] sm:$0xf]
      %v6974 = vld [vmem:[%s6966 + $0x1c] sm:$0xf]
      %v6975 = vpack.c.bf16 %v6952, %v6950
      %v6976 = vpack.c.bf16 %v6953, %v6951
      %v6977 = vpack.c.bf16 %v6956, %v6954
      %v6978 = vpack.c.bf16 %v6957, %v6955
      %v6979 = vpack.c.bf16 %v6960, %v6958
      %v6980 = vpack.c.bf16 %v6961, %v6959
      %v6981 = vpack.c.bf16 %v6964, %v6962
      %v6982 = vpack.c.bf16 %v6965, %v6963
      %v6991 = vunpack.c.l.b16 %v6967
      %v6992 = vunpack.c.l.b16 %v6968
      %v6993 = vunpack.c.l.b16 %v6969
      %v6994 = vunpack.c.l.b16 %v6970
      %v6995 = vunpack.c.l.b16 %v6971
      %v6996 = vunpack.c.l.b16 %v6972
      %v6997 = vunpack.c.l.b16 %v6973
      %v6998 = vunpack.c.l.b16 %v6974
      %v6999 = vpack.c.b16 %v6992, %v6991
      %v7000 = vpack.c.b16 %v6994, %v6993
      %v7001 = vpack.c.b16 %v6996, %v6995
      %v7002 = vpack.c.b16 %v6998, %v6997
      %v7004 = vsel %vm1958, %v6999, 0
      %v7007 = vsel %vm1958, %v7000, 0
      %v7010 = vsel %vm1958, %v7001, 0
      %v7013 = vsel %vm1958, %v7002, 0
      %7015 = vmatprep.subr.bf16.mxu0 %v6976
      %7016 = vmatpush1.bf16.msra.mxu0 %v6975
      %7017 = vmatprep.subr.bf16.mxu0 %v6978
      %7018 = vmatpush1.bf16.msra.mxu0 %v6977
      %7019 = vmatprep.subr.bf16.mxu0 %v6980
      %7020 = vmatpush1.bf16.msra.mxu0 %v6979
      %7021 = vmatprep.subr.bf16.mxu0 %v6982
      %7022 = vmatpush1.bf16.msra.mxu0 %v6981
      %7023 = vmatprep.subr.bf16.mxu0 0
      %7024 = vmatpush1.bf16.msra.mxu0 0
      %7025 = vmatprep.subr.bf16.mxu0 0
      %7026 = vmatpush1.bf16.msra.mxu0 0
      %7027 = vmatprep.subr.bf16.mxu0 0
      %7028 = vmatpush1.bf16.msra.mxu0 0
      %7029 = vmatprep.subr.bf16.mxu0 0
      %7030 = vmatpush1.bf16.msra.mxu0 0
      %7031 = vmatprep.subr.bf16.mxu0 0
      %7032 = vmatpush1.bf16.msra.mxu0 0
      %7033 = vmatprep.subr.bf16.mxu0 0
      %7034 = vmatpush1.bf16.msra.mxu0 0
      %7035 = vmatprep.subr.bf16.mxu0 0
      %7036 = vmatpush1.bf16.msra.mxu0 0
      %7037 = vmatprep.subr.bf16.mxu0 0
      %7038 = vmatpush1.bf16.msra.mxu0 0
      %7039 = vmatprep.subr.bf16.mxu0 0
      %7040 = vmatpush1.bf16.msra.mxu0 0
      %7041 = vmatprep.subr.bf16.mxu0 0
      %7042 = vmatpush1.bf16.msra.mxu0 0
      %7043 = vmatprep.subr.bf16.mxu0 0
      %7044 = vmatpush1.bf16.msra.mxu0 0
      %7045 = vmatprep.subr.bf16.mxu0 0
      %7046 = vmatpush1.bf16.msra.mxu0 0
      %7047 = vmatprep.mubr.bf16.mxu0 0
      %7048 = vmatmul.mubr.bf16.gmra.mrb[0].mxu0 %v7004
      %v7049 = vpop.f32.mrb[0].mxu0
      %v7050 = vadd.f32 0.0, %v7049
      %v7051 = vpop.f32.mrb[0].mxu0
      %v7052 = vadd.f32 0.0, %v7051
      %v7053 = vpop.f32.mrb[0].mxu0
      %v7054 = vadd.f32 0.0, %v7053
      %v7055 = vpop.f32.mrb[0].mxu0
      %v7056 = vadd.f32 0.0, %v7055
      %7057 = vmatprep.mubr.bf16.mxu0 0
      %7058 = vmatmul.mubr.bf16.gmra.mrb[0].mxu0 %v7007
      %v7059 = vpop.f32.mrb[0].mxu0
      %v7060 = vadd.f32 0.0, %v7059
      %v7061 = vpop.f32.mrb[0].mxu0
      %v7062 = vadd.f32 0.0, %v7061
      %v7063 = vpop.f32.mrb[0].mxu0
      %v7064 = vadd.f32 0.0, %v7063
      %v7065 = vpop.f32.mrb[0].mxu0
      %v7066 = vadd.f32 0.0, %v7065
      %7067 = vmatprep.mubr.bf16.mxu0 0
      %7068 = vmatmul.mubr.bf16.gmra.mrb[0].mxu0 %v7010
      %v7069 = vpop.f32.mrb[0].mxu0
      %v7070 = vadd.f32 0.0, %v7069
      %v7071 = vpop.f32.mrb[0].mxu0
      %v7072 = vadd.f32 0.0, %v7071
      %v7073 = vpop.f32.mrb[0].mxu0
      %v7074 = vadd.f32 0.0, %v7073
      %v7075 = vpop.f32.mrb[0].mxu0
      %v7076 = vadd.f32 0.0, %v7075
      %7077 = vmatprep.mubr.bf16.mxu0 0
      %7078 = vmatmul.mubr.bf16.gmra.mrb[0].mxu0 %v7013
      %v7079 = vpop.f32.mrb[0].mxu0
      %v7080 = vadd.f32 0.0, %v7079
      %v7081 = vpop.f32.mrb[0].mxu0
      %v7082 = vadd.f32 0.0, %v7081
      %v7083 = vpop.f32.mrb[0].mxu0
      %v7084 = vadd.f32 0.0, %v7083
      %v7085 = vpop.f32.mrb[0].mxu0
      %v7086 = vadd.f32 0.0, %v7085
      %7087 = vdwg.mxu0
      %v7088 = vadd.f32 %v6886, %v7050
      %v7089 = vadd.f32 %v6887, %v7052
      %v7090 = vadd.f32 %v6888, %v7054
      %v7091 = vadd.f32 %v6889, %v7056
      %v7092 = vadd.f32 %v6890, %v7060
      %v7093 = vadd.f32 %v6891, %v7062
      %v7094 = vadd.f32 %v6892, %v7064
      %v7095 = vadd.f32 %v6893, %v7066
      %v7096 = vadd.f32 %v6894, %v7070
      %v7097 = vadd.f32 %v6895, %v7072
      %v7098 = vadd.f32 %v6896, %v7074
      %v7099 = vadd.f32 %v6897, %v7076
      %v7100 = vadd.f32 %v6898, %v7080
      %v7101 = vadd.f32 %v6899, %v7082
      %v7102 = vadd.f32 %v6900, %v7084
      %v7103 = vadd.f32 %v6901, %v7086
      %s7104 = scalar_lea.vmem %s5, 128
      %v7105 = vld [vmem:[%s7104] sm:$0xff]
      %v7106 = vld [vmem:[%s7104 + $0x8] sm:$0xff]
      %v7107 = vld [vmem:[%s7104 + $0x10] sm:$0xff]
      %v7108 = vld [vmem:[%s7104 + $0x18] sm:$0xff]
      %v7109 = vld [vmem:[%s7104 + $0x20] sm:$0xff]
      %v7110 = vld [vmem:[%s7104 + $0x28] sm:$0xff]
      %v7111 = vld [vmem:[%s7104 + $0x30] sm:$0xff]
      %v7112 = vld [vmem:[%s7104 + $0x38] sm:$0xff]
      %7114 = vset.pattern.permute.xlu0 0
      %7115 = vperm.xlu0 %7114, %v7105
      %v7116 = vpop.permute.xlu0 %7115
      %7119 = vset.pattern.permute.xlu0 0
      %7120 = vperm.xlu0 %7119, %v7106
      %v7121 = vpop.permute.xlu0 %7120
      %7124 = vset.pattern.permute.xlu0 0
      %7125 = vperm.xlu0 %7124, %v7107
      %v7126 = vpop.permute.xlu0 %7125
      %7129 = vset.pattern.permute.xlu0 0
      %7130 = vperm.xlu0 %7129, %v7108
      %v7131 = vpop.permute.xlu0 %7130
      %7134 = vset.pattern.permute.xlu0 0
      %7135 = vperm.xlu0 %7134, %v7109
      %v7136 = vpop.permute.xlu0 %7135
      %7139 = vset.pattern.permute.xlu0 0
      %7140 = vperm.xlu0 %7139, %v7110
      %v7141 = vpop.permute.xlu0 %7140
      %7144 = vset.pattern.permute.xlu0 0
      %7145 = vperm.xlu0 %7144, %v7111
      %v7146 = vpop.permute.xlu0 %7145
      %7149 = vset.pattern.permute.xlu0 0
      %7150 = vperm.xlu0 %7149, %v7112
      %v7151 = vpop.permute.xlu0 %7150
      %v7153 = vadd.f32 %v7088, %v7116
      %v7154 = vadd.f32 %v7089, %v7116
      %v7155 = vadd.f32 %v7090, %v7121
      %v7156 = vadd.f32 %v7091, %v7121
      %v7157 = vadd.f32 %v7092, %v7126
      %v7158 = vadd.f32 %v7093, %v7126
      %v7159 = vadd.f32 %v7094, %v7131
      %v7160 = vadd.f32 %v7095, %v7131
      %v7161 = vadd.f32 %v7096, %v7136
      %v7162 = vadd.f32 %v7097, %v7136
      %v7163 = vadd.f32 %v7098, %v7141
      %v7164 = vadd.f32 %v7099, %v7141
      %v7165 = vadd.f32 %v7100, %v7146
      %v7166 = vadd.f32 %v7101, %v7146
      %v7167 = vadd.f32 %v7102, %v7151
      %v7168 = vadd.f32 %v7103, %v7151
      %v7169 = vmax.f32 %v7153, 0.0
      %v7170 = vmax.f32 %v7154, 0.0
      %v7171 = vmax.f32 %v7155, 0.0
      %v7172 = vmax.f32 %v7156, 0.0
      %v7173 = vmax.f32 %v7157, 0.0
      %v7174 = vmax.f32 %v7158, 0.0
      %v7175 = vmax.f32 %v7159, 0.0
      %v7176 = vmax.f32 %v7160, 0.0
      %v7177 = vmax.f32 %v7161, 0.0
      %v7178 = vmax.f32 %v7162, 0.0
      %v7179 = vmax.f32 %v7163, 0.0
      %v7180 = vmax.f32 %v7164, 0.0
      %v7181 = vmax.f32 %v7165, 0.0
      %v7182 = vmax.f32 %v7166, 0.0
      %v7183 = vmax.f32 %v7167, 0.0
      %v7184 = vmax.f32 %v7168, 0.0
      %7185 = vrot.lane.b32.xlu0 %v7169, 17
      %v7186 = vpop.permute.xlu0 %7185
      %7187 = vrot.lane.b32.xlu0 %v7171, 17
      %v7188 = vpop.permute.xlu0 %7187
      %7189 = vrot.lane.b32.xlu0 %v7173, 17
      %v7190 = vpop.permute.xlu0 %7189
      %7191 = vrot.lane.b32.xlu0 %v7175, 17
      %v7192 = vpop.permute.xlu0 %7191
      %7193 = vrot.lane.b32.xlu0 %v7177, 17
      %v7194 = vpop.permute.xlu0 %7193
      %7195 = vrot.lane.b32.xlu0 %v7179, 17
      %v7196 = vpop.permute.xlu0 %7195
      %7197 = vrot.lane.b32.xlu0 %v7181, 17
      %v7198 = vpop.permute.xlu0 %7197
      %7199 = vrot.lane.b32.xlu0 %v7183, 17
      %v7200 = vpop.permute.xlu0 %7199
      %7201 = vrot.lane.b32.xlu0 %v7170, 17
      %v7202 = vpop.permute.xlu0 %7201
      %7203 = vrot.lane.b32.xlu0 %v7172, 17
      %v7204 = vpop.permute.xlu0 %7203
      %7205 = vrot.lane.b32.xlu0 %v7174, 17
      %v7206 = vpop.permute.xlu0 %7205
      %7207 = vrot.lane.b32.xlu0 %v7176, 17
      %v7208 = vpop.permute.xlu0 %7207
      %7209 = vrot.lane.b32.xlu0 %v7178, 17
      %v7210 = vpop.permute.xlu0 %7209
      %7211 = vrot.lane.b32.xlu0 %v7180, 17
      %v7212 = vpop.permute.xlu0 %7211
      %7213 = vrot.lane.b32.xlu0 %v7182, 17
      %v7214 = vpop.permute.xlu0 %7213
      %7215 = vrot.lane.b32.xlu0 %v7184, 17
      %v7216 = vpop.permute.xlu0 %7215
      %v7217 = vsel %vm330, %v7186, %v7202
      %v7218 = vsel %vm330, %v7188, %v7204
      %v7219 = vsel %vm330, %v7190, %v7206
      %v7220 = vsel %vm330, %v7192, %v7208
      %v7221 = vsel %vm330, %v7194, %v7210
      %v7222 = vsel %vm330, %v7196, %v7212
      %v7223 = vsel %vm330, %v7198, %v7214
      %v7224 = vsel %vm330, %v7200, %v7216
      %v7225 = vsel %vm330, %v7202, %v7186
      %v7226 = vsel %vm330, %v7204, %v7188
      %v7227 = vsel %vm330, %v7206, %v7190
      %v7228 = vsel %vm330, %v7208, %v7192
      %v7229 = vsel %vm330, %v7210, %v7194
      %v7230 = vsel %vm330, %v7212, %v7196
      %v7231 = vsel %vm330, %v7214, %v7198
      %v7232 = vsel %vm330, %v7216, %v7200
      %v7233 = vmul.f32 %v7225, %v337
      %v7234 = vmul.f32 %v7217, %v341
      %v7235 = vmul.f32 %v7226, %v337
      %v7236 = vmul.f32 %v7218, %v341
      %v7237 = vmul.f32 %v7227, %v337
      %v7238 = vmul.f32 %v7219, %v341
      %v7239 = vmul.f32 %v7228, %v337
      %v7240 = vmul.f32 %v7220, %v341
      %v7241 = vmul.f32 %v7229, %v337
      %v7242 = vmul.f32 %v7221, %v341
      %v7243 = vmul.f32 %v7230, %v337
      %v7244 = vmul.f32 %v7222, %v341
      %v7245 = vmul.f32 %v7231, %v337
      %v7246 = vmul.f32 %v7223, %v341
      %v7247 = vmul.f32 %v7232, %v337
      %v7248 = vmul.f32 %v7224, %v341
      %s7249 = scalar_lea.vmem %s4, 864
      %v7250 = vld [vmem:[%s7249] sm:$0xf]
      %v7251 = vld [vmem:[%s7249 + $0x4] sm:$0xf]
      %v7252 = vld [vmem:[%s7249 + $0x8] sm:$0xf]
      %v7253 = vld [vmem:[%s7249 + $0xc] sm:$0xf]
      %v7254 = vld [vmem:[%s7249 + $0x10] sm:$0xf]
      %v7255 = vld [vmem:[%s7249 + $0x14] sm:$0xf]
      %v7256 = vld [vmem:[%s7249 + $0x18] sm:$0xf]
      %v7257 = vld [vmem:[%s7249 + $0x1c] sm:$0xf]
      %v7258 = vpack.c.bf16 %v7235, %v7233
      %v7259 = vpack.c.bf16 %v7236, %v7234
      %v7260 = vpack.c.bf16 %v7239, %v7237
      %v7261 = vpack.c.bf16 %v7240, %v7238
      %v7262 = vpack.c.bf16 %v7243, %v7241
      %v7263 = vpack.c.bf16 %v7244, %v7242
      %v7264 = vpack.c.bf16 %v7247, %v7245
      %v7265 = vpack.c.bf16 %v7248, %v7246
      %7266 = vrot.lane.b32.xlu0 %v7169, 16
      %v7267 = vpop.permute.xlu0 %7266
      %7268 = vrot.lane.b32.xlu0 %v7171, 16
      %v7269 = vpop.permute.xlu0 %7268
      %7270 = vrot.lane.b32.xlu0 %v7173, 16
      %v7271 = vpop.permute.xlu0 %7270
      %7272 = vrot.lane.b32.xlu0 %v7175, 16
      %v7273 = vpop.permute.xlu0 %7272
      %7274 = vrot.lane.b32.xlu0 %v7177, 16
      %v7275 = vpop.permute.xlu0 %7274
      %7276 = vrot.lane.b32.xlu0 %v7179, 16
      %v7277 = vpop.permute.xlu0 %7276
      %7278 = vrot.lane.b32.xlu0 %v7181, 16
      %v7279 = vpop.permute.xlu0 %7278
      %7280 = vrot.lane.b32.xlu0 %v7183, 16
      %v7281 = vpop.permute.xlu0 %7280
      %7282 = vrot.lane.b32.xlu0 %v7170, 16
      %v7283 = vpop.permute.xlu0 %7282
      %7284 = vrot.lane.b32.xlu0 %v7172, 16
      %v7285 = vpop.permute.xlu0 %7284
      %7286 = vrot.lane.b32.xlu0 %v7174, 16
      %v7287 = vpop.permute.xlu0 %7286
      %7288 = vrot.lane.b32.xlu0 %v7176, 16
      %v7289 = vpop.permute.xlu0 %7288
      %7290 = vrot.lane.b32.xlu0 %v7178, 16
      %v7291 = vpop.permute.xlu0 %7290
      %7292 = vrot.lane.b32.xlu0 %v7180, 16
      %v7293 = vpop.permute.xlu0 %7292
      %7294 = vrot.lane.b32.xlu0 %v7182, 16
      %v7295 = vpop.permute.xlu0 %7294
      %7296 = vrot.lane.b32.xlu0 %v7184, 16
      %v7297 = vpop.permute.xlu0 %7296
      %v7298 = vsel %vm360, %v7267, %v7283
      %v7299 = vsel %vm360, %v7269, %v7285
      %v7300 = vsel %vm360, %v7271, %v7287
      %v7301 = vsel %vm360, %v7273, %v7289
      %v7302 = vsel %vm360, %v7275, %v7291
      %v7303 = vsel %vm360, %v7277, %v7293
      %v7304 = vsel %vm360, %v7279, %v7295
      %v7305 = vsel %vm360, %v7281, %v7297
      %v7306 = vsel %vm360, %v7283, %v7267
      %v7307 = vsel %vm360, %v7285, %v7269
      %v7308 = vsel %vm360, %v7287, %v7271
      %v7309 = vsel %vm360, %v7289, %v7273
      %v7310 = vsel %vm360, %v7291, %v7275
      %v7311 = vsel %vm360, %v7293, %v7277
      %v7312 = vsel %vm360, %v7295, %v7279
      %v7313 = vsel %vm360, %v7297, %v7281
      %v7314 = vmul.f32 %v7306, %v367
      %v7315 = vmul.f32 %v7298, %v371
      %v7316 = vmul.f32 %v7307, %v367
      %v7317 = vmul.f32 %v7299, %v371
      %v7318 = vmul.f32 %v7308, %v367
      %v7319 = vmul.f32 %v7300, %v371
      %v7320 = vmul.f32 %v7309, %v367
      %v7321 = vmul.f32 %v7301, %v371
      %v7322 = vmul.f32 %v7310, %v367
      %v7323 = vmul.f32 %v7302, %v371
      %v7324 = vmul.f32 %v7311, %v367
      %v7325 = vmul.f32 %v7303, %v371
      %v7326 = vmul.f32 %v7312, %v367
      %v7327 = vmul.f32 %v7304, %v371
      %v7328 = vmul.f32 %v7313, %v367
      %v7329 = vmul.f32 %v7305, %v371
      %s7330 = scalar_lea.vmem %s4, 896
      %v7331 = vld [vmem:[%s7330] sm:$0xf]
      %v7332 = vld [vmem:[%s7330 + $0x4] sm:$0xf]
      %v7333 = vld [vmem:[%s7330 + $0x8] sm:$0xf]
      %v7334 = vld [vmem:[%s7330 + $0xc] sm:$0xf]
      %v7335 = vld [vmem:[%s7330 + $0x10] sm:$0xf]
      %v7336 = vld [vmem:[%s7330 + $0x14] sm:$0xf]
      %v7337 = vld [vmem:[%s7330 + $0x18] sm:$0xf]
      %v7338 = vld [vmem:[%s7330 + $0x1c] sm:$0xf]
      %v7339 = vpack.c.bf16 %v7316, %v7314
      %v7340 = vpack.c.bf16 %v7317, %v7315
      %v7341 = vpack.c.bf16 %v7320, %v7318
      %v7342 = vpack.c.bf16 %v7321, %v7319
      %v7343 = vpack.c.bf16 %v7324, %v7322
      %v7344 = vpack.c.bf16 %v7325, %v7323
      %v7345 = vpack.c.bf16 %v7328, %v7326
      %v7346 = vpack.c.bf16 %v7329, %v7327
      %v7355 = vunpack.c.l.b16 %v7331
      %v7356 = vunpack.c.l.b16 %v7332
      %v7357 = vunpack.c.l.b16 %v7333
      %v7358 = vunpack.c.l.b16 %v7334
      %v7359 = vunpack.c.l.b16 %v7335
      %v7360 = vunpack.c.l.b16 %v7336
      %v7361 = vunpack.c.l.b16 %v7337
      %v7362 = vunpack.c.l.b16 %v7338
      %v7363 = vpack.c.b16 %v7356, %v7355
      %v7364 = vpack.c.b16 %v7358, %v7357
      %v7365 = vpack.c.b16 %v7360, %v7359
      %v7366 = vpack.c.b16 %v7362, %v7361
      %v7368 = vsel %vm1958, %v7363, 0
      %v7371 = vsel %vm1958, %v7364, 0
      %v7374 = vsel %vm1958, %v7365, 0
      %v7377 = vsel %vm1958, %v7366, 0
      %7379 = vmatprep.subr.bf16.mxu0 %v7340
      %7380 = vmatpush1.bf16.msra.mxu0 %v7339
      %7381 = vmatprep.subr.bf16.mxu0 %v7342
      %7382 = vmatpush1.bf16.msra.mxu0 %v7341
      %7383 = vmatprep.subr.bf16.mxu0 %v7344
      %7384 = vmatpush1.bf16.msra.mxu0 %v7343
      %7385 = vmatprep.subr.bf16.mxu0 %v7346
      %7386 = vmatpush1.bf16.msra.mxu0 %v7345
      %7387 = vmatprep.subr.bf16.mxu0 0
      %7388 = vmatpush1.bf16.msra.mxu0 0
      %7389 = vmatprep.subr.bf16.mxu0 0
      %7390 = vmatpush1.bf16.msra.mxu0 0
      %7391 = vmatprep.subr.bf16.mxu0 0
      %7392 = vmatpush1.bf16.msra.mxu0 0
      %7393 = vmatprep.subr.bf16.mxu0 0
      %7394 = vmatpush1.bf16.msra.mxu0 0
      %7395 = vmatprep.subr.bf16.mxu0 0
      %7396 = vmatpush1.bf16.msra.mxu0 0
      %7397 = vmatprep.subr.bf16.mxu0 0
      %7398 = vmatpush1.bf16.msra.mxu0 0
      %7399 = vmatprep.subr.bf16.mxu0 0
      %7400 = vmatpush1.bf16.msra.mxu0 0
      %7401 = vmatprep.subr.bf16.mxu0 0
      %7402 = vmatpush1.bf16.msra.mxu0 0
      %7403 = vmatprep.subr.bf16.mxu0 0
      %7404 = vmatpush1.bf16.msra.mxu0 0
      %7405 = vmatprep.subr.bf16.mxu0 0
      %7406 = vmatpush1.bf16.msra.mxu0 0
      %7407 = vmatprep.subr.bf16.mxu0 0
      %7408 = vmatpush1.bf16.msra.mxu0 0
      %7409 = vmatprep.subr.bf16.mxu0 0
      %7410 = vmatpush1.bf16.msra.mxu0 0
      %7411 = vmatprep.mubr.bf16.mxu0 0
      %7412 = vmatmul.mubr.bf16.gmra.mrb[0].mxu0 %v7368
      %v7413 = vpop.f32.mrb[0].mxu0
      %v7414 = vadd.f32 0.0, %v7413
      %v7415 = vpop.f32.mrb[0].mxu0
      %v7416 = vadd.f32 0.0, %v7415
      %v7417 = vpop.f32.mrb[0].mxu0
      %v7418 = vadd.f32 0.0, %v7417
      %v7419 = vpop.f32.mrb[0].mxu0
      %v7420 = vadd.f32 0.0, %v7419
      %7421 = vmatprep.mubr.bf16.mxu0 0
      %7422 = vmatmul.mubr.bf16.gmra.mrb[0].mxu0 %v7371
      %v7423 = vpop.f32.mrb[0].mxu0
      %v7424 = vadd.f32 0.0, %v7423
      %v7425 = vpop.f32.mrb[0].mxu0
      %v7426 = vadd.f32 0.0, %v7425
      %v7427 = vpop.f32.mrb[0].mxu0
      %v7428 = vadd.f32 0.0, %v7427
      %v7429 = vpop.f32.mrb[0].mxu0
      %v7430 = vadd.f32 0.0, %v7429
      %7431 = vmatprep.mubr.bf16.mxu0 0
      %7432 = vmatmul.mubr.bf16.gmra.mrb[0].mxu0 %v7374
      %v7433 = vpop.f32.mrb[0].mxu0
      %v7434 = vadd.f32 0.0, %v7433
      %v7435 = vpop.f32.mrb[0].mxu0
      %v7436 = vadd.f32 0.0, %v7435
      %v7437 = vpop.f32.mrb[0].mxu0
      %v7438 = vadd.f32 0.0, %v7437
      %v7439 = vpop.f32.mrb[0].mxu0
      %v7440 = vadd.f32 0.0, %v7439
      %7441 = vmatprep.mubr.bf16.mxu0 0
      %7442 = vmatmul.mubr.bf16.gmra.mrb[0].mxu0 %v7377
      %v7443 = vpop.f32.mrb[0].mxu0
      %v7444 = vadd.f32 0.0, %v7443
      %v7445 = vpop.f32.mrb[0].mxu0
      %v7446 = vadd.f32 0.0, %v7445
      %v7447 = vpop.f32.mrb[0].mxu0
      %v7448 = vadd.f32 0.0, %v7447
      %v7449 = vpop.f32.mrb[0].mxu0
      %v7450 = vadd.f32 0.0, %v7449
      %7451 = vdwg.mxu0
      %v7460 = vunpack.c.l.b16 %v7250
      %v7461 = vunpack.c.l.b16 %v7251
      %v7462 = vunpack.c.l.b16 %v7252
      %v7463 = vunpack.c.l.b16 %v7253
      %v7464 = vunpack.c.l.b16 %v7254
      %v7465 = vunpack.c.l.b16 %v7255
      %v7466 = vunpack.c.l.b16 %v7256
      %v7467 = vunpack.c.l.b16 %v7257
      %v7468 = vpack.c.b16 %v7461, %v7460
      %v7469 = vpack.c.b16 %v7463, %v7462
      %v7470 = vpack.c.b16 %v7465, %v7464
      %v7471 = vpack.c.b16 %v7467, %v7466
      %v7473 = vsel %vm1958, %v7468, 0
      %v7476 = vsel %vm1958, %v7469, 0
      %v7479 = vsel %vm1958, %v7470, 0
      %v7482 = vsel %vm1958, %v7471, 0
      %7484 = vmatprep.subr.bf16.mxu0 %v7259
      %7485 = vmatpush1.bf16.msra.mxu0 %v7258
      %7486 = vmatprep.subr.bf16.mxu0 %v7261
      %7487 = vmatpush1.bf16.msra.mxu0 %v7260
      %7488 = vmatprep.subr.bf16.mxu0 %v7263
      %7489 = vmatpush1.bf16.msra.mxu0 %v7262
      %7490 = vmatprep.subr.bf16.mxu0 %v7265
      %7491 = vmatpush1.bf16.msra.mxu0 %v7264
      %7492 = vmatprep.subr.bf16.mxu0 0
      %7493 = vmatpush1.bf16.msra.mxu0 0
      %7494 = vmatprep.subr.bf16.mxu0 0
      %7495 = vmatpush1.bf16.msra.mxu0 0
      %7496 = vmatprep.subr.bf16.mxu0 0
      %7497 = vmatpush1.bf16.msra.mxu0 0
      %7498 = vmatprep.subr.bf16.mxu0 0
      %7499 = vmatpush1.bf16.msra.mxu0 0
      %7500 = vmatprep.subr.bf16.mxu0 0
      %7501 = vmatpush1.bf16.msra.mxu0 0
      %7502 = vmatprep.subr.bf16.mxu0 0
      %7503 = vmatpush1.bf16.msra.mxu0 0
      %7504 = vmatprep.subr.bf16.mxu0 0
      %7505 = vmatpush1.bf16.msra.mxu0 0
      %7506 = vmatprep.subr.bf16.mxu0 0
      %7507 = vmatpush1.bf16.msra.mxu0 0
      %7508 = vmatprep.subr.bf16.mxu0 0
      %7509 = vmatpush1.bf16.msra.mxu0 0
      %7510 = vmatprep.subr.bf16.mxu0 0
      %7511 = vmatpush1.bf16.msra.mxu0 0
      %7512 = vmatprep.subr.bf16.mxu0 0
      %7513 = vmatpush1.bf16.msra.mxu0 0
      %7514 = vmatprep.subr.bf16.mxu0 0
      %7515 = vmatpush1.bf16.msra.mxu0 0
      %7516 = vmatprep.mubr.bf16.mxu0 0
      %7517 = vmatmul.mubr.bf16.gmra.mrb[0].mxu0 %v7473
      %v7518 = vpop.f32.mrb[0].mxu0
      %v7519 = vadd.f32 %v7414, %v7518
      %v7520 = vpop.f32.mrb[0].mxu0
      %v7521 = vadd.f32 %v7416, %v7520
      %v7522 = vpop.f32.mrb[0].mxu0
      %v7523 = vadd.f32 %v7418, %v7522
      %v7524 = vpop.f32.mrb[0].mxu0
      %v7525 = vadd.f32 %v7420, %v7524
      %7526 = vmatprep.mubr.bf16.mxu0 0
      %7527 = vmatmul.mubr.bf16.gmra.mrb[0].mxu0 %v7476
      %v7528 = vpop.f32.mrb[0].mxu0
      %v7529 = vadd.f32 %v7424, %v7528
      %v7530 = vpop.f32.mrb[0].mxu0
      %v7531 = vadd.f32 %v7426, %v7530
      %v7532 = vpop.f32.mrb[0].mxu0
      %v7533 = vadd.f32 %v7428, %v7532
      %v7534 = vpop.f32.mrb[0].mxu0
      %v7535 = vadd.f32 %v7430, %v7534
      %7536 = vmatprep.mubr.bf16.mxu0 0
      %7537 = vmatmul.mubr.bf16.gmra.mrb[0].mxu0 %v7479
      %v7538 = vpop.f32.mrb[0].mxu0
      %v7539 = vadd.f32 %v7434, %v7538
      %v7540 = vpop.f32.mrb[0].mxu0
      %v7541 = vadd.f32 %v7436, %v7540
      %v7542 = vpop.f32.mrb[0].mxu0
      %v7543 = vadd.f32 %v7438, %v7542
      %v7544 = vpop.f32.mrb[0].mxu0
      %v7545 = vadd.f32 %v7440, %v7544
      %7546 = vmatprep.mubr.bf16.mxu0 0
      %7547 = vmatmul.mubr.bf16.gmra.mrb[0].mxu0 %v7482
      %v7548 = vpop.f32.mrb[0].mxu0
      %v7549 = vadd.f32 %v7444, %v7548
      %v7550 = vpop.f32.mrb[0].mxu0
      %v7551 = vadd.f32 %v7446, %v7550
      %v7552 = vpop.f32.mrb[0].mxu0
      %v7553 = vadd.f32 %v7448, %v7552
      %v7554 = vpop.f32.mrb[0].mxu0
      %v7555 = vadd.f32 %v7450, %v7554
      %7556 = vdwg.mxu0
      %7557 = vrot.lane.b32.xlu0 %v7169, 15
      %v7558 = vpop.permute.xlu0 %7557
      %7559 = vrot.lane.b32.xlu0 %v7171, 15
      %v7560 = vpop.permute.xlu0 %7559
      %7561 = vrot.lane.b32.xlu0 %v7173, 15
      %v7562 = vpop.permute.xlu0 %7561
      %7563 = vrot.lane.b32.xlu0 %v7175, 15
      %v7564 = vpop.permute.xlu0 %7563
      %7565 = vrot.lane.b32.xlu0 %v7177, 15
      %v7566 = vpop.permute.xlu0 %7565
      %7567 = vrot.lane.b32.xlu0 %v7179, 15
      %v7568 = vpop.permute.xlu0 %7567
      %7569 = vrot.lane.b32.xlu0 %v7181, 15
      %v7570 = vpop.permute.xlu0 %7569
      %7571 = vrot.lane.b32.xlu0 %v7183, 15
      %v7572 = vpop.permute.xlu0 %7571
      %7573 = vrot.lane.b32.xlu0 %v7170, 15
      %v7574 = vpop.permute.xlu0 %7573
      %7575 = vrot.lane.b32.xlu0 %v7172, 15
      %v7576 = vpop.permute.xlu0 %7575
      %7577 = vrot.lane.b32.xlu0 %v7174, 15
      %v7578 = vpop.permute.xlu0 %7577
      %7579 = vrot.lane.b32.xlu0 %v7176, 15
      %v7580 = vpop.permute.xlu0 %7579
      %7581 = vrot.lane.b32.xlu0 %v7178, 15
      %v7582 = vpop.permute.xlu0 %7581
      %7583 = vrot.lane.b32.xlu0 %v7180, 15
      %v7584 = vpop.permute.xlu0 %7583
      %7585 = vrot.lane.b32.xlu0 %v7182, 15
      %v7586 = vpop.permute.xlu0 %7585
      %7587 = vrot.lane.b32.xlu0 %v7184, 15
      %v7588 = vpop.permute.xlu0 %7587
      %v7589 = vsel %vm615, %v7558, %v7574
      %v7590 = vsel %vm615, %v7560, %v7576
      %v7591 = vsel %vm615, %v7562, %v7578
      %v7592 = vsel %vm615, %v7564, %v7580
      %v7593 = vsel %vm615, %v7566, %v7582
      %v7594 = vsel %vm615, %v7568, %v7584
      %v7595 = vsel %vm615, %v7570, %v7586
      %v7596 = vsel %vm615, %v7572, %v7588
      %v7597 = vsel %vm615, %v7574, %v7558
      %v7598 = vsel %vm615, %v7576, %v7560
      %v7599 = vsel %vm615, %v7578, %v7562
      %v7600 = vsel %vm615, %v7580, %v7564
      %v7601 = vsel %vm615, %v7582, %v7566
      %v7602 = vsel %vm615, %v7584, %v7568
      %v7603 = vsel %vm615, %v7586, %v7570
      %v7604 = vsel %vm615, %v7588, %v7572
      %v7605 = vmul.f32 %v7597, %v622
      %v7606 = vmul.f32 %v7589, %v626
      %v7607 = vmul.f32 %v7598, %v622
      %v7608 = vmul.f32 %v7590, %v626
      %v7609 = vmul.f32 %v7599, %v622
      %v7610 = vmul.f32 %v7591, %v626
      %v7611 = vmul.f32 %v7600, %v622
      %v7612 = vmul.f32 %v7592, %v626
      %v7613 = vmul.f32 %v7601, %v622
      %v7614 = vmul.f32 %v7593, %v626
      %v7615 = vmul.f32 %v7602, %v622
      %v7616 = vmul.f32 %v7594, %v626
      %v7617 = vmul.f32 %v7603, %v622
      %v7618 = vmul.f32 %v7595, %v626
      %v7619 = vmul.f32 %v7604, %v622
      %v7620 = vmul.f32 %v7596, %v626
      %s7621 = scalar_lea.vmem %s4, 928
      %v7622 = vld [vmem:[%s7621] sm:$0xf]
      %v7623 = vld [vmem:[%s7621 + $0x4] sm:$0xf]
      %v7624 = vld [vmem:[%s7621 + $0x8] sm:$0xf]
      %v7625 = vld [vmem:[%s7621 + $0xc] sm:$0xf]
      %v7626 = vld [vmem:[%s7621 + $0x10] sm:$0xf]
      %v7627 = vld [vmem:[%s7621 + $0x14] sm:$0xf]
      %v7628 = vld [vmem:[%s7621 + $0x18] sm:$0xf]
      %v7629 = vld [vmem:[%s7621 + $0x1c] sm:$0xf]
      %v7630 = vpack.c.bf16 %v7607, %v7605
      %v7631 = vpack.c.bf16 %v7608, %v7606
      %v7632 = vpack.c.bf16 %v7611, %v7609
      %v7633 = vpack.c.bf16 %v7612, %v7610
      %v7634 = vpack.c.bf16 %v7615, %v7613
      %v7635 = vpack.c.bf16 %v7616, %v7614
      %v7636 = vpack.c.bf16 %v7619, %v7617
      %v7637 = vpack.c.bf16 %v7620, %v7618
      %v7646 = vunpack.c.l.b16 %v7622
      %v7647 = vunpack.c.l.b16 %v7623
      %v7648 = vunpack.c.l.b16 %v7624
      %v7649 = vunpack.c.l.b16 %v7625
      %v7650 = vunpack.c.l.b16 %v7626
      %v7651 = vunpack.c.l.b16 %v7627
      %v7652 = vunpack.c.l.b16 %v7628
      %v7653 = vunpack.c.l.b16 %v7629
      %v7654 = vpack.c.b16 %v7647, %v7646
      %v7655 = vpack.c.b16 %v7649, %v7648
      %v7656 = vpack.c.b16 %v7651, %v7650
      %v7657 = vpack.c.b16 %v7653, %v7652
      %v7659 = vsel %vm1958, %v7654, 0
      %v7662 = vsel %vm1958, %v7655, 0
      %v7665 = vsel %vm1958, %v7656, 0
      %v7668 = vsel %vm1958, %v7657, 0
      %7670 = vmatprep.subr.bf16.mxu0 %v7631
      %7671 = vmatpush1.bf16.msra.mxu0 %v7630
      %7672 = vmatprep.subr.bf16.mxu0 %v7633
      %7673 = vmatpush1.bf16.msra.mxu0 %v7632
      %7674 = vmatprep.subr.bf16.mxu0 %v7635
      %7675 = vmatpush1.bf16.msra.mxu0 %v7634
      %7676 = vmatprep.subr.bf16.mxu0 %v7637
      %7677 = vmatpush1.bf16.msra.mxu0 %v7636
      %7678 = vmatprep.subr.bf16.mxu0 0
      %7679 = vmatpush1.bf16.msra.mxu0 0
      %7680 = vmatprep.subr.bf16.mxu0 0
      %7681 = vmatpush1.bf16.msra.mxu0 0
      %7682 = vmatprep.subr.bf16.mxu0 0
      %7683 = vmatpush1.bf16.msra.mxu0 0
      %7684 = vmatprep.subr.bf16.mxu0 0
      %7685 = vmatpush1.bf16.msra.mxu0 0
      %7686 = vmatprep.subr.bf16.mxu0 0
      %7687 = vmatpush1.bf16.msra.mxu0 0
      %7688 = vmatprep.subr.bf16.mxu0 0
      %7689 = vmatpush1.bf16.msra.mxu0 0
      %7690 = vmatprep.subr.bf16.mxu0 0
      %7691 = vmatpush1.bf16.msra.mxu0 0
      %7692 = vmatprep.subr.bf16.mxu0 0
      %7693 = vmatpush1.bf16.msra.mxu0 0
      %7694 = vmatprep.subr.bf16.mxu0 0
      %7695 = vmatpush1.bf16.msra.mxu0 0
      %7696 = vmatprep.subr.bf16.mxu0 0
      %7697 = vmatpush1.bf16.msra.mxu0 0
      %7698 = vmatprep.subr.bf16.mxu0 0
      %7699 = vmatpush1.bf16.msra.mxu0 0
      %7700 = vmatprep.subr.bf16.mxu0 0
      %7701 = vmatpush1.bf16.msra.mxu0 0
      %7702 = vmatprep.mubr.bf16.mxu0 0
      %7703 = vmatmul.mubr.bf16.gmra.mrb[0].mxu0 %v7659
      %v7704 = vpop.f32.mrb[0].mxu0
      %v7705 = vadd.f32 0.0, %v7704
      %v7706 = vpop.f32.mrb[0].mxu0
      %v7707 = vadd.f32 0.0, %v7706
      %v7708 = vpop.f32.mrb[0].mxu0
      %v7709 = vadd.f32 0.0, %v7708
      %v7710 = vpop.f32.mrb[0].mxu0
      %v7711 = vadd.f32 0.0, %v7710
      %7712 = vmatprep.mubr.bf16.mxu0 0
      %7713 = vmatmul.mubr.bf16.gmra.mrb[0].mxu0 %v7662
      %v7714 = vpop.f32.mrb[0].mxu0
      %v7715 = vadd.f32 0.0, %v7714
      %v7716 = vpop.f32.mrb[0].mxu0
      %v7717 = vadd.f32 0.0, %v7716
      %v7718 = vpop.f32.mrb[0].mxu0
      %v7719 = vadd.f32 0.0, %v7718
      %v7720 = vpop.f32.mrb[0].mxu0
      %v7721 = vadd.f32 0.0, %v7720
      %7722 = vmatprep.mubr.bf16.mxu0 0
      %7723 = vmatmul.mubr.bf16.gmra.mrb[0].mxu0 %v7665
      %v7724 = vpop.f32.mrb[0].mxu0
      %v7725 = vadd.f32 0.0, %v7724
      %v7726 = vpop.f32.mrb[0].mxu0
      %v7727 = vadd.f32 0.0, %v7726
      %v7728 = vpop.f32.mrb[0].mxu0
      %v7729 = vadd.f32 0.0, %v7728
      %v7730 = vpop.f32.mrb[0].mxu0
      %v7731 = vadd.f32 0.0, %v7730
      %7732 = vmatprep.mubr.bf16.mxu0 0
      %7733 = vmatmul.mubr.bf16.gmra.mrb[0].mxu0 %v7668
      %v7734 = vpop.f32.mrb[0].mxu0
      %v7735 = vadd.f32 0.0, %v7734
      %v7736 = vpop.f32.mrb[0].mxu0
      %v7737 = vadd.f32 0.0, %v7736
      %v7738 = vpop.f32.mrb[0].mxu0
      %v7739 = vadd.f32 0.0, %v7738
      %v7740 = vpop.f32.mrb[0].mxu0
      %v7741 = vadd.f32 0.0, %v7740
      %7742 = vdwg.mxu0
      %v7743 = vadd.f32 %v7519, %v7705
      %v7744 = vadd.f32 %v7521, %v7707
      %v7745 = vadd.f32 %v7523, %v7709
      %v7746 = vadd.f32 %v7525, %v7711
      %v7747 = vadd.f32 %v7529, %v7715
      %v7748 = vadd.f32 %v7531, %v7717
      %v7749 = vadd.f32 %v7533, %v7719
      %v7750 = vadd.f32 %v7535, %v7721
      %v7751 = vadd.f32 %v7539, %v7725
      %v7752 = vadd.f32 %v7541, %v7727
      %v7753 = vadd.f32 %v7543, %v7729
      %v7754 = vadd.f32 %v7545, %v7731
      %v7755 = vadd.f32 %v7549, %v7735
      %v7756 = vadd.f32 %v7551, %v7737
      %v7757 = vadd.f32 %v7553, %v7739
      %v7758 = vadd.f32 %v7555, %v7741
      %7759 = vrot.lane.b32.xlu0 %v7169, 1
      %v7760 = vpop.permute.xlu0 %7759
      %7761 = vrot.lane.b32.xlu0 %v7171, 1
      %v7762 = vpop.permute.xlu0 %7761
      %7763 = vrot.lane.b32.xlu0 %v7173, 1
      %v7764 = vpop.permute.xlu0 %7763
      %7765 = vrot.lane.b32.xlu0 %v7175, 1
      %v7766 = vpop.permute.xlu0 %7765
      %7767 = vrot.lane.b32.xlu0 %v7177, 1
      %v7768 = vpop.permute.xlu0 %7767
      %7769 = vrot.lane.b32.xlu0 %v7179, 1
      %v7770 = vpop.permute.xlu0 %7769
      %7771 = vrot.lane.b32.xlu0 %v7181, 1
      %v7772 = vpop.permute.xlu0 %7771
      %7773 = vrot.lane.b32.xlu0 %v7183, 1
      %v7774 = vpop.permute.xlu0 %7773
      %7775 = vrot.lane.b32.xlu0 %v7170, 1
      %v7776 = vpop.permute.xlu0 %7775
      %7777 = vrot.lane.b32.xlu0 %v7172, 1
      %v7778 = vpop.permute.xlu0 %7777
      %7779 = vrot.lane.b32.xlu0 %v7174, 1
      %v7780 = vpop.permute.xlu0 %7779
      %7781 = vrot.lane.b32.xlu0 %v7176, 1
      %v7782 = vpop.permute.xlu0 %7781
      %7783 = vrot.lane.b32.xlu0 %v7178, 1
      %v7784 = vpop.permute.xlu0 %7783
      %7785 = vrot.lane.b32.xlu0 %v7180, 1
      %v7786 = vpop.permute.xlu0 %7785
      %7787 = vrot.lane.b32.xlu0 %v7182, 1
      %v7788 = vpop.permute.xlu0 %7787
      %7789 = vrot.lane.b32.xlu0 %v7184, 1
      %v7790 = vpop.permute.xlu0 %7789
      %v7791 = vsel %vm773, %v7760, %v7776
      %v7792 = vsel %vm773, %v7762, %v7778
      %v7793 = vsel %vm773, %v7764, %v7780
      %v7794 = vsel %vm773, %v7766, %v7782
      %v7795 = vsel %vm773, %v7768, %v7784
      %v7796 = vsel %vm773, %v7770, %v7786
      %v7797 = vsel %vm773, %v7772, %v7788
      %v7798 = vsel %vm773, %v7774, %v7790
      %v7799 = vsel %vm773, %v7776, %v7760
      %v7800 = vsel %vm773, %v7778, %v7762
      %v7801 = vsel %vm773, %v7780, %v7764
      %v7802 = vsel %vm773, %v7782, %v7766
      %v7803 = vsel %vm773, %v7784, %v7768
      %v7804 = vsel %vm773, %v7786, %v7770
      %v7805 = vsel %vm773, %v7788, %v7772
      %v7806 = vsel %vm773, %v7790, %v7774
      %v7807 = vmul.f32 %v7799, %v780
      %v7808 = vmul.f32 %v7791, %v784
      %v7809 = vmul.f32 %v7800, %v780
      %v7810 = vmul.f32 %v7792, %v784
      %v7811 = vmul.f32 %v7801, %v780
      %v7812 = vmul.f32 %v7793, %v784
      %v7813 = vmul.f32 %v7802, %v780
      %v7814 = vmul.f32 %v7794, %v784
      %v7815 = vmul.f32 %v7803, %v780
      %v7816 = vmul.f32 %v7795, %v784
      %v7817 = vmul.f32 %v7804, %v780
      %v7818 = vmul.f32 %v7796, %v784
      %v7819 = vmul.f32 %v7805, %v780
      %v7820 = vmul.f32 %v7797, %v784
      %v7821 = vmul.f32 %v7806, %v780
      %v7822 = vmul.f32 %v7798, %v784
      %s7823 = scalar_lea.vmem %s4, 960
      %v7824 = vld [vmem:[%s7823] sm:$0xf]
      %v7825 = vld [vmem:[%s7823 + $0x4] sm:$0xf]
      %v7826 = vld [vmem:[%s7823 + $0x8] sm:$0xf]
      %v7827 = vld [vmem:[%s7823 + $0xc] sm:$0xf]
      %v7828 = vld [vmem:[%s7823 + $0x10] sm:$0xf]
      %v7829 = vld [vmem:[%s7823 + $0x14] sm:$0xf]
      %v7830 = vld [vmem:[%s7823 + $0x18] sm:$0xf]
      %v7831 = vld [vmem:[%s7823 + $0x1c] sm:$0xf]
      %v7832 = vpack.c.bf16 %v7809, %v7807
      %v7833 = vpack.c.bf16 %v7810, %v7808
      %v7834 = vpack.c.bf16 %v7813, %v7811
      %v7835 = vpack.c.bf16 %v7814, %v7812
      %v7836 = vpack.c.bf16 %v7817, %v7815
      %v7837 = vpack.c.bf16 %v7818, %v7816
      %v7838 = vpack.c.bf16 %v7821, %v7819
      %v7839 = vpack.c.bf16 %v7822, %v7820
      %v7848 = vunpack.c.l.b16 %v7824
      %v7849 = vunpack.c.l.b16 %v7825
      %v7850 = vunpack.c.l.b16 %v7826
      %v7851 = vunpack.c.l.b16 %v7827
      %v7852 = vunpack.c.l.b16 %v7828
      %v7853 = vunpack.c.l.b16 %v7829
      %v7854 = vunpack.c.l.b16 %v7830
      %v7855 = vunpack.c.l.b16 %v7831
      %v7856 = vpack.c.b16 %v7849, %v7848
      %v7857 = vpack.c.b16 %v7851, %v7850
      %v7858 = vpack.c.b16 %v7853, %v7852
      %v7859 = vpack.c.b16 %v7855, %v7854
      %v7861 = vsel %vm1958, %v7856, 0
      %v7864 = vsel %vm1958, %v7857, 0
      %v7867 = vsel %vm1958, %v7858, 0
      %v7870 = vsel %vm1958, %v7859, 0
      %7872 = vmatprep.subr.bf16.mxu0 %v7833
      %7873 = vmatpush1.bf16.msra.mxu0 %v7832
      %7874 = vmatprep.subr.bf16.mxu0 %v7835
      %7875 = vmatpush1.bf16.msra.mxu0 %v7834
      %7876 = vmatprep.subr.bf16.mxu0 %v7837
      %7877 = vmatpush1.bf16.msra.mxu0 %v7836
      %7878 = vmatprep.subr.bf16.mxu0 %v7839
      %7879 = vmatpush1.bf16.msra.mxu0 %v7838
      %7880 = vmatprep.subr.bf16.mxu0 0
      %7881 = vmatpush1.bf16.msra.mxu0 0
      %7882 = vmatprep.subr.bf16.mxu0 0
      %7883 = vmatpush1.bf16.msra.mxu0 0
      %7884 = vmatprep.subr.bf16.mxu0 0
      %7885 = vmatpush1.bf16.msra.mxu0 0
      %7886 = vmatprep.subr.bf16.mxu0 0
      %7887 = vmatpush1.bf16.msra.mxu0 0
      %7888 = vmatprep.subr.bf16.mxu0 0
      %7889 = vmatpush1.bf16.msra.mxu0 0
      %7890 = vmatprep.subr.bf16.mxu0 0
      %7891 = vmatpush1.bf16.msra.mxu0 0
      %7892 = vmatprep.subr.bf16.mxu0 0
      %7893 = vmatpush1.bf16.msra.mxu0 0
      %7894 = vmatprep.subr.bf16.mxu0 0
      %7895 = vmatpush1.bf16.msra.mxu0 0
      %7896 = vmatprep.subr.bf16.mxu0 0
      %7897 = vmatpush1.bf16.msra.mxu0 0
      %7898 = vmatprep.subr.bf16.mxu0 0
      %7899 = vmatpush1.bf16.msra.mxu0 0
      %7900 = vmatprep.subr.bf16.mxu0 0
      %7901 = vmatpush1.bf16.msra.mxu0 0
      %7902 = vmatprep.subr.bf16.mxu0 0
      %7903 = vmatpush1.bf16.msra.mxu0 0
      %7904 = vmatprep.mubr.bf16.mxu0 0
      %7905 = vmatmul.mubr.bf16.gmra.mrb[0].mxu0 %v7861
      %v7906 = vpop.f32.mrb[0].mxu0
      %v7907 = vadd.f32 0.0, %v7906
      %v7908 = vpop.f32.mrb[0].mxu0
      %v7909 = vadd.f32 0.0, %v7908
      %v7910 = vpop.f32.mrb[0].mxu0
      %v7911 = vadd.f32 0.0, %v7910
      %v7912 = vpop.f32.mrb[0].mxu0
      %v7913 = vadd.f32 0.0, %v7912
      %7914 = vmatprep.mubr.bf16.mxu0 0
      %7915 = vmatmul.mubr.bf16.gmra.mrb[0].mxu0 %v7864
      %v7916 = vpop.f32.mrb[0].mxu0
      %v7917 = vadd.f32 0.0, %v7916
      %v7918 = vpop.f32.mrb[0].mxu0
      %v7919 = vadd.f32 0.0, %v7918
      %v7920 = vpop.f32.mrb[0].mxu0
      %v7921 = vadd.f32 0.0, %v7920
      %v7922 = vpop.f32.mrb[0].mxu0
      %v7923 = vadd.f32 0.0, %v7922
      %7924 = vmatprep.mubr.bf16.mxu0 0
      %7925 = vmatmul.mubr.bf16.gmra.mrb[0].mxu0 %v7867
      %v7926 = vpop.f32.mrb[0].mxu0
      %v7927 = vadd.f32 0.0, %v7926
      %v7928 = vpop.f32.mrb[0].mxu0
      %v7929 = vadd.f32 0.0, %v7928
      %v7930 = vpop.f32.mrb[0].mxu0
      %v7931 = vadd.f32 0.0, %v7930
      %v7932 = vpop.f32.mrb[0].mxu0
      %v7933 = vadd.f32 0.0, %v7932
      %7934 = vmatprep.mubr.bf16.mxu0 0
      %7935 = vmatmul.mubr.bf16.gmra.mrb[0].mxu0 %v7870
      %v7936 = vpop.f32.mrb[0].mxu0
      %v7937 = vadd.f32 0.0, %v7936
      %v7938 = vpop.f32.mrb[0].mxu0
      %v7939 = vadd.f32 0.0, %v7938
      %v7940 = vpop.f32.mrb[0].mxu0
      %v7941 = vadd.f32 0.0, %v7940
      %v7942 = vpop.f32.mrb[0].mxu0
      %v7943 = vadd.f32 0.0, %v7942
      %7944 = vdwg.mxu0
      %v7945 = vadd.f32 %v7743, %v7907
      %v7946 = vadd.f32 %v7744, %v7909
      %v7947 = vadd.f32 %v7745, %v7911
      %v7948 = vadd.f32 %v7746, %v7913
      %v7949 = vadd.f32 %v7747, %v7917
      %v7950 = vadd.f32 %v7748, %v7919
      %v7951 = vadd.f32 %v7749, %v7921
      %v7952 = vadd.f32 %v7750, %v7923
      %v7953 = vadd.f32 %v7751, %v7927
      %v7954 = vadd.f32 %v7752, %v7929
      %v7955 = vadd.f32 %v7753, %v7931
      %v7956 = vadd.f32 %v7754, %v7933
      %v7957 = vadd.f32 %v7755, %v7937
      %v7958 = vadd.f32 %v7756, %v7939
      %v7959 = vadd.f32 %v7757, %v7941
      %v7960 = vadd.f32 %v7758, %v7943
      %s7961 = scalar_lea.vmem %s4, 992
      %v7962 = vld [vmem:[%s7961] sm:$0xf]
      %v7963 = vld [vmem:[%s7961 + $0x4] sm:$0xf]
      %v7964 = vld [vmem:[%s7961 + $0x8] sm:$0xf]
      %v7965 = vld [vmem:[%s7961 + $0xc] sm:$0xf]
      %v7966 = vld [vmem:[%s7961 + $0x10] sm:$0xf]
      %v7967 = vld [vmem:[%s7961 + $0x14] sm:$0xf]
      %v7968 = vld [vmem:[%s7961 + $0x18] sm:$0xf]
      %v7969 = vld [vmem:[%s7961 + $0x1c] sm:$0xf]
      %v7970 = vpack.c.bf16 %v7171, %v7169
      %v7971 = vpack.c.bf16 %v7172, %v7170
      %v7972 = vpack.c.bf16 %v7175, %v7173
      %v7973 = vpack.c.bf16 %v7176, %v7174
      %v7974 = vpack.c.bf16 %v7179, %v7177
      %v7975 = vpack.c.bf16 %v7180, %v7178
      %v7976 = vpack.c.bf16 %v7183, %v7181
      %v7977 = vpack.c.bf16 %v7184, %v7182
      %v7986 = vunpack.c.l.b16 %v7962
      %v7987 = vunpack.c.l.b16 %v7963
      %v7988 = vunpack.c.l.b16 %v7964
      %v7989 = vunpack.c.l.b16 %v7965
      %v7990 = vunpack.c.l.b16 %v7966
      %v7991 = vunpack.c.l.b16 %v7967
      %v7992 = vunpack.c.l.b16 %v7968
      %v7993 = vunpack.c.l.b16 %v7969
      %v7994 = vpack.c.b16 %v7987, %v7986
      %v7995 = vpack.c.b16 %v7989, %v7988
      %v7996 = vpack.c.b16 %v7991, %v7990
      %v7997 = vpack.c.b16 %v7993, %v7992
      %v7999 = vsel %vm1958, %v7994, 0
      %v8002 = vsel %vm1958, %v7995, 0
      %v8005 = vsel %vm1958, %v7996, 0
      %v8008 = vsel %vm1958, %v7997, 0
      %8010 = vmatprep.subr.bf16.mxu0 %v7971
      %8011 = vmatpush1.bf16.msra.mxu0 %v7970
      %8012 = vmatprep.subr.bf16.mxu0 %v7973
      %8013 = vmatpush1.bf16.msra.mxu0 %v7972
      %8014 = vmatprep.subr.bf16.mxu0 %v7975
      %8015 = vmatpush1.bf16.msra.mxu0 %v7974
      %8016 = vmatprep.subr.bf16.mxu0 %v7977
      %8017 = vmatpush1.bf16.msra.mxu0 %v7976
      %8018 = vmatprep.subr.bf16.mxu0 0
      %8019 = vmatpush1.bf16.msra.mxu0 0
      %8020 = vmatprep.subr.bf16.mxu0 0
      %8021 = vmatpush1.bf16.msra.mxu0 0
      %8022 = vmatprep.subr.bf16.mxu0 0
      %8023 = vmatpush1.bf16.msra.mxu0 0
      %8024 = vmatprep.subr.bf16.mxu0 0
      %8025 = vmatpush1.bf16.msra.mxu0 0
      %8026 = vmatprep.subr.bf16.mxu0 0
      %8027 = vmatpush1.bf16.msra.mxu0 0
      %8028 = vmatprep.subr.bf16.mxu0 0
      %8029 = vmatpush1.bf16.msra.mxu0 0
      %8030 = vmatprep.subr.bf16.mxu0 0
      %8031 = vmatpush1.bf16.msra.mxu0 0
      %8032 = vmatprep.subr.bf16.mxu0 0
      %8033 = vmatpush1.bf16.msra.mxu0 0
      %8034 = vmatprep.subr.bf16.mxu0 0
      %8035 = vmatpush1.bf16.msra.mxu0 0
      %8036 = vmatprep.subr.bf16.mxu0 0
      %8037 = vmatpush1.bf16.msra.mxu0 0
      %8038 = vmatprep.subr.bf16.mxu0 0
      %8039 = vmatpush1.bf16.msra.mxu0 0
      %8040 = vmatprep.subr.bf16.mxu0 0
      %8041 = vmatpush1.bf16.msra.mxu0 0
      %8042 = vmatprep.mubr.bf16.mxu0 0
      %8043 = vmatmul.mubr.bf16.gmra.mrb[0].mxu0 %v7999
      %v8044 = vpop.f32.mrb[0].mxu0
      %v8045 = vadd.f32 0.0, %v8044
      %v8046 = vpop.f32.mrb[0].mxu0
      %v8047 = vadd.f32 0.0, %v8046
      %v8048 = vpop.f32.mrb[0].mxu0
      %v8049 = vadd.f32 0.0, %v8048
      %v8050 = vpop.f32.mrb[0].mxu0
      %v8051 = vadd.f32 0.0, %v8050
      %8052 = vmatprep.mubr.bf16.mxu0 0
      %8053 = vmatmul.mubr.bf16.gmra.mrb[0].mxu0 %v8002
      %v8054 = vpop.f32.mrb[0].mxu0
      %v8055 = vadd.f32 0.0, %v8054
      %v8056 = vpop.f32.mrb[0].mxu0
      %v8057 = vadd.f32 0.0, %v8056
      %v8058 = vpop.f32.mrb[0].mxu0
      %v8059 = vadd.f32 0.0, %v8058
      %v8060 = vpop.f32.mrb[0].mxu0
      %v8061 = vadd.f32 0.0, %v8060
      %8062 = vmatprep.mubr.bf16.mxu0 0
      %8063 = vmatmul.mubr.bf16.gmra.mrb[0].mxu0 %v8005
      %v8064 = vpop.f32.mrb[0].mxu0
      %v8065 = vadd.f32 0.0, %v8064
      %v8066 = vpop.f32.mrb[0].mxu0
      %v8067 = vadd.f32 0.0, %v8066
      %v8068 = vpop.f32.mrb[0].mxu0
      %v8069 = vadd.f32 0.0, %v8068
      %v8070 = vpop.f32.mrb[0].mxu0
      %v8071 = vadd.f32 0.0, %v8070
      %8072 = vmatprep.mubr.bf16.mxu0 0
      %8073 = vmatmul.mubr.bf16.gmra.mrb[0].mxu0 %v8008
      %v8074 = vpop.f32.mrb[0].mxu0
      %v8075 = vadd.f32 0.0, %v8074
      %v8076 = vpop.f32.mrb[0].mxu0
      %v8077 = vadd.f32 0.0, %v8076
      %v8078 = vpop.f32.mrb[0].mxu0
      %v8079 = vadd.f32 0.0, %v8078
      %v8080 = vpop.f32.mrb[0].mxu0
      %v8081 = vadd.f32 0.0, %v8080
      %8082 = vdwg.mxu0
      %v8083 = vadd.f32 %v7945, %v8045
      %v8084 = vadd.f32 %v7946, %v8047
      %v8085 = vadd.f32 %v7947, %v8049
      %v8086 = vadd.f32 %v7948, %v8051
      %v8087 = vadd.f32 %v7949, %v8055
      %v8088 = vadd.f32 %v7950, %v8057
      %v8089 = vadd.f32 %v7951, %v8059
      %v8090 = vadd.f32 %v7952, %v8061
      %v8091 = vadd.f32 %v7953, %v8065
      %v8092 = vadd.f32 %v7954, %v8067
      %v8093 = vadd.f32 %v7955, %v8069
      %v8094 = vadd.f32 %v7956, %v8071
      %v8095 = vadd.f32 %v7957, %v8075
      %v8096 = vadd.f32 %v7958, %v8077
      %v8097 = vadd.f32 %v7959, %v8079
      %v8098 = vadd.f32 %v7960, %v8081
      %8099 = vrot.lane.b32.xlu0 %v7169, 127
      %v8100 = vpop.permute.xlu0 %8099
      %8101 = vrot.lane.b32.xlu0 %v7171, 127
      %v8102 = vpop.permute.xlu0 %8101
      %8103 = vrot.lane.b32.xlu0 %v7173, 127
      %v8104 = vpop.permute.xlu0 %8103
      %8105 = vrot.lane.b32.xlu0 %v7175, 127
      %v8106 = vpop.permute.xlu0 %8105
      %8107 = vrot.lane.b32.xlu0 %v7177, 127
      %v8108 = vpop.permute.xlu0 %8107
      %8109 = vrot.lane.b32.xlu0 %v7179, 127
      %v8110 = vpop.permute.xlu0 %8109
      %8111 = vrot.lane.b32.xlu0 %v7181, 127
      %v8112 = vpop.permute.xlu0 %8111
      %8113 = vrot.lane.b32.xlu0 %v7183, 127
      %v8114 = vpop.permute.xlu0 %8113
      %8115 = vrot.lane.b32.xlu0 %v7170, 127
      %v8116 = vpop.permute.xlu0 %8115
      %8117 = vrot.lane.b32.xlu0 %v7172, 127
      %v8118 = vpop.permute.xlu0 %8117
      %8119 = vrot.lane.b32.xlu0 %v7174, 127
      %v8120 = vpop.permute.xlu0 %8119
      %8121 = vrot.lane.b32.xlu0 %v7176, 127
      %v8122 = vpop.permute.xlu0 %8121
      %8123 = vrot.lane.b32.xlu0 %v7178, 127
      %v8124 = vpop.permute.xlu0 %8123
      %8125 = vrot.lane.b32.xlu0 %v7180, 127
      %v8126 = vpop.permute.xlu0 %8125
      %8127 = vrot.lane.b32.xlu0 %v7182, 127
      %v8128 = vpop.permute.xlu0 %8127
      %8129 = vrot.lane.b32.xlu0 %v7184, 127
      %v8130 = vpop.permute.xlu0 %8129
      %v8131 = vsel %vm1069, %v8100, %v8116
      %v8132 = vsel %vm1069, %v8102, %v8118
      %v8133 = vsel %vm1069, %v8104, %v8120
      %v8134 = vsel %vm1069, %v8106, %v8122
      %v8135 = vsel %vm1069, %v8108, %v8124
      %v8136 = vsel %vm1069, %v8110, %v8126
      %v8137 = vsel %vm1069, %v8112, %v8128
      %v8138 = vsel %vm1069, %v8114, %v8130
      %v8139 = vsel %vm1069, %v8116, %v8100
      %v8140 = vsel %vm1069, %v8118, %v8102
      %v8141 = vsel %vm1069, %v8120, %v8104
      %v8142 = vsel %vm1069, %v8122, %v8106
      %v8143 = vsel %vm1069, %v8124, %v8108
      %v8144 = vsel %vm1069, %v8126, %v8110
      %v8145 = vsel %vm1069, %v8128, %v8112
      %v8146 = vsel %vm1069, %v8130, %v8114
      %v8147 = vmul.f32 %v8131, %v1076
      %v8148 = vmul.f32 %v8139, %v1080
      %v8149 = vmul.f32 %v8132, %v1076
      %v8150 = vmul.f32 %v8140, %v1080
      %v8151 = vmul.f32 %v8133, %v1076
      %v8152 = vmul.f32 %v8141, %v1080
      %v8153 = vmul.f32 %v8134, %v1076
      %v8154 = vmul.f32 %v8142, %v1080
      %v8155 = vmul.f32 %v8135, %v1076
      %v8156 = vmul.f32 %v8143, %v1080
      %v8157 = vmul.f32 %v8136, %v1076
      %v8158 = vmul.f32 %v8144, %v1080
      %v8159 = vmul.f32 %v8137, %v1076
      %v8160 = vmul.f32 %v8145, %v1080
      %v8161 = vmul.f32 %v8138, %v1076
      %v8162 = vmul.f32 %v8146, %v1080
      %s8163 = scalar_lea.vmem %s4, 1024
      %v8164 = vld [vmem:[%s8163] sm:$0xf]
      %v8165 = vld [vmem:[%s8163 + $0x4] sm:$0xf]
      %v8166 = vld [vmem:[%s8163 + $0x8] sm:$0xf]
      %v8167 = vld [vmem:[%s8163 + $0xc] sm:$0xf]
      %v8168 = vld [vmem:[%s8163 + $0x10] sm:$0xf]
      %v8169 = vld [vmem:[%s8163 + $0x14] sm:$0xf]
      %v8170 = vld [vmem:[%s8163 + $0x18] sm:$0xf]
      %v8171 = vld [vmem:[%s8163 + $0x1c] sm:$0xf]
      %v8172 = vpack.c.bf16 %v8149, %v8147
      %v8173 = vpack.c.bf16 %v8150, %v8148
      %v8174 = vpack.c.bf16 %v8153, %v8151
      %v8175 = vpack.c.bf16 %v8154, %v8152
      %v8176 = vpack.c.bf16 %v8157, %v8155
      %v8177 = vpack.c.bf16 %v8158, %v8156
      %v8178 = vpack.c.bf16 %v8161, %v8159
      %v8179 = vpack.c.bf16 %v8162, %v8160
      %v8188 = vunpack.c.l.b16 %v8164
      %v8189 = vunpack.c.l.b16 %v8165
      %v8190 = vunpack.c.l.b16 %v8166
      %v8191 = vunpack.c.l.b16 %v8167
      %v8192 = vunpack.c.l.b16 %v8168
      %v8193 = vunpack.c.l.b16 %v8169
      %v8194 = vunpack.c.l.b16 %v8170
      %v8195 = vunpack.c.l.b16 %v8171
      %v8196 = vpack.c.b16 %v8189, %v8188
      %v8197 = vpack.c.b16 %v8191, %v8190
      %v8198 = vpack.c.b16 %v8193, %v8192
      %v8199 = vpack.c.b16 %v8195, %v8194
      %v8201 = vsel %vm1958, %v8196, 0
      %v8204 = vsel %vm1958, %v8197, 0
      %v8207 = vsel %vm1958, %v8198, 0
      %v8210 = vsel %vm1958, %v8199, 0
      %8212 = vmatprep.subr.bf16.mxu0 %v8173
      %8213 = vmatpush1.bf16.msra.mxu0 %v8172
      %8214 = vmatprep.subr.bf16.mxu0 %v8175
      %8215 = vmatpush1.bf16.msra.mxu0 %v8174
      %8216 = vmatprep.subr.bf16.mxu0 %v8177
      %8217 = vmatpush1.bf16.msra.mxu0 %v8176
      %8218 = vmatprep.subr.bf16.mxu0 %v8179
      %8219 = vmatpush1.bf16.msra.mxu0 %v8178
      %8220 = vmatprep.subr.bf16.mxu0 0
      %8221 = vmatpush1.bf16.msra.mxu0 0
      %8222 = vmatprep.subr.bf16.mxu0 0
      %8223 = vmatpush1.bf16.msra.mxu0 0
      %8224 = vmatprep.subr.bf16.mxu0 0
      %8225 = vmatpush1.bf16.msra.mxu0 0
      %8226 = vmatprep.subr.bf16.mxu0 0
      %8227 = vmatpush1.bf16.msra.mxu0 0
      %8228 = vmatprep.subr.bf16.mxu0 0
      %8229 = vmatpush1.bf16.msra.mxu0 0
      %8230 = vmatprep.subr.bf16.mxu0 0
      %8231 = vmatpush1.bf16.msra.mxu0 0
      %8232 = vmatprep.subr.bf16.mxu0 0
      %8233 = vmatpush1.bf16.msra.mxu0 0
      %8234 = vmatprep.subr.bf16.mxu0 0
      %8235 = vmatpush1.bf16.msra.mxu0 0
      %8236 = vmatprep.subr.bf16.mxu0 0
      %8237 = vmatpush1.bf16.msra.mxu0 0
      %8238 = vmatprep.subr.bf16.mxu0 0
      %8239 = vmatpush1.bf16.msra.mxu0 0
      %8240 = vmatprep.subr.bf16.mxu0 0
      %8241 = vmatpush1.bf16.msra.mxu0 0
      %8242 = vmatprep.subr.bf16.mxu0 0
      %8243 = vmatpush1.bf16.msra.mxu0 0
      %8244 = vmatprep.mubr.bf16.mxu0 0
      %8245 = vmatmul.mubr.bf16.gmra.mrb[0].mxu0 %v8201
      %v8246 = vpop.f32.mrb[0].mxu0
      %v8247 = vadd.f32 0.0, %v8246
      %v8248 = vpop.f32.mrb[0].mxu0
      %v8249 = vadd.f32 0.0, %v8248
      %v8250 = vpop.f32.mrb[0].mxu0
      %v8251 = vadd.f32 0.0, %v8250
      %v8252 = vpop.f32.mrb[0].mxu0
      %v8253 = vadd.f32 0.0, %v8252
      %8254 = vmatprep.mubr.bf16.mxu0 0
      %8255 = vmatmul.mubr.bf16.gmra.mrb[0].mxu0 %v8204
      %v8256 = vpop.f32.mrb[0].mxu0
      %v8257 = vadd.f32 0.0, %v8256
      %v8258 = vpop.f32.mrb[0].mxu0
      %v8259 = vadd.f32 0.0, %v8258
      %v8260 = vpop.f32.mrb[0].mxu0
      %v8261 = vadd.f32 0.0, %v8260
      %v8262 = vpop.f32.mrb[0].mxu0
      %v8263 = vadd.f32 0.0, %v8262
      %8264 = vmatprep.mubr.bf16.mxu0 0
      %8265 = vmatmul.mubr.bf16.gmra.mrb[0].mxu0 %v8207
      %v8266 = vpop.f32.mrb[0].mxu0
      %v8267 = vadd.f32 0.0, %v8266
      %v8268 = vpop.f32.mrb[0].mxu0
      %v8269 = vadd.f32 0.0, %v8268
      %v8270 = vpop.f32.mrb[0].mxu0
      %v8271 = vadd.f32 0.0, %v8270
      %v8272 = vpop.f32.mrb[0].mxu0
      %v8273 = vadd.f32 0.0, %v8272
      %8274 = vmatprep.mubr.bf16.mxu0 0
      %8275 = vmatmul.mubr.bf16.gmra.mrb[0].mxu0 %v8210
      %v8276 = vpop.f32.mrb[0].mxu0
      %v8277 = vadd.f32 0.0, %v8276
      %v8278 = vpop.f32.mrb[0].mxu0
      %v8279 = vadd.f32 0.0, %v8278
      %v8280 = vpop.f32.mrb[0].mxu0
      %v8281 = vadd.f32 0.0, %v8280
      %v8282 = vpop.f32.mrb[0].mxu0
      %v8283 = vadd.f32 0.0, %v8282
      %8284 = vdwg.mxu0
      %v8285 = vadd.f32 %v8083, %v8247
      %v8286 = vadd.f32 %v8084, %v8249
      %v8287 = vadd.f32 %v8085, %v8251
      %v8288 = vadd.f32 %v8086, %v8253
      %v8289 = vadd.f32 %v8087, %v8257
      %v8290 = vadd.f32 %v8088, %v8259
      %v8291 = vadd.f32 %v8089, %v8261
      %v8292 = vadd.f32 %v8090, %v8263
      %v8293 = vadd.f32 %v8091, %v8267
      %v8294 = vadd.f32 %v8092, %v8269
      %v8295 = vadd.f32 %v8093, %v8271
      %v8296 = vadd.f32 %v8094, %v8273
      %v8297 = vadd.f32 %v8095, %v8277
      %v8298 = vadd.f32 %v8096, %v8279
      %v8299 = vadd.f32 %v8097, %v8281
      %v8300 = vadd.f32 %v8098, %v8283
      %8301 = vrot.lane.b32.xlu0 %v7169, 113
      %v8302 = vpop.permute.xlu0 %8301
      %8303 = vrot.lane.b32.xlu0 %v7171, 113
      %v8304 = vpop.permute.xlu0 %8303
      %8305 = vrot.lane.b32.xlu0 %v7173, 113
      %v8306 = vpop.permute.xlu0 %8305
      %8307 = vrot.lane.b32.xlu0 %v7175, 113
      %v8308 = vpop.permute.xlu0 %8307
      %8309 = vrot.lane.b32.xlu0 %v7177, 113
      %v8310 = vpop.permute.xlu0 %8309
      %8311 = vrot.lane.b32.xlu0 %v7179, 113
      %v8312 = vpop.permute.xlu0 %8311
      %8313 = vrot.lane.b32.xlu0 %v7181, 113
      %v8314 = vpop.permute.xlu0 %8313
      %8315 = vrot.lane.b32.xlu0 %v7183, 113
      %v8316 = vpop.permute.xlu0 %8315
      %8317 = vrot.lane.b32.xlu0 %v7170, 113
      %v8318 = vpop.permute.xlu0 %8317
      %8319 = vrot.lane.b32.xlu0 %v7172, 113
      %v8320 = vpop.permute.xlu0 %8319
      %8321 = vrot.lane.b32.xlu0 %v7174, 113
      %v8322 = vpop.permute.xlu0 %8321
      %8323 = vrot.lane.b32.xlu0 %v7176, 113
      %v8324 = vpop.permute.xlu0 %8323
      %8325 = vrot.lane.b32.xlu0 %v7178, 113
      %v8326 = vpop.permute.xlu0 %8325
      %8327 = vrot.lane.b32.xlu0 %v7180, 113
      %v8328 = vpop.permute.xlu0 %8327
      %8329 = vrot.lane.b32.xlu0 %v7182, 113
      %v8330 = vpop.permute.xlu0 %8329
      %8331 = vrot.lane.b32.xlu0 %v7184, 113
      %v8332 = vpop.permute.xlu0 %8331
      %v8333 = vsel %vm1227, %v8302, %v8318
      %v8334 = vsel %vm1227, %v8304, %v8320
      %v8335 = vsel %vm1227, %v8306, %v8322
      %v8336 = vsel %vm1227, %v8308, %v8324
      %v8337 = vsel %vm1227, %v8310, %v8326
      %v8338 = vsel %vm1227, %v8312, %v8328
      %v8339 = vsel %vm1227, %v8314, %v8330
      %v8340 = vsel %vm1227, %v8316, %v8332
      %v8341 = vsel %vm1227, %v8318, %v8302
      %v8342 = vsel %vm1227, %v8320, %v8304
      %v8343 = vsel %vm1227, %v8322, %v8306
      %v8344 = vsel %vm1227, %v8324, %v8308
      %v8345 = vsel %vm1227, %v8326, %v8310
      %v8346 = vsel %vm1227, %v8328, %v8312
      %v8347 = vsel %vm1227, %v8330, %v8314
      %v8348 = vsel %vm1227, %v8332, %v8316
      %v8349 = vmul.f32 %v8333, %v1234
      %v8350 = vmul.f32 %v8341, %v1238
      %v8351 = vmul.f32 %v8334, %v1234
      %v8352 = vmul.f32 %v8342, %v1238
      %v8353 = vmul.f32 %v8335, %v1234
      %v8354 = vmul.f32 %v8343, %v1238
      %v8355 = vmul.f32 %v8336, %v1234
      %v8356 = vmul.f32 %v8344, %v1238
      %v8357 = vmul.f32 %v8337, %v1234
      %v8358 = vmul.f32 %v8345, %v1238
      %v8359 = vmul.f32 %v8338, %v1234
      %v8360 = vmul.f32 %v8346, %v1238
      %v8361 = vmul.f32 %v8339, %v1234
      %v8362 = vmul.f32 %v8347, %v1238
      %v8363 = vmul.f32 %v8340, %v1234
      %v8364 = vmul.f32 %v8348, %v1238
      %s8365 = scalar_lea.vmem %s4, 1056
      %v8366 = vld [vmem:[%s8365] sm:$0xf]
      %v8367 = vld [vmem:[%s8365 + $0x4] sm:$0xf]
      %v8368 = vld [vmem:[%s8365 + $0x8] sm:$0xf]
      %v8369 = vld [vmem:[%s8365 + $0xc] sm:$0xf]
      %v8370 = vld [vmem:[%s8365 + $0x10] sm:$0xf]
      %v8371 = vld [vmem:[%s8365 + $0x14] sm:$0xf]
      %v8372 = vld [vmem:[%s8365 + $0x18] sm:$0xf]
      %v8373 = vld [vmem:[%s8365 + $0x1c] sm:$0xf]
      %v8374 = vpack.c.bf16 %v8351, %v8349
      %v8375 = vpack.c.bf16 %v8352, %v8350
      %v8376 = vpack.c.bf16 %v8355, %v8353
      %v8377 = vpack.c.bf16 %v8356, %v8354
      %v8378 = vpack.c.bf16 %v8359, %v8357
      %v8379 = vpack.c.bf16 %v8360, %v8358
      %v8380 = vpack.c.bf16 %v8363, %v8361
      %v8381 = vpack.c.bf16 %v8364, %v8362
      %v8390 = vunpack.c.l.b16 %v8366
      %v8391 = vunpack.c.l.b16 %v8367
      %v8392 = vunpack.c.l.b16 %v8368
      %v8393 = vunpack.c.l.b16 %v8369
      %v8394 = vunpack.c.l.b16 %v8370
      %v8395 = vunpack.c.l.b16 %v8371
      %v8396 = vunpack.c.l.b16 %v8372
      %v8397 = vunpack.c.l.b16 %v8373
      %v8398 = vpack.c.b16 %v8391, %v8390
      %v8399 = vpack.c.b16 %v8393, %v8392
      %v8400 = vpack.c.b16 %v8395, %v8394
      %v8401 = vpack.c.b16 %v8397, %v8396
      %v8403 = vsel %vm1958, %v8398, 0
      %v8406 = vsel %vm1958, %v8399, 0
      %v8409 = vsel %vm1958, %v8400, 0
      %v8412 = vsel %vm1958, %v8401, 0
      %8414 = vmatprep.subr.bf16.mxu0 %v8375
      %8415 = vmatpush1.bf16.msra.mxu0 %v8374
      %8416 = vmatprep.subr.bf16.mxu0 %v8377
      %8417 = vmatpush1.bf16.msra.mxu0 %v8376
      %8418 = vmatprep.subr.bf16.mxu0 %v8379
      %8419 = vmatpush1.bf16.msra.mxu0 %v8378
      %8420 = vmatprep.subr.bf16.mxu0 %v8381
      %8421 = vmatpush1.bf16.msra.mxu0 %v8380
      %8422 = vmatprep.subr.bf16.mxu0 0
      %8423 = vmatpush1.bf16.msra.mxu0 0
      %8424 = vmatprep.subr.bf16.mxu0 0
      %8425 = vmatpush1.bf16.msra.mxu0 0
      %8426 = vmatprep.subr.bf16.mxu0 0
      %8427 = vmatpush1.bf16.msra.mxu0 0
      %8428 = vmatprep.subr.bf16.mxu0 0
      %8429 = vmatpush1.bf16.msra.mxu0 0
      %8430 = vmatprep.subr.bf16.mxu0 0
      %8431 = vmatpush1.bf16.msra.mxu0 0
      %8432 = vmatprep.subr.bf16.mxu0 0
      %8433 = vmatpush1.bf16.msra.mxu0 0
      %8434 = vmatprep.subr.bf16.mxu0 0
      %8435 = vmatpush1.bf16.msra.mxu0 0
      %8436 = vmatprep.subr.bf16.mxu0 0
      %8437 = vmatpush1.bf16.msra.mxu0 0
      %8438 = vmatprep.subr.bf16.mxu0 0
      %8439 = vmatpush1.bf16.msra.mxu0 0
      %8440 = vmatprep.subr.bf16.mxu0 0
      %8441 = vmatpush1.bf16.msra.mxu0 0
      %8442 = vmatprep.subr.bf16.mxu0 0
      %8443 = vmatpush1.bf16.msra.mxu0 0
      %8444 = vmatprep.subr.bf16.mxu0 0
      %8445 = vmatpush1.bf16.msra.mxu0 0
      %8446 = vmatprep.mubr.bf16.mxu0 0
      %8447 = vmatmul.mubr.bf16.gmra.mrb[0].mxu0 %v8403
      %v8448 = vpop.f32.mrb[0].mxu0
      %v8449 = vadd.f32 0.0, %v8448
      %v8450 = vpop.f32.mrb[0].mxu0
      %v8451 = vadd.f32 0.0, %v8450
      %v8452 = vpop.f32.mrb[0].mxu0
      %v8453 = vadd.f32 0.0, %v8452
      %v8454 = vpop.f32.mrb[0].mxu0
      %v8455 = vadd.f32 0.0, %v8454
      %8456 = vmatprep.mubr.bf16.mxu0 0
      %8457 = vmatmul.mubr.bf16.gmra.mrb[0].mxu0 %v8406
      %v8458 = vpop.f32.mrb[0].mxu0
      %v8459 = vadd.f32 0.0, %v8458
      %v8460 = vpop.f32.mrb[0].mxu0
      %v8461 = vadd.f32 0.0, %v8460
      %v8462 = vpop.f32.mrb[0].mxu0
      %v8463 = vadd.f32 0.0, %v8462
      %v8464 = vpop.f32.mrb[0].mxu0
      %v8465 = vadd.f32 0.0, %v8464
      %8466 = vmatprep.mubr.bf16.mxu0 0
      %8467 = vmatmul.mubr.bf16.gmra.mrb[0].mxu0 %v8409
      %v8468 = vpop.f32.mrb[0].mxu0
      %v8469 = vadd.f32 0.0, %v8468
      %v8470 = vpop.f32.mrb[0].mxu0
      %v8471 = vadd.f32 0.0, %v8470
      %v8472 = vpop.f32.mrb[0].mxu0
      %v8473 = vadd.f32 0.0, %v8472
      %v8474 = vpop.f32.mrb[0].mxu0
      %v8475 = vadd.f32 0.0, %v8474
      %8476 = vmatprep.mubr.bf16.mxu0 0
      %8477 = vmatmul.mubr.bf16.gmra.mrb[0].mxu0 %v8412
      %v8478 = vpop.f32.mrb[0].mxu0
      %v8479 = vadd.f32 0.0, %v8478
      %v8480 = vpop.f32.mrb[0].mxu0
      %v8481 = vadd.f32 0.0, %v8480
      %v8482 = vpop.f32.mrb[0].mxu0
      %v8483 = vadd.f32 0.0, %v8482
      %v8484 = vpop.f32.mrb[0].mxu0
      %v8485 = vadd.f32 0.0, %v8484
      %8486 = vdwg.mxu0
      %v8487 = vadd.f32 %v8285, %v8449
      %v8488 = vadd.f32 %v8286, %v8451
      %v8489 = vadd.f32 %v8287, %v8453
      %v8490 = vadd.f32 %v8288, %v8455
      %v8491 = vadd.f32 %v8289, %v8459
      %v8492 = vadd.f32 %v8290, %v8461
      %v8493 = vadd.f32 %v8291, %v8463
      %v8494 = vadd.f32 %v8292, %v8465
      %v8495 = vadd.f32 %v8293, %v8469
      %v8496 = vadd.f32 %v8294, %v8471
      %v8497 = vadd.f32 %v8295, %v8473
      %v8498 = vadd.f32 %v8296, %v8475
      %v8499 = vadd.f32 %v8297, %v8479
      %v8500 = vadd.f32 %v8298, %v8481
      %v8501 = vadd.f32 %v8299, %v8483
      %v8502 = vadd.f32 %v8300, %v8485
      %8503 = vrot.lane.b32.xlu0 %v7169, 112
      %v8504 = vpop.permute.xlu0 %8503
      %8505 = vrot.lane.b32.xlu0 %v7171, 112
      %v8506 = vpop.permute.xlu0 %8505
      %8507 = vrot.lane.b32.xlu0 %v7173, 112
      %v8508 = vpop.permute.xlu0 %8507
      %8509 = vrot.lane.b32.xlu0 %v7175, 112
      %v8510 = vpop.permute.xlu0 %8509
      %8511 = vrot.lane.b32.xlu0 %v7177, 112
      %v8512 = vpop.permute.xlu0 %8511
      %8513 = vrot.lane.b32.xlu0 %v7179, 112
      %v8514 = vpop.permute.xlu0 %8513
      %8515 = vrot.lane.b32.xlu0 %v7181, 112
      %v8516 = vpop.permute.xlu0 %8515
      %8517 = vrot.lane.b32.xlu0 %v7183, 112
      %v8518 = vpop.permute.xlu0 %8517
      %8519 = vrot.lane.b32.xlu0 %v7170, 112
      %v8520 = vpop.permute.xlu0 %8519
      %8521 = vrot.lane.b32.xlu0 %v7172, 112
      %v8522 = vpop.permute.xlu0 %8521
      %8523 = vrot.lane.b32.xlu0 %v7174, 112
      %v8524 = vpop.permute.xlu0 %8523
      %8525 = vrot.lane.b32.xlu0 %v7176, 112
      %v8526 = vpop.permute.xlu0 %8525
      %8527 = vrot.lane.b32.xlu0 %v7178, 112
      %v8528 = vpop.permute.xlu0 %8527
      %8529 = vrot.lane.b32.xlu0 %v7180, 112
      %v8530 = vpop.permute.xlu0 %8529
      %8531 = vrot.lane.b32.xlu0 %v7182, 112
      %v8532 = vpop.permute.xlu0 %8531
      %8533 = vrot.lane.b32.xlu0 %v7184, 112
      %v8534 = vpop.permute.xlu0 %8533
      %v8535 = vsel %vm1385, %v8504, %v8520
      %v8536 = vsel %vm1385, %v8506, %v8522
      %v8537 = vsel %vm1385, %v8508, %v8524
      %v8538 = vsel %vm1385, %v8510, %v8526
      %v8539 = vsel %vm1385, %v8512, %v8528
      %v8540 = vsel %vm1385, %v8514, %v8530
      %v8541 = vsel %vm1385, %v8516, %v8532
      %v8542 = vsel %vm1385, %v8518, %v8534
      %v8543 = vsel %vm1385, %v8520, %v8504
      %v8544 = vsel %vm1385, %v8522, %v8506
      %v8545 = vsel %vm1385, %v8524, %v8508
      %v8546 = vsel %vm1385, %v8526, %v8510
      %v8547 = vsel %vm1385, %v8528, %v8512
      %v8548 = vsel %vm1385, %v8530, %v8514
      %v8549 = vsel %vm1385, %v8532, %v8516
      %v8550 = vsel %vm1385, %v8534, %v8518
      %v8551 = vmul.f32 %v8535, %v1392
      %v8552 = vmul.f32 %v8543, %v1396
      %v8553 = vmul.f32 %v8536, %v1392
      %v8554 = vmul.f32 %v8544, %v1396
      %v8555 = vmul.f32 %v8537, %v1392
      %v8556 = vmul.f32 %v8545, %v1396
      %v8557 = vmul.f32 %v8538, %v1392
      %v8558 = vmul.f32 %v8546, %v1396
      %v8559 = vmul.f32 %v8539, %v1392
      %v8560 = vmul.f32 %v8547, %v1396
      %v8561 = vmul.f32 %v8540, %v1392
      %v8562 = vmul.f32 %v8548, %v1396
      %v8563 = vmul.f32 %v8541, %v1392
      %v8564 = vmul.f32 %v8549, %v1396
      %v8565 = vmul.f32 %v8542, %v1392
      %v8566 = vmul.f32 %v8550, %v1396
      %s8567 = scalar_lea.vmem %s4, 1088
      %v8568 = vld [vmem:[%s8567] sm:$0xf]
      %v8569 = vld [vmem:[%s8567 + $0x4] sm:$0xf]
      %v8570 = vld [vmem:[%s8567 + $0x8] sm:$0xf]
      %v8571 = vld [vmem:[%s8567 + $0xc] sm:$0xf]
      %v8572 = vld [vmem:[%s8567 + $0x10] sm:$0xf]
      %v8573 = vld [vmem:[%s8567 + $0x14] sm:$0xf]
      %v8574 = vld [vmem:[%s8567 + $0x18] sm:$0xf]
      %v8575 = vld [vmem:[%s8567 + $0x1c] sm:$0xf]
      %v8576 = vpack.c.bf16 %v8553, %v8551
      %v8577 = vpack.c.bf16 %v8554, %v8552
      %v8578 = vpack.c.bf16 %v8557, %v8555
      %v8579 = vpack.c.bf16 %v8558, %v8556
      %v8580 = vpack.c.bf16 %v8561, %v8559
      %v8581 = vpack.c.bf16 %v8562, %v8560
      %v8582 = vpack.c.bf16 %v8565, %v8563
      %v8583 = vpack.c.bf16 %v8566, %v8564
      %v8592 = vunpack.c.l.b16 %v8568
      %v8593 = vunpack.c.l.b16 %v8569
      %v8594 = vunpack.c.l.b16 %v8570
      %v8595 = vunpack.c.l.b16 %v8571
      %v8596 = vunpack.c.l.b16 %v8572
      %v8597 = vunpack.c.l.b16 %v8573
      %v8598 = vunpack.c.l.b16 %v8574
      %v8599 = vunpack.c.l.b16 %v8575
      %v8600 = vpack.c.b16 %v8593, %v8592
      %v8601 = vpack.c.b16 %v8595, %v8594
      %v8602 = vpack.c.b16 %v8597, %v8596
      %v8603 = vpack.c.b16 %v8599, %v8598
      %v8605 = vsel %vm1958, %v8600, 0
      %v8608 = vsel %vm1958, %v8601, 0
      %v8611 = vsel %vm1958, %v8602, 0
      %v8614 = vsel %vm1958, %v8603, 0
      %8616 = vmatprep.subr.bf16.mxu0 %v8577
      %8617 = vmatpush1.bf16.msra.mxu0 %v8576
      %8618 = vmatprep.subr.bf16.mxu0 %v8579
      %8619 = vmatpush1.bf16.msra.mxu0 %v8578
      %8620 = vmatprep.subr.bf16.mxu0 %v8581
      %8621 = vmatpush1.bf16.msra.mxu0 %v8580
      %8622 = vmatprep.subr.bf16.mxu0 %v8583
      %8623 = vmatpush1.bf16.msra.mxu0 %v8582
      %8624 = vmatprep.subr.bf16.mxu0 0
      %8625 = vmatpush1.bf16.msra.mxu0 0
      %8626 = vmatprep.subr.bf16.mxu0 0
      %8627 = vmatpush1.bf16.msra.mxu0 0
      %8628 = vmatprep.subr.bf16.mxu0 0
      %8629 = vmatpush1.bf16.msra.mxu0 0
      %8630 = vmatprep.subr.bf16.mxu0 0
      %8631 = vmatpush1.bf16.msra.mxu0 0
      %8632 = vmatprep.subr.bf16.mxu0 0
      %8633 = vmatpush1.bf16.msra.mxu0 0
      %8634 = vmatprep.subr.bf16.mxu0 0
      %8635 = vmatpush1.bf16.msra.mxu0 0
      %8636 = vmatprep.subr.bf16.mxu0 0
      %8637 = vmatpush1.bf16.msra.mxu0 0
      %8638 = vmatprep.subr.bf16.mxu0 0
      %8639 = vmatpush1.bf16.msra.mxu0 0
      %8640 = vmatprep.subr.bf16.mxu0 0
      %8641 = vmatpush1.bf16.msra.mxu0 0
      %8642 = vmatprep.subr.bf16.mxu0 0
      %8643 = vmatpush1.bf16.msra.mxu0 0
      %8644 = vmatprep.subr.bf16.mxu0 0
      %8645 = vmatpush1.bf16.msra.mxu0 0
      %8646 = vmatprep.subr.bf16.mxu0 0
      %8647 = vmatpush1.bf16.msra.mxu0 0
      %8648 = vmatprep.mubr.bf16.mxu0 0
      %8649 = vmatmul.mubr.bf16.gmra.mrb[0].mxu0 %v8605
      %v8650 = vpop.f32.mrb[0].mxu0
      %v8651 = vadd.f32 0.0, %v8650
      %v8652 = vpop.f32.mrb[0].mxu0
      %v8653 = vadd.f32 0.0, %v8652
      %v8654 = vpop.f32.mrb[0].mxu0
      %v8655 = vadd.f32 0.0, %v8654
      %v8656 = vpop.f32.mrb[0].mxu0
      %v8657 = vadd.f32 0.0, %v8656
      %8658 = vmatprep.mubr.bf16.mxu0 0
      %8659 = vmatmul.mubr.bf16.gmra.mrb[0].mxu0 %v8608
      %v8660 = vpop.f32.mrb[0].mxu0
      %v8661 = vadd.f32 0.0, %v8660
      %v8662 = vpop.f32.mrb[0].mxu0
      %v8663 = vadd.f32 0.0, %v8662
      %v8664 = vpop.f32.mrb[0].mxu0
      %v8665 = vadd.f32 0.0, %v8664
      %v8666 = vpop.f32.mrb[0].mxu0
      %v8667 = vadd.f32 0.0, %v8666
      %8668 = vmatprep.mubr.bf16.mxu0 0
      %8669 = vmatmul.mubr.bf16.gmra.mrb[0].mxu0 %v8611
      %v8670 = vpop.f32.mrb[0].mxu0
      %v8671 = vadd.f32 0.0, %v8670
      %v8672 = vpop.f32.mrb[0].mxu0
      %v8673 = vadd.f32 0.0, %v8672
      %v8674 = vpop.f32.mrb[0].mxu0
      %v8675 = vadd.f32 0.0, %v8674
      %v8676 = vpop.f32.mrb[0].mxu0
      %v8677 = vadd.f32 0.0, %v8676
      %8678 = vmatprep.mubr.bf16.mxu0 0
      %8679 = vmatmul.mubr.bf16.gmra.mrb[0].mxu0 %v8614
      %v8680 = vpop.f32.mrb[0].mxu0
      %v8681 = vadd.f32 0.0, %v8680
      %v8682 = vpop.f32.mrb[0].mxu0
      %v8683 = vadd.f32 0.0, %v8682
      %v8684 = vpop.f32.mrb[0].mxu0
      %v8685 = vadd.f32 0.0, %v8684
      %v8686 = vpop.f32.mrb[0].mxu0
      %v8687 = vadd.f32 0.0, %v8686
      %8688 = vdwg.mxu0
      %v8689 = vadd.f32 %v8487, %v8651
      %v8690 = vadd.f32 %v8488, %v8653
      %v8691 = vadd.f32 %v8489, %v8655
      %v8692 = vadd.f32 %v8490, %v8657
      %v8693 = vadd.f32 %v8491, %v8661
      %v8694 = vadd.f32 %v8492, %v8663
      %v8695 = vadd.f32 %v8493, %v8665
      %v8696 = vadd.f32 %v8494, %v8667
      %v8697 = vadd.f32 %v8495, %v8671
      %v8698 = vadd.f32 %v8496, %v8673
      %v8699 = vadd.f32 %v8497, %v8675
      %v8700 = vadd.f32 %v8498, %v8677
      %v8701 = vadd.f32 %v8499, %v8681
      %v8702 = vadd.f32 %v8500, %v8683
      %v8703 = vadd.f32 %v8501, %v8685
      %v8704 = vadd.f32 %v8502, %v8687
      %8705 = vrot.lane.b32.xlu0 %v7169, 111
      %v8706 = vpop.permute.xlu0 %8705
      %8707 = vrot.lane.b32.xlu0 %v7171, 111
      %v8708 = vpop.permute.xlu0 %8707
      %8709 = vrot.lane.b32.xlu0 %v7173, 111
      %v8710 = vpop.permute.xlu0 %8709
      %8711 = vrot.lane.b32.xlu0 %v7175, 111
      %v8712 = vpop.permute.xlu0 %8711
      %8713 = vrot.lane.b32.xlu0 %v7177, 111
      %v8714 = vpop.permute.xlu0 %8713
      %8715 = vrot.lane.b32.xlu0 %v7179, 111
      %v8716 = vpop.permute.xlu0 %8715
      %8717 = vrot.lane.b32.xlu0 %v7181, 111
      %v8718 = vpop.permute.xlu0 %8717
      %8719 = vrot.lane.b32.xlu0 %v7183, 111
      %v8720 = vpop.permute.xlu0 %8719
      %8721 = vrot.lane.b32.xlu0 %v7170, 111
      %v8722 = vpop.permute.xlu0 %8721
      %8723 = vrot.lane.b32.xlu0 %v7172, 111
      %v8724 = vpop.permute.xlu0 %8723
      %8725 = vrot.lane.b32.xlu0 %v7174, 111
      %v8726 = vpop.permute.xlu0 %8725
      %8727 = vrot.lane.b32.xlu0 %v7176, 111
      %v8728 = vpop.permute.xlu0 %8727
      %8729 = vrot.lane.b32.xlu0 %v7178, 111
      %v8730 = vpop.permute.xlu0 %8729
      %8731 = vrot.lane.b32.xlu0 %v7180, 111
      %v8732 = vpop.permute.xlu0 %8731
      %8733 = vrot.lane.b32.xlu0 %v7182, 111
      %v8734 = vpop.permute.xlu0 %8733
      %8735 = vrot.lane.b32.xlu0 %v7184, 111
      %v8736 = vpop.permute.xlu0 %8735
      %v8737 = vsel %vm1543, %v8706, %v8722
      %v8738 = vsel %vm1543, %v8708, %v8724
      %v8739 = vsel %vm1543, %v8710, %v8726
      %v8740 = vsel %vm1543, %v8712, %v8728
      %v8741 = vsel %vm1543, %v8714, %v8730
      %v8742 = vsel %vm1543, %v8716, %v8732
      %v8743 = vsel %vm1543, %v8718, %v8734
      %v8744 = vsel %vm1543, %v8720, %v8736
      %v8745 = vsel %vm1543, %v8722, %v8706
      %v8746 = vsel %vm1543, %v8724, %v8708
      %v8747 = vsel %vm1543, %v8726, %v8710
      %v8748 = vsel %vm1543, %v8728, %v8712
      %v8749 = vsel %vm1543, %v8730, %v8714
      %v8750 = vsel %vm1543, %v8732, %v8716
      %v8751 = vsel %vm1543, %v8734, %v8718
      %v8752 = vsel %vm1543, %v8736, %v8720
      %v8753 = vmul.f32 %v8737, %v1550
      %v8754 = vmul.f32 %v8745, %v1554
      %v8755 = vmul.f32 %v8738, %v1550
      %v8756 = vmul.f32 %v8746, %v1554
      %v8757 = vmul.f32 %v8739, %v1550
      %v8758 = vmul.f32 %v8747, %v1554
      %v8759 = vmul.f32 %v8740, %v1550
      %v8760 = vmul.f32 %v8748, %v1554
      %v8761 = vmul.f32 %v8741, %v1550
      %v8762 = vmul.f32 %v8749, %v1554
      %v8763 = vmul.f32 %v8742, %v1550
      %v8764 = vmul.f32 %v8750, %v1554
      %v8765 = vmul.f32 %v8743, %v1550
      %v8766 = vmul.f32 %v8751, %v1554
      %v8767 = vmul.f32 %v8744, %v1550
      %v8768 = vmul.f32 %v8752, %v1554
      %s8769 = scalar_lea.vmem %s4, 1120
      %v8770 = vld [vmem:[%s8769] sm:$0xf]
      %v8771 = vld [vmem:[%s8769 + $0x4] sm:$0xf]
      %v8772 = vld [vmem:[%s8769 + $0x8] sm:$0xf]
      %v8773 = vld [vmem:[%s8769 + $0xc] sm:$0xf]
      %v8774 = vld [vmem:[%s8769 + $0x10] sm:$0xf]
      %v8775 = vld [vmem:[%s8769 + $0x14] sm:$0xf]
      %v8776 = vld [vmem:[%s8769 + $0x18] sm:$0xf]
      %v8777 = vld [vmem:[%s8769 + $0x1c] sm:$0xf]
      %v8778 = vpack.c.bf16 %v8755, %v8753
      %v8779 = vpack.c.bf16 %v8756, %v8754
      %v8780 = vpack.c.bf16 %v8759, %v8757
      %v8781 = vpack.c.bf16 %v8760, %v8758
      %v8782 = vpack.c.bf16 %v8763, %v8761
      %v8783 = vpack.c.bf16 %v8764, %v8762
      %v8784 = vpack.c.bf16 %v8767, %v8765
      %v8785 = vpack.c.bf16 %v8768, %v8766
      %v8794 = vunpack.c.l.b16 %v8770
      %v8795 = vunpack.c.l.b16 %v8771
      %v8796 = vunpack.c.l.b16 %v8772
      %v8797 = vunpack.c.l.b16 %v8773
      %v8798 = vunpack.c.l.b16 %v8774
      %v8799 = vunpack.c.l.b16 %v8775
      %v8800 = vunpack.c.l.b16 %v8776
      %v8801 = vunpack.c.l.b16 %v8777
      %v8802 = vpack.c.b16 %v8795, %v8794
      %v8803 = vpack.c.b16 %v8797, %v8796
      %v8804 = vpack.c.b16 %v8799, %v8798
      %v8805 = vpack.c.b16 %v8801, %v8800
      %v8807 = vsel %vm1958, %v8802, 0
      %v8810 = vsel %vm1958, %v8803, 0
      %v8813 = vsel %vm1958, %v8804, 0
      %v8816 = vsel %vm1958, %v8805, 0
      %8818 = vmatprep.subr.bf16.mxu0 %v8779
      %8819 = vmatpush1.bf16.msra.mxu0 %v8778
      %8820 = vmatprep.subr.bf16.mxu0 %v8781
      %8821 = vmatpush1.bf16.msra.mxu0 %v8780
      %8822 = vmatprep.subr.bf16.mxu0 %v8783
      %8823 = vmatpush1.bf16.msra.mxu0 %v8782
      %8824 = vmatprep.subr.bf16.mxu0 %v8785
      %8825 = vmatpush1.bf16.msra.mxu0 %v8784
      %8826 = vmatprep.subr.bf16.mxu0 0
      %8827 = vmatpush1.bf16.msra.mxu0 0
      %8828 = vmatprep.subr.bf16.mxu0 0
      %8829 = vmatpush1.bf16.msra.mxu0 0
      %8830 = vmatprep.subr.bf16.mxu0 0
      %8831 = vmatpush1.bf16.msra.mxu0 0
      %8832 = vmatprep.subr.bf16.mxu0 0
      %8833 = vmatpush1.bf16.msra.mxu0 0
      %8834 = vmatprep.subr.bf16.mxu0 0
      %8835 = vmatpush1.bf16.msra.mxu0 0
      %8836 = vmatprep.subr.bf16.mxu0 0
      %8837 = vmatpush1.bf16.msra.mxu0 0
      %8838 = vmatprep.subr.bf16.mxu0 0
      %8839 = vmatpush1.bf16.msra.mxu0 0
      %8840 = vmatprep.subr.bf16.mxu0 0
      %8841 = vmatpush1.bf16.msra.mxu0 0
      %8842 = vmatprep.subr.bf16.mxu0 0
      %8843 = vmatpush1.bf16.msra.mxu0 0
      %8844 = vmatprep.subr.bf16.mxu0 0
      %8845 = vmatpush1.bf16.msra.mxu0 0
      %8846 = vmatprep.subr.bf16.mxu0 0
      %8847 = vmatpush1.bf16.msra.mxu0 0
      %8848 = vmatprep.subr.bf16.mxu0 0
      %8849 = vmatpush1.bf16.msra.mxu0 0
      %8850 = vmatprep.mubr.bf16.mxu0 0
      %8851 = vmatmul.mubr.bf16.gmra.mrb[0].mxu0 %v8807
      %v8852 = vpop.f32.mrb[0].mxu0
      %v8853 = vadd.f32 0.0, %v8852
      %v8854 = vpop.f32.mrb[0].mxu0
      %v8855 = vadd.f32 0.0, %v8854
      %v8856 = vpop.f32.mrb[0].mxu0
      %v8857 = vadd.f32 0.0, %v8856
      %v8858 = vpop.f32.mrb[0].mxu0
      %v8859 = vadd.f32 0.0, %v8858
      %8860 = vmatprep.mubr.bf16.mxu0 0
      %8861 = vmatmul.mubr.bf16.gmra.mrb[0].mxu0 %v8810
      %v8862 = vpop.f32.mrb[0].mxu0
      %v8863 = vadd.f32 0.0, %v8862
      %v8864 = vpop.f32.mrb[0].mxu0
      %v8865 = vadd.f32 0.0, %v8864
      %v8866 = vpop.f32.mrb[0].mxu0
      %v8867 = vadd.f32 0.0, %v8866
      %v8868 = vpop.f32.mrb[0].mxu0
      %v8869 = vadd.f32 0.0, %v8868
      %8870 = vmatprep.mubr.bf16.mxu0 0
      %8871 = vmatmul.mubr.bf16.gmra.mrb[0].mxu0 %v8813
      %v8872 = vpop.f32.mrb[0].mxu0
      %v8873 = vadd.f32 0.0, %v8872
      %v8874 = vpop.f32.mrb[0].mxu0
      %v8875 = vadd.f32 0.0, %v8874
      %v8876 = vpop.f32.mrb[0].mxu0
      %v8877 = vadd.f32 0.0, %v8876
      %v8878 = vpop.f32.mrb[0].mxu0
      %v8879 = vadd.f32 0.0, %v8878
      %8880 = vmatprep.mubr.bf16.mxu0 0
      %8881 = vmatmul.mubr.bf16.gmra.mrb[0].mxu0 %v8816
      %v8882 = vpop.f32.mrb[0].mxu0
      %v8883 = vadd.f32 0.0, %v8882
      %v8884 = vpop.f32.mrb[0].mxu0
      %v8885 = vadd.f32 0.0, %v8884
      %v8886 = vpop.f32.mrb[0].mxu0
      %v8887 = vadd.f32 0.0, %v8886
      %v8888 = vpop.f32.mrb[0].mxu0
      %v8889 = vadd.f32 0.0, %v8888
      %8890 = vdwg.mxu0
      %v8891 = vadd.f32 %v8689, %v8853
      %v8892 = vadd.f32 %v8690, %v8855
      %v8893 = vadd.f32 %v8691, %v8857
      %v8894 = vadd.f32 %v8692, %v8859
      %v8895 = vadd.f32 %v8693, %v8863
      %v8896 = vadd.f32 %v8694, %v8865
      %v8897 = vadd.f32 %v8695, %v8867
      %v8898 = vadd.f32 %v8696, %v8869
      %v8899 = vadd.f32 %v8697, %v8873
      %v8900 = vadd.f32 %v8698, %v8875
      %v8901 = vadd.f32 %v8699, %v8877
      %v8902 = vadd.f32 %v8700, %v8879
      %v8903 = vadd.f32 %v8701, %v8883
      %v8904 = vadd.f32 %v8702, %v8885
      %v8905 = vadd.f32 %v8703, %v8887
      %v8906 = vadd.f32 %v8704, %v8889
      %s8907 = scalar_lea.vmem %s5, 192
      %v8908 = vld [vmem:[%s8907] sm:$0xff]
      %v8909 = vld [vmem:[%s8907 + $0x8] sm:$0xff]
      %v8910 = vld [vmem:[%s8907 + $0x10] sm:$0xff]
      %v8911 = vld [vmem:[%s8907 + $0x18] sm:$0xff]
      %v8912 = vld [vmem:[%s8907 + $0x20] sm:$0xff]
      %v8913 = vld [vmem:[%s8907 + $0x28] sm:$0xff]
      %v8914 = vld [vmem:[%s8907 + $0x30] sm:$0xff]
      %v8915 = vld [vmem:[%s8907 + $0x38] sm:$0xff]
      %8917 = vset.pattern.permute.xlu0 0
      %8918 = vperm.xlu0 %8917, %v8908
      %v8919 = vpop.permute.xlu0 %8918
      %8922 = vset.pattern.permute.xlu0 0
      %8923 = vperm.xlu0 %8922, %v8909
      %v8924 = vpop.permute.xlu0 %8923
      %8927 = vset.pattern.permute.xlu0 0
      %8928 = vperm.xlu0 %8927, %v8910
      %v8929 = vpop.permute.xlu0 %8928
      %8932 = vset.pattern.permute.xlu0 0
      %8933 = vperm.xlu0 %8932, %v8911
      %v8934 = vpop.permute.xlu0 %8933
      %8937 = vset.pattern.permute.xlu0 0
      %8938 = vperm.xlu0 %8937, %v8912
      %v8939 = vpop.permute.xlu0 %8938
      %8942 = vset.pattern.permute.xlu0 0
      %8943 = vperm.xlu0 %8942, %v8913
      %v8944 = vpop.permute.xlu0 %8943
      %8947 = vset.pattern.permute.xlu0 0
      %8948 = vperm.xlu0 %8947, %v8914
      %v8949 = vpop.permute.xlu0 %8948
      %8952 = vset.pattern.permute.xlu0 0
      %8953 = vperm.xlu0 %8952, %v8915
      %v8954 = vpop.permute.xlu0 %8953
      %v8956 = vadd.f32 %v8891, %v8919
      %v8957 = vadd.f32 %v8892, %v8919
      %v8958 = vadd.f32 %v8893, %v8924
      %v8959 = vadd.f32 %v8894, %v8924
      %v8960 = vadd.f32 %v8895, %v8929
      %v8961 = vadd.f32 %v8896, %v8929
      %v8962 = vadd.f32 %v8897, %v8934
      %v8963 = vadd.f32 %v8898, %v8934
      %v8964 = vadd.f32 %v8899, %v8939
      %v8965 = vadd.f32 %v8900, %v8939
      %v8966 = vadd.f32 %v8901, %v8944
      %v8967 = vadd.f32 %v8902, %v8944
      %v8968 = vadd.f32 %v8903, %v8949
      %v8969 = vadd.f32 %v8904, %v8949
      %v8970 = vadd.f32 %v8905, %v8954
      %v8971 = vadd.f32 %v8906, %v8954
      %v8972 = vmax.f32 %v8956, 0.0
      %v8973 = vmax.f32 %v8957, 0.0
      %v8974 = vmax.f32 %v8958, 0.0
      %v8975 = vmax.f32 %v8959, 0.0
      %v8976 = vmax.f32 %v8960, 0.0
      %v8977 = vmax.f32 %v8961, 0.0
      %v8978 = vmax.f32 %v8962, 0.0
      %v8979 = vmax.f32 %v8963, 0.0
      %v8980 = vmax.f32 %v8964, 0.0
      %v8981 = vmax.f32 %v8965, 0.0
      %v8982 = vmax.f32 %v8966, 0.0
      %v8983 = vmax.f32 %v8967, 0.0
      %v8984 = vmax.f32 %v8968, 0.0
      %v8985 = vmax.f32 %v8969, 0.0
      %v8986 = vmax.f32 %v8970, 0.0
      %v8987 = vmax.f32 %v8971, 0.0
      %v8988 = vld [vmem:[%s6] sm:$0x3]
      %v8989 = vpack.c.bf16 %v8974, %v8972
      %v8990 = vpack.c.bf16 %v8975, %v8973
      %v8991 = vpack.c.bf16 %v8978, %v8976
      %v8992 = vpack.c.bf16 %v8979, %v8977
      %v8993 = vpack.c.bf16 %v8982, %v8980
      %v8994 = vpack.c.bf16 %v8983, %v8981
      %v8995 = vpack.c.bf16 %v8986, %v8984
      %v8996 = vpack.c.bf16 %v8987, %v8985
      %v8997 = vld [vmem:[%s7] sm:$0x7]
      %8999 = vset.pattern.permute.xlu0 0
      %9000 = vperm.xlu0 %8999, %v8997
      %v9001 = vpop.permute.xlu0 %9000
      %v9004 = vsel %vm1958, %v8988, 0
      %9006 = vmatprep.subr.bf16.mxu0 %v8990
      %9007 = vmatpush1.bf16.msra.mxu0 %v8989
      %9008 = vmatprep.subr.bf16.mxu0 %v8992
      %9009 = vmatpush1.bf16.msra.mxu0 %v8991
      %9010 = vmatprep.subr.bf16.mxu0 %v8994
      %9011 = vmatpush1.bf16.msra.mxu0 %v8993
      %9012 = vmatprep.subr.bf16.mxu0 %v8996
      %9013 = vmatpush1.bf16.msra.mxu0 %v8995
      %9014 = vmatprep.subr.bf16.mxu0 0
      %9015 = vmatpush1.bf16.msra.mxu0 0
      %9016 = vmatprep.subr.bf16.mxu0 0
      %9017 = vmatpush1.bf16.msra.mxu0 0
      %9018 = vmatprep.subr.bf16.mxu0 0
      %9019 = vmatpush1.bf16.msra.mxu0 0
      %9020 = vmatprep.subr.bf16.mxu0 0
      %9021 = vmatpush1.bf16.msra.mxu0 0
      %9022 = vmatprep.subr.bf16.mxu0 0
      %9023 = vmatpush1.bf16.msra.mxu0 0
      %9024 = vmatprep.subr.bf16.mxu0 0
      %9025 = vmatpush1.bf16.msra.mxu0 0
      %9026 = vmatprep.subr.bf16.mxu0 0
      %9027 = vmatpush1.bf16.msra.mxu0 0
      %9028 = vmatprep.subr.bf16.mxu0 0
      %9029 = vmatpush1.bf16.msra.mxu0 0
      %9030 = vmatprep.subr.bf16.mxu0 0
      %9031 = vmatpush1.bf16.msra.mxu0 0
      %9032 = vmatprep.subr.bf16.mxu0 0
      %9033 = vmatpush1.bf16.msra.mxu0 0
      %9034 = vmatprep.subr.bf16.mxu0 0
      %9035 = vmatpush1.bf16.msra.mxu0 0
      %9036 = vmatprep.subr.bf16.mxu0 0
      %9037 = vmatpush1.bf16.msra.mxu0 0
      %9038 = vmatprep.mubr.bf16.mxu0 0
      %9039 = vmatmul.mubr.bf16.gmra.mrb[0].mxu0 %v9004
      %v9040 = vpop.f32.mrb[0].mxu0
      %v9041 = vadd.f32 %v9001, %v9040
      %v9042 = vpop.f32.mrb[0].mxu0
      %v9043 = vadd.f32 %v9001, %v9042
      %v9044 = vpop.f32.mrb[0].mxu0
      %v9045 = vpop.f32.mrb[0].mxu0
      %9046 = vdwg.mxu0
      %v9047 = vtanh.pop %v9041
      %v9048 = vtanh.pop %v9043
      %v9051 = vcombine.low %v9047, %v9048
      %9053 = vst [vmem:[%s305] sm:$0x77] %v9051
      %p9054 = scmp.lt.s32.totalorder %s19, 1
      %s9055 = scalar_select %p9054, %s19, 1
      %s9056 = smul.addr %s9055, 2
      %s9057 = smul.addr %s9056, 4
      %s9058 = scalar_lea.vmem %s8, %s9057
      // Predicated region
      $region53: #{trigger_model_forward.1} parent=51 // pred_check
        %p9059 = pneg %p210
      $region54: #{trigger_model_forward.1} parent=51 // pred_check_branch
        %9061 = sbr.rel (%p9059) target = $region56
      $region55: #{trigger_model_forward.1} parent=51 // pred_region
        _
      $region56: #{trigger_model_forward.1} parent=51 // pred_fallthru
        _
    $region52: #{trigger_model_forward.1} parent=5 // pred_fallthru
      _
    %p9062 = scmp.le.s32.totalorder 2, %s14
    // Predicated region
    $region57: #{trigger_model_forward.1} parent=5 // pred_check
      %p9063 = pneg %p9062
    $region58: #{trigger_model_forward.1} parent=5 // pred_check_branch
      %9065 = sbr.rel (%p9063) target = $region60
    $region59: #{trigger_model_forward.1} parent=5 // pred_region
      %s9066 = ssub.s32 %s14, 2
      // Predicated region
      $region61: #{trigger_model_forward.1} parent=59 // pred_check
        %p9067 = pneg %p216
      $region62: #{trigger_model_forward.1} parent=59 // pred_check_branch
        %9069 = sbr.rel (%p9067) target = $region64
      $region63: #{trigger_model_forward.1} parent=59 // pred_region
        %p9070 = scmp.lt.s32.totalorder %s20, 1
        %s9071 = scalar_select %p9070, %s20, 1
        %s9072 = smul.addr %s9071, 2
        %s9073 = smul.addr %s9072, 4
        %s9074 = scalar_lea.vmem %s8, %s9073
      $region64: #{trigger_model_forward.1} parent=59 // pred_fallthru
        _
    $region60: #{trigger_model_forward.1} parent=5 // pred_fallthru
      _
  $region6: #{trigger_model_forward.1} parent=0 // loop_footer
    %s18 = sadd.s32 1, %s14
  $region7: #{trigger_model_forward.1} parent=0 // loop_footer_branch
    %13 = sbr.rel target = $region3
  $region8: #{trigger_model_forward.1} parent=0 // loop_exit
    _

</llo_original>
